<compile_context>
chip_gen: v7x
topology: tpu7x:2x2x1
jax: 0.10.0
libtpu: 0.0.40
codegen_flags: <defaults>
</compile_context>

<pallas_src>
import jax
import jax.numpy as jnp
from jax import lax
from jax.experimental import pallas as pl
from jax.experimental.pallas import tpu as pltpu

# Static network geometry (fc1 = Linear(64*7*7, 128) implies a 28x28x1 input).
H = W = 28            # input spatial size
H1 = W1 = 14          # after pool1
H2 = W2 = 7           # after pool2
C1, C2 = 32, 64
# conv2 consumes pool1's output zero-padded to (P2H, P2W) and flattened.
# P2W is sublane-friendly; P2H=18 gives the flat shifted reads enough slack
# (max read row 223 + 34 = 257 < 288).
P2H, P2W = 18, 16
ROWS2 = H1 * P2W      # 224 "virtual" conv2 output rows per image
K2 = 9 * C1           # 288 folded contraction dim for conv2
FC_IN = H2 * W2 * C2  # 3136
FC_HID = 128
FC_OUT_PAD = 128      # fc2 padded 10 -> 128 lanes for lane-dense stores


# ----------------------------------------------------------------------------
# Pallas kernels
# ----------------------------------------------------------------------------
def _fused_conv_kernel(x_ref, w1_ref, b1_ref, w2_ref, b2_ref, out_ref,
                       xpad_ref, hp1_ref, p1_ref, s_ref, hp2_ref):
    """conv1+BN1+ReLU+pool -> conv2+BN2+ReLU+pool for a tile of Bt images.

    All intermediates live in VMEM scratch; only the pooled (7,7,64) conv2
    activation is written back to HBM.
    """
    bt = x_ref.shape[0]

    # Zero the two zero-padded scratches once per grid step: only their pad
    # rings must stay zero, the interiors are fully rewritten per image.
    # (Done unconditionally -- cheap -- so it is also correct when the
    # "parallel" grid axis is split across v7x's two TensorCores.)
    xpad_ref[...] = jnp.zeros(xpad_ref.shape, xpad_ref.dtype)
    p1_ref[...] = jnp.zeros(p1_ref.shape, p1_ref.dtype)

    # Hoist all weight / bias reads out of the per-image loop.
    w1v = w1_ref[...]            # (9, 32)  f32, BN folded
    b1v = b1_ref[...]            # (1, 32)  f32
    w2v = w2_ref[...]            # (288, 64) bf16, BN folded, taps concatenated
    b2v = b2_ref[...]            # (1, 64)  f32

    def per_image(i, carry):
        # ---- conv1 (3x3, pad 1, Cin=1) on the VPU --------------------------
        # Replicate the padded image across the 32 output channels once, so
        # the 9 tap reads below are already channel-major and need no per-tap
        # lane broadcast.
        xpad_ref[1:H + 1, 1:W + 1, :] = jnp.broadcast_to(x_ref[i], (H, W, C1))
        acc = jnp.zeros((H, W, C1), jnp.float32)
        for k in range(9):
            dy, dx = divmod(k, 3)
            acc = acc + xpad_ref[dy:dy + H, dx:dx + W, :] * w1v[k]
        y1 = jnp.maximum(acc + b1v, 0.0)                        # BN folded

        # 2x2 max-pool: H-pool via a leading-dim reshape (layout-free),
        # W-pool via stride-2 sublane reads from scratch.
        yr = y1.reshape(H1, 2, W, C1)
        hp1_ref[...] = jnp.maximum(yr[:, 0], yr[:, 1])          # (14, 28, 32)
        pooled1 = jnp.maximum(hp1_ref[:, pl.ds(0, W1, 2), :],
                              hp1_ref[:, pl.ds(1, W1, 2), :])   # (14, 14, 32)

        # Scatter pooled rows into the zero-padded flat conv2 input slab:
        # flat row = (y+1)*16 + (x+1); the pad ring rows/cols stay zero.
        for p in range(H1):
            base = (p + 1) * P2W + 1
            p1_ref[base:base + W1, :] = pooled1[p]

        # ---- conv2 (3x3, pad 1, 32->64): 9 taps folded into K=288 ----------
        # Virtual output row o = oy*16 + ox (ox in [0,16); columns 14/15 are
        # garbage but finite -- the pad ring is zero -- and are never read by
        # the stride-2 W-pool below).  Tap (dy,dx) reads flat row o + dy*16+dx;
        # max read row 223 + 34 = 257 < 288.
        for k in range(9):
            dy, dx = divmod(k, 3)
            s = dy * P2W + dx
            s_ref[:, k * C1:(k + 1) * C1] = (
                p1_ref[s:s + ROWS2, :].astype(s_ref.dtype))
        y2 = jnp.dot(s_ref[...], w2v, preferred_element_type=jnp.float32)
        y2 = jnp.maximum(y2 + b2v, 0.0)                         # (224, 64)

        # 2x2 max-pool on the virtual-row layout.
        for a in range(H2):
            hp2_ref[a] = jnp.maximum(y2[(2 * a) * P2W:(2 * a + 1) * P2W, :],
                                     y2[(2 * a + 1) * P2W:(2 * a + 2) * P2W, :])
        pooled2 = jnp.maximum(hp2_ref[:, pl.ds(0, W2, 2), :],
                              hp2_ref[:, pl.ds(1, W2, 2), :])   # (7, 7, 64)
        out_ref[i] = pooled2.astype(out_ref.dtype)
        return carry

    lax.fori_loop(0, bt, per_image, 0)


def _fc_kernel(x_ref, w1_ref, b1_ref, w2_ref, b2_ref, out_ref):
    """Fused fc1 + ReLU + (eval-mode dropout = identity) + fc2 (padded to 128)."""
    h = jnp.dot(x_ref[...], w1_ref[...], preferred_element_type=jnp.float32)
    h = jnp.maximum(h + b1_ref[...], 0.0)
    # TODO(synk): nn.Dropout(0.3) train-mode masking not implemented (inference only).
    o = jnp.dot(h.astype(w2_ref.dtype), w2_ref[...],
                preferred_element_type=jnp.float32)
    out_ref[...] = (o + b2_ref[...]).astype(out_ref.dtype)


# ----------------------------------------------------------------------------
# pallas_call wrappers
# ----------------------------------------------------------------------------
def _pick_conv_bt(batch, max_bt=8):
    """Largest batch tile <= max_bt that divides B, preferring >=2 grid steps
    so v7x's two TensorCores both get work."""
    divs = [d for d in range(min(max_bt, batch), 0, -1) if batch % d == 0]
    for d in divs:
        if batch // d >= 2:
            return d
    return divs[0]


def _conv_block(x_nhwc, w1, b1, w2, b2):
    B = x_nhwc.shape[0]
    bt = _pick_conv_bt(B)
    return pl.pallas_call(
        _fused_conv_kernel,
        out_shape=jax.ShapeDtypeStruct((B, H2, W2, C2), jnp.bfloat16),
        grid=(B // bt,),
        in_specs=[
            pl.BlockSpec((bt, H, W, 1), lambda g: (g, 0, 0, 0)),
            pl.BlockSpec((9, C1), lambda g: (0, 0)),
            pl.BlockSpec((1, C1), lambda g: (0, 0)),
            pl.BlockSpec((K2, C2), lambda g: (0, 0)),
            pl.BlockSpec((1, C2), lambda g: (0, 0)),
        ],
        out_specs=pl.BlockSpec((bt, H2, W2, C2), lambda g: (g, 0, 0, 0)),
        scratch_shapes=[
            pltpu.VMEM((H + 2, W + 2, C1), jnp.float32),  # padded, ch-replicated image
            pltpu.VMEM((H1, W, C1), jnp.float32),         # conv1 H-pool buffer
            pltpu.VMEM((P2H * P2W, C1), jnp.float32),     # padded flat pool1 output
            pltpu.VMEM((ROWS2, K2), jnp.bfloat16),        # conv2 im2col slab (K=288)
            pltpu.VMEM((H2, P2W, C2), jnp.float32),       # conv2 H-pool buffer
        ],
        compiler_params=pltpu.CompilerParams(
            dimension_semantics=("parallel",),
            vmem_limit_bytes=32 << 20),
    )(x_nhwc, w1, b1, w2, b2)


def _pick_fc_tm(batch):
    """Row tile for the fc kernel: multiple of 8 (or the whole batch),
    preferring >=2 grid steps; sized to stay far below v7x's 64 MiB VMEM."""
    for t in (256, 128, 64, 32, 16, 8):
        if batch % t == 0 and batch // t >= 2:
            return t
    for t in (512, 256, 128, 64, 32, 16, 8):
        if batch % t == 0:
            return t
    return batch


def _fc_block(x_flat, w1, b1, w2, b2):
    B = x_flat.shape[0]
    tm = _pick_fc_tm(B)
    return pl.pallas_call(
        _fc_kernel,
        out_shape=jax.ShapeDtypeStruct((B, FC_OUT_PAD), jnp.float32),
        grid=(B // tm,),
        in_specs=[
            pl.BlockSpec((tm, FC_IN), lambda i: (i, 0)),
            pl.BlockSpec((FC_IN, FC_HID), lambda i: (0, 0)),
            pl.BlockSpec((1, FC_HID), lambda i: (0, 0)),
            pl.BlockSpec((FC_HID, FC_OUT_PAD), lambda i: (0, 0)),
            pl.BlockSpec((1, FC_OUT_PAD), lambda i: (0, 0)),
        ],
        out_specs=pl.BlockSpec((tm, FC_OUT_PAD), lambda i: (i, 0)),
        compiler_params=pltpu.CompilerParams(
            dimension_semantics=("parallel",),
            vmem_limit_bytes=32 << 20),
    )(x_flat, w1, b1, w2, b2)


# ----------------------------------------------------------------------------
# Parameters (PyTorch layouts), one-time folding / permutation, forward pass
# ----------------------------------------------------------------------------
def init_torch_style_params(key):
    """Parameters in PyTorch layouts: Conv2d (out,in,kh,kw), Linear (out,in)."""
    ks = jax.random.split(key, 8)

    def uni(k, shape, fan_in):
        bound = float(fan_in) ** -0.5
        return jax.random.uniform(k, shape, jnp.float32, -bound, bound)

    return {
        "conv1_w": uni(ks[0], (C1, 1, 3, 3), 9), "conv1_b": uni(ks[1], (C1,), 9),
        "bn1_gamma": jnp.ones((C1,), jnp.float32), "bn1_beta": jnp.zeros((C1,), jnp.float32),
        "bn1_mean": jnp.zeros((C1,), jnp.float32), "bn1_var": jnp.ones((C1,), jnp.float32),
        "conv2_w": uni(ks[2], (C2, C1, 3, 3), 9 * C1), "conv2_b": uni(ks[3], (C2,), 9 * C1),
        "bn2_gamma": jnp.ones((C2,), jnp.float32), "bn2_beta": jnp.zeros((C2,), jnp.float32),
        "bn2_mean": jnp.zeros((C2,), jnp.float32), "bn2_var": jnp.ones((C2,), jnp.float32),
        "fc1_w": uni(ks[4], (FC_HID, FC_IN), FC_IN), "fc1_b": uni(ks[5], (FC_HID,), FC_IN),
        "fc2_w": uni(ks[6], (10, FC_HID), FC_HID), "fc2_b": uni(ks[7], (10,), FC_HID),
    }


def prepare_params(p, eps=1e-5, mxu_dtype=jnp.bfloat16):
    """One-time prep: fold BN into conv weights, pack conv2 taps into the
    contraction dim, permute fc1 rows to the NHWC flatten order, zero-pad fc2
    to 128 lanes, and cast MXU operands to bf16."""
    def fold(w, b, g, beta, mu, var):
        s = g / jnp.sqrt(var + eps)
        return w * s[:, None, None, None], (b - mu) * s + beta

    w1, b1 = fold(p["conv1_w"], p["conv1_b"], p["bn1_gamma"], p["bn1_beta"],
                  p["bn1_mean"], p["bn1_var"])
    w2, b2 = fold(p["conv2_w"], p["conv2_b"], p["bn2_gamma"], p["bn2_beta"],
                  p["bn2_mean"], p["bn2_var"])
    # conv1: (out=32, in=1, 3, 3) -> (tap, out) = (9, 32); stays f32 (VPU path).
    w1k = jnp.transpose(w1, (2, 3, 1, 0)).reshape(9, C1).astype(jnp.float32)
    # conv2: (64, 32, 3, 3) -> taps folded into the contraction: (9*32, 64) bf16.
    w2k = jnp.transpose(w2, (2, 3, 1, 0)).reshape(K2, C2).astype(mxu_dtype)
    # fc1: PyTorch flattens NCHW (c,h,w); pooled activations are NHWC (h,w,c),
    # so permute the weight rows once instead of transposing activations.
    fc1 = (p["fc1_w"].reshape(FC_HID, C2, H2, W2)
           .transpose(2, 3, 1, 0).reshape(FC_IN, FC_HID))
    # fc2: (10,128) -> (128,128) zero-padded for lane-dense output stores.
    fc2 = jnp.zeros((FC_HID, FC_OUT_PAD), jnp.float32).at[:, :10].set(p["fc2_w"].T)
    fc2_b = jnp.zeros((FC_OUT_PAD,), jnp.float32).at[:10].set(p["fc2_b"])
    return {
        "w1": w1k, "b1": b1.reshape(1, C1).astype(jnp.float32),
        "w2": w2k, "b2": b2.reshape(1, C2).astype(jnp.float32),
        "fc1_w": fc1.astype(mxu_dtype),
        "fc1_b": p["fc1_b"].reshape(1, FC_HID).astype(jnp.float32),
        "fc2_w": fc2.astype(mxu_dtype), "fc2_b": fc2_b.reshape(1, FC_OUT_PAD),
    }


@jax.jit
def improved_cnn_forward(kp, x_nchw):
    B = x_nchw.shape[0]
    assert x_nchw.shape[1:] == (1, H, W), x_nchw.shape
    # NCHW -> NHWC is a free reshape since C == 1.
    x = x_nchw.reshape(B, H, W, 1).astype(jnp.float32)
    y2 = _conv_block(x, kp["w1"], kp["b1"], kp["w2"], kp["b2"])    # (B,7,7,64) bf16
    # NHWC flatten is a free HBM reshape; fc1 rows were permuted to match.
    logits = _fc_block(y2.reshape(B, FC_IN), kp["fc1_w"], kp["fc1_b"],
                       kp["fc2_w"], kp["fc2_b"])                   # (B,128) f32
    return logits[:, :10]


# ----------------------------------------------------------------------------
if __name__ == "__main__":
    key = jax.random.PRNGKey(0)
    k_param, k_x = jax.random.split(key)
    torch_style = init_torch_style_params(k_param)
    kparams = prepare_params(torch_style)

    # fc1 = Linear(64*7*7, 128) implies a 28x28 single-channel (MNIST-like) input.
    x = jax.random.normal(k_x, (2, 1, 28, 28), jnp.float32)

    out = improved_cnn_forward(kparams, x)
    out = jax.block_until_ready(out)
    assert out.shape == (2, 10), out.shape
    assert bool(jnp.all(jnp.isfinite(out)))
    print("KERNEL_OK")
</pallas_src>

<mosaic_0001>
module attributes {stable_mosaic.version = 11 : i64} {
  func.func @_fused_conv_kernel(%arg0: i32, %arg1: memref<1x28x28x1xf32, #tpu.memory_space<vmem>>, %arg2: memref<9x32xf32, #tpu.memory_space<vmem>>, %arg3: memref<1x32xf32, #tpu.memory_space<vmem>>, %arg4: memref<288x64xbf16, #tpu.memory_space<vmem>>, %arg5: memref<1x64xf32, #tpu.memory_space<vmem>>, %arg6: memref<1x7x7x64xbf16, #tpu.memory_space<vmem>>, %arg7: memref<30x30x32xf32, #tpu.memory_space<vmem>>, %arg8: memref<14x28x32xf32, #tpu.memory_space<vmem>>, %arg9: memref<288x32xf32, #tpu.memory_space<vmem>>, %arg10: memref<224x288xbf16, #tpu.memory_space<vmem>>, %arg11: memref<7x16x64xf32, #tpu.memory_space<vmem>>) attributes {dimension_semantics = [#tpu.dimension_semantics<parallel>], iteration_bounds = array<i64: 2>, scalar_prefetch = 0 : i64, scratch_operands = 5 : i64, tpu.core_type = #tpu.core_type<tc>, window_params = [{transform_indices = @transform_0, window_bounds = array<i64: 1, 28, 28, 1>}, {pipeline_mode = #tpu.pipeline_mode<synchronous>, transform_indices = @transform_1, window_bounds = array<i64: 9, 32>}, {pipeline_mode = #tpu.pipeline_mode<synchronous>, transform_indices = @transform_2, window_bounds = array<i64: 1, 32>}, {pipeline_mode = #tpu.pipeline_mode<synchronous>, transform_indices = @transform_3, window_bounds = array<i64: 288, 64>}, {pipeline_mode = #tpu.pipeline_mode<synchronous>, transform_indices = @transform_4, window_bounds = array<i64: 1, 64>}, {transform_indices = @transform_5, window_bounds = array<i64: 1, 7, 7, 64>}]} {
    %cst = arith.constant 0.000000e+00 : f32
    %0 = vector.broadcast %cst : f32 to vector<30x30x32xf32>
    %c0 = arith.constant 0 : index
    %c0_0 = arith.constant 0 : index
    %c0_1 = arith.constant 0 : index
    %1 = vector.load %arg7[%c0, %c0_0, %c0_1] : memref<30x30x32xf32, #tpu.memory_space<vmem>>, vector<30x30x32xf32>
    tpu.vector_store %arg7[%c0, %c0_0, %c0_1], %0 {strides = array<i32>} : memref<30x30x32xf32, #tpu.memory_space<vmem>>, vector<30x30x32xf32>,
    %cst_2 = arith.constant 0.000000e+00 : f32
    %2 = vector.broadcast %cst_2 : f32 to vector<288x32xf32>
    %c0_3 = arith.constant 0 : index
    %c0_4 = arith.constant 0 : index
    %3 = vector.load %arg9[%c0_3, %c0_4] : memref<288x32xf32, #tpu.memory_space<vmem>>, vector<288x32xf32>
    tpu.vector_store %arg9[%c0_3, %c0_4], %2 {strides = array<i32>} : memref<288x32xf32, #tpu.memory_space<vmem>>, vector<288x32xf32>,
    %c0_5 = arith.constant 0 : index
    %c0_6 = arith.constant 0 : index
    %4 = vector.load %arg2[%c0_5, %c0_6] : memref<9x32xf32, #tpu.memory_space<vmem>>, vector<9x32xf32>
    %c0_7 = arith.constant 0 : index
    %c0_8 = arith.constant 0 : index
    %5 = vector.load %arg3[%c0_7, %c0_8] : memref<1x32xf32, #tpu.memory_space<vmem>>, vector<1x32xf32>
    %c0_9 = arith.constant 0 : index
    %c0_10 = arith.constant 0 : index
    %6 = vector.load %arg4[%c0_9, %c0_10] : memref<288x64xbf16, #tpu.memory_space<vmem>>, vector<288x64xbf16>
    %c0_11 = arith.constant 0 : index
    %c0_12 = arith.constant 0 : index
    %7 = vector.load %arg5[%c0_11, %c0_12] : memref<1x64xf32, #tpu.memory_space<vmem>>, vector<1x64xf32>
    %c0_i32 = arith.constant 0 : i32
    %8 = arith.index_cast %c0_i32 : i32 to index
    %c0_13 = arith.constant 0 : index
    %c0_14 = arith.constant 0 : index
    %c0_15 = arith.constant 0 : index
    %9 = vector.load %arg1[%8, %c0_13, %c0_14, %c0_15] : memref<1x28x28x1xf32, #tpu.memory_space<vmem>>, vector<1x28x28x1xf32>
    %10 = vector.shape_cast %9 : vector<1x28x28x1xf32> to vector<28x28x1xf32>
    %11 = vector.shape_cast %10 : vector<28x28x1xf32> to vector<28x28x1xf32>
    %12 = vector.broadcast %11 : vector<28x28x1xf32> to vector<28x28x32xf32>
    %c1 = arith.constant 1 : index
    %c1_16 = arith.constant 1 : index
    %c0_17 = arith.constant 0 : index
    %13 = vector.load %arg7[%c1, %c1_16, %c0_17] : memref<30x30x32xf32, #tpu.memory_space<vmem>>, vector<28x28x32xf32>
    tpu.vector_store %arg7[%c1, %c1_16, %c0_17], %12 {strides = array<i32>} : memref<30x30x32xf32, #tpu.memory_space<vmem>>, vector<28x28x32xf32>,
    %cst_18 = arith.constant 0.000000e+00 : f32
    %14 = vector.broadcast %cst_18 : f32 to vector<28x28x32xf32>
    %c0_19 = arith.constant 0 : index
    %c0_20 = arith.constant 0 : index
    %c0_21 = arith.constant 0 : index
    %15 = vector.load %arg7[%c0_19, %c0_20, %c0_21] : memref<30x30x32xf32, #tpu.memory_space<vmem>>, vector<28x28x32xf32>
    %16 = vector.extract_strided_slice %4 {offsets = [0, 0], sizes = [1, 32], strides = [1, 1]} : vector<9x32xf32> to vector<1x32xf32>
    %17 = vector.shape_cast %16 : vector<1x32xf32> to vector<32xf32>
    %18 = vector.shape_cast %17 : vector<32xf32> to vector<1x1x32xf32>
    %19 = vector.broadcast %18 : vector<1x1x32xf32> to vector<28x28x32xf32>
    %20 = arith.mulf %15, %19 : vector<28x28x32xf32>
    %21 = arith.addf %14, %20 : vector<28x28x32xf32>
    %c0_22 = arith.constant 0 : index
    %c1_23 = arith.constant 1 : index
    %c0_24 = arith.constant 0 : index
    %22 = vector.load %arg7[%c0_22, %c1_23, %c0_24] : memref<30x30x32xf32, #tpu.memory_space<vmem>>, vector<28x28x32xf32>
    %23 = vector.extract_strided_slice %4 {offsets = [1, 0], sizes = [1, 32], strides = [1, 1]} : vector<9x32xf32> to vector<1x32xf32>
    %24 = vector.shape_cast %23 : vector<1x32xf32> to vector<32xf32>
    %25 = vector.shape_cast %24 : vector<32xf32> to vector<1x1x32xf32>
    %26 = vector.broadcast %25 : vector<1x1x32xf32> to vector<28x28x32xf32>
    %27 = arith.mulf %22, %26 : vector<28x28x32xf32>
    %28 = arith.addf %21, %27 : vector<28x28x32xf32>
    %c0_25 = arith.constant 0 : index
    %c2 = arith.constant 2 : index
    %c0_26 = arith.constant 0 : index
    %29 = vector.load %arg7[%c0_25, %c2, %c0_26] : memref<30x30x32xf32, #tpu.memory_space<vmem>>, vector<28x28x32xf32>
    %30 = vector.extract_strided_slice %4 {offsets = [2, 0], sizes = [1, 32], strides = [1, 1]} : vector<9x32xf32> to vector<1x32xf32>
    %31 = vector.shape_cast %30 : vector<1x32xf32> to vector<32xf32>
    %32 = vector.shape_cast %31 : vector<32xf32> to vector<1x1x32xf32>
    %33 = vector.broadcast %32 : vector<1x1x32xf32> to vector<28x28x32xf32>
    %34 = arith.mulf %29, %33 : vector<28x28x32xf32>
    %35 = arith.addf %28, %34 : vector<28x28x32xf32>
    %c1_27 = arith.constant 1 : index
    %c0_28 = arith.constant 0 : index
    %c0_29 = arith.constant 0 : index
    %36 = vector.load %arg7[%c1_27, %c0_28, %c0_29] : memref<30x30x32xf32, #tpu.memory_space<vmem>>, vector<28x28x32xf32>
    %37 = vector.extract_strided_slice %4 {offsets = [3, 0], sizes = [1, 32], strides = [1, 1]} : vector<9x32xf32> to vector<1x32xf32>
    %38 = vector.shape_cast %37 : vector<1x32xf32> to vector<32xf32>
    %39 = vector.shape_cast %38 : vector<32xf32> to vector<1x1x32xf32>
    %40 = vector.broadcast %39 : vector<1x1x32xf32> to vector<28x28x32xf32>
    %41 = arith.mulf %36, %40 : vector<28x28x32xf32>
    %42 = arith.addf %35, %41 : vector<28x28x32xf32>
    %c1_30 = arith.constant 1 : index
    %c1_31 = arith.constant 1 : index
    %c0_32 = arith.constant 0 : index
    %43 = vector.load %arg7[%c1_30, %c1_31, %c0_32] : memref<30x30x32xf32, #tpu.memory_space<vmem>>, vector<28x28x32xf32>
    %44 = vector.extract_strided_slice %4 {offsets = [4, 0], sizes = [1, 32], strides = [1, 1]} : vector<9x32xf32> to vector<1x32xf32>
    %45 = vector.shape_cast %44 : vector<1x32xf32> to vector<32xf32>
    %46 = vector.shape_cast %45 : vector<32xf32> to vector<1x1x32xf32>
    %47 = vector.broadcast %46 : vector<1x1x32xf32> to vector<28x28x32xf32>
    %48 = arith.mulf %43, %47 : vector<28x28x32xf32>
    %49 = arith.addf %42, %48 : vector<28x28x32xf32>
    %c1_33 = arith.constant 1 : index
    %c2_34 = arith.constant 2 : index
    %c0_35 = arith.constant 0 : index
    %50 = vector.load %arg7[%c1_33, %c2_34, %c0_35] : memref<30x30x32xf32, #tpu.memory_space<vmem>>, vector<28x28x32xf32>
    %51 = vector.extract_strided_slice %4 {offsets = [5, 0], sizes = [1, 32], strides = [1, 1]} : vector<9x32xf32> to vector<1x32xf32>
    %52 = vector.shape_cast %51 : vector<1x32xf32> to vector<32xf32>
    %53 = vector.shape_cast %52 : vector<32xf32> to vector<1x1x32xf32>
    %54 = vector.broadcast %53 : vector<1x1x32xf32> to vector<28x28x32xf32>
    %55 = arith.mulf %50, %54 : vector<28x28x32xf32>
    %56 = arith.addf %49, %55 : vector<28x28x32xf32>
    %c2_36 = arith.constant 2 : index
    %c0_37 = arith.constant 0 : index
    %c0_38 = arith.constant 0 : index
    %57 = vector.load %arg7[%c2_36, %c0_37, %c0_38] : memref<30x30x32xf32, #tpu.memory_space<vmem>>, vector<28x28x32xf32>
    %58 = vector.extract_strided_slice %4 {offsets = [6, 0], sizes = [1, 32], strides = [1, 1]} : vector<9x32xf32> to vector<1x32xf32>
    %59 = vector.shape_cast %58 : vector<1x32xf32> to vector<32xf32>
    %60 = vector.shape_cast %59 : vector<32xf32> to vector<1x1x32xf32>
    %61 = vector.broadcast %60 : vector<1x1x32xf32> to vector<28x28x32xf32>
    %62 = arith.mulf %57, %61 : vector<28x28x32xf32>
    %63 = arith.addf %56, %62 : vector<28x28x32xf32>
    %c2_39 = arith.constant 2 : index
    %c1_40 = arith.constant 1 : index
    %c0_41 = arith.constant 0 : index
    %64 = vector.load %arg7[%c2_39, %c1_40, %c0_41] : memref<30x30x32xf32, #tpu.memory_space<vmem>>, vector<28x28x32xf32>
    %65 = vector.extract_strided_slice %4 {offsets = [7, 0], sizes = [1, 32], strides = [1, 1]} : vector<9x32xf32> to vector<1x32xf32>
    %66 = vector.shape_cast %65 : vector<1x32xf32> to vector<32xf32>
    %67 = vector.shape_cast %66 : vector<32xf32> to vector<1x1x32xf32>
    %68 = vector.broadcast %67 : vector<1x1x32xf32> to vector<28x28x32xf32>
    %69 = arith.mulf %64, %68 : vector<28x28x32xf32>
    %70 = arith.addf %63, %69 : vector<28x28x32xf32>
    %c2_42 = arith.constant 2 : index
    %c2_43 = arith.constant 2 : index
    %c0_44 = arith.constant 0 : index
    %71 = vector.load %arg7[%c2_42, %c2_43, %c0_44] : memref<30x30x32xf32, #tpu.memory_space<vmem>>, vector<28x28x32xf32>
    %72 = vector.extract_strided_slice %4 {offsets = [8, 0], sizes = [1, 32], strides = [1, 1]} : vector<9x32xf32> to vector<1x32xf32>
    %73 = vector.shape_cast %72 : vector<1x32xf32> to vector<32xf32>
    %74 = vector.shape_cast %73 : vector<32xf32> to vector<1x1x32xf32>
    %75 = vector.broadcast %74 : vector<1x1x32xf32> to vector<28x28x32xf32>
    %76 = arith.mulf %71, %75 : vector<28x28x32xf32>
    %77 = arith.addf %70, %76 : vector<28x28x32xf32>
    %78 = vector.shape_cast %5 : vector<1x32xf32> to vector<1x1x32xf32>
    %79 = vector.broadcast %78 : vector<1x1x32xf32> to vector<28x28x32xf32>
    %80 = arith.addf %77, %79 : vector<28x28x32xf32>
    %cst_45 = arith.constant 0.000000e+00 : f32
    %81 = vector.broadcast %cst_45 : f32 to vector<28x28x32xf32>
    %82 = arith.maximumf %80, %81 : vector<28x28x32xf32>
    %83 = vector.shape_cast %82 : vector<28x28x32xf32> to vector<14x2x28x32xf32>
    %84 = vector.extract_strided_slice %83 {offsets = [0, 0, 0, 0], sizes = [14, 1, 28, 32], strides = [1, 1, 1, 1]} : vector<14x2x28x32xf32> to vector<14x1x28x32xf32>
    %85 = vector.shape_cast %84 : vector<14x1x28x32xf32> to vector<14x28x32xf32>
    %86 = vector.extract_strided_slice %83 {offsets = [0, 1, 0, 0], sizes = [14, 1, 28, 32], strides = [1, 1, 1, 1]} : vector<14x2x28x32xf32> to vector<14x1x28x32xf32>
    %87 = vector.shape_cast %86 : vector<14x1x28x32xf32> to vector<14x28x32xf32>
    %88 = arith.maximumf %85, %87 : vector<14x28x32xf32>
    %c0_46 = arith.constant 0 : index
    %c0_47 = arith.constant 0 : index
    %c0_48 = arith.constant 0 : index
    %89 = vector.load %arg8[%c0_46, %c0_47, %c0_48] : memref<14x28x32xf32, #tpu.memory_space<vmem>>, vector<14x28x32xf32>
    tpu.vector_store %arg8[%c0_46, %c0_47, %c0_48], %88 {strides = array<i32>} : memref<14x28x32xf32, #tpu.memory_space<vmem>>, vector<14x28x32xf32>,
    %c0_49 = arith.constant 0 : index
    %c0_50 = arith.constant 0 : index
    %c0_51 = arith.constant 0 : index
    %90 = tpu.strided_load %arg8[%c0_49, %c0_50, %c0_51] {strides = array<i32: 1, 2, 1>} : memref<14x28x32xf32, #tpu.memory_space<vmem>>, vector<14x14x32xf32>
    %c0_52 = arith.constant 0 : index
    %c1_53 = arith.constant 1 : index
    %c0_54 = arith.constant 0 : index
    %91 = tpu.strided_load %arg8[%c0_52, %c1_53, %c0_54] {strides = array<i32: 1, 2, 1>} : memref<14x28x32xf32, #tpu.memory_space<vmem>>, vector<14x14x32xf32>
    %92 = arith.maximumf %90, %91 : vector<14x14x32xf32>
    %93 = vector.extract_strided_slice %92 {offsets = [0, 0, 0], sizes = [1, 14, 32], strides = [1, 1, 1]} : vector<14x14x32xf32> to vector<1x14x32xf32>
    %94 = vector.shape_cast %93 : vector<1x14x32xf32> to vector<14x32xf32>
    %c17 = arith.constant 17 : index
    %c0_55 = arith.constant 0 : index
    %95 = vector.load %arg9[%c17, %c0_55] : memref<288x32xf32, #tpu.memory_space<vmem>>, vector<14x32xf32>
    tpu.vector_store %arg9[%c17, %c0_55], %94 {strides = array<i32>} : memref<288x32xf32, #tpu.memory_space<vmem>>, vector<14x32xf32>,
    %96 = vector.extract_strided_slice %92 {offsets = [1, 0, 0], sizes = [1, 14, 32], strides = [1, 1, 1]} : vector<14x14x32xf32> to vector<1x14x32xf32>
    %97 = vector.shape_cast %96 : vector<1x14x32xf32> to vector<14x32xf32>
    %c33 = arith.constant 33 : index
    %c0_56 = arith.constant 0 : index
    %98 = vector.load %arg9[%c33, %c0_56] : memref<288x32xf32, #tpu.memory_space<vmem>>, vector<14x32xf32>
    tpu.vector_store %arg9[%c33, %c0_56], %97 {strides = array<i32>} : memref<288x32xf32, #tpu.memory_space<vmem>>, vector<14x32xf32>,
    %99 = vector.extract_strided_slice %92 {offsets = [2, 0, 0], sizes = [1, 14, 32], strides = [1, 1, 1]} : vector<14x14x32xf32> to vector<1x14x32xf32>
    %100 = vector.shape_cast %99 : vector<1x14x32xf32> to vector<14x32xf32>
    %c49 = arith.constant 49 : index
    %c0_57 = arith.constant 0 : index
    %101 = vector.load %arg9[%c49, %c0_57] : memref<288x32xf32, #tpu.memory_space<vmem>>, vector<14x32xf32>
    tpu.vector_store %arg9[%c49, %c0_57], %100 {strides = array<i32>} : memref<288x32xf32, #tpu.memory_space<vmem>>, vector<14x32xf32>,
    %102 = vector.extract_strided_slice %92 {offsets = [3, 0, 0], sizes = [1, 14, 32], strides = [1, 1, 1]} : vector<14x14x32xf32> to vector<1x14x32xf32>
    %103 = vector.shape_cast %102 : vector<1x14x32xf32> to vector<14x32xf32>
    %c65 = arith.constant 65 : index
    %c0_58 = arith.constant 0 : index
    %104 = vector.load %arg9[%c65, %c0_58] : memref<288x32xf32, #tpu.memory_space<vmem>>, vector<14x32xf32>
    tpu.vector_store %arg9[%c65, %c0_58], %103 {strides = array<i32>} : memref<288x32xf32, #tpu.memory_space<vmem>>, vector<14x32xf32>,
    %105 = vector.extract_strided_slice %92 {offsets = [4, 0, 0], sizes = [1, 14, 32], strides = [1, 1, 1]} : vector<14x14x32xf32> to vector<1x14x32xf32>
    %106 = vector.shape_cast %105 : vector<1x14x32xf32> to vector<14x32xf32>
    %c81 = arith.constant 81 : index
    %c0_59 = arith.constant 0 : index
    %107 = vector.load %arg9[%c81, %c0_59] : memref<288x32xf32, #tpu.memory_space<vmem>>, vector<14x32xf32>
    tpu.vector_store %arg9[%c81, %c0_59], %106 {strides = array<i32>} : memref<288x32xf32, #tpu.memory_space<vmem>>, vector<14x32xf32>,
    %108 = vector.extract_strided_slice %92 {offsets = [5, 0, 0], sizes = [1, 14, 32], strides = [1, 1, 1]} : vector<14x14x32xf32> to vector<1x14x32xf32>
    %109 = vector.shape_cast %108 : vector<1x14x32xf32> to vector<14x32xf32>
    %c97 = arith.constant 97 : index
    %c0_60 = arith.constant 0 : index
    %110 = vector.load %arg9[%c97, %c0_60] : memref<288x32xf32, #tpu.memory_space<vmem>>, vector<14x32xf32>
    tpu.vector_store %arg9[%c97, %c0_60], %109 {strides = array<i32>} : memref<288x32xf32, #tpu.memory_space<vmem>>, vector<14x32xf32>,
    %111 = vector.extract_strided_slice %92 {offsets = [6, 0, 0], sizes = [1, 14, 32], strides = [1, 1, 1]} : vector<14x14x32xf32> to vector<1x14x32xf32>
    %112 = vector.shape_cast %111 : vector<1x14x32xf32> to vector<14x32xf32>
    %c113 = arith.constant 113 : index
    %c0_61 = arith.constant 0 : index
    %113 = vector.load %arg9[%c113, %c0_61] : memref<288x32xf32, #tpu.memory_space<vmem>>, vector<14x32xf32>
    tpu.vector_store %arg9[%c113, %c0_61], %112 {strides = array<i32>} : memref<288x32xf32, #tpu.memory_space<vmem>>, vector<14x32xf32>,
    %114 = vector.extract_strided_slice %92 {offsets = [7, 0, 0], sizes = [1, 14, 32], strides = [1, 1, 1]} : vector<14x14x32xf32> to vector<1x14x32xf32>
    %115 = vector.shape_cast %114 : vector<1x14x32xf32> to vector<14x32xf32>
    %c129 = arith.constant 129 : index
    %c0_62 = arith.constant 0 : index
    %116 = vector.load %arg9[%c129, %c0_62] : memref<288x32xf32, #tpu.memory_space<vmem>>, vector<14x32xf32>
    tpu.vector_store %arg9[%c129, %c0_62], %115 {strides = array<i32>} : memref<288x32xf32, #tpu.memory_space<vmem>>, vector<14x32xf32>,
    %117 = vector.extract_strided_slice %92 {offsets = [8, 0, 0], sizes = [1, 14, 32], strides = [1, 1, 1]} : vector<14x14x32xf32> to vector<1x14x32xf32>
    %118 = vector.shape_cast %117 : vector<1x14x32xf32> to vector<14x32xf32>
    %c145 = arith.constant 145 : index
    %c0_63 = arith.constant 0 : index
    %119 = vector.load %arg9[%c145, %c0_63] : memref<288x32xf32, #tpu.memory_space<vmem>>, vector<14x32xf32>
    tpu.vector_store %arg9[%c145, %c0_63], %118 {strides = array<i32>} : memref<288x32xf32, #tpu.memory_space<vmem>>, vector<14x32xf32>,
    %120 = vector.extract_strided_slice %92 {offsets = [9, 0, 0], sizes = [1, 14, 32], strides = [1, 1, 1]} : vector<14x14x32xf32> to vector<1x14x32xf32>
    %121 = vector.shape_cast %120 : vector<1x14x32xf32> to vector<14x32xf32>
    %c161 = arith.constant 161 : index
    %c0_64 = arith.constant 0 : index
    %122 = vector.load %arg9[%c161, %c0_64] : memref<288x32xf32, #tpu.memory_space<vmem>>, vector<14x32xf32>
    tpu.vector_store %arg9[%c161, %c0_64], %121 {strides = array<i32>} : memref<288x32xf32, #tpu.memory_space<vmem>>, vector<14x32xf32>,
    %123 = vector.extract_strided_slice %92 {offsets = [10, 0, 0], sizes = [1, 14, 32], strides = [1, 1, 1]} : vector<14x14x32xf32> to vector<1x14x32xf32>
    %124 = vector.shape_cast %123 : vector<1x14x32xf32> to vector<14x32xf32>
    %c177 = arith.constant 177 : index
    %c0_65 = arith.constant 0 : index
    %125 = vector.load %arg9[%c177, %c0_65] : memref<288x32xf32, #tpu.memory_space<vmem>>, vector<14x32xf32>
    tpu.vector_store %arg9[%c177, %c0_65], %124 {strides = array<i32>} : memref<288x32xf32, #tpu.memory_space<vmem>>, vector<14x32xf32>,
    %126 = vector.extract_strided_slice %92 {offsets = [11, 0, 0], sizes = [1, 14, 32], strides = [1, 1, 1]} : vector<14x14x32xf32> to vector<1x14x32xf32>
    %127 = vector.shape_cast %126 : vector<1x14x32xf32> to vector<14x32xf32>
    %c193 = arith.constant 193 : index
    %c0_66 = arith.constant 0 : index
    %128 = vector.load %arg9[%c193, %c0_66] : memref<288x32xf32, #tpu.memory_space<vmem>>, vector<14x32xf32>
    tpu.vector_store %arg9[%c193, %c0_66], %127 {strides = array<i32>} : memref<288x32xf32, #tpu.memory_space<vmem>>, vector<14x32xf32>,
    %129 = vector.extract_strided_slice %92 {offsets = [12, 0, 0], sizes = [1, 14, 32], strides = [1, 1, 1]} : vector<14x14x32xf32> to vector<1x14x32xf32>
    %130 = vector.shape_cast %129 : vector<1x14x32xf32> to vector<14x32xf32>
    %c209 = arith.constant 209 : index
    %c0_67 = arith.constant 0 : index
    %131 = vector.load %arg9[%c209, %c0_67] : memref<288x32xf32, #tpu.memory_space<vmem>>, vector<14x32xf32>
    tpu.vector_store %arg9[%c209, %c0_67], %130 {strides = array<i32>} : memref<288x32xf32, #tpu.memory_space<vmem>>, vector<14x32xf32>,
    %132 = vector.extract_strided_slice %92 {offsets = [13, 0, 0], sizes = [1, 14, 32], strides = [1, 1, 1]} : vector<14x14x32xf32> to vector<1x14x32xf32>
    %133 = vector.shape_cast %132 : vector<1x14x32xf32> to vector<14x32xf32>
    %c225 = arith.constant 225 : index
    %c0_68 = arith.constant 0 : index
    %134 = vector.load %arg9[%c225, %c0_68] : memref<288x32xf32, #tpu.memory_space<vmem>>, vector<14x32xf32>
    tpu.vector_store %arg9[%c225, %c0_68], %133 {strides = array<i32>} : memref<288x32xf32, #tpu.memory_space<vmem>>, vector<14x32xf32>,
    %c0_69 = arith.constant 0 : index
    %c0_70 = arith.constant 0 : index
    %135 = vector.load %arg9[%c0_69, %c0_70] : memref<288x32xf32, #tpu.memory_space<vmem>>, vector<224x32xf32>
    %136 = arith.truncf %135 : vector<224x32xf32> to vector<224x32xbf16>
    %c0_71 = arith.constant 0 : index
    %c0_72 = arith.constant 0 : index
    %137 = vector.load %arg10[%c0_71, %c0_72] : memref<224x288xbf16, #tpu.memory_space<vmem>>, vector<224x32xbf16>
    tpu.vector_store %arg10[%c0_71, %c0_72], %136 {strides = array<i32>} : memref<224x288xbf16, #tpu.memory_space<vmem>>, vector<224x32xbf16>,
    %c1_73 = arith.constant 1 : index
    %c0_74 = arith.constant 0 : index
    %138 = vector.load %arg9[%c1_73, %c0_74] : memref<288x32xf32, #tpu.memory_space<vmem>>, vector<224x32xf32>
    %139 = arith.truncf %138 : vector<224x32xf32> to vector<224x32xbf16>
    %c0_75 = arith.constant 0 : index
    %c32 = arith.constant 32 : index
    %140 = vector.load %arg10[%c0_75, %c32] : memref<224x288xbf16, #tpu.memory_space<vmem>>, vector<224x32xbf16>
    tpu.vector_store %arg10[%c0_75, %c32], %139 {strides = array<i32>} : memref<224x288xbf16, #tpu.memory_space<vmem>>, vector<224x32xbf16>,
    %c2_76 = arith.constant 2 : index
    %c0_77 = arith.constant 0 : index
    %141 = vector.load %arg9[%c2_76, %c0_77] : memref<288x32xf32, #tpu.memory_space<vmem>>, vector<224x32xf32>
    %142 = arith.truncf %141 : vector<224x32xf32> to vector<224x32xbf16>
    %c0_78 = arith.constant 0 : index
    %c64 = arith.constant 64 : index
    %143 = vector.load %arg10[%c0_78, %c64] : memref<224x288xbf16, #tpu.memory_space<vmem>>, vector<224x32xbf16>
    tpu.vector_store %arg10[%c0_78, %c64], %142 {strides = array<i32>} : memref<224x288xbf16, #tpu.memory_space<vmem>>, vector<224x32xbf16>,
    %c16 = arith.constant 16 : index
    %c0_79 = arith.constant 0 : index
    %144 = vector.load %arg9[%c16, %c0_79] : memref<288x32xf32, #tpu.memory_space<vmem>>, vector<224x32xf32>
    %145 = arith.truncf %144 : vector<224x32xf32> to vector<224x32xbf16>
    %c0_80 = arith.constant 0 : index
    %c96 = arith.constant 96 : index
    %146 = vector.load %arg10[%c0_80, %c96] : memref<224x288xbf16, #tpu.memory_space<vmem>>, vector<224x32xbf16>
    tpu.vector_store %arg10[%c0_80, %c96], %145 {strides = array<i32>} : memref<224x288xbf16, #tpu.memory_space<vmem>>, vector<224x32xbf16>,
    %c17_81 = arith.constant 17 : index
    %c0_82 = arith.constant 0 : index
    %147 = vector.load %arg9[%c17_81, %c0_82] : memref<288x32xf32, #tpu.memory_space<vmem>>, vector<224x32xf32>
    %148 = arith.truncf %147 : vector<224x32xf32> to vector<224x32xbf16>
    %c0_83 = arith.constant 0 : index
    %c128 = arith.constant 128 : index
    %149 = vector.load %arg10[%c0_83, %c128] : memref<224x288xbf16, #tpu.memory_space<vmem>>, vector<224x32xbf16>
    tpu.vector_store %arg10[%c0_83, %c128], %148 {strides = array<i32>} : memref<224x288xbf16, #tpu.memory_space<vmem>>, vector<224x32xbf16>,
    %c18 = arith.constant 18 : index
    %c0_84 = arith.constant 0 : index
    %150 = vector.load %arg9[%c18, %c0_84] : memref<288x32xf32, #tpu.memory_space<vmem>>, vector<224x32xf32>
    %151 = arith.truncf %150 : vector<224x32xf32> to vector<224x32xbf16>
    %c0_85 = arith.constant 0 : index
    %c160 = arith.constant 160 : index
    %152 = vector.load %arg10[%c0_85, %c160] : memref<224x288xbf16, #tpu.memory_space<vmem>>, vector<224x32xbf16>
    tpu.vector_store %arg10[%c0_85, %c160], %151 {strides = array<i32>} : memref<224x288xbf16, #tpu.memory_space<vmem>>, vector<224x32xbf16>,
    %c32_86 = arith.constant 32 : index
    %c0_87 = arith.constant 0 : index
    %153 = vector.load %arg9[%c32_86, %c0_87] : memref<288x32xf32, #tpu.memory_space<vmem>>, vector<224x32xf32>
    %154 = arith.truncf %153 : vector<224x32xf32> to vector<224x32xbf16>
    %c0_88 = arith.constant 0 : index
    %c192 = arith.constant 192 : index
    %155 = vector.load %arg10[%c0_88, %c192] : memref<224x288xbf16, #tpu.memory_space<vmem>>, vector<224x32xbf16>
    tpu.vector_store %arg10[%c0_88, %c192], %154 {strides = array<i32>} : memref<224x288xbf16, #tpu.memory_space<vmem>>, vector<224x32xbf16>,
    %c33_89 = arith.constant 33 : index
    %c0_90 = arith.constant 0 : index
    %156 = vector.load %arg9[%c33_89, %c0_90] : memref<288x32xf32, #tpu.memory_space<vmem>>, vector<224x32xf32>
    %157 = arith.truncf %156 : vector<224x32xf32> to vector<224x32xbf16>
    %c0_91 = arith.constant 0 : index
    %c224 = arith.constant 224 : index
    %158 = vector.load %arg10[%c0_91, %c224] : memref<224x288xbf16, #tpu.memory_space<vmem>>, vector<224x32xbf16>
    tpu.vector_store %arg10[%c0_91, %c224], %157 {strides = array<i32>} : memref<224x288xbf16, #tpu.memory_space<vmem>>, vector<224x32xbf16>,
    %c34 = arith.constant 34 : index
    %c0_92 = arith.constant 0 : index
    %159 = vector.load %arg9[%c34, %c0_92] : memref<288x32xf32, #tpu.memory_space<vmem>>, vector<224x32xf32>
    %160 = arith.truncf %159 : vector<224x32xf32> to vector<224x32xbf16>
    %c0_93 = arith.constant 0 : index
    %c256 = arith.constant 256 : index
    %161 = vector.load %arg10[%c0_93, %c256] : memref<224x288xbf16, #tpu.memory_space<vmem>>, vector<224x32xbf16>
    tpu.vector_store %arg10[%c0_93, %c256], %160 {strides = array<i32>} : memref<224x288xbf16, #tpu.memory_space<vmem>>, vector<224x32xbf16>,
    %c0_94 = arith.constant 0 : index
    %c0_95 = arith.constant 0 : index
    %162 = vector.load %arg10[%c0_94, %c0_95] : memref<224x288xbf16, #tpu.memory_space<vmem>>, vector<224x288xbf16>
    %cst_96 = arith.constant dense<0.000000e+00> : vector<224x64xf32>
    %163 = tpu.matmul %162, %6, %cst_96 {dimension_numbers = #tpu.dot_dimension_numbers<[1], [0], [0], [1], [0, 0, 1, 1], [], []>} : vector<224x288xbf16>, vector<288x64xbf16>, vector<224x64xf32> -> vector<224x64xf32>
    %164 = vector.broadcast %7 : vector<1x64xf32> to vector<224x64xf32>
    %165 = arith.addf %163, %164 : vector<224x64xf32>
    %cst_97 = arith.constant 0.000000e+00 : f32
    %166 = vector.broadcast %cst_97 : f32 to vector<224x64xf32>
    %167 = arith.maximumf %165, %166 : vector<224x64xf32>
    %168 = vector.extract_strided_slice %167 {offsets = [0, 0], sizes = [16, 64], strides = [1, 1]} : vector<224x64xf32> to vector<16x64xf32>
    %169 = vector.extract_strided_slice %167 {offsets = [16, 0], sizes = [16, 64], strides = [1, 1]} : vector<224x64xf32> to vector<16x64xf32>
    %170 = arith.maximumf %168, %169 : vector<16x64xf32>
    %c0_98 = arith.constant 0 : index
    %c0_99 = arith.constant 0 : index
    %c0_100 = arith.constant 0 : index
    %171 = vector.load %arg11[%c0_98, %c0_99, %c0_100] : memref<7x16x64xf32, #tpu.memory_space<vmem>>, vector<1x16x64xf32>
    %172 = vector.shape_cast %171 : vector<1x16x64xf32> to vector<16x64xf32>
    %173 = vector.shape_cast %170 : vector<16x64xf32> to vector<1x16x64xf32>
    tpu.vector_store %arg11[%c0_98, %c0_99, %c0_100], %173 {strides = array<i32>} : memref<7x16x64xf32, #tpu.memory_space<vmem>>, vector<1x16x64xf32>,
    %174 = vector.extract_strided_slice %167 {offsets = [32, 0], sizes = [16, 64], strides = [1, 1]} : vector<224x64xf32> to vector<16x64xf32>
    %175 = vector.extract_strided_slice %167 {offsets = [48, 0], sizes = [16, 64], strides = [1, 1]} : vector<224x64xf32> to vector<16x64xf32>
    %176 = arith.maximumf %174, %175 : vector<16x64xf32>
    %c1_101 = arith.constant 1 : index
    %c0_102 = arith.constant 0 : index
    %c0_103 = arith.constant 0 : index
    %177 = vector.load %arg11[%c1_101, %c0_102, %c0_103] : memref<7x16x64xf32, #tpu.memory_space<vmem>>, vector<1x16x64xf32>
    %178 = vector.shape_cast %177 : vector<1x16x64xf32> to vector<16x64xf32>
    %179 = vector.shape_cast %176 : vector<16x64xf32> to vector<1x16x64xf32>
    tpu.vector_store %arg11[%c1_101, %c0_102, %c0_103], %179 {strides = array<i32>} : memref<7x16x64xf32, #tpu.memory_space<vmem>>, vector<1x16x64xf32>,
    %180 = vector.extract_strided_slice %167 {offsets = [64, 0], sizes = [16, 64], strides = [1, 1]} : vector<224x64xf32> to vector<16x64xf32>
    %181 = vector.extract_strided_slice %167 {offsets = [80, 0], sizes = [16, 64], strides = [1, 1]} : vector<224x64xf32> to vector<16x64xf32>
    %182 = arith.maximumf %180, %181 : vector<16x64xf32>
    %c2_104 = arith.constant 2 : index
    %c0_105 = arith.constant 0 : index
    %c0_106 = arith.constant 0 : index
    %183 = vector.load %arg11[%c2_104, %c0_105, %c0_106] : memref<7x16x64xf32, #tpu.memory_space<vmem>>, vector<1x16x64xf32>
    %184 = vector.shape_cast %183 : vector<1x16x64xf32> to vector<16x64xf32>
    %185 = vector.shape_cast %182 : vector<16x64xf32> to vector<1x16x64xf32>
    tpu.vector_store %arg11[%c2_104, %c0_105, %c0_106], %185 {strides = array<i32>} : memref<7x16x64xf32, #tpu.memory_space<vmem>>, vector<1x16x64xf32>,
    %186 = vector.extract_strided_slice %167 {offsets = [96, 0], sizes = [16, 64], strides = [1, 1]} : vector<224x64xf32> to vector<16x64xf32>
    %187 = vector.extract_strided_slice %167 {offsets = [112, 0], sizes = [16, 64], strides = [1, 1]} : vector<224x64xf32> to vector<16x64xf32>
    %188 = arith.maximumf %186, %187 : vector<16x64xf32>
    %c3 = arith.constant 3 : index
    %c0_107 = arith.constant 0 : index
    %c0_108 = arith.constant 0 : index
    %189 = vector.load %arg11[%c3, %c0_107, %c0_108] : memref<7x16x64xf32, #tpu.memory_space<vmem>>, vector<1x16x64xf32>
    %190 = vector.shape_cast %189 : vector<1x16x64xf32> to vector<16x64xf32>
    %191 = vector.shape_cast %188 : vector<16x64xf32> to vector<1x16x64xf32>
    tpu.vector_store %arg11[%c3, %c0_107, %c0_108], %191 {strides = array<i32>} : memref<7x16x64xf32, #tpu.memory_space<vmem>>, vector<1x16x64xf32>,
    %192 = vector.extract_strided_slice %167 {offsets = [128, 0], sizes = [16, 64], strides = [1, 1]} : vector<224x64xf32> to vector<16x64xf32>
    %193 = vector.extract_strided_slice %167 {offsets = [144, 0], sizes = [16, 64], strides = [1, 1]} : vector<224x64xf32> to vector<16x64xf32>
    %194 = arith.maximumf %192, %193 : vector<16x64xf32>
    %c4 = arith.constant 4 : index
    %c0_109 = arith.constant 0 : index
    %c0_110 = arith.constant 0 : index
    %195 = vector.load %arg11[%c4, %c0_109, %c0_110] : memref<7x16x64xf32, #tpu.memory_space<vmem>>, vector<1x16x64xf32>
    %196 = vector.shape_cast %195 : vector<1x16x64xf32> to vector<16x64xf32>
    %197 = vector.shape_cast %194 : vector<16x64xf32> to vector<1x16x64xf32>
    tpu.vector_store %arg11[%c4, %c0_109, %c0_110], %197 {strides = array<i32>} : memref<7x16x64xf32, #tpu.memory_space<vmem>>, vector<1x16x64xf32>,
    %198 = vector.extract_strided_slice %167 {offsets = [160, 0], sizes = [16, 64], strides = [1, 1]} : vector<224x64xf32> to vector<16x64xf32>
    %199 = vector.extract_strided_slice %167 {offsets = [176, 0], sizes = [16, 64], strides = [1, 1]} : vector<224x64xf32> to vector<16x64xf32>
    %200 = arith.maximumf %198, %199 : vector<16x64xf32>
    %c5 = arith.constant 5 : index
    %c0_111 = arith.constant 0 : index
    %c0_112 = arith.constant 0 : index
    %201 = vector.load %arg11[%c5, %c0_111, %c0_112] : memref<7x16x64xf32, #tpu.memory_space<vmem>>, vector<1x16x64xf32>
    %202 = vector.shape_cast %201 : vector<1x16x64xf32> to vector<16x64xf32>
    %203 = vector.shape_cast %200 : vector<16x64xf32> to vector<1x16x64xf32>
    tpu.vector_store %arg11[%c5, %c0_111, %c0_112], %203 {strides = array<i32>} : memref<7x16x64xf32, #tpu.memory_space<vmem>>, vector<1x16x64xf32>,
    %204 = vector.extract_strided_slice %167 {offsets = [192, 0], sizes = [16, 64], strides = [1, 1]} : vector<224x64xf32> to vector<16x64xf32>
    %205 = vector.extract_strided_slice %167 {offsets = [208, 0], sizes = [16, 64], strides = [1, 1]} : vector<224x64xf32> to vector<16x64xf32>
    %206 = arith.maximumf %204, %205 : vector<16x64xf32>
    %c6 = arith.constant 6 : index
    %c0_113 = arith.constant 0 : index
    %c0_114 = arith.constant 0 : index
    %207 = vector.load %arg11[%c6, %c0_113, %c0_114] : memref<7x16x64xf32, #tpu.memory_space<vmem>>, vector<1x16x64xf32>
    %208 = vector.shape_cast %207 : vector<1x16x64xf32> to vector<16x64xf32>
    %209 = vector.shape_cast %206 : vector<16x64xf32> to vector<1x16x64xf32>
    tpu.vector_store %arg11[%c6, %c0_113, %c0_114], %209 {strides = array<i32>} : memref<7x16x64xf32, #tpu.memory_space<vmem>>, vector<1x16x64xf32>,
    %c0_115 = arith.constant 0 : index
    %c0_116 = arith.constant 0 : index
    %c0_117 = arith.constant 0 : index
    %210 = tpu.strided_load %arg11[%c0_115, %c0_116, %c0_117] {strides = array<i32: 1, 2, 1>} : memref<7x16x64xf32, #tpu.memory_space<vmem>>, vector<7x7x64xf32>
    %c0_118 = arith.constant 0 : index
    %c1_119 = arith.constant 1 : index
    %c0_120 = arith.constant 0 : index
    %211 = tpu.strided_load %arg11[%c0_118, %c1_119, %c0_120] {strides = array<i32: 1, 2, 1>} : memref<7x16x64xf32, #tpu.memory_space<vmem>>, vector<7x7x64xf32>
    %212 = arith.maximumf %210, %211 : vector<7x7x64xf32>
    %213 = arith.truncf %212 : vector<7x7x64xf32> to vector<7x7x64xbf16>
    %214 = arith.index_cast %c0_i32 : i32 to index
    %c0_121 = arith.constant 0 : index
    %c0_122 = arith.constant 0 : index
    %c0_123 = arith.constant 0 : index
    %215 = vector.load %arg6[%214, %c0_121, %c0_122, %c0_123] : memref<1x7x7x64xbf16, #tpu.memory_space<vmem>>, vector<1x7x7x64xbf16>
    %216 = vector.shape_cast %215 : vector<1x7x7x64xbf16> to vector<7x7x64xbf16>
    %217 = vector.shape_cast %213 : vector<7x7x64xbf16> to vector<1x7x7x64xbf16>
    tpu.vector_store %arg6[%214, %c0_121, %c0_122, %c0_123], %217 {strides = array<i32>} : memref<1x7x7x64xbf16, #tpu.memory_space<vmem>>, vector<1x7x7x64xbf16>,
    %c1_i32 = arith.constant 1 : i32
    return
  }
  func.func @transform_0(%arg0: i32) -> (i32, i32, i32, i32) {
    %c0_i32 = arith.constant 0 : i32
    %c0_i32_0 = arith.constant 0 : i32
    %c0_i32_1 = arith.constant 0 : i32
    %c0_i32_2 = arith.constant 0 : i32
    return %arg0, %c0_i32, %c0_i32_0, %c0_i32_1 : i32, i32, i32, i32
  }
  func.func @transform_1(%arg0: i32) -> (i32, i32) {
    %c0_i32 = arith.constant 0 : i32
    %c0_i32_0 = arith.constant 0 : i32
    %c0_i32_1 = arith.constant 0 : i32
    return %c0_i32, %c0_i32_0 : i32, i32
  }
  func.func @transform_2(%arg0: i32) -> (i32, i32) {
    %c0_i32 = arith.constant 0 : i32
    %c0_i32_0 = arith.constant 0 : i32
    %c0_i32_1 = arith.constant 0 : i32
    return %c0_i32, %c0_i32_0 : i32, i32
  }
  func.func @transform_3(%arg0: i32) -> (i32, i32) {
    %c0_i32 = arith.constant 0 : i32
    %c0_i32_0 = arith.constant 0 : i32
    %c0_i32_1 = arith.constant 0 : i32
    return %c0_i32, %c0_i32_0 : i32, i32
  }
  func.func @transform_4(%arg0: i32) -> (i32, i32) {
    %c0_i32 = arith.constant 0 : i32
    %c0_i32_0 = arith.constant 0 : i32
    %c0_i32_1 = arith.constant 0 : i32
    return %c0_i32, %c0_i32_0 : i32, i32
  }
  func.func @transform_5(%arg0: i32) -> (i32, i32, i32, i32) {
    %c0_i32 = arith.constant 0 : i32
    %c0_i32_0 = arith.constant 0 : i32
    %c0_i32_1 = arith.constant 0 : i32
    %c0_i32_2 = arith.constant 0 : i32
    return %arg0, %c0_i32, %c0_i32_0, %c0_i32_1 : i32, i32, i32, i32
  }
}

module attributes {stable_mosaic.version = 11 : i64} {
  func.func @_fc_kernel(%arg0: i32, %arg1: memref<2x3136xbf16, #tpu.memory_space<vmem>>, %arg2: memref<3136x128xbf16, #tpu.memory_space<vmem>>, %arg3: memref<1x128xf32, #tpu.memory_space<vmem>>, %arg4: memref<128x128xbf16, #tpu.memory_space<vmem>>, %arg5: memref<1x128xf32, #tpu.memory_space<vmem>>, %arg6: memref<2x128xf32, #tpu.memory_space<vmem>>) attributes {dimension_semantics = [#tpu.dimension_semantics<parallel>], iteration_bounds = array<i64: 1>, scalar_prefetch = 0 : i64, scratch_operands = 0 : i64, tpu.core_type = #tpu.core_type<tc>, window_params = [{transform_indices = @transform_0, window_bounds = array<i64: 2, 3136>}, {pipeline_mode = #tpu.pipeline_mode<synchronous>, transform_indices = @transform_1, window_bounds = array<i64: 3136, 128>}, {pipeline_mode = #tpu.pipeline_mode<synchronous>, transform_indices = @transform_2, window_bounds = array<i64: 1, 128>}, {pipeline_mode = #tpu.pipeline_mode<synchronous>, transform_indices = @transform_3, window_bounds = array<i64: 128, 128>}, {pipeline_mode = #tpu.pipeline_mode<synchronous>, transform_indices = @transform_4, window_bounds = array<i64: 1, 128>}, {transform_indices = @transform_5, window_bounds = array<i64: 2, 128>}]} {
    %c0 = arith.constant 0 : index
    %c0_0 = arith.constant 0 : index
    %0 = vector.load %arg1[%c0, %c0_0] : memref<2x3136xbf16, #tpu.memory_space<vmem>>, vector<2x3136xbf16>
    %c0_1 = arith.constant 0 : index
    %c0_2 = arith.constant 0 : index
    %1 = vector.load %arg2[%c0_1, %c0_2] : memref<3136x128xbf16, #tpu.memory_space<vmem>>, vector<3136x128xbf16>
    %cst = arith.constant dense<0.000000e+00> : vector<2x128xf32>
    %2 = tpu.matmul %0, %1, %cst {dimension_numbers = #tpu.dot_dimension_numbers<[1], [0], [0], [1], [0, 0, 1, 1], [], []>} : vector<2x3136xbf16>, vector<3136x128xbf16>, vector<2x128xf32> -> vector<2x128xf32>
    %c0_3 = arith.constant 0 : index
    %c0_4 = arith.constant 0 : index
    %3 = vector.load %arg3[%c0_3, %c0_4] : memref<1x128xf32, #tpu.memory_space<vmem>>, vector<1x128xf32>
    %4 = vector.broadcast %3 : vector<1x128xf32> to vector<2x128xf32>
    %5 = arith.addf %2, %4 : vector<2x128xf32>
    %cst_5 = arith.constant 0.000000e+00 : f32
    %6 = vector.broadcast %cst_5 : f32 to vector<2x128xf32>
    %7 = arith.maximumf %5, %6 : vector<2x128xf32>
    %8 = arith.truncf %7 : vector<2x128xf32> to vector<2x128xbf16>
    %c0_6 = arith.constant 0 : index
    %c0_7 = arith.constant 0 : index
    %9 = vector.load %arg4[%c0_6, %c0_7] : memref<128x128xbf16, #tpu.memory_space<vmem>>, vector<128x128xbf16>
    %cst_8 = arith.constant dense<0.000000e+00> : vector<2x128xf32>
    %10 = tpu.matmul %8, %9, %cst_8 {dimension_numbers = #tpu.dot_dimension_numbers<[1], [0], [0], [1], [0, 0, 1, 1], [], []>} : vector<2x128xbf16>, vector<128x128xbf16>, vector<2x128xf32> -> vector<2x128xf32>
    %c0_9 = arith.constant 0 : index
    %c0_10 = arith.constant 0 : index
    %11 = vector.load %arg5[%c0_9, %c0_10] : memref<1x128xf32, #tpu.memory_space<vmem>>, vector<1x128xf32>
    %12 = vector.broadcast %11 : vector<1x128xf32> to vector<2x128xf32>
    %13 = arith.addf %10, %12 : vector<2x128xf32>
    %c0_11 = arith.constant 0 : index
    %c0_12 = arith.constant 0 : index
    %14 = vector.load %arg6[%c0_11, %c0_12] : memref<2x128xf32, #tpu.memory_space<vmem>>, vector<2x128xf32>
    tpu.vector_store %arg6[%c0_11, %c0_12], %13 {strides = array<i32>} : memref<2x128xf32, #tpu.memory_space<vmem>>, vector<2x128xf32>,
    return
  }
  func.func @transform_0(%arg0: i32) -> (i32, i32) {
    %c0_i32 = arith.constant 0 : i32
    %c0_i32_0 = arith.constant 0 : i32
    return %arg0, %c0_i32 : i32, i32
  }
  func.func @transform_1(%arg0: i32) -> (i32, i32) {
    %c0_i32 = arith.constant 0 : i32
    %c0_i32_0 = arith.constant 0 : i32
    %c0_i32_1 = arith.constant 0 : i32
    return %c0_i32, %c0_i32_0 : i32, i32
  }
  func.func @transform_2(%arg0: i32) -> (i32, i32) {
    %c0_i32 = arith.constant 0 : i32
    %c0_i32_0 = arith.constant 0 : i32
    %c0_i32_1 = arith.constant 0 : i32
    return %c0_i32, %c0_i32_0 : i32, i32
  }
  func.func @transform_3(%arg0: i32) -> (i32, i32) {
    %c0_i32 = arith.constant 0 : i32
    %c0_i32_0 = arith.constant 0 : i32
    %c0_i32_1 = arith.constant 0 : i32
    return %c0_i32, %c0_i32_0 : i32, i32
  }
  func.func @transform_4(%arg0: i32) -> (i32, i32) {
    %c0_i32 = arith.constant 0 : i32
    %c0_i32_0 = arith.constant 0 : i32
    %c0_i32_1 = arith.constant 0 : i32
    return %c0_i32, %c0_i32_0 : i32, i32
  }
  func.func @transform_5(%arg0: i32) -> (i32, i32) {
    %c0_i32 = arith.constant 0 : i32
    %c0_i32_0 = arith.constant 0 : i32
    return %arg0, %c0_i32 : i32, i32
  }
}

</mosaic_0001>

<llo_original>
// kernel: improved_cnn_forward.3
$region0: #{improved_cnn_forward.3}
  #allocation0 [shape = 'u32[]', space=smem, size = 0x4, offset = 0x4, fixed_abs, tag = 'smem constant byte address 0x4 - core index']
  #allocation1 [shape = 'u32[144,128]{1,0:T(1,128)}', space=vmem, size = 0x12000, scoped, tag = 'internal scratch']
  %s0 = inlined_call_operand.vmem [shape: bf16[2,3136], index: 0, kind: input, shape index: {}]
  %s1 = inlined_call_operand.vmem [shape: bf16[3136,128], index: 1, kind: input, shape index: {}]
  %s2 = inlined_call_operand.vmem [shape: f32[1,128], index: 2, kind: input, shape index: {}]
  %s3 = inlined_call_operand.vmem [shape: bf16[128,128], index: 3, kind: input, shape index: {}]
  %s4 = inlined_call_operand.vmem [shape: f32[1,128], index: 4, kind: input, shape index: {}]
  %s5 = inlined_call_operand.hbm [shape: f32[2,128], index: 5, kind: output, shape index: {}]
  %s6 = sld [smem:[#allocation0]]
  $region30: #{improved_cnn_forward.3} parent=0
    _
  %s8 = ssub.s32 1, %s6
  %s9 = scalar_select 0, %s8, %s6
  $region1: #{improved_cnn_forward.3} parent=0
    #allocation2 [shape = 'u8[1024]{0}', space=vmem, size = 0x400, scoped, tag = 'output window, operand 0, single buffered']
    #allocation3 [shape = 's32[1]{0}', space=sflag, size = 0x4, scoped, tag = 'scoped memory for improved_cnn_forward.3']
    %10 = vsyncpa [#allocation3], 0
    // Predicated region
    $region2: #{improved_cnn_forward.3} parent=1 // pred_check
      _
    $region3: #{improved_cnn_forward.3} parent=1 // pred_check_branch
      %12 = sbr.rel (0) target = $region5
    $region4: #{improved_cnn_forward.3} parent=1 // pred_region
      _
    $region5: #{improved_cnn_forward.3} parent=1 // pred_fallthru
      _
    // Predicated region
    $region6: #{improved_cnn_forward.3} parent=1 // pred_check
      _
    $region7: #{improved_cnn_forward.3} parent=1 // pred_check_branch
      %14 = sbr.rel (0) target = $region9
    $region8: #{improved_cnn_forward.3} parent=1 // pred_region
      _
    $region9: #{improved_cnn_forward.3} parent=1 // pred_fallthru
      _
    // Predicated region
    $region10: #{improved_cnn_forward.3} parent=1 // pred_check
      _
    $region11: #{improved_cnn_forward.3} parent=1 // pred_check_branch
      %16 = sbr.rel (0) target = $region13
    $region12: #{improved_cnn_forward.3} parent=1 // pred_region
      _
    $region13: #{improved_cnn_forward.3} parent=1 // pred_fallthru
      _
    // Predicated region
    $region14: #{improved_cnn_forward.3} parent=1 // pred_check
      _
    $region15: #{improved_cnn_forward.3} parent=1 // pred_check_branch
      %18 = sbr.rel (0) target = $region17
    $region16: #{improved_cnn_forward.3} parent=1 // pred_region
      _
    $region17: #{improved_cnn_forward.3} parent=1 // pred_fallthru
      _
    // Predicated region
    $region18: #{improved_cnn_forward.3} parent=1 // pred_check
      _
    $region19: #{improved_cnn_forward.3} parent=1 // pred_check_branch
      %20 = sbr.rel (0) target = $region21
    $region20: #{improved_cnn_forward.3} parent=1 // pred_region
      _
    $region21: #{improved_cnn_forward.3} parent=1 // pred_fallthru
      _
    %v22 = vld [vmem:[%s0] sm:$0xff]
    %v23 = vld [vmem:[%s0 + $0x8] sm:$0xff]
    %v24 = vld [vmem:[%s0 + $0x10] sm:$0xff]
    %v25 = vld [vmem:[%s0 + $0x18] sm:$0x1]
    %v26 = vld [vmem:[%s1] sm:$0xf]
    %v27 = vld [vmem:[%s1 + $0x4] sm:$0xf]
    %v28 = vld [vmem:[%s1 + $0x8] sm:$0xf]
    %v29 = vld [vmem:[%s1 + $0xc] sm:$0xf]
    %v30 = vld [vmem:[%s1 + $0x10] sm:$0xf]
    %v31 = vld [vmem:[%s1 + $0x14] sm:$0xf]
    %v32 = vld [vmem:[%s1 + $0x18] sm:$0xf]
    %v33 = vld [vmem:[%s1 + $0x1c] sm:$0xf]
    %v34 = vld [vmem:[%s1 + $0x20] sm:$0xf]
    %v35 = vld [vmem:[%s1 + $0x24] sm:$0xf]
    %v36 = vld [vmem:[%s1 + $0x28] sm:$0xf]
    %v37 = vld [vmem:[%s1 + $0x2c] sm:$0xf]
    %v38 = vld [vmem:[%s1 + $0x30] sm:$0xf]
    %v39 = vld [vmem:[%s1 + $0x34] sm:$0xf]
    %v40 = vld [vmem:[%s1 + $0x38] sm:$0xf]
    %v41 = vld [vmem:[%s1 + $0x3c] sm:$0xf]
    %v42 = vld [vmem:[%s1 + $0x40] sm:$0xf]
    %v43 = vld [vmem:[%s1 + $0x44] sm:$0xf]
    %v44 = vld [vmem:[%s1 + $0x48] sm:$0xf]
    %v45 = vld [vmem:[%s1 + $0x4c] sm:$0xf]
    %v46 = vld [vmem:[%s1 + $0x50] sm:$0xf]
    %v47 = vld [vmem:[%s1 + $0x54] sm:$0xf]
    %v48 = vld [vmem:[%s1 + $0x58] sm:$0xf]
    %v49 = vld [vmem:[%s1 + $0x5c] sm:$0xf]
    %v50 = vld [vmem:[%s1 + $0x60] sm:$0xf]
    %v51 = vld [vmem:[%s1 + $0x64] sm:$0xf]
    %v52 = vld [vmem:[%s1 + $0x68] sm:$0xf]
    %v53 = vld [vmem:[%s1 + $0x6c] sm:$0xf]
    %v54 = vld [vmem:[%s1 + $0x70] sm:$0xf]
    %v55 = vld [vmem:[%s1 + $0x74] sm:$0xf]
    %v56 = vld [vmem:[%s1 + $0x78] sm:$0xf]
    %v57 = vld [vmem:[%s1 + $0x7c] sm:$0xf]
    %v58 = vld [vmem:[%s1 + $0x80] sm:$0xf]
    %v59 = vld [vmem:[%s1 + $0x84] sm:$0xf]
    %v60 = vld [vmem:[%s1 + $0x88] sm:$0xf]
    %v61 = vld [vmem:[%s1 + $0x8c] sm:$0xf]
    %v62 = vld [vmem:[%s1 + $0x90] sm:$0xf]
    %v63 = vld [vmem:[%s1 + $0x94] sm:$0xf]
    %v64 = vld [vmem:[%s1 + $0x98] sm:$0xf]
    %v65 = vld [vmem:[%s1 + $0x9c] sm:$0xf]
    %v66 = vld [vmem:[%s1 + $0xa0] sm:$0xf]
    %v67 = vld [vmem:[%s1 + $0xa4] sm:$0xf]
    %v68 = vld [vmem:[%s1 + $0xa8] sm:$0xf]
    %v69 = vld [vmem:[%s1 + $0xac] sm:$0xf]
    %v70 = vld [vmem:[%s1 + $0xb0] sm:$0xf]
    %v71 = vld [vmem:[%s1 + $0xb4] sm:$0xf]
    %v72 = vld [vmem:[%s1 + $0xb8] sm:$0xf]
    %v73 = vld [vmem:[%s1 + $0xbc] sm:$0xf]
    %v74 = vld [vmem:[%s1 + $0xc0] sm:$0xf]
    %v75 = vld [vmem:[%s1 + $0xc4] sm:$0xf]
    %v76 = vld [vmem:[%s1 + $0xc8] sm:$0xf]
    %v77 = vld [vmem:[%s1 + $0xcc] sm:$0xf]
    %v78 = vld [vmem:[%s1 + $0xd0] sm:$0xf]
    %v79 = vld [vmem:[%s1 + $0xd4] sm:$0xf]
    %v80 = vld [vmem:[%s1 + $0xd8] sm:$0xf]
    %v81 = vld [vmem:[%s1 + $0xdc] sm:$0xf]
    %v82 = vld [vmem:[%s1 + $0xe0] sm:$0xf]
    %v83 = vld [vmem:[%s1 + $0xe4] sm:$0xf]
    %v84 = vld [vmem:[%s1 + $0xe8] sm:$0xf]
    %v85 = vld [vmem:[%s1 + $0xec] sm:$0xf]
    %v86 = vld [vmem:[%s1 + $0xf0] sm:$0xf]
    %v87 = vld [vmem:[%s1 + $0xf4] sm:$0xf]
    %v88 = vld [vmem:[%s1 + $0xf8] sm:$0xf]
    %v89 = vld [vmem:[%s1 + $0xfc] sm:$0xf]
    %v90 = vld [vmem:[%s1 + $0x100] sm:$0xf]
    %v91 = vld [vmem:[%s1 + $0x104] sm:$0xf]
    %v92 = vld [vmem:[%s1 + $0x108] sm:$0xf]
    %v93 = vld [vmem:[%s1 + $0x10c] sm:$0xf]
    %v94 = vld [vmem:[%s1 + $0x110] sm:$0xf]
    %v95 = vld [vmem:[%s1 + $0x114] sm:$0xf]
    %v96 = vld [vmem:[%s1 + $0x118] sm:$0xf]
    %v97 = vld [vmem:[%s1 + $0x11c] sm:$0xf]
    %v98 = vld [vmem:[%s1 + $0x120] sm:$0xf]
    %v99 = vld [vmem:[%s1 + $0x124] sm:$0xf]
    %v100 = vld [vmem:[%s1 + $0x128] sm:$0xf]
    %v101 = vld [vmem:[%s1 + $0x12c] sm:$0xf]
    %v102 = vld [vmem:[%s1 + $0x130] sm:$0xf]
    %v103 = vld [vmem:[%s1 + $0x134] sm:$0xf]
    %v104 = vld [vmem:[%s1 + $0x138] sm:$0xf]
    %v105 = vld [vmem:[%s1 + $0x13c] sm:$0xf]
    %v106 = vld [vmem:[%s1 + $0x140] sm:$0xf]
    %v107 = vld [vmem:[%s1 + $0x144] sm:$0xf]
    %v108 = vld [vmem:[%s1 + $0x148] sm:$0xf]
    %v109 = vld [vmem:[%s1 + $0x14c] sm:$0xf]
    %v110 = vld [vmem:[%s1 + $0x150] sm:$0xf]
    %v111 = vld [vmem:[%s1 + $0x154] sm:$0xf]
    %v112 = vld [vmem:[%s1 + $0x158] sm:$0xf]
    %v113 = vld [vmem:[%s1 + $0x15c] sm:$0xf]
    %v114 = vld [vmem:[%s1 + $0x160] sm:$0xf]
    %v115 = vld [vmem:[%s1 + $0x164] sm:$0xf]
    %v116 = vld [vmem:[%s1 + $0x168] sm:$0xf]
    %v117 = vld [vmem:[%s1 + $0x16c] sm:$0xf]
    %v118 = vld [vmem:[%s1 + $0x170] sm:$0xf]
    %v119 = vld [vmem:[%s1 + $0x174] sm:$0xf]
    %v120 = vld [vmem:[%s1 + $0x178] sm:$0xf]
    %v121 = vld [vmem:[%s1 + $0x17c] sm:$0xf]
    %v122 = vld [vmem:[%s1 + $0x180] sm:$0xf]
    %v123 = vld [vmem:[%s1 + $0x184] sm:$0xf]
    %v124 = vld [vmem:[%s1 + $0x188] sm:$0xf]
    %v125 = vld [vmem:[%s1 + $0x18c] sm:$0xf]
    %v126 = vld [vmem:[%s1 + $0x190] sm:$0xf]
    %v127 = vld [vmem:[%s1 + $0x194] sm:$0xf]
    %v128 = vld [vmem:[%s1 + $0x198] sm:$0xf]
    %v129 = vld [vmem:[%s1 + $0x19c] sm:$0xf]
    %v130 = vld [vmem:[%s1 + $0x1a0] sm:$0xf]
    %v131 = vld [vmem:[%s1 + $0x1a4] sm:$0xf]
    %v132 = vld [vmem:[%s1 + $0x1a8] sm:$0xf]
    %v133 = vld [vmem:[%s1 + $0x1ac] sm:$0xf]
    %v134 = vld [vmem:[%s1 + $0x1b0] sm:$0xf]
    %v135 = vld [vmem:[%s1 + $0x1b4] sm:$0xf]
    %v136 = vld [vmem:[%s1 + $0x1b8] sm:$0xf]
    %v137 = vld [vmem:[%s1 + $0x1bc] sm:$0xf]
    %v138 = vld [vmem:[%s1 + $0x1c0] sm:$0xf]
    %v139 = vld [vmem:[%s1 + $0x1c4] sm:$0xf]
    %v140 = vld [vmem:[%s1 + $0x1c8] sm:$0xf]
    %v141 = vld [vmem:[%s1 + $0x1cc] sm:$0xf]
    %v142 = vld [vmem:[%s1 + $0x1d0] sm:$0xf]
    %v143 = vld [vmem:[%s1 + $0x1d4] sm:$0xf]
    %v144 = vld [vmem:[%s1 + $0x1d8] sm:$0xf]
    %v145 = vld [vmem:[%s1 + $0x1dc] sm:$0xf]
    %v146 = vld [vmem:[%s1 + $0x1e0] sm:$0xf]
    %v147 = vld [vmem:[%s1 + $0x1e4] sm:$0xf]
    %v148 = vld [vmem:[%s1 + $0x1e8] sm:$0xf]
    %v149 = vld [vmem:[%s1 + $0x1ec] sm:$0xf]
    %v150 = vld [vmem:[%s1 + $0x1f0] sm:$0xf]
    %v151 = vld [vmem:[%s1 + $0x1f4] sm:$0xf]
    %v152 = vld [vmem:[%s1 + $0x1f8] sm:$0xf]
    %v153 = vld [vmem:[%s1 + $0x1fc] sm:$0xf]
    %v154 = vld [vmem:[%s1 + $0x200] sm:$0xf]
    %v155 = vld [vmem:[%s1 + $0x204] sm:$0xf]
    %v156 = vld [vmem:[%s1 + $0x208] sm:$0xf]
    %v157 = vld [vmem:[%s1 + $0x20c] sm:$0xf]
    %v158 = vld [vmem:[%s1 + $0x210] sm:$0xf]
    %v159 = vld [vmem:[%s1 + $0x214] sm:$0xf]
    %v160 = vld [vmem:[%s1 + $0x218] sm:$0xf]
    %v161 = vld [vmem:[%s1 + $0x21c] sm:$0xf]
    %v162 = vld [vmem:[%s1 + $0x220] sm:$0xf]
    %v163 = vld [vmem:[%s1 + $0x224] sm:$0xf]
    %v164 = vld [vmem:[%s1 + $0x228] sm:$0xf]
    %v165 = vld [vmem:[%s1 + $0x22c] sm:$0xf]
    %v166 = vld [vmem:[%s1 + $0x230] sm:$0xf]
    %v167 = vld [vmem:[%s1 + $0x234] sm:$0xf]
    %v168 = vld [vmem:[%s1 + $0x238] sm:$0xf]
    %v169 = vld [vmem:[%s1 + $0x23c] sm:$0xf]
    %v170 = vld [vmem:[%s1 + $0x240] sm:$0xf]
    %v171 = vld [vmem:[%s1 + $0x244] sm:$0xf]
    %v172 = vld [vmem:[%s1 + $0x248] sm:$0xf]
    %v173 = vld [vmem:[%s1 + $0x24c] sm:$0xf]
    %v174 = vld [vmem:[%s1 + $0x250] sm:$0xf]
    %v175 = vld [vmem:[%s1 + $0x254] sm:$0xf]
    %v176 = vld [vmem:[%s1 + $0x258] sm:$0xf]
    %v177 = vld [vmem:[%s1 + $0x25c] sm:$0xf]
    %v178 = vld [vmem:[%s1 + $0x260] sm:$0xf]
    %v179 = vld [vmem:[%s1 + $0x264] sm:$0xf]
    %v180 = vld [vmem:[%s1 + $0x268] sm:$0xf]
    %v181 = vld [vmem:[%s1 + $0x26c] sm:$0xf]
    %v182 = vld [vmem:[%s1 + $0x270] sm:$0xf]
    %v183 = vld [vmem:[%s1 + $0x274] sm:$0xf]
    %v184 = vld [vmem:[%s1 + $0x278] sm:$0xf]
    %v185 = vld [vmem:[%s1 + $0x27c] sm:$0xf]
    %v186 = vld [vmem:[%s1 + $0x280] sm:$0xf]
    %v187 = vld [vmem:[%s1 + $0x284] sm:$0xf]
    %v188 = vld [vmem:[%s1 + $0x288] sm:$0xf]
    %v189 = vld [vmem:[%s1 + $0x28c] sm:$0xf]
    %v190 = vld [vmem:[%s1 + $0x290] sm:$0xf]
    %v191 = vld [vmem:[%s1 + $0x294] sm:$0xf]
    %v192 = vld [vmem:[%s1 + $0x298] sm:$0xf]
    %v193 = vld [vmem:[%s1 + $0x29c] sm:$0xf]
    %v194 = vld [vmem:[%s1 + $0x2a0] sm:$0xf]
    %v195 = vld [vmem:[%s1 + $0x2a4] sm:$0xf]
    %v196 = vld [vmem:[%s1 + $0x2a8] sm:$0xf]
    %v197 = vld [vmem:[%s1 + $0x2ac] sm:$0xf]
    %v198 = vld [vmem:[%s1 + $0x2b0] sm:$0xf]
    %v199 = vld [vmem:[%s1 + $0x2b4] sm:$0xf]
    %v200 = vld [vmem:[%s1 + $0x2b8] sm:$0xf]
    %v201 = vld [vmem:[%s1 + $0x2bc] sm:$0xf]
    %v202 = vld [vmem:[%s1 + $0x2c0] sm:$0xf]
    %v203 = vld [vmem:[%s1 + $0x2c4] sm:$0xf]
    %v204 = vld [vmem:[%s1 + $0x2c8] sm:$0xf]
    %v205 = vld [vmem:[%s1 + $0x2cc] sm:$0xf]
    %v206 = vld [vmem:[%s1 + $0x2d0] sm:$0xf]
    %v207 = vld [vmem:[%s1 + $0x2d4] sm:$0xf]
    %v208 = vld [vmem:[%s1 + $0x2d8] sm:$0xf]
    %v209 = vld [vmem:[%s1 + $0x2dc] sm:$0xf]
    %v210 = vld [vmem:[%s1 + $0x2e0] sm:$0xf]
    %v211 = vld [vmem:[%s1 + $0x2e4] sm:$0xf]
    %v212 = vld [vmem:[%s1 + $0x2e8] sm:$0xf]
    %v213 = vld [vmem:[%s1 + $0x2ec] sm:$0xf]
    %v214 = vld [vmem:[%s1 + $0x2f0] sm:$0xf]
    %v215 = vld [vmem:[%s1 + $0x2f4] sm:$0xf]
    %v216 = vld [vmem:[%s1 + $0x2f8] sm:$0xf]
    %v217 = vld [vmem:[%s1 + $0x2fc] sm:$0xf]
    %v218 = vld [vmem:[%s1 + $0x300] sm:$0xf]
    %v219 = vld [vmem:[%s1 + $0x304] sm:$0xf]
    %v220 = vld [vmem:[%s1 + $0x308] sm:$0xf]
    %v221 = vld [vmem:[%s1 + $0x30c] sm:$0xf]
    %v222 = vld [vmem:[%s1 + $0x310] sm:$0xf]
    %v223 = vld [vmem:[%s1 + $0x314] sm:$0xf]
    %v224 = vld [vmem:[%s1 + $0x318] sm:$0xf]
    %v225 = vld [vmem:[%s1 + $0x31c] sm:$0xf]
    %v226 = vld [vmem:[%s1 + $0x320] sm:$0xf]
    %v227 = vld [vmem:[%s1 + $0x324] sm:$0xf]
    %v228 = vld [vmem:[%s1 + $0x328] sm:$0xf]
    %v229 = vld [vmem:[%s1 + $0x32c] sm:$0xf]
    %v230 = vld [vmem:[%s1 + $0x330] sm:$0xf]
    %v231 = vld [vmem:[%s1 + $0x334] sm:$0xf]
    %v232 = vld [vmem:[%s1 + $0x338] sm:$0xf]
    %v233 = vld [vmem:[%s1 + $0x33c] sm:$0xf]
    %v234 = vld [vmem:[%s1 + $0x340] sm:$0xf]
    %v235 = vld [vmem:[%s1 + $0x344] sm:$0xf]
    %v236 = vld [vmem:[%s1 + $0x348] sm:$0xf]
    %v237 = vld [vmem:[%s1 + $0x34c] sm:$0xf]
    %v238 = vld [vmem:[%s1 + $0x350] sm:$0xf]
    %v239 = vld [vmem:[%s1 + $0x354] sm:$0xf]
    %v240 = vld [vmem:[%s1 + $0x358] sm:$0xf]
    %v241 = vld [vmem:[%s1 + $0x35c] sm:$0xf]
    %v242 = vld [vmem:[%s1 + $0x360] sm:$0xf]
    %v243 = vld [vmem:[%s1 + $0x364] sm:$0xf]
    %v244 = vld [vmem:[%s1 + $0x368] sm:$0xf]
    %v245 = vld [vmem:[%s1 + $0x36c] sm:$0xf]
    %v246 = vld [vmem:[%s1 + $0x370] sm:$0xf]
    %v247 = vld [vmem:[%s1 + $0x374] sm:$0xf]
    %v248 = vld [vmem:[%s1 + $0x378] sm:$0xf]
    %v249 = vld [vmem:[%s1 + $0x37c] sm:$0xf]
    %v250 = vld [vmem:[%s1 + $0x380] sm:$0xf]
    %v251 = vld [vmem:[%s1 + $0x384] sm:$0xf]
    %v252 = vld [vmem:[%s1 + $0x388] sm:$0xf]
    %v253 = vld [vmem:[%s1 + $0x38c] sm:$0xf]
    %v254 = vld [vmem:[%s1 + $0x390] sm:$0xf]
    %v255 = vld [vmem:[%s1 + $0x394] sm:$0xf]
    %v256 = vld [vmem:[%s1 + $0x398] sm:$0xf]
    %v257 = vld [vmem:[%s1 + $0x39c] sm:$0xf]
    %v258 = vld [vmem:[%s1 + $0x3a0] sm:$0xf]
    %v259 = vld [vmem:[%s1 + $0x3a4] sm:$0xf]
    %v260 = vld [vmem:[%s1 + $0x3a8] sm:$0xf]
    %v261 = vld [vmem:[%s1 + $0x3ac] sm:$0xf]
    %v262 = vld [vmem:[%s1 + $0x3b0] sm:$0xf]
    %v263 = vld [vmem:[%s1 + $0x3b4] sm:$0xf]
    %v264 = vld [vmem:[%s1 + $0x3b8] sm:$0xf]
    %v265 = vld [vmem:[%s1 + $0x3bc] sm:$0xf]
    %v266 = vld [vmem:[%s1 + $0x3c0] sm:$0xf]
    %v267 = vld [vmem:[%s1 + $0x3c4] sm:$0xf]
    %v268 = vld [vmem:[%s1 + $0x3c8] sm:$0xf]
    %v269 = vld [vmem:[%s1 + $0x3cc] sm:$0xf]
    %v270 = vld [vmem:[%s1 + $0x3d0] sm:$0xf]
    %v271 = vld [vmem:[%s1 + $0x3d4] sm:$0xf]
    %v272 = vld [vmem:[%s1 + $0x3d8] sm:$0xf]
    %v273 = vld [vmem:[%s1 + $0x3dc] sm:$0xf]
    %v274 = vld [vmem:[%s1 + $0x3e0] sm:$0xf]
    %v275 = vld [vmem:[%s1 + $0x3e4] sm:$0xf]
    %v276 = vld [vmem:[%s1 + $0x3e8] sm:$0xf]
    %v277 = vld [vmem:[%s1 + $0x3ec] sm:$0xf]
    %v278 = vld [vmem:[%s1 + $0x3f0] sm:$0xf]
    %v279 = vld [vmem:[%s1 + $0x3f4] sm:$0xf]
    %v280 = vld [vmem:[%s1 + $0x3f8] sm:$0xf]
    %v281 = vld [vmem:[%s1 + $0x3fc] sm:$0xf]
    %v282 = vld [vmem:[%s1 + $0x400] sm:$0xf]
    %v283 = vld [vmem:[%s1 + $0x404] sm:$0xf]
    %v284 = vld [vmem:[%s1 + $0x408] sm:$0xf]
    %v285 = vld [vmem:[%s1 + $0x40c] sm:$0xf]
    %v286 = vld [vmem:[%s1 + $0x410] sm:$0xf]
    %v287 = vld [vmem:[%s1 + $0x414] sm:$0xf]
    %v288 = vld [vmem:[%s1 + $0x418] sm:$0xf]
    %v289 = vld [vmem:[%s1 + $0x41c] sm:$0xf]
    %v290 = vld [vmem:[%s1 + $0x420] sm:$0xf]
    %v291 = vld [vmem:[%s1 + $0x424] sm:$0xf]
    %v292 = vld [vmem:[%s1 + $0x428] sm:$0xf]
    %v293 = vld [vmem:[%s1 + $0x42c] sm:$0xf]
    %v294 = vld [vmem:[%s1 + $0x430] sm:$0xf]
    %v295 = vld [vmem:[%s1 + $0x434] sm:$0xf]
    %v296 = vld [vmem:[%s1 + $0x438] sm:$0xf]
    %v297 = vld [vmem:[%s1 + $0x43c] sm:$0xf]
    %v298 = vld [vmem:[%s1 + $0x440] sm:$0xf]
    %v299 = vld [vmem:[%s1 + $0x444] sm:$0xf]
    %v300 = vld [vmem:[%s1 + $0x448] sm:$0xf]
    %v301 = vld [vmem:[%s1 + $0x44c] sm:$0xf]
    %v302 = vld [vmem:[%s1 + $0x450] sm:$0xf]
    %v303 = vld [vmem:[%s1 + $0x454] sm:$0xf]
    %v304 = vld [vmem:[%s1 + $0x458] sm:$0xf]
    %v305 = vld [vmem:[%s1 + $0x45c] sm:$0xf]
    %v306 = vld [vmem:[%s1 + $0x460] sm:$0xf]
    %v307 = vld [vmem:[%s1 + $0x464] sm:$0xf]
    %v308 = vld [vmem:[%s1 + $0x468] sm:$0xf]
    %v309 = vld [vmem:[%s1 + $0x46c] sm:$0xf]
    %v310 = vld [vmem:[%s1 + $0x470] sm:$0xf]
    %v311 = vld [vmem:[%s1 + $0x474] sm:$0xf]
    %v312 = vld [vmem:[%s1 + $0x478] sm:$0xf]
    %v313 = vld [vmem:[%s1 + $0x47c] sm:$0xf]
    %v314 = vld [vmem:[%s1 + $0x480] sm:$0xf]
    %v315 = vld [vmem:[%s1 + $0x484] sm:$0xf]
    %v316 = vld [vmem:[%s1 + $0x488] sm:$0xf]
    %v317 = vld [vmem:[%s1 + $0x48c] sm:$0xf]
    %v318 = vld [vmem:[%s1 + $0x490] sm:$0xf]
    %v319 = vld [vmem:[%s1 + $0x494] sm:$0xf]
    %v320 = vld [vmem:[%s1 + $0x498] sm:$0xf]
    %v321 = vld [vmem:[%s1 + $0x49c] sm:$0xf]
    %v322 = vld [vmem:[%s1 + $0x4a0] sm:$0xf]
    %v323 = vld [vmem:[%s1 + $0x4a4] sm:$0xf]
    %v324 = vld [vmem:[%s1 + $0x4a8] sm:$0xf]
    %v325 = vld [vmem:[%s1 + $0x4ac] sm:$0xf]
    %v326 = vld [vmem:[%s1 + $0x4b0] sm:$0xf]
    %v327 = vld [vmem:[%s1 + $0x4b4] sm:$0xf]
    %v328 = vld [vmem:[%s1 + $0x4b8] sm:$0xf]
    %v329 = vld [vmem:[%s1 + $0x4bc] sm:$0xf]
    %v330 = vld [vmem:[%s1 + $0x4c0] sm:$0xf]
    %v331 = vld [vmem:[%s1 + $0x4c4] sm:$0xf]
    %v332 = vld [vmem:[%s1 + $0x4c8] sm:$0xf]
    %v333 = vld [vmem:[%s1 + $0x4cc] sm:$0xf]
    %v334 = vld [vmem:[%s1 + $0x4d0] sm:$0xf]
    %v335 = vld [vmem:[%s1 + $0x4d4] sm:$0xf]
    %v336 = vld [vmem:[%s1 + $0x4d8] sm:$0xf]
    %v337 = vld [vmem:[%s1 + $0x4dc] sm:$0xf]
    %v338 = vld [vmem:[%s1 + $0x4e0] sm:$0xf]
    %v339 = vld [vmem:[%s1 + $0x4e4] sm:$0xf]
    %v340 = vld [vmem:[%s1 + $0x4e8] sm:$0xf]
    %v341 = vld [vmem:[%s1 + $0x4ec] sm:$0xf]
    %v342 = vld [vmem:[%s1 + $0x4f0] sm:$0xf]
    %v343 = vld [vmem:[%s1 + $0x4f4] sm:$0xf]
    %v344 = vld [vmem:[%s1 + $0x4f8] sm:$0xf]
    %v345 = vld [vmem:[%s1 + $0x4fc] sm:$0xf]
    %v346 = vld [vmem:[%s1 + $0x500] sm:$0xf]
    %v347 = vld [vmem:[%s1 + $0x504] sm:$0xf]
    %v348 = vld [vmem:[%s1 + $0x508] sm:$0xf]
    %v349 = vld [vmem:[%s1 + $0x50c] sm:$0xf]
    %v350 = vld [vmem:[%s1 + $0x510] sm:$0xf]
    %v351 = vld [vmem:[%s1 + $0x514] sm:$0xf]
    %v352 = vld [vmem:[%s1 + $0x518] sm:$0xf]
    %v353 = vld [vmem:[%s1 + $0x51c] sm:$0xf]
    %v354 = vld [vmem:[%s1 + $0x520] sm:$0xf]
    %v355 = vld [vmem:[%s1 + $0x524] sm:$0xf]
    %v356 = vld [vmem:[%s1 + $0x528] sm:$0xf]
    %v357 = vld [vmem:[%s1 + $0x52c] sm:$0xf]
    %v358 = vld [vmem:[%s1 + $0x530] sm:$0xf]
    %v359 = vld [vmem:[%s1 + $0x534] sm:$0xf]
    %v360 = vld [vmem:[%s1 + $0x538] sm:$0xf]
    %v361 = vld [vmem:[%s1 + $0x53c] sm:$0xf]
    %v362 = vld [vmem:[%s1 + $0x540] sm:$0xf]
    %v363 = vld [vmem:[%s1 + $0x544] sm:$0xf]
    %v364 = vld [vmem:[%s1 + $0x548] sm:$0xf]
    %v365 = vld [vmem:[%s1 + $0x54c] sm:$0xf]
    %v366 = vld [vmem:[%s1 + $0x550] sm:$0xf]
    %v367 = vld [vmem:[%s1 + $0x554] sm:$0xf]
    %v368 = vld [vmem:[%s1 + $0x558] sm:$0xf]
    %v369 = vld [vmem:[%s1 + $0x55c] sm:$0xf]
    %v370 = vld [vmem:[%s1 + $0x560] sm:$0xf]
    %v371 = vld [vmem:[%s1 + $0x564] sm:$0xf]
    %v372 = vld [vmem:[%s1 + $0x568] sm:$0xf]
    %v373 = vld [vmem:[%s1 + $0x56c] sm:$0xf]
    %v374 = vld [vmem:[%s1 + $0x570] sm:$0xf]
    %v375 = vld [vmem:[%s1 + $0x574] sm:$0xf]
    %v376 = vld [vmem:[%s1 + $0x578] sm:$0xf]
    %v377 = vld [vmem:[%s1 + $0x57c] sm:$0xf]
    %v378 = vld [vmem:[%s1 + $0x580] sm:$0xf]
    %v379 = vld [vmem:[%s1 + $0x584] sm:$0xf]
    %v380 = vld [vmem:[%s1 + $0x588] sm:$0xf]
    %v381 = vld [vmem:[%s1 + $0x58c] sm:$0xf]
    %v382 = vld [vmem:[%s1 + $0x590] sm:$0xf]
    %v383 = vld [vmem:[%s1 + $0x594] sm:$0xf]
    %v384 = vld [vmem:[%s1 + $0x598] sm:$0xf]
    %v385 = vld [vmem:[%s1 + $0x59c] sm:$0xf]
    %v386 = vld [vmem:[%s1 + $0x5a0] sm:$0xf]
    %v387 = vld [vmem:[%s1 + $0x5a4] sm:$0xf]
    %v388 = vld [vmem:[%s1 + $0x5a8] sm:$0xf]
    %v389 = vld [vmem:[%s1 + $0x5ac] sm:$0xf]
    %v390 = vld [vmem:[%s1 + $0x5b0] sm:$0xf]
    %v391 = vld [vmem:[%s1 + $0x5b4] sm:$0xf]
    %v392 = vld [vmem:[%s1 + $0x5b8] sm:$0xf]
    %v393 = vld [vmem:[%s1 + $0x5bc] sm:$0xf]
    %v394 = vld [vmem:[%s1 + $0x5c0] sm:$0xf]
    %v395 = vld [vmem:[%s1 + $0x5c4] sm:$0xf]
    %v396 = vld [vmem:[%s1 + $0x5c8] sm:$0xf]
    %v397 = vld [vmem:[%s1 + $0x5cc] sm:$0xf]
    %v398 = vld [vmem:[%s1 + $0x5d0] sm:$0xf]
    %v399 = vld [vmem:[%s1 + $0x5d4] sm:$0xf]
    %v400 = vld [vmem:[%s1 + $0x5d8] sm:$0xf]
    %v401 = vld [vmem:[%s1 + $0x5dc] sm:$0xf]
    %v402 = vld [vmem:[%s1 + $0x5e0] sm:$0xf]
    %v403 = vld [vmem:[%s1 + $0x5e4] sm:$0xf]
    %v404 = vld [vmem:[%s1 + $0x5e8] sm:$0xf]
    %v405 = vld [vmem:[%s1 + $0x5ec] sm:$0xf]
    %v406 = vld [vmem:[%s1 + $0x5f0] sm:$0xf]
    %v407 = vld [vmem:[%s1 + $0x5f4] sm:$0xf]
    %v408 = vld [vmem:[%s1 + $0x5f8] sm:$0xf]
    %v409 = vld [vmem:[%s1 + $0x5fc] sm:$0xf]
    %v410 = vld [vmem:[%s1 + $0x600] sm:$0xf]
    %v411 = vld [vmem:[%s1 + $0x604] sm:$0xf]
    %v412 = vld [vmem:[%s1 + $0x608] sm:$0xf]
    %v413 = vld [vmem:[%s1 + $0x60c] sm:$0xf]
    %v414 = vld [vmem:[%s1 + $0x610] sm:$0xf]
    %v415 = vld [vmem:[%s1 + $0x614] sm:$0xf]
    %v416 = vld [vmem:[%s1 + $0x618] sm:$0xf]
    %v417 = vld [vmem:[%s1 + $0x61c] sm:$0xf]
    %v418 = vld [vmem:[%s2] sm:$0x1]
    %v420 = vlaneseq
    %v421 = vshrl.u32 %v420, 7
    %v422 = vsub.s32 0, %v421
    %v423 = vrot.slane %v418, %v422
    %v429 = vcombine.high %v22, %v22
    %v431 = vunpack.c.l.s4 1966171168
    %v432 = vunpack.c.0.s8 %v431
    %v433 = vlaneseq
    %v434 = vshrl.u32 %v433, 7
    %v435 = vsub.s32 %v432, %v434
    %v436 = vrot.slane %v22, %v435
    %v438 = vunpack.c.l.s4 1966171168
    %v439 = vunpack.c.0.s8 %v438
    %v440 = vlaneseq
    %v441 = vshrl.u32 %v440, 7
    %v442 = vsub.s32 %v439, %v441
    %v443 = vrot.slane %v429, %v442
    %v444 = vcombine.high %v436, %v436
    %v445 = vcombine.high %v443, %v443
    %v447 = vunpack.c.l.s4 1966171168
    %v448 = vunpack.c.0.s8 %v447
    %v449 = vlaneseq
    %v450 = vshrl.u32 %v449, 7
    %v451 = vsub.s32 %v448, %v450
    %v452 = vrot.slane %v436, %v451
    %v454 = vunpack.c.l.s4 1966171168
    %v455 = vunpack.c.0.s8 %v454
    %v456 = vlaneseq
    %v457 = vshrl.u32 %v456, 7
    %v458 = vsub.s32 %v455, %v457
    %v459 = vrot.slane %v443, %v458
    %v461 = vunpack.c.l.s4 1966171168
    %v462 = vunpack.c.0.s8 %v461
    %v463 = vlaneseq
    %v464 = vshrl.u32 %v463, 7
    %v465 = vsub.s32 %v462, %v464
    %v466 = vrot.slane %v444, %v465
    %v468 = vunpack.c.l.s4 1966171168
    %v469 = vunpack.c.0.s8 %v468
    %v470 = vlaneseq
    %v471 = vshrl.u32 %v470, 7
    %v472 = vsub.s32 %v469, %v471
    %v473 = vrot.slane %v445, %v472
    %v474 = vcombine.high %v452, %v452
    %v475 = vcombine.high %v459, %v459
    %v476 = vcombine.high %v466, %v466
    %v477 = vcombine.high %v473, %v473
    %v478 = vcombine.high %v23, %v23
    %v480 = vunpack.c.l.s4 1966171168
    %v481 = vunpack.c.0.s8 %v480
    %v482 = vlaneseq
    %v483 = vshrl.u32 %v482, 7
    %v484 = vsub.s32 %v481, %v483
    %v485 = vrot.slane %v23, %v484
    %v487 = vunpack.c.l.s4 1966171168
    %v488 = vunpack.c.0.s8 %v487
    %v489 = vlaneseq
    %v490 = vshrl.u32 %v489, 7
    %v491 = vsub.s32 %v488, %v490
    %v492 = vrot.slane %v478, %v491
    %v493 = vcombine.high %v485, %v485
    %v494 = vcombine.high %v492, %v492
    %v496 = vunpack.c.l.s4 1966171168
    %v497 = vunpack.c.0.s8 %v496
    %v498 = vlaneseq
    %v499 = vshrl.u32 %v498, 7
    %v500 = vsub.s32 %v497, %v499
    %v501 = vrot.slane %v485, %v500
    %v503 = vunpack.c.l.s4 1966171168
    %v504 = vunpack.c.0.s8 %v503
    %v505 = vlaneseq
    %v506 = vshrl.u32 %v505, 7
    %v507 = vsub.s32 %v504, %v506
    %v508 = vrot.slane %v492, %v507
    %v510 = vunpack.c.l.s4 1966171168
    %v511 = vunpack.c.0.s8 %v510
    %v512 = vlaneseq
    %v513 = vshrl.u32 %v512, 7
    %v514 = vsub.s32 %v511, %v513
    %v515 = vrot.slane %v493, %v514
    %v517 = vunpack.c.l.s4 1966171168
    %v518 = vunpack.c.0.s8 %v517
    %v519 = vlaneseq
    %v520 = vshrl.u32 %v519, 7
    %v521 = vsub.s32 %v518, %v520
    %v522 = vrot.slane %v494, %v521
    %v523 = vcombine.high %v501, %v501
    %v524 = vcombine.high %v508, %v508
    %v525 = vcombine.high %v515, %v515
    %v526 = vcombine.high %v522, %v522
    %v527 = vcombine.high %v24, %v24
    %v529 = vunpack.c.l.s4 1966171168
    %v530 = vunpack.c.0.s8 %v529
    %v531 = vlaneseq
    %v532 = vshrl.u32 %v531, 7
    %v533 = vsub.s32 %v530, %v532
    %v534 = vrot.slane %v24, %v533
    %v536 = vunpack.c.l.s4 1966171168
    %v537 = vunpack.c.0.s8 %v536
    %v538 = vlaneseq
    %v539 = vshrl.u32 %v538, 7
    %v540 = vsub.s32 %v537, %v539
    %v541 = vrot.slane %v527, %v540
    %v542 = vcombine.high %v534, %v534
    %v543 = vcombine.high %v541, %v541
    %v545 = vunpack.c.l.s4 1966171168
    %v546 = vunpack.c.0.s8 %v545
    %v547 = vlaneseq
    %v548 = vshrl.u32 %v547, 7
    %v549 = vsub.s32 %v546, %v548
    %v550 = vrot.slane %v534, %v549
    %v552 = vunpack.c.l.s4 1966171168
    %v553 = vunpack.c.0.s8 %v552
    %v554 = vlaneseq
    %v555 = vshrl.u32 %v554, 7
    %v556 = vsub.s32 %v553, %v555
    %v557 = vrot.slane %v541, %v556
    %v559 = vunpack.c.l.s4 1966171168
    %v560 = vunpack.c.0.s8 %v559
    %v561 = vlaneseq
    %v562 = vshrl.u32 %v561, 7
    %v563 = vsub.s32 %v560, %v562
    %v564 = vrot.slane %v542, %v563
    %v566 = vunpack.c.l.s4 1966171168
    %v567 = vunpack.c.0.s8 %v566
    %v568 = vlaneseq
    %v569 = vshrl.u32 %v568, 7
    %v570 = vsub.s32 %v567, %v569
    %v571 = vrot.slane %v543, %v570
    %v572 = vcombine.high %v550, %v550
    %v573 = vcombine.high %v557, %v557
    %v574 = vcombine.high %v564, %v564
    %v575 = vcombine.high %v571, %v571
    %v577 = vunpack.c.l.s4 1966171168
    %v578 = vunpack.c.0.s8 %v577
    %v579 = vlaneseq
    %v580 = vshrl.u32 %v579, 7
    %v581 = vsub.s32 %v578, %v580
    %v582 = vrot.slane %v25, %v581
    %v584 = vunpack.c.l.s4 1966171168
    %v585 = vunpack.c.0.s8 %v584
    %v586 = vlaneseq
    %v587 = vshrl.u32 %v586, 7
    %v588 = vsub.s32 %v585, %v587
    %v589 = vrot.slane %v582, %v588
    %v1006 = vunpack.c.l.b16 %v26
    %v1007 = vunpack.c.l.b16 %v27
    %v1008 = vunpack.c.l.b16 %v28
    %v1009 = vunpack.c.l.b16 %v29
    %v1010 = vunpack.c.l.b16 %v30
    %v1011 = vunpack.c.l.b16 %v31
    %v1012 = vunpack.c.l.b16 %v32
    %v1013 = vunpack.c.l.b16 %v33
    %v1014 = vunpack.c.l.b16 %v34
    %v1015 = vunpack.c.l.b16 %v35
    %v1016 = vunpack.c.l.b16 %v36
    %v1017 = vunpack.c.l.b16 %v37
    %v1018 = vunpack.c.l.b16 %v38
    %v1019 = vunpack.c.l.b16 %v39
    %v1020 = vunpack.c.l.b16 %v40
    %v1021 = vunpack.c.l.b16 %v41
    %v1022 = vunpack.c.l.b16 %v42
    %v1023 = vunpack.c.l.b16 %v43
    %v1024 = vunpack.c.l.b16 %v44
    %v1025 = vunpack.c.l.b16 %v45
    %v1026 = vunpack.c.l.b16 %v46
    %v1027 = vunpack.c.l.b16 %v47
    %v1028 = vunpack.c.l.b16 %v48
    %v1029 = vunpack.c.l.b16 %v49
    %v1030 = vunpack.c.l.b16 %v50
    %v1031 = vunpack.c.l.b16 %v51
    %v1032 = vunpack.c.l.b16 %v52
    %v1033 = vunpack.c.l.b16 %v53
    %v1034 = vunpack.c.l.b16 %v54
    %v1035 = vunpack.c.l.b16 %v55
    %v1036 = vunpack.c.l.b16 %v56
    %v1037 = vunpack.c.l.b16 %v57
    %v1038 = vunpack.c.l.b16 %v58
    %v1039 = vunpack.c.l.b16 %v59
    %v1040 = vunpack.c.l.b16 %v60
    %v1041 = vunpack.c.l.b16 %v61
    %v1042 = vunpack.c.l.b16 %v62
    %v1043 = vunpack.c.l.b16 %v63
    %v1044 = vunpack.c.l.b16 %v64
    %v1045 = vunpack.c.l.b16 %v65
    %v1046 = vunpack.c.l.b16 %v66
    %v1047 = vunpack.c.l.b16 %v67
    %v1048 = vunpack.c.l.b16 %v68
    %v1049 = vunpack.c.l.b16 %v69
    %v1050 = vunpack.c.l.b16 %v70
    %v1051 = vunpack.c.l.b16 %v71
    %v1052 = vunpack.c.l.b16 %v72
    %v1053 = vunpack.c.l.b16 %v73
    %v1054 = vunpack.c.l.b16 %v74
    %v1055 = vunpack.c.l.b16 %v75
    %v1056 = vunpack.c.l.b16 %v76
    %v1057 = vunpack.c.l.b16 %v77
    %v1058 = vunpack.c.l.b16 %v78
    %v1059 = vunpack.c.l.b16 %v79
    %v1060 = vunpack.c.l.b16 %v80
    %v1061 = vunpack.c.l.b16 %v81
    %v1062 = vunpack.c.l.b16 %v82
    %v1063 = vunpack.c.l.b16 %v83
    %v1064 = vunpack.c.l.b16 %v84
    %v1065 = vunpack.c.l.b16 %v85
    %v1066 = vunpack.c.l.b16 %v86
    %v1067 = vunpack.c.l.b16 %v87
    %v1068 = vunpack.c.l.b16 %v88
    %v1069 = vunpack.c.l.b16 %v89
    %v1070 = vunpack.c.l.b16 %v90
    %v1071 = vunpack.c.l.b16 %v91
    %v1072 = vunpack.c.l.b16 %v92
    %v1073 = vunpack.c.l.b16 %v93
    %v1074 = vunpack.c.l.b16 %v94
    %v1075 = vunpack.c.l.b16 %v95
    %v1076 = vunpack.c.l.b16 %v96
    %v1077 = vunpack.c.l.b16 %v97
    %v1078 = vunpack.c.l.b16 %v98
    %v1079 = vunpack.c.l.b16 %v99
    %v1080 = vunpack.c.l.b16 %v100
    %v1081 = vunpack.c.l.b16 %v101
    %v1082 = vunpack.c.l.b16 %v102
    %v1083 = vunpack.c.l.b16 %v103
    %v1084 = vunpack.c.l.b16 %v104
    %v1085 = vunpack.c.l.b16 %v105
    %v1086 = vunpack.c.l.b16 %v106
    %v1087 = vunpack.c.l.b16 %v107
    %v1088 = vunpack.c.l.b16 %v108
    %v1089 = vunpack.c.l.b16 %v109
    %v1090 = vunpack.c.l.b16 %v110
    %v1091 = vunpack.c.l.b16 %v111
    %v1092 = vunpack.c.l.b16 %v112
    %v1093 = vunpack.c.l.b16 %v113
    %v1094 = vunpack.c.l.b16 %v114
    %v1095 = vunpack.c.l.b16 %v115
    %v1096 = vunpack.c.l.b16 %v116
    %v1097 = vunpack.c.l.b16 %v117
    %v1098 = vunpack.c.l.b16 %v118
    %v1099 = vunpack.c.l.b16 %v119
    %v1100 = vunpack.c.l.b16 %v120
    %v1101 = vunpack.c.l.b16 %v121
    %v1102 = vunpack.c.l.b16 %v122
    %v1103 = vunpack.c.l.b16 %v123
    %v1104 = vunpack.c.l.b16 %v124
    %v1105 = vunpack.c.l.b16 %v125
    %v1106 = vunpack.c.l.b16 %v126
    %v1107 = vunpack.c.l.b16 %v127
    %v1108 = vunpack.c.l.b16 %v128
    %v1109 = vunpack.c.l.b16 %v129
    %v1110 = vunpack.c.l.b16 %v130
    %v1111 = vunpack.c.l.b16 %v131
    %v1112 = vunpack.c.l.b16 %v132
    %v1113 = vunpack.c.l.b16 %v133
    %v1114 = vunpack.c.l.b16 %v134
    %v1115 = vunpack.c.l.b16 %v135
    %v1116 = vunpack.c.l.b16 %v136
    %v1117 = vunpack.c.l.b16 %v137
    %v1118 = vunpack.c.l.b16 %v138
    %v1119 = vunpack.c.l.b16 %v139
    %v1120 = vunpack.c.l.b16 %v140
    %v1121 = vunpack.c.l.b16 %v141
    %v1122 = vunpack.c.l.b16 %v142
    %v1123 = vunpack.c.l.b16 %v143
    %v1124 = vunpack.c.l.b16 %v144
    %v1125 = vunpack.c.l.b16 %v145
    %v1126 = vunpack.c.l.b16 %v146
    %v1127 = vunpack.c.l.b16 %v147
    %v1128 = vunpack.c.l.b16 %v148
    %v1129 = vunpack.c.l.b16 %v149
    %v1130 = vunpack.c.l.b16 %v150
    %v1131 = vunpack.c.l.b16 %v151
    %v1132 = vunpack.c.l.b16 %v152
    %v1133 = vunpack.c.l.b16 %v153
    %v1134 = vunpack.c.l.b16 %v154
    %v1135 = vunpack.c.l.b16 %v155
    %v1136 = vunpack.c.l.b16 %v156
    %v1137 = vunpack.c.l.b16 %v157
    %v1138 = vunpack.c.l.b16 %v158
    %v1139 = vunpack.c.l.b16 %v159
    %v1140 = vunpack.c.l.b16 %v160
    %v1141 = vunpack.c.l.b16 %v161
    %v1142 = vunpack.c.l.b16 %v162
    %v1143 = vunpack.c.l.b16 %v163
    %v1144 = vunpack.c.l.b16 %v164
    %v1145 = vunpack.c.l.b16 %v165
    %v1146 = vunpack.c.l.b16 %v166
    %v1147 = vunpack.c.l.b16 %v167
    %v1148 = vunpack.c.l.b16 %v168
    %v1149 = vunpack.c.l.b16 %v169
    %v1150 = vunpack.c.l.b16 %v170
    %v1151 = vunpack.c.l.b16 %v171
    %v1152 = vunpack.c.l.b16 %v172
    %v1153 = vunpack.c.l.b16 %v173
    %v1154 = vunpack.c.l.b16 %v174
    %v1155 = vunpack.c.l.b16 %v175
    %v1156 = vunpack.c.l.b16 %v176
    %v1157 = vunpack.c.l.b16 %v177
    %v1158 = vunpack.c.l.b16 %v178
    %v1159 = vunpack.c.l.b16 %v179
    %v1160 = vunpack.c.l.b16 %v180
    %v1161 = vunpack.c.l.b16 %v181
    %v1162 = vunpack.c.l.b16 %v182
    %v1163 = vunpack.c.l.b16 %v183
    %v1164 = vunpack.c.l.b16 %v184
    %v1165 = vunpack.c.l.b16 %v185
    %v1166 = vunpack.c.l.b16 %v186
    %v1167 = vunpack.c.l.b16 %v187
    %v1168 = vunpack.c.l.b16 %v188
    %v1169 = vunpack.c.l.b16 %v189
    %v1170 = vunpack.c.l.b16 %v190
    %v1171 = vunpack.c.l.b16 %v191
    %v1172 = vunpack.c.l.b16 %v192
    %v1173 = vunpack.c.l.b16 %v193
    %v1174 = vunpack.c.l.b16 %v194
    %v1175 = vunpack.c.l.b16 %v195
    %v1176 = vunpack.c.l.b16 %v196
    %v1177 = vunpack.c.l.b16 %v197
    %v1178 = vunpack.c.l.b16 %v198
    %v1179 = vunpack.c.l.b16 %v199
    %v1180 = vunpack.c.l.b16 %v200
    %v1181 = vunpack.c.l.b16 %v201
    %v1182 = vunpack.c.l.b16 %v202
    %v1183 = vunpack.c.l.b16 %v203
    %v1184 = vunpack.c.l.b16 %v204
    %v1185 = vunpack.c.l.b16 %v205
    %v1186 = vunpack.c.l.b16 %v206
    %v1187 = vunpack.c.l.b16 %v207
    %v1188 = vunpack.c.l.b16 %v208
    %v1189 = vunpack.c.l.b16 %v209
    %v1190 = vunpack.c.l.b16 %v210
    %v1191 = vunpack.c.l.b16 %v211
    %v1192 = vunpack.c.l.b16 %v212
    %v1193 = vunpack.c.l.b16 %v213
    %v1194 = vunpack.c.l.b16 %v214
    %v1195 = vunpack.c.l.b16 %v215
    %v1196 = vunpack.c.l.b16 %v216
    %v1197 = vunpack.c.l.b16 %v217
    %v1198 = vunpack.c.l.b16 %v218
    %v1199 = vunpack.c.l.b16 %v219
    %v1200 = vunpack.c.l.b16 %v220
    %v1201 = vunpack.c.l.b16 %v221
    %v1202 = vunpack.c.l.b16 %v222
    %v1203 = vunpack.c.l.b16 %v223
    %v1204 = vunpack.c.l.b16 %v224
    %v1205 = vunpack.c.l.b16 %v225
    %v1206 = vunpack.c.l.b16 %v226
    %v1207 = vunpack.c.l.b16 %v227
    %v1208 = vunpack.c.l.b16 %v228
    %v1209 = vunpack.c.l.b16 %v229
    %v1210 = vunpack.c.l.b16 %v230
    %v1211 = vunpack.c.l.b16 %v231
    %v1212 = vunpack.c.l.b16 %v232
    %v1213 = vunpack.c.l.b16 %v233
    %v1214 = vunpack.c.l.b16 %v234
    %v1215 = vunpack.c.l.b16 %v235
    %v1216 = vunpack.c.l.b16 %v236
    %v1217 = vunpack.c.l.b16 %v237
    %v1218 = vunpack.c.l.b16 %v238
    %v1219 = vunpack.c.l.b16 %v239
    %v1220 = vunpack.c.l.b16 %v240
    %v1221 = vunpack.c.l.b16 %v241
    %v1222 = vunpack.c.l.b16 %v242
    %v1223 = vunpack.c.l.b16 %v243
    %v1224 = vunpack.c.l.b16 %v244
    %v1225 = vunpack.c.l.b16 %v245
    %v1226 = vunpack.c.l.b16 %v246
    %v1227 = vunpack.c.l.b16 %v247
    %v1228 = vunpack.c.l.b16 %v248
    %v1229 = vunpack.c.l.b16 %v249
    %v1230 = vunpack.c.l.b16 %v250
    %v1231 = vunpack.c.l.b16 %v251
    %v1232 = vunpack.c.l.b16 %v252
    %v1233 = vunpack.c.l.b16 %v253
    %v1234 = vunpack.c.l.b16 %v254
    %v1235 = vunpack.c.l.b16 %v255
    %v1236 = vunpack.c.l.b16 %v256
    %v1237 = vunpack.c.l.b16 %v257
    %v1238 = vunpack.c.l.b16 %v258
    %v1239 = vunpack.c.l.b16 %v259
    %v1240 = vunpack.c.l.b16 %v260
    %v1241 = vunpack.c.l.b16 %v261
    %v1242 = vunpack.c.l.b16 %v262
    %v1243 = vunpack.c.l.b16 %v263
    %v1244 = vunpack.c.l.b16 %v264
    %v1245 = vunpack.c.l.b16 %v265
    %v1246 = vunpack.c.l.b16 %v266
    %v1247 = vunpack.c.l.b16 %v267
    %v1248 = vunpack.c.l.b16 %v268
    %v1249 = vunpack.c.l.b16 %v269
    %v1250 = vunpack.c.l.b16 %v270
    %v1251 = vunpack.c.l.b16 %v271
    %v1252 = vunpack.c.l.b16 %v272
    %v1253 = vunpack.c.l.b16 %v273
    %v1254 = vunpack.c.l.b16 %v274
    %v1255 = vunpack.c.l.b16 %v275
    %v1256 = vunpack.c.l.b16 %v276
    %v1257 = vunpack.c.l.b16 %v277
    %v1258 = vunpack.c.l.b16 %v278
    %v1259 = vunpack.c.l.b16 %v279
    %v1260 = vunpack.c.l.b16 %v280
    %v1261 = vunpack.c.l.b16 %v281
    %v1262 = vunpack.c.l.b16 %v282
    %v1263 = vunpack.c.l.b16 %v283
    %v1264 = vunpack.c.l.b16 %v284
    %v1265 = vunpack.c.l.b16 %v285
    %v1266 = vunpack.c.l.b16 %v286
    %v1267 = vunpack.c.l.b16 %v287
    %v1268 = vunpack.c.l.b16 %v288
    %v1269 = vunpack.c.l.b16 %v289
    %v1270 = vunpack.c.l.b16 %v290
    %v1271 = vunpack.c.l.b16 %v291
    %v1272 = vunpack.c.l.b16 %v292
    %v1273 = vunpack.c.l.b16 %v293
    %v1274 = vunpack.c.l.b16 %v294
    %v1275 = vunpack.c.l.b16 %v295
    %v1276 = vunpack.c.l.b16 %v296
    %v1277 = vunpack.c.l.b16 %v297
    %v1278 = vunpack.c.l.b16 %v298
    %v1279 = vunpack.c.l.b16 %v299
    %v1280 = vunpack.c.l.b16 %v300
    %v1281 = vunpack.c.l.b16 %v301
    %v1282 = vunpack.c.l.b16 %v302
    %v1283 = vunpack.c.l.b16 %v303
    %v1284 = vunpack.c.l.b16 %v304
    %v1285 = vunpack.c.l.b16 %v305
    %v1286 = vunpack.c.l.b16 %v306
    %v1287 = vunpack.c.l.b16 %v307
    %v1288 = vunpack.c.l.b16 %v308
    %v1289 = vunpack.c.l.b16 %v309
    %v1290 = vunpack.c.l.b16 %v310
    %v1291 = vunpack.c.l.b16 %v311
    %v1292 = vunpack.c.l.b16 %v312
    %v1293 = vunpack.c.l.b16 %v313
    %v1294 = vunpack.c.l.b16 %v314
    %v1295 = vunpack.c.l.b16 %v315
    %v1296 = vunpack.c.l.b16 %v316
    %v1297 = vunpack.c.l.b16 %v317
    %v1298 = vunpack.c.l.b16 %v318
    %v1299 = vunpack.c.l.b16 %v319
    %v1300 = vunpack.c.l.b16 %v320
    %v1301 = vunpack.c.l.b16 %v321
    %v1302 = vunpack.c.l.b16 %v322
    %v1303 = vunpack.c.l.b16 %v323
    %v1304 = vunpack.c.l.b16 %v324
    %v1305 = vunpack.c.l.b16 %v325
    %v1306 = vunpack.c.l.b16 %v326
    %v1307 = vunpack.c.l.b16 %v327
    %v1308 = vunpack.c.l.b16 %v328
    %v1309 = vunpack.c.l.b16 %v329
    %v1310 = vunpack.c.l.b16 %v330
    %v1311 = vunpack.c.l.b16 %v331
    %v1312 = vunpack.c.l.b16 %v332
    %v1313 = vunpack.c.l.b16 %v333
    %v1314 = vunpack.c.l.b16 %v334
    %v1315 = vunpack.c.l.b16 %v335
    %v1316 = vunpack.c.l.b16 %v336
    %v1317 = vunpack.c.l.b16 %v337
    %v1318 = vunpack.c.l.b16 %v338
    %v1319 = vunpack.c.l.b16 %v339
    %v1320 = vunpack.c.l.b16 %v340
    %v1321 = vunpack.c.l.b16 %v341
    %v1322 = vunpack.c.l.b16 %v342
    %v1323 = vunpack.c.l.b16 %v343
    %v1324 = vunpack.c.l.b16 %v344
    %v1325 = vunpack.c.l.b16 %v345
    %v1326 = vunpack.c.l.b16 %v346
    %v1327 = vunpack.c.l.b16 %v347
    %v1328 = vunpack.c.l.b16 %v348
    %v1329 = vunpack.c.l.b16 %v349
    %v1330 = vunpack.c.l.b16 %v350
    %v1331 = vunpack.c.l.b16 %v351
    %v1332 = vunpack.c.l.b16 %v352
    %v1333 = vunpack.c.l.b16 %v353
    %v1334 = vunpack.c.l.b16 %v354
    %v1335 = vunpack.c.l.b16 %v355
    %v1336 = vunpack.c.l.b16 %v356
    %v1337 = vunpack.c.l.b16 %v357
    %v1338 = vunpack.c.l.b16 %v358
    %v1339 = vunpack.c.l.b16 %v359
    %v1340 = vunpack.c.l.b16 %v360
    %v1341 = vunpack.c.l.b16 %v361
    %v1342 = vunpack.c.l.b16 %v362
    %v1343 = vunpack.c.l.b16 %v363
    %v1344 = vunpack.c.l.b16 %v364
    %v1345 = vunpack.c.l.b16 %v365
    %v1346 = vunpack.c.l.b16 %v366
    %v1347 = vunpack.c.l.b16 %v367
    %v1348 = vunpack.c.l.b16 %v368
    %v1349 = vunpack.c.l.b16 %v369
    %v1350 = vunpack.c.l.b16 %v370
    %v1351 = vunpack.c.l.b16 %v371
    %v1352 = vunpack.c.l.b16 %v372
    %v1353 = vunpack.c.l.b16 %v373
    %v1354 = vunpack.c.l.b16 %v374
    %v1355 = vunpack.c.l.b16 %v375
    %v1356 = vunpack.c.l.b16 %v376
    %v1357 = vunpack.c.l.b16 %v377
    %v1358 = vunpack.c.l.b16 %v378
    %v1359 = vunpack.c.l.b16 %v379
    %v1360 = vunpack.c.l.b16 %v380
    %v1361 = vunpack.c.l.b16 %v381
    %v1362 = vunpack.c.l.b16 %v382
    %v1363 = vunpack.c.l.b16 %v383
    %v1364 = vunpack.c.l.b16 %v384
    %v1365 = vunpack.c.l.b16 %v385
    %v1366 = vunpack.c.l.b16 %v386
    %v1367 = vunpack.c.l.b16 %v387
    %v1368 = vunpack.c.l.b16 %v388
    %v1369 = vunpack.c.l.b16 %v389
    %v1370 = vunpack.c.l.b16 %v390
    %v1371 = vunpack.c.l.b16 %v391
    %v1372 = vunpack.c.l.b16 %v392
    %v1373 = vunpack.c.l.b16 %v393
    %v1374 = vunpack.c.l.b16 %v394
    %v1375 = vunpack.c.l.b16 %v395
    %v1376 = vunpack.c.l.b16 %v396
    %v1377 = vunpack.c.l.b16 %v397
    %v1378 = vunpack.c.l.b16 %v398
    %v1379 = vunpack.c.l.b16 %v399
    %v1380 = vunpack.c.l.b16 %v400
    %v1381 = vunpack.c.l.b16 %v401
    %v1382 = vunpack.c.l.b16 %v402
    %v1383 = vunpack.c.l.b16 %v403
    %v1384 = vunpack.c.l.b16 %v404
    %v1385 = vunpack.c.l.b16 %v405
    %v1386 = vunpack.c.l.b16 %v406
    %v1387 = vunpack.c.l.b16 %v407
    %v1388 = vunpack.c.l.b16 %v408
    %v1389 = vunpack.c.l.b16 %v409
    %v1390 = vunpack.c.l.b16 %v410
    %v1391 = vunpack.c.l.b16 %v411
    %v1392 = vunpack.c.l.b16 %v412
    %v1393 = vunpack.c.l.b16 %v413
    %v1394 = vunpack.c.l.b16 %v414
    %v1395 = vunpack.c.l.b16 %v415
    %v1396 = vunpack.c.l.b16 %v416
    %v1397 = vunpack.c.l.b16 %v417
    %v1398 = vpack.c.b16 %v1007, %v1006
    %v1399 = vpack.c.b16 %v1009, %v1008
    %v1400 = vpack.c.b16 %v1011, %v1010
    %v1401 = vpack.c.b16 %v1013, %v1012
    %v1402 = vpack.c.b16 %v1015, %v1014
    %v1403 = vpack.c.b16 %v1017, %v1016
    %v1404 = vpack.c.b16 %v1019, %v1018
    %v1405 = vpack.c.b16 %v1021, %v1020
    %v1406 = vpack.c.b16 %v1023, %v1022
    %v1407 = vpack.c.b16 %v1025, %v1024
    %v1408 = vpack.c.b16 %v1027, %v1026
    %v1409 = vpack.c.b16 %v1029, %v1028
    %v1410 = vpack.c.b16 %v1031, %v1030
    %v1411 = vpack.c.b16 %v1033, %v1032
    %v1412 = vpack.c.b16 %v1035, %v1034
    %v1413 = vpack.c.b16 %v1037, %v1036
    %v1414 = vpack.c.b16 %v1039, %v1038
    %v1415 = vpack.c.b16 %v1041, %v1040
    %v1416 = vpack.c.b16 %v1043, %v1042
    %v1417 = vpack.c.b16 %v1045, %v1044
    %v1418 = vpack.c.b16 %v1047, %v1046
    %v1419 = vpack.c.b16 %v1049, %v1048
    %v1420 = vpack.c.b16 %v1051, %v1050
    %v1421 = vpack.c.b16 %v1053, %v1052
    %v1422 = vpack.c.b16 %v1055, %v1054
    %v1423 = vpack.c.b16 %v1057, %v1056
    %v1424 = vpack.c.b16 %v1059, %v1058
    %v1425 = vpack.c.b16 %v1061, %v1060
    %v1426 = vpack.c.b16 %v1063, %v1062
    %v1427 = vpack.c.b16 %v1065, %v1064
    %v1428 = vpack.c.b16 %v1067, %v1066
    %v1429 = vpack.c.b16 %v1069, %v1068
    %v1430 = vpack.c.b16 %v1071, %v1070
    %v1431 = vpack.c.b16 %v1073, %v1072
    %v1432 = vpack.c.b16 %v1075, %v1074
    %v1433 = vpack.c.b16 %v1077, %v1076
    %v1434 = vpack.c.b16 %v1079, %v1078
    %v1435 = vpack.c.b16 %v1081, %v1080
    %v1436 = vpack.c.b16 %v1083, %v1082
    %v1437 = vpack.c.b16 %v1085, %v1084
    %v1438 = vpack.c.b16 %v1087, %v1086
    %v1439 = vpack.c.b16 %v1089, %v1088
    %v1440 = vpack.c.b16 %v1091, %v1090
    %v1441 = vpack.c.b16 %v1093, %v1092
    %v1442 = vpack.c.b16 %v1095, %v1094
    %v1443 = vpack.c.b16 %v1097, %v1096
    %v1444 = vpack.c.b16 %v1099, %v1098
    %v1445 = vpack.c.b16 %v1101, %v1100
    %v1446 = vpack.c.b16 %v1103, %v1102
    %v1447 = vpack.c.b16 %v1105, %v1104
    %v1448 = vpack.c.b16 %v1107, %v1106
    %v1449 = vpack.c.b16 %v1109, %v1108
    %v1450 = vpack.c.b16 %v1111, %v1110
    %v1451 = vpack.c.b16 %v1113, %v1112
    %v1452 = vpack.c.b16 %v1115, %v1114
    %v1453 = vpack.c.b16 %v1117, %v1116
    %v1454 = vpack.c.b16 %v1119, %v1118
    %v1455 = vpack.c.b16 %v1121, %v1120
    %v1456 = vpack.c.b16 %v1123, %v1122
    %v1457 = vpack.c.b16 %v1125, %v1124
    %v1458 = vpack.c.b16 %v1127, %v1126
    %v1459 = vpack.c.b16 %v1129, %v1128
    %v1460 = vpack.c.b16 %v1131, %v1130
    %v1461 = vpack.c.b16 %v1133, %v1132
    %v1462 = vpack.c.b16 %v1135, %v1134
    %v1463 = vpack.c.b16 %v1137, %v1136
    %v1464 = vpack.c.b16 %v1139, %v1138
    %v1465 = vpack.c.b16 %v1141, %v1140
    %v1466 = vpack.c.b16 %v1143, %v1142
    %v1467 = vpack.c.b16 %v1145, %v1144
    %v1468 = vpack.c.b16 %v1147, %v1146
    %v1469 = vpack.c.b16 %v1149, %v1148
    %v1470 = vpack.c.b16 %v1151, %v1150
    %v1471 = vpack.c.b16 %v1153, %v1152
    %v1472 = vpack.c.b16 %v1155, %v1154
    %v1473 = vpack.c.b16 %v1157, %v1156
    %v1474 = vpack.c.b16 %v1159, %v1158
    %v1475 = vpack.c.b16 %v1161, %v1160
    %v1476 = vpack.c.b16 %v1163, %v1162
    %v1477 = vpack.c.b16 %v1165, %v1164
    %v1478 = vpack.c.b16 %v1167, %v1166
    %v1479 = vpack.c.b16 %v1169, %v1168
    %v1480 = vpack.c.b16 %v1171, %v1170
    %v1481 = vpack.c.b16 %v1173, %v1172
    %v1482 = vpack.c.b16 %v1175, %v1174
    %v1483 = vpack.c.b16 %v1177, %v1176
    %v1484 = vpack.c.b16 %v1179, %v1178
    %v1485 = vpack.c.b16 %v1181, %v1180
    %v1486 = vpack.c.b16 %v1183, %v1182
    %v1487 = vpack.c.b16 %v1185, %v1184
    %v1488 = vpack.c.b16 %v1187, %v1186
    %v1489 = vpack.c.b16 %v1189, %v1188
    %v1490 = vpack.c.b16 %v1191, %v1190
    %v1491 = vpack.c.b16 %v1193, %v1192
    %v1492 = vpack.c.b16 %v1195, %v1194
    %v1493 = vpack.c.b16 %v1197, %v1196
    %v1494 = vpack.c.b16 %v1199, %v1198
    %v1495 = vpack.c.b16 %v1201, %v1200
    %v1496 = vpack.c.b16 %v1203, %v1202
    %v1497 = vpack.c.b16 %v1205, %v1204
    %v1498 = vpack.c.b16 %v1207, %v1206
    %v1499 = vpack.c.b16 %v1209, %v1208
    %v1500 = vpack.c.b16 %v1211, %v1210
    %v1501 = vpack.c.b16 %v1213, %v1212
    %v1502 = vpack.c.b16 %v1215, %v1214
    %v1503 = vpack.c.b16 %v1217, %v1216
    %v1504 = vpack.c.b16 %v1219, %v1218
    %v1505 = vpack.c.b16 %v1221, %v1220
    %v1506 = vpack.c.b16 %v1223, %v1222
    %v1507 = vpack.c.b16 %v1225, %v1224
    %v1508 = vpack.c.b16 %v1227, %v1226
    %v1509 = vpack.c.b16 %v1229, %v1228
    %v1510 = vpack.c.b16 %v1231, %v1230
    %v1511 = vpack.c.b16 %v1233, %v1232
    %v1512 = vpack.c.b16 %v1235, %v1234
    %v1513 = vpack.c.b16 %v1237, %v1236
    %v1514 = vpack.c.b16 %v1239, %v1238
    %v1515 = vpack.c.b16 %v1241, %v1240
    %v1516 = vpack.c.b16 %v1243, %v1242
    %v1517 = vpack.c.b16 %v1245, %v1244
    %v1518 = vpack.c.b16 %v1247, %v1246
    %v1519 = vpack.c.b16 %v1249, %v1248
    %v1520 = vpack.c.b16 %v1251, %v1250
    %v1521 = vpack.c.b16 %v1253, %v1252
    %v1522 = vpack.c.b16 %v1255, %v1254
    %v1523 = vpack.c.b16 %v1257, %v1256
    %v1524 = vpack.c.b16 %v1259, %v1258
    %v1525 = vpack.c.b16 %v1261, %v1260
    %v1526 = vpack.c.b16 %v1263, %v1262
    %v1527 = vpack.c.b16 %v1265, %v1264
    %v1528 = vpack.c.b16 %v1267, %v1266
    %v1529 = vpack.c.b16 %v1269, %v1268
    %v1530 = vpack.c.b16 %v1271, %v1270
    %v1531 = vpack.c.b16 %v1273, %v1272
    %v1532 = vpack.c.b16 %v1275, %v1274
    %v1533 = vpack.c.b16 %v1277, %v1276
    %v1534 = vpack.c.b16 %v1279, %v1278
    %v1535 = vpack.c.b16 %v1281, %v1280
    %v1536 = vpack.c.b16 %v1283, %v1282
    %v1537 = vpack.c.b16 %v1285, %v1284
    %v1538 = vpack.c.b16 %v1287, %v1286
    %v1539 = vpack.c.b16 %v1289, %v1288
    %v1540 = vpack.c.b16 %v1291, %v1290
    %v1541 = vpack.c.b16 %v1293, %v1292
    %v1542 = vpack.c.b16 %v1295, %v1294
    %v1543 = vpack.c.b16 %v1297, %v1296
    %v1544 = vpack.c.b16 %v1299, %v1298
    %v1545 = vpack.c.b16 %v1301, %v1300
    %v1546 = vpack.c.b16 %v1303, %v1302
    %v1547 = vpack.c.b16 %v1305, %v1304
    %v1548 = vpack.c.b16 %v1307, %v1306
    %v1549 = vpack.c.b16 %v1309, %v1308
    %v1550 = vpack.c.b16 %v1311, %v1310
    %v1551 = vpack.c.b16 %v1313, %v1312
    %v1552 = vpack.c.b16 %v1315, %v1314
    %v1553 = vpack.c.b16 %v1317, %v1316
    %v1554 = vpack.c.b16 %v1319, %v1318
    %v1555 = vpack.c.b16 %v1321, %v1320
    %v1556 = vpack.c.b16 %v1323, %v1322
    %v1557 = vpack.c.b16 %v1325, %v1324
    %v1558 = vpack.c.b16 %v1327, %v1326
    %v1559 = vpack.c.b16 %v1329, %v1328
    %v1560 = vpack.c.b16 %v1331, %v1330
    %v1561 = vpack.c.b16 %v1333, %v1332
    %v1562 = vpack.c.b16 %v1335, %v1334
    %v1563 = vpack.c.b16 %v1337, %v1336
    %v1564 = vpack.c.b16 %v1339, %v1338
    %v1565 = vpack.c.b16 %v1341, %v1340
    %v1566 = vpack.c.b16 %v1343, %v1342
    %v1567 = vpack.c.b16 %v1345, %v1344
    %v1568 = vpack.c.b16 %v1347, %v1346
    %v1569 = vpack.c.b16 %v1349, %v1348
    %v1570 = vpack.c.b16 %v1351, %v1350
    %v1571 = vpack.c.b16 %v1353, %v1352
    %v1572 = vpack.c.b16 %v1355, %v1354
    %v1573 = vpack.c.b16 %v1357, %v1356
    %v1574 = vpack.c.b16 %v1359, %v1358
    %v1575 = vpack.c.b16 %v1361, %v1360
    %v1576 = vpack.c.b16 %v1363, %v1362
    %v1577 = vpack.c.b16 %v1365, %v1364
    %v1578 = vpack.c.b16 %v1367, %v1366
    %v1579 = vpack.c.b16 %v1369, %v1368
    %v1580 = vpack.c.b16 %v1371, %v1370
    %v1581 = vpack.c.b16 %v1373, %v1372
    %v1582 = vpack.c.b16 %v1375, %v1374
    %v1583 = vpack.c.b16 %v1377, %v1376
    %v1584 = vpack.c.b16 %v1379, %v1378
    %v1585 = vpack.c.b16 %v1381, %v1380
    %v1586 = vpack.c.b16 %v1383, %v1382
    %v1587 = vpack.c.b16 %v1385, %v1384
    %v1588 = vpack.c.b16 %v1387, %v1386
    %v1589 = vpack.c.b16 %v1389, %v1388
    %v1590 = vpack.c.b16 %v1391, %v1390
    %v1591 = vpack.c.b16 %v1393, %v1392
    %v1592 = vpack.c.b16 %v1395, %v1394
    %v1593 = vpack.c.b16 %v1397, %v1396
    %vm1790 = vcmask 523264
    %v1792 = vsel %vm1790, %v589, 0
    %1794 = vmatprep.subr.bf16.mxu0 0
    %1795 = vmatpush1.bf16.msra.mxu0 %v1398
    %1796 = vmatprep.subr.bf16.mxu0 0
    %1797 = vmatpush1.bf16.msra.mxu0 %v1399
    %1798 = vmatprep.subr.bf16.mxu0 0
    %1799 = vmatpush1.bf16.msra.mxu0 %v1400
    %1800 = vmatprep.subr.bf16.mxu0 0
    %1801 = vmatpush1.bf16.msra.mxu0 %v1401
    %1802 = vmatprep.subr.bf16.mxu0 0
    %1803 = vmatpush1.bf16.msra.mxu0 %v1402
    %1804 = vmatprep.subr.bf16.mxu0 0
    %1805 = vmatpush1.bf16.msra.mxu0 %v1403
    %1806 = vmatprep.subr.bf16.mxu0 0
    %1807 = vmatpush1.bf16.msra.mxu0 %v1404
    %1808 = vmatprep.subr.bf16.mxu0 0
    %1809 = vmatpush1.bf16.msra.mxu0 %v1405
    %1810 = vmatprep.subr.bf16.mxu0 0
    %1811 = vmatpush1.bf16.msra.mxu0 %v1406
    %1812 = vmatprep.subr.bf16.mxu0 0
    %1813 = vmatpush1.bf16.msra.mxu0 %v1407
    %1814 = vmatprep.subr.bf16.mxu0 0
    %1815 = vmatpush1.bf16.msra.mxu0 %v1408
    %1816 = vmatprep.subr.bf16.mxu0 0
    %1817 = vmatpush1.bf16.msra.mxu0 %v1409
    %1818 = vmatprep.subr.bf16.mxu0 0
    %1819 = vmatpush1.bf16.msra.mxu0 %v1410
    %1820 = vmatprep.subr.bf16.mxu0 0
    %1821 = vmatpush1.bf16.msra.mxu0 %v1411
    %1822 = vmatprep.subr.bf16.mxu0 0
    %1823 = vmatpush1.bf16.msra.mxu0 %v1412
    %1824 = vmatprep.subr.bf16.mxu0 0
    %1825 = vmatpush1.bf16.msra.mxu0 %v1413
    %1826 = vmatprep.mubr.bf16.mxu0 %v466
    %1827 = vmatmul.mubr.bf16.gmra.mrb[0].mxu0 %v452
    %v1828 = vpop.f32.mrb[0].mxu0
    %v1829 = vadd.f32 %v423, %v1828
    %v1830 = vpop.f32.mrb[0].mxu0
    %v1831 = vpop.f32.mrb[0].mxu0
    %v1832 = vpop.f32.mrb[0].mxu0
    %1833 = vdwg.mxu0
    %1834 = vmatprep.subr.bf16.mxu0 0
    %1835 = vmatpush1.bf16.msra.mxu0 %v1414
    %1836 = vmatprep.subr.bf16.mxu0 0
    %1837 = vmatpush1.bf16.msra.mxu0 %v1415
    %1838 = vmatprep.subr.bf16.mxu0 0
    %1839 = vmatpush1.bf16.msra.mxu0 %v1416
    %1840 = vmatprep.subr.bf16.mxu0 0
    %1841 = vmatpush1.bf16.msra.mxu0 %v1417
    %1842 = vmatprep.subr.bf16.mxu0 0
    %1843 = vmatpush1.bf16.msra.mxu0 %v1418
    %1844 = vmatprep.subr.bf16.mxu0 0
    %1845 = vmatpush1.bf16.msra.mxu0 %v1419
    %1846 = vmatprep.subr.bf16.mxu0 0
    %1847 = vmatpush1.bf16.msra.mxu0 %v1420
    %1848 = vmatprep.subr.bf16.mxu0 0
    %1849 = vmatpush1.bf16.msra.mxu0 %v1421
    %1850 = vmatprep.subr.bf16.mxu0 0
    %1851 = vmatpush1.bf16.msra.mxu0 %v1422
    %1852 = vmatprep.subr.bf16.mxu0 0
    %1853 = vmatpush1.bf16.msra.mxu0 %v1423
    %1854 = vmatprep.subr.bf16.mxu0 0
    %1855 = vmatpush1.bf16.msra.mxu0 %v1424
    %1856 = vmatprep.subr.bf16.mxu0 0
    %1857 = vmatpush1.bf16.msra.mxu0 %v1425
    %1858 = vmatprep.subr.bf16.mxu0 0
    %1859 = vmatpush1.bf16.msra.mxu0 %v1426
    %1860 = vmatprep.subr.bf16.mxu0 0
    %1861 = vmatpush1.bf16.msra.mxu0 %v1427
    %1862 = vmatprep.subr.bf16.mxu0 0
    %1863 = vmatpush1.bf16.msra.mxu0 %v1428
    %1864 = vmatprep.subr.bf16.mxu0 0
    %1865 = vmatpush1.bf16.msra.mxu0 %v1429
    %1866 = vmatprep.mubr.bf16.mxu0 %v476
    %1867 = vmatmul.mubr.bf16.gmra.mrb[0].mxu0 %v474
    %v1868 = vpop.f32.mrb[0].mxu0
    %v1869 = vadd.f32 %v1829, %v1868
    %v1870 = vpop.f32.mrb[0].mxu0
    %v1871 = vpop.f32.mrb[0].mxu0
    %v1872 = vpop.f32.mrb[0].mxu0
    %1873 = vdwg.mxu0
    %1874 = vmatprep.subr.bf16.mxu0 0
    %1875 = vmatpush1.bf16.msra.mxu0 %v1430
    %1876 = vmatprep.subr.bf16.mxu0 0
    %1877 = vmatpush1.bf16.msra.mxu0 %v1431
    %1878 = vmatprep.subr.bf16.mxu0 0
    %1879 = vmatpush1.bf16.msra.mxu0 %v1432
    %1880 = vmatprep.subr.bf16.mxu0 0
    %1881 = vmatpush1.bf16.msra.mxu0 %v1433
    %1882 = vmatprep.subr.bf16.mxu0 0
    %1883 = vmatpush1.bf16.msra.mxu0 %v1434
    %1884 = vmatprep.subr.bf16.mxu0 0
    %1885 = vmatpush1.bf16.msra.mxu0 %v1435
    %1886 = vmatprep.subr.bf16.mxu0 0
    %1887 = vmatpush1.bf16.msra.mxu0 %v1436
    %1888 = vmatprep.subr.bf16.mxu0 0
    %1889 = vmatpush1.bf16.msra.mxu0 %v1437
    %1890 = vmatprep.subr.bf16.mxu0 0
    %1891 = vmatpush1.bf16.msra.mxu0 %v1438
    %1892 = vmatprep.subr.bf16.mxu0 0
    %1893 = vmatpush1.bf16.msra.mxu0 %v1439
    %1894 = vmatprep.subr.bf16.mxu0 0
    %1895 = vmatpush1.bf16.msra.mxu0 %v1440
    %1896 = vmatprep.subr.bf16.mxu0 0
    %1897 = vmatpush1.bf16.msra.mxu0 %v1441
    %1898 = vmatprep.subr.bf16.mxu0 0
    %1899 = vmatpush1.bf16.msra.mxu0 %v1442
    %1900 = vmatprep.subr.bf16.mxu0 0
    %1901 = vmatpush1.bf16.msra.mxu0 %v1443
    %1902 = vmatprep.subr.bf16.mxu0 0
    %1903 = vmatpush1.bf16.msra.mxu0 %v1444
    %1904 = vmatprep.subr.bf16.mxu0 0
    %1905 = vmatpush1.bf16.msra.mxu0 %v1445
    %1906 = vmatprep.mubr.bf16.mxu0 %v473
    %1907 = vmatmul.mubr.bf16.gmra.mrb[0].mxu0 %v459
    %v1908 = vpop.f32.mrb[0].mxu0
    %v1909 = vadd.f32 %v1869, %v1908
    %v1910 = vpop.f32.mrb[0].mxu0
    %v1911 = vpop.f32.mrb[0].mxu0
    %v1912 = vpop.f32.mrb[0].mxu0
    %1913 = vdwg.mxu0
    %1914 = vmatprep.subr.bf16.mxu0 0
    %1915 = vmatpush1.bf16.msra.mxu0 %v1446
    %1916 = vmatprep.subr.bf16.mxu0 0
    %1917 = vmatpush1.bf16.msra.mxu0 %v1447
    %1918 = vmatprep.subr.bf16.mxu0 0
    %1919 = vmatpush1.bf16.msra.mxu0 %v1448
    %1920 = vmatprep.subr.bf16.mxu0 0
    %1921 = vmatpush1.bf16.msra.mxu0 %v1449
    %1922 = vmatprep.subr.bf16.mxu0 0
    %1923 = vmatpush1.bf16.msra.mxu0 %v1450
    %1924 = vmatprep.subr.bf16.mxu0 0
    %1925 = vmatpush1.bf16.msra.mxu0 %v1451
    %1926 = vmatprep.subr.bf16.mxu0 0
    %1927 = vmatpush1.bf16.msra.mxu0 %v1452
    %1928 = vmatprep.subr.bf16.mxu0 0
    %1929 = vmatpush1.bf16.msra.mxu0 %v1453
    %1930 = vmatprep.subr.bf16.mxu0 0
    %1931 = vmatpush1.bf16.msra.mxu0 %v1454
    %1932 = vmatprep.subr.bf16.mxu0 0
    %1933 = vmatpush1.bf16.msra.mxu0 %v1455
    %1934 = vmatprep.subr.bf16.mxu0 0
    %1935 = vmatpush1.bf16.msra.mxu0 %v1456
    %1936 = vmatprep.subr.bf16.mxu0 0
    %1937 = vmatpush1.bf16.msra.mxu0 %v1457
    %1938 = vmatprep.subr.bf16.mxu0 0
    %1939 = vmatpush1.bf16.msra.mxu0 %v1458
    %1940 = vmatprep.subr.bf16.mxu0 0
    %1941 = vmatpush1.bf16.msra.mxu0 %v1459
    %1942 = vmatprep.subr.bf16.mxu0 0
    %1943 = vmatpush1.bf16.msra.mxu0 %v1460
    %1944 = vmatprep.subr.bf16.mxu0 0
    %1945 = vmatpush1.bf16.msra.mxu0 %v1461
    %1946 = vmatprep.mubr.bf16.mxu0 %v477
    %1947 = vmatmul.mubr.bf16.gmra.mrb[0].mxu0 %v475
    %v1948 = vpop.f32.mrb[0].mxu0
    %v1949 = vadd.f32 %v1909, %v1948
    %v1950 = vpop.f32.mrb[0].mxu0
    %v1951 = vpop.f32.mrb[0].mxu0
    %v1952 = vpop.f32.mrb[0].mxu0
    %1953 = vdwg.mxu0
    %1954 = vmatprep.subr.bf16.mxu0 0
    %1955 = vmatpush1.bf16.msra.mxu0 %v1462
    %1956 = vmatprep.subr.bf16.mxu0 0
    %1957 = vmatpush1.bf16.msra.mxu0 %v1463
    %1958 = vmatprep.subr.bf16.mxu0 0
    %1959 = vmatpush1.bf16.msra.mxu0 %v1464
    %1960 = vmatprep.subr.bf16.mxu0 0
    %1961 = vmatpush1.bf16.msra.mxu0 %v1465
    %1962 = vmatprep.subr.bf16.mxu0 0
    %1963 = vmatpush1.bf16.msra.mxu0 %v1466
    %1964 = vmatprep.subr.bf16.mxu0 0
    %1965 = vmatpush1.bf16.msra.mxu0 %v1467
    %1966 = vmatprep.subr.bf16.mxu0 0
    %1967 = vmatpush1.bf16.msra.mxu0 %v1468
    %1968 = vmatprep.subr.bf16.mxu0 0
    %1969 = vmatpush1.bf16.msra.mxu0 %v1469
    %1970 = vmatprep.subr.bf16.mxu0 0
    %1971 = vmatpush1.bf16.msra.mxu0 %v1470
    %1972 = vmatprep.subr.bf16.mxu0 0
    %1973 = vmatpush1.bf16.msra.mxu0 %v1471
    %1974 = vmatprep.subr.bf16.mxu0 0
    %1975 = vmatpush1.bf16.msra.mxu0 %v1472
    %1976 = vmatprep.subr.bf16.mxu0 0
    %1977 = vmatpush1.bf16.msra.mxu0 %v1473
    %1978 = vmatprep.subr.bf16.mxu0 0
    %1979 = vmatpush1.bf16.msra.mxu0 %v1474
    %1980 = vmatprep.subr.bf16.mxu0 0
    %1981 = vmatpush1.bf16.msra.mxu0 %v1475
    %1982 = vmatprep.subr.bf16.mxu0 0
    %1983 = vmatpush1.bf16.msra.mxu0 %v1476
    %1984 = vmatprep.subr.bf16.mxu0 0
    %1985 = vmatpush1.bf16.msra.mxu0 %v1477
    %1986 = vmatprep.mubr.bf16.mxu0 %v515
    %1987 = vmatmul.mubr.bf16.gmra.mrb[0].mxu0 %v501
    %v1988 = vpop.f32.mrb[0].mxu0
    %v1989 = vadd.f32 %v1949, %v1988
    %v1990 = vpop.f32.mrb[0].mxu0
    %v1991 = vpop.f32.mrb[0].mxu0
    %v1992 = vpop.f32.mrb[0].mxu0
    %1993 = vdwg.mxu0
    %1994 = vmatprep.subr.bf16.mxu0 0
    %1995 = vmatpush1.bf16.msra.mxu0 %v1478
    %1996 = vmatprep.subr.bf16.mxu0 0
    %1997 = vmatpush1.bf16.msra.mxu0 %v1479
    %1998 = vmatprep.subr.bf16.mxu0 0
    %1999 = vmatpush1.bf16.msra.mxu0 %v1480
    %2000 = vmatprep.subr.bf16.mxu0 0
    %2001 = vmatpush1.bf16.msra.mxu0 %v1481
    %2002 = vmatprep.subr.bf16.mxu0 0
    %2003 = vmatpush1.bf16.msra.mxu0 %v1482
    %2004 = vmatprep.subr.bf16.mxu0 0
    %2005 = vmatpush1.bf16.msra.mxu0 %v1483
    %2006 = vmatprep.subr.bf16.mxu0 0
    %2007 = vmatpush1.bf16.msra.mxu0 %v1484
    %2008 = vmatprep.subr.bf16.mxu0 0
    %2009 = vmatpush1.bf16.msra.mxu0 %v1485
    %2010 = vmatprep.subr.bf16.mxu0 0
    %2011 = vmatpush1.bf16.msra.mxu0 %v1486
    %2012 = vmatprep.subr.bf16.mxu0 0
    %2013 = vmatpush1.bf16.msra.mxu0 %v1487
    %2014 = vmatprep.subr.bf16.mxu0 0
    %2015 = vmatpush1.bf16.msra.mxu0 %v1488
    %2016 = vmatprep.subr.bf16.mxu0 0
    %2017 = vmatpush1.bf16.msra.mxu0 %v1489
    %2018 = vmatprep.subr.bf16.mxu0 0
    %2019 = vmatpush1.bf16.msra.mxu0 %v1490
    %2020 = vmatprep.subr.bf16.mxu0 0
    %2021 = vmatpush1.bf16.msra.mxu0 %v1491
    %2022 = vmatprep.subr.bf16.mxu0 0
    %2023 = vmatpush1.bf16.msra.mxu0 %v1492
    %2024 = vmatprep.subr.bf16.mxu0 0
    %2025 = vmatpush1.bf16.msra.mxu0 %v1493
    %2026 = vmatprep.mubr.bf16.mxu0 %v525
    %2027 = vmatmul.mubr.bf16.gmra.mrb[0].mxu0 %v523
    %v2028 = vpop.f32.mrb[0].mxu0
    %v2029 = vadd.f32 %v1989, %v2028
    %v2030 = vpop.f32.mrb[0].mxu0
    %v2031 = vpop.f32.mrb[0].mxu0
    %v2032 = vpop.f32.mrb[0].mxu0
    %2033 = vdwg.mxu0
    %2034 = vmatprep.subr.bf16.mxu0 0
    %2035 = vmatpush1.bf16.msra.mxu0 %v1494
    %2036 = vmatprep.subr.bf16.mxu0 0
    %2037 = vmatpush1.bf16.msra.mxu0 %v1495
    %2038 = vmatprep.subr.bf16.mxu0 0
    %2039 = vmatpush1.bf16.msra.mxu0 %v1496
    %2040 = vmatprep.subr.bf16.mxu0 0
    %2041 = vmatpush1.bf16.msra.mxu0 %v1497
    %2042 = vmatprep.subr.bf16.mxu0 0
    %2043 = vmatpush1.bf16.msra.mxu0 %v1498
    %2044 = vmatprep.subr.bf16.mxu0 0
    %2045 = vmatpush1.bf16.msra.mxu0 %v1499
    %2046 = vmatprep.subr.bf16.mxu0 0
    %2047 = vmatpush1.bf16.msra.mxu0 %v1500
    %2048 = vmatprep.subr.bf16.mxu0 0
    %2049 = vmatpush1.bf16.msra.mxu0 %v1501
    %2050 = vmatprep.subr.bf16.mxu0 0
    %2051 = vmatpush1.bf16.msra.mxu0 %v1502
    %2052 = vmatprep.subr.bf16.mxu0 0
    %2053 = vmatpush1.bf16.msra.mxu0 %v1503
    %2054 = vmatprep.subr.bf16.mxu0 0
    %2055 = vmatpush1.bf16.msra.mxu0 %v1504
    %2056 = vmatprep.subr.bf16.mxu0 0
    %2057 = vmatpush1.bf16.msra.mxu0 %v1505
    %2058 = vmatprep.subr.bf16.mxu0 0
    %2059 = vmatpush1.bf16.msra.mxu0 %v1506
    %2060 = vmatprep.subr.bf16.mxu0 0
    %2061 = vmatpush1.bf16.msra.mxu0 %v1507
    %2062 = vmatprep.subr.bf16.mxu0 0
    %2063 = vmatpush1.bf16.msra.mxu0 %v1508
    %2064 = vmatprep.subr.bf16.mxu0 0
    %2065 = vmatpush1.bf16.msra.mxu0 %v1509
    %2066 = vmatprep.mubr.bf16.mxu0 %v522
    %2067 = vmatmul.mubr.bf16.gmra.mrb[0].mxu0 %v508
    %v2068 = vpop.f32.mrb[0].mxu0
    %v2069 = vadd.f32 %v2029, %v2068
    %v2070 = vpop.f32.mrb[0].mxu0
    %v2071 = vpop.f32.mrb[0].mxu0
    %v2072 = vpop.f32.mrb[0].mxu0
    %2073 = vdwg.mxu0
    %2074 = vmatprep.subr.bf16.mxu0 0
    %2075 = vmatpush1.bf16.msra.mxu0 %v1510
    %2076 = vmatprep.subr.bf16.mxu0 0
    %2077 = vmatpush1.bf16.msra.mxu0 %v1511
    %2078 = vmatprep.subr.bf16.mxu0 0
    %2079 = vmatpush1.bf16.msra.mxu0 %v1512
    %2080 = vmatprep.subr.bf16.mxu0 0
    %2081 = vmatpush1.bf16.msra.mxu0 %v1513
    %2082 = vmatprep.subr.bf16.mxu0 0
    %2083 = vmatpush1.bf16.msra.mxu0 %v1514
    %2084 = vmatprep.subr.bf16.mxu0 0
    %2085 = vmatpush1.bf16.msra.mxu0 %v1515
    %2086 = vmatprep.subr.bf16.mxu0 0
    %2087 = vmatpush1.bf16.msra.mxu0 %v1516
    %2088 = vmatprep.subr.bf16.mxu0 0
    %2089 = vmatpush1.bf16.msra.mxu0 %v1517
    %2090 = vmatprep.subr.bf16.mxu0 0
    %2091 = vmatpush1.bf16.msra.mxu0 %v1518
    %2092 = vmatprep.subr.bf16.mxu0 0
    %2093 = vmatpush1.bf16.msra.mxu0 %v1519
    %2094 = vmatprep.subr.bf16.mxu0 0
    %2095 = vmatpush1.bf16.msra.mxu0 %v1520
    %2096 = vmatprep.subr.bf16.mxu0 0
    %2097 = vmatpush1.bf16.msra.mxu0 %v1521
    %2098 = vmatprep.subr.bf16.mxu0 0
    %2099 = vmatpush1.bf16.msra.mxu0 %v1522
    %2100 = vmatprep.subr.bf16.mxu0 0
    %2101 = vmatpush1.bf16.msra.mxu0 %v1523
    %2102 = vmatprep.subr.bf16.mxu0 0
    %2103 = vmatpush1.bf16.msra.mxu0 %v1524
    %2104 = vmatprep.subr.bf16.mxu0 0
    %2105 = vmatpush1.bf16.msra.mxu0 %v1525
    %2106 = vmatprep.mubr.bf16.mxu0 %v526
    %2107 = vmatmul.mubr.bf16.gmra.mrb[0].mxu0 %v524
    %v2108 = vpop.f32.mrb[0].mxu0
    %v2109 = vadd.f32 %v2069, %v2108
    %v2110 = vpop.f32.mrb[0].mxu0
    %v2111 = vpop.f32.mrb[0].mxu0
    %v2112 = vpop.f32.mrb[0].mxu0
    %2113 = vdwg.mxu0
    %2114 = vmatprep.subr.bf16.mxu0 0
    %2115 = vmatpush1.bf16.msra.mxu0 %v1526
    %2116 = vmatprep.subr.bf16.mxu0 0
    %2117 = vmatpush1.bf16.msra.mxu0 %v1527
    %2118 = vmatprep.subr.bf16.mxu0 0
    %2119 = vmatpush1.bf16.msra.mxu0 %v1528
    %2120 = vmatprep.subr.bf16.mxu0 0
    %2121 = vmatpush1.bf16.msra.mxu0 %v1529
    %2122 = vmatprep.subr.bf16.mxu0 0
    %2123 = vmatpush1.bf16.msra.mxu0 %v1530
    %2124 = vmatprep.subr.bf16.mxu0 0
    %2125 = vmatpush1.bf16.msra.mxu0 %v1531
    %2126 = vmatprep.subr.bf16.mxu0 0
    %2127 = vmatpush1.bf16.msra.mxu0 %v1532
    %2128 = vmatprep.subr.bf16.mxu0 0
    %2129 = vmatpush1.bf16.msra.mxu0 %v1533
    %2130 = vmatprep.subr.bf16.mxu0 0
    %2131 = vmatpush1.bf16.msra.mxu0 %v1534
    %2132 = vmatprep.subr.bf16.mxu0 0
    %2133 = vmatpush1.bf16.msra.mxu0 %v1535
    %2134 = vmatprep.subr.bf16.mxu0 0
    %2135 = vmatpush1.bf16.msra.mxu0 %v1536
    %2136 = vmatprep.subr.bf16.mxu0 0
    %2137 = vmatpush1.bf16.msra.mxu0 %v1537
    %2138 = vmatprep.subr.bf16.mxu0 0
    %2139 = vmatpush1.bf16.msra.mxu0 %v1538
    %2140 = vmatprep.subr.bf16.mxu0 0
    %2141 = vmatpush1.bf16.msra.mxu0 %v1539
    %2142 = vmatprep.subr.bf16.mxu0 0
    %2143 = vmatpush1.bf16.msra.mxu0 %v1540
    %2144 = vmatprep.subr.bf16.mxu0 0
    %2145 = vmatpush1.bf16.msra.mxu0 %v1541
    %2146 = vmatprep.mubr.bf16.mxu0 %v564
    %2147 = vmatmul.mubr.bf16.gmra.mrb[0].mxu0 %v550
    %v2148 = vpop.f32.mrb[0].mxu0
    %v2149 = vadd.f32 %v2109, %v2148
    %v2150 = vpop.f32.mrb[0].mxu0
    %v2151 = vpop.f32.mrb[0].mxu0
    %v2152 = vpop.f32.mrb[0].mxu0
    %2153 = vdwg.mxu0
    %2154 = vmatprep.subr.bf16.mxu0 0
    %2155 = vmatpush1.bf16.msra.mxu0 %v1542
    %2156 = vmatprep.subr.bf16.mxu0 0
    %2157 = vmatpush1.bf16.msra.mxu0 %v1543
    %2158 = vmatprep.subr.bf16.mxu0 0
    %2159 = vmatpush1.bf16.msra.mxu0 %v1544
    %2160 = vmatprep.subr.bf16.mxu0 0
    %2161 = vmatpush1.bf16.msra.mxu0 %v1545
    %2162 = vmatprep.subr.bf16.mxu0 0
    %2163 = vmatpush1.bf16.msra.mxu0 %v1546
    %2164 = vmatprep.subr.bf16.mxu0 0
    %2165 = vmatpush1.bf16.msra.mxu0 %v1547
    %2166 = vmatprep.subr.bf16.mxu0 0
    %2167 = vmatpush1.bf16.msra.mxu0 %v1548
    %2168 = vmatprep.subr.bf16.mxu0 0
    %2169 = vmatpush1.bf16.msra.mxu0 %v1549
    %2170 = vmatprep.subr.bf16.mxu0 0
    %2171 = vmatpush1.bf16.msra.mxu0 %v1550
    %2172 = vmatprep.subr.bf16.mxu0 0
    %2173 = vmatpush1.bf16.msra.mxu0 %v1551
    %2174 = vmatprep.subr.bf16.mxu0 0
    %2175 = vmatpush1.bf16.msra.mxu0 %v1552
    %2176 = vmatprep.subr.bf16.mxu0 0
    %2177 = vmatpush1.bf16.msra.mxu0 %v1553
    %2178 = vmatprep.subr.bf16.mxu0 0
    %2179 = vmatpush1.bf16.msra.mxu0 %v1554
    %2180 = vmatprep.subr.bf16.mxu0 0
    %2181 = vmatpush1.bf16.msra.mxu0 %v1555
    %2182 = vmatprep.subr.bf16.mxu0 0
    %2183 = vmatpush1.bf16.msra.mxu0 %v1556
    %2184 = vmatprep.subr.bf16.mxu0 0
    %2185 = vmatpush1.bf16.msra.mxu0 %v1557
    %2186 = vmatprep.mubr.bf16.mxu0 %v574
    %2187 = vmatmul.mubr.bf16.gmra.mrb[0].mxu0 %v572
    %v2188 = vpop.f32.mrb[0].mxu0
    %v2189 = vadd.f32 %v2149, %v2188
    %v2190 = vpop.f32.mrb[0].mxu0
    %v2191 = vpop.f32.mrb[0].mxu0
    %v2192 = vpop.f32.mrb[0].mxu0
    %2193 = vdwg.mxu0
    %2194 = vmatprep.subr.bf16.mxu0 0
    %2195 = vmatpush1.bf16.msra.mxu0 %v1558
    %2196 = vmatprep.subr.bf16.mxu0 0
    %2197 = vmatpush1.bf16.msra.mxu0 %v1559
    %2198 = vmatprep.subr.bf16.mxu0 0
    %2199 = vmatpush1.bf16.msra.mxu0 %v1560
    %2200 = vmatprep.subr.bf16.mxu0 0
    %2201 = vmatpush1.bf16.msra.mxu0 %v1561
    %2202 = vmatprep.subr.bf16.mxu0 0
    %2203 = vmatpush1.bf16.msra.mxu0 %v1562
    %2204 = vmatprep.subr.bf16.mxu0 0
    %2205 = vmatpush1.bf16.msra.mxu0 %v1563
    %2206 = vmatprep.subr.bf16.mxu0 0
    %2207 = vmatpush1.bf16.msra.mxu0 %v1564
    %2208 = vmatprep.subr.bf16.mxu0 0
    %2209 = vmatpush1.bf16.msra.mxu0 %v1565
    %2210 = vmatprep.subr.bf16.mxu0 0
    %2211 = vmatpush1.bf16.msra.mxu0 %v1566
    %2212 = vmatprep.subr.bf16.mxu0 0
    %2213 = vmatpush1.bf16.msra.mxu0 %v1567
    %2214 = vmatprep.subr.bf16.mxu0 0
    %2215 = vmatpush1.bf16.msra.mxu0 %v1568
    %2216 = vmatprep.subr.bf16.mxu0 0
    %2217 = vmatpush1.bf16.msra.mxu0 %v1569
    %2218 = vmatprep.subr.bf16.mxu0 0
    %2219 = vmatpush1.bf16.msra.mxu0 %v1570
    %2220 = vmatprep.subr.bf16.mxu0 0
    %2221 = vmatpush1.bf16.msra.mxu0 %v1571
    %2222 = vmatprep.subr.bf16.mxu0 0
    %2223 = vmatpush1.bf16.msra.mxu0 %v1572
    %2224 = vmatprep.subr.bf16.mxu0 0
    %2225 = vmatpush1.bf16.msra.mxu0 %v1573
    %2226 = vmatprep.mubr.bf16.mxu0 %v571
    %2227 = vmatmul.mubr.bf16.gmra.mrb[0].mxu0 %v557
    %v2228 = vpop.f32.mrb[0].mxu0
    %v2229 = vadd.f32 %v2189, %v2228
    %v2230 = vpop.f32.mrb[0].mxu0
    %v2231 = vpop.f32.mrb[0].mxu0
    %v2232 = vpop.f32.mrb[0].mxu0
    %2233 = vdwg.mxu0
    %2234 = vmatprep.subr.bf16.mxu0 0
    %2235 = vmatpush1.bf16.msra.mxu0 %v1574
    %2236 = vmatprep.subr.bf16.mxu0 0
    %2237 = vmatpush1.bf16.msra.mxu0 %v1575
    %2238 = vmatprep.subr.bf16.mxu0 0
    %2239 = vmatpush1.bf16.msra.mxu0 %v1576
    %2240 = vmatprep.subr.bf16.mxu0 0
    %2241 = vmatpush1.bf16.msra.mxu0 %v1577
    %2242 = vmatprep.subr.bf16.mxu0 0
    %2243 = vmatpush1.bf16.msra.mxu0 %v1578
    %2244 = vmatprep.subr.bf16.mxu0 0
    %2245 = vmatpush1.bf16.msra.mxu0 %v1579
    %2246 = vmatprep.subr.bf16.mxu0 0
    %2247 = vmatpush1.bf16.msra.mxu0 %v1580
    %2248 = vmatprep.subr.bf16.mxu0 0
    %2249 = vmatpush1.bf16.msra.mxu0 %v1581
    %2250 = vmatprep.subr.bf16.mxu0 0
    %2251 = vmatpush1.bf16.msra.mxu0 %v1582
    %2252 = vmatprep.subr.bf16.mxu0 0
    %2253 = vmatpush1.bf16.msra.mxu0 %v1583
    %2254 = vmatprep.subr.bf16.mxu0 0
    %2255 = vmatpush1.bf16.msra.mxu0 %v1584
    %2256 = vmatprep.subr.bf16.mxu0 0
    %2257 = vmatpush1.bf16.msra.mxu0 %v1585
    %2258 = vmatprep.subr.bf16.mxu0 0
    %2259 = vmatpush1.bf16.msra.mxu0 %v1586
    %2260 = vmatprep.subr.bf16.mxu0 0
    %2261 = vmatpush1.bf16.msra.mxu0 %v1587
    %2262 = vmatprep.subr.bf16.mxu0 0
    %2263 = vmatpush1.bf16.msra.mxu0 %v1588
    %2264 = vmatprep.subr.bf16.mxu0 0
    %2265 = vmatpush1.bf16.msra.mxu0 %v1589
    %2266 = vmatprep.mubr.bf16.mxu0 %v575
    %2267 = vmatmul.mubr.bf16.gmra.mrb[0].mxu0 %v573
    %v2268 = vpop.f32.mrb[0].mxu0
    %v2269 = vadd.f32 %v2229, %v2268
    %v2270 = vpop.f32.mrb[0].mxu0
    %v2271 = vpop.f32.mrb[0].mxu0
    %v2272 = vpop.f32.mrb[0].mxu0
    %2273 = vdwg.mxu0
    %2274 = vmatprep.subr.bf16.mxu0 0
    %2275 = vmatpush1.bf16.msra.mxu0 %v1590
    %2276 = vmatprep.subr.bf16.mxu0 0
    %2277 = vmatpush1.bf16.msra.mxu0 %v1591
    %2278 = vmatprep.subr.bf16.mxu0 0
    %2279 = vmatpush1.bf16.msra.mxu0 %v1592
    %2280 = vmatprep.subr.bf16.mxu0 0
    %2281 = vmatpush1.bf16.msra.mxu0 %v1593
    %2282 = vmatprep.subr.bf16.mxu0 0
    %2283 = vmatpush1.bf16.msra.mxu0 0
    %2284 = vmatprep.subr.bf16.mxu0 0
    %2285 = vmatpush1.bf16.msra.mxu0 0
    %2286 = vmatprep.subr.bf16.mxu0 0
    %2287 = vmatpush1.bf16.msra.mxu0 0
    %2288 = vmatprep.subr.bf16.mxu0 0
    %2289 = vmatpush1.bf16.msra.mxu0 0
    %2290 = vmatprep.subr.bf16.mxu0 0
    %2291 = vmatpush1.bf16.msra.mxu0 0
    %2292 = vmatprep.subr.bf16.mxu0 0
    %2293 = vmatpush1.bf16.msra.mxu0 0
    %2294 = vmatprep.subr.bf16.mxu0 0
    %2295 = vmatpush1.bf16.msra.mxu0 0
    %2296 = vmatprep.subr.bf16.mxu0 0
    %2297 = vmatpush1.bf16.msra.mxu0 0
    %2298 = vmatprep.subr.bf16.mxu0 0
    %2299 = vmatpush1.bf16.msra.mxu0 0
    %2300 = vmatprep.subr.bf16.mxu0 0
    %2301 = vmatpush1.bf16.msra.mxu0 0
    %2302 = vmatprep.subr.bf16.mxu0 0
    %2303 = vmatpush1.bf16.msra.mxu0 0
    %2304 = vmatprep.subr.bf16.mxu0 0
    %2305 = vmatpush1.bf16.msra.mxu0 0
    %2306 = vmatprep.mubr.bf16.mxu0 0
    %2307 = vmatmul.mubr.bf16.gmra.mrb[0].mxu0 %v1792
    %v2308 = vpop.f32.mrb[0].mxu0
    %v2309 = vadd.f32 %v2269, %v2308
    %v2310 = vpop.f32.mrb[0].mxu0
    %v2311 = vpop.f32.mrb[0].mxu0
    %v2312 = vpop.f32.mrb[0].mxu0
    %2313 = vdwg.mxu0
    %v2314 = vmax.f32 %v2309, 0.0
    %v2315 = vpack.c.bf16 %v2314, %v2314
    %v2316 = vld [vmem:[%s3] sm:$0xf]
    %v2317 = vld [vmem:[%s3 + $0x4] sm:$0xf]
    %v2318 = vld [vmem:[%s3 + $0x8] sm:$0xf]
    %v2319 = vld [vmem:[%s3 + $0xc] sm:$0xf]
    %v2320 = vld [vmem:[%s3 + $0x10] sm:$0xf]
    %v2321 = vld [vmem:[%s3 + $0x14] sm:$0xf]
    %v2322 = vld [vmem:[%s3 + $0x18] sm:$0xf]
    %v2323 = vld [vmem:[%s3 + $0x1c] sm:$0xf]
    %v2324 = vld [vmem:[%s3 + $0x20] sm:$0xf]
    %v2325 = vld [vmem:[%s3 + $0x24] sm:$0xf]
    %v2326 = vld [vmem:[%s3 + $0x28] sm:$0xf]
    %v2327 = vld [vmem:[%s3 + $0x2c] sm:$0xf]
    %v2328 = vld [vmem:[%s3 + $0x30] sm:$0xf]
    %v2329 = vld [vmem:[%s3 + $0x34] sm:$0xf]
    %v2330 = vld [vmem:[%s3 + $0x38] sm:$0xf]
    %v2331 = vld [vmem:[%s3 + $0x3c] sm:$0xf]
    %v2332 = vld [vmem:[%s4] sm:$0x1]
    %v2334 = vlaneseq
    %v2335 = vshrl.u32 %v2334, 7
    %v2336 = vsub.s32 0, %v2335
    %v2337 = vrot.slane %v2332, %v2336
    %v2355 = vunpack.c.l.b16 %v2316
    %v2356 = vunpack.c.l.b16 %v2317
    %v2357 = vunpack.c.l.b16 %v2318
    %v2358 = vunpack.c.l.b16 %v2319
    %v2359 = vunpack.c.l.b16 %v2320
    %v2360 = vunpack.c.l.b16 %v2321
    %v2361 = vunpack.c.l.b16 %v2322
    %v2362 = vunpack.c.l.b16 %v2323
    %v2363 = vunpack.c.l.b16 %v2324
    %v2364 = vunpack.c.l.b16 %v2325
    %v2365 = vunpack.c.l.b16 %v2326
    %v2366 = vunpack.c.l.b16 %v2327
    %v2367 = vunpack.c.l.b16 %v2328
    %v2368 = vunpack.c.l.b16 %v2329
    %v2369 = vunpack.c.l.b16 %v2330
    %v2370 = vunpack.c.l.b16 %v2331
    %v2371 = vpack.c.b16 %v2356, %v2355
    %v2372 = vpack.c.b16 %v2358, %v2357
    %v2373 = vpack.c.b16 %v2360, %v2359
    %v2374 = vpack.c.b16 %v2362, %v2361
    %v2375 = vpack.c.b16 %v2364, %v2363
    %v2376 = vpack.c.b16 %v2366, %v2365
    %v2377 = vpack.c.b16 %v2368, %v2367
    %v2378 = vpack.c.b16 %v2370, %v2369
    %2387 = vmatprep.subr.bf16.mxu0 0
    %2388 = vmatpush1.bf16.msra.mxu0 %v2371
    %2389 = vmatprep.subr.bf16.mxu0 0
    %2390 = vmatpush1.bf16.msra.mxu0 %v2372
    %2391 = vmatprep.subr.bf16.mxu0 0
    %2392 = vmatpush1.bf16.msra.mxu0 %v2373
    %2393 = vmatprep.subr.bf16.mxu0 0
    %2394 = vmatpush1.bf16.msra.mxu0 %v2374
    %2395 = vmatprep.subr.bf16.mxu0 0
    %2396 = vmatpush1.bf16.msra.mxu0 %v2375
    %2397 = vmatprep.subr.bf16.mxu0 0
    %2398 = vmatpush1.bf16.msra.mxu0 %v2376
    %2399 = vmatprep.subr.bf16.mxu0 0
    %2400 = vmatpush1.bf16.msra.mxu0 %v2377
    %2401 = vmatprep.subr.bf16.mxu0 0
    %2402 = vmatpush1.bf16.msra.mxu0 %v2378
    %2403 = vmatprep.subr.bf16.mxu0 0
    %2404 = vmatpush1.bf16.msra.mxu0 0
    %2405 = vmatprep.subr.bf16.mxu0 0
    %2406 = vmatpush1.bf16.msra.mxu0 0
    %2407 = vmatprep.subr.bf16.mxu0 0
    %2408 = vmatpush1.bf16.msra.mxu0 0
    %2409 = vmatprep.subr.bf16.mxu0 0
    %2410 = vmatpush1.bf16.msra.mxu0 0
    %2411 = vmatprep.subr.bf16.mxu0 0
    %2412 = vmatpush1.bf16.msra.mxu0 0
    %2413 = vmatprep.subr.bf16.mxu0 0
    %2414 = vmatpush1.bf16.msra.mxu0 0
    %2415 = vmatprep.subr.bf16.mxu0 0
    %2416 = vmatpush1.bf16.msra.mxu0 0
    %2417 = vmatprep.subr.bf16.mxu0 0
    %2418 = vmatpush1.bf16.msra.mxu0 0
    %2419 = vmatprep.mubr.bf16.mxu0 0
    %2420 = vmatmul.mubr.bf16.gmra.mrb[0].mxu0 %v2315
    %v2421 = vpop.f32.mrb[0].mxu0
    %v2422 = vadd.f32 %v2337, %v2421
    %v2423 = vpop.f32.mrb[0].mxu0
    %v2424 = vpop.f32.mrb[0].mxu0
    %v2425 = vpop.f32.mrb[0].mxu0
    %2426 = vdwg.mxu0
    %2427 = vst [vmem:[#allocation2] sm:$0x3] %v2422
    // Predicated region
    $region22: #{improved_cnn_forward.3} parent=1 // pred_check
      _
    $region23: #{improved_cnn_forward.3} parent=1 // pred_check_branch
      %2429 = sbr.rel (0) target = $region25
    $region24: #{improved_cnn_forward.3} parent=1 // pred_region
      %s2431 = ssub.s32 32, 32
      %2432 = vsyncadd [#allocation3], %s2431
      %s2434 = sshll.u32 [#allocation2], 4
      %s2435 = int_to_ptr.vmem [resolvable:$true] %s2434
      %2437 = dma.vmem_to_hbm [thread:$0]  %s2435, 32, %s5, [#allocation3]
    $region25: #{improved_cnn_forward.3} parent=1 // pred_fallthru
      _
    // Predicated region
    $region26: #{improved_cnn_forward.3} parent=1 // pred_check
      _
    $region27: #{improved_cnn_forward.3} parent=1 // pred_check_branch
      %2439 = sbr.rel (0) target = $region29
    $region28: #{improved_cnn_forward.3} parent=1 // pred_region
      %2440 = dma.done [#allocation3], 32
    $region29: #{improved_cnn_forward.3} parent=1 // pred_fallthru
      _
    %2441 = vsyncpa [#allocation3], 1

// kernel: improved_cnn_forward.2
$region0: #{improved_cnn_forward.2}
  #allocation0 [shape = 'u32[]', space=smem, size = 0x4, offset = 0x4, fixed_abs, tag = 'smem constant byte address 0x4 - core index']
  #allocation1 [shape = 'u32[144,128]{1,0:T(1,128)}', space=vmem, size = 0x12000, scoped, tag = 'internal scratch']
  #allocation2 [shape = 'f32[30,30,32]{2,1,0:T(8,128)}', space=vmem, size = 0x78000, scoped, tag = 'scratch operand']
  #allocation3 [shape = 'f32[14,28,32]{2,1,0:T(8,128)}', space=vmem, size = 0x38000, scoped, tag = 'scratch operand']
  #allocation4 [shape = 'f32[288,32]{1,0:T(8,128)}', space=vmem, size = 0x24000, scoped, tag = 'scratch operand']
  #allocation5 [shape = 'bf16[224,288]{1,0:T(16,128)(2,1)}', space=vmem, size = 0x2a000, scoped, tag = 'scratch operand']
  #allocation6 [shape = 'f32[7,16,64]{2,1,0:T(8,128)}', space=vmem, size = 0xe000, scoped, tag = 'scratch operand']
  %s0 = inlined_call_operand.vmem [shape: f32[2,28,28,1], index: 0, kind: input, shape index: {}]
  %s1 = inlined_call_operand.vmem [shape: f32[9,32], index: 1, kind: input, shape index: {}]
  %s2 = inlined_call_operand.vmem [shape: f32[1,32], index: 2, kind: input, shape index: {}]
  %s3 = inlined_call_operand.vmem [shape: bf16[288,64], index: 3, kind: input, shape index: {}]
  %s4 = inlined_call_operand.vmem [shape: f32[1,64], index: 4, kind: input, shape index: {}]
  %s5 = inlined_call_operand.vmem [shape: bf16[2,7,7,64], index: 5, kind: output, shape index: {}]
  %s6 = sld [smem:[#allocation0]]
  $region53: #{improved_cnn_forward.2} parent=0
    _
  %s8 = ssub.s32 1, %s6
  %s9 = scalar_select 0, %s8, %s6
  loop: start=0, step=1, limit=4
  $region2: #{improved_cnn_forward.2} parent=0 // loop_pre_header
    _
  $region3: #{improved_cnn_forward.2} parent=0 // loop_header
    %s11 = sphi 0, %s15
    %p12 = scmp.ge.s32.totalorder %s11, 4
    %s21 = sphi 0, %s23
    %s24 = sphi 0, %s21
    %s25 = sphi 0, %s24
    %s41 = sphi 0, %s25
    %s45 = sphi 0, %s45
    %s47 = sphi 0, %s45
    %s48 = sphi 0, %s47
    %s62 = sphi 0, %s48
    %s66 = sphi 0, %s66
    %s68 = sphi 0, %s66
    %s69 = sphi 0, %s68
    %s83 = sphi 0, %s69
    %s87 = sphi 0, %s87
    %s89 = sphi 0, %s87
    %s90 = sphi 0, %s89
    %s104 = sphi 0, %s90
    %s108 = sphi 0, %s108
    %s110 = sphi 0, %s108
    %s111 = sphi 0, %s110
    %s125 = sphi 0, %s111
    %s131 = sphi 0, %s133
    %s134 = sphi 0, %s131
    %s135 = sphi 0, %s134
    %s151 = sphi 0, %s135
  $region4: #{improved_cnn_forward.2} parent=0 // loop_header_branch
    %14 = sbr.rel (%p12) target = $region8
  $region5: #{improved_cnn_forward.2} parent=0 // loop_body
    %s16 = ssub.s32 %s11, 1
    %s17 = ssub.s32 %s11, 2
    %s18 = sadd.s32 %s11, 1
    %s19 = ssub.s32 %s11, %s18
    %p20 = scmp.eq.s32.totalorder %s19, 0
    %s22 = sadd.s32 %s21, 1
    %s23 = scalar_select %p20, %s21, %s22
    %p26 = pneg %p20
    %p27 = scmp.eq.s32.totalorder %s11, 1
    %p28 = por %p26, %p27
    %p29 = scmp.ne.s32.totalorder %s21, %s24
    %p30 = scmp.eq.s32.totalorder %s11, 0
    %p31 = por %p29, %p30
    %p32 = scmp.ne.s32.totalorder %s21, %s24
    %p33 = scmp.eq.s32.totalorder %s16, 1
    %p34 = por %p32, %p33
    %p35 = scmp.ne.s32.totalorder %s24, %s25
    %p36 = scmp.eq.s32.totalorder %s16, 0
    %p37 = por %p35, %p36
    %p38 = scmp.ne.s32.totalorder %s24, %s25
    %p39 = scmp.eq.s32.totalorder %s17, 1
    %p40 = por %p38, %p39
    %p42 = scmp.ne.s32.totalorder %s25, %s41
    %p43 = scmp.eq.s32.totalorder %s17, 0
    %p44 = por %p42, %p43
    %s46 = sadd.s32 %s45, 1
    %p49 = scmp.eq.s32.totalorder %s11, 1
    %p50 = scmp.ne.s32.totalorder %s45, %s47
    %p51 = scmp.eq.s32.totalorder %s11, 0
    %p52 = por %p50, %p51
    %p53 = scmp.ne.s32.totalorder %s45, %s47
    %p54 = scmp.eq.s32.totalorder %s16, 1
    %p55 = por %p53, %p54
    %p56 = scmp.ne.s32.totalorder %s47, %s48
    %p57 = scmp.eq.s32.totalorder %s16, 0
    %p58 = por %p56, %p57
    %p59 = scmp.ne.s32.totalorder %s47, %s48
    %p60 = scmp.eq.s32.totalorder %s17, 1
    %p61 = por %p59, %p60
    %p63 = scmp.ne.s32.totalorder %s48, %s62
    %p64 = scmp.eq.s32.totalorder %s17, 0
    %p65 = por %p63, %p64
    %s67 = sadd.s32 %s66, 1
    %p70 = scmp.eq.s32.totalorder %s11, 1
    %p71 = scmp.ne.s32.totalorder %s66, %s68
    %p72 = scmp.eq.s32.totalorder %s11, 0
    %p73 = por %p71, %p72
    %p74 = scmp.ne.s32.totalorder %s66, %s68
    %p75 = scmp.eq.s32.totalorder %s16, 1
    %p76 = por %p74, %p75
    %p77 = scmp.ne.s32.totalorder %s68, %s69
    %p78 = scmp.eq.s32.totalorder %s16, 0
    %p79 = por %p77, %p78
    %p80 = scmp.ne.s32.totalorder %s68, %s69
    %p81 = scmp.eq.s32.totalorder %s17, 1
    %p82 = por %p80, %p81
    %p84 = scmp.ne.s32.totalorder %s69, %s83
    %p85 = scmp.eq.s32.totalorder %s17, 0
    %p86 = por %p84, %p85
    %s88 = sadd.s32 %s87, 1
    %p91 = scmp.eq.s32.totalorder %s11, 1
    %p92 = scmp.ne.s32.totalorder %s87, %s89
    %p93 = scmp.eq.s32.totalorder %s11, 0
    %p94 = por %p92, %p93
    %p95 = scmp.ne.s32.totalorder %s87, %s89
    %p96 = scmp.eq.s32.totalorder %s16, 1
    %p97 = por %p95, %p96
    %p98 = scmp.ne.s32.totalorder %s89, %s90
    %p99 = scmp.eq.s32.totalorder %s16, 0
    %p100 = por %p98, %p99
    %p101 = scmp.ne.s32.totalorder %s89, %s90
    %p102 = scmp.eq.s32.totalorder %s17, 1
    %p103 = por %p101, %p102
    %p105 = scmp.ne.s32.totalorder %s90, %s104
    %p106 = scmp.eq.s32.totalorder %s17, 0
    %p107 = por %p105, %p106
    %s109 = sadd.s32 %s108, 1
    %p112 = scmp.eq.s32.totalorder %s11, 1
    %p113 = scmp.ne.s32.totalorder %s108, %s110
    %p114 = scmp.eq.s32.totalorder %s11, 0
    %p115 = por %p113, %p114
    %p116 = scmp.ne.s32.totalorder %s108, %s110
    %p117 = scmp.eq.s32.totalorder %s16, 1
    %p118 = por %p116, %p117
    %p119 = scmp.ne.s32.totalorder %s110, %s111
    %p120 = scmp.eq.s32.totalorder %s16, 0
    %p121 = por %p119, %p120
    %p122 = scmp.ne.s32.totalorder %s110, %s111
    %p123 = scmp.eq.s32.totalorder %s17, 1
    %p124 = por %p122, %p123
    %p126 = scmp.ne.s32.totalorder %s111, %s125
    %p127 = scmp.eq.s32.totalorder %s17, 0
    %p128 = por %p126, %p127
    %s129 = ssub.s32 %s11, %s18
    %p130 = scmp.eq.s32.totalorder %s129, 0
    %s132 = sadd.s32 %s131, 1
    %s133 = scalar_select %p130, %s131, %s132
    %p136 = pneg %p130
    %p137 = scmp.eq.s32.totalorder %s11, 1
    %p138 = por %p136, %p137
    %p139 = scmp.ne.s32.totalorder %s131, %s134
    %p140 = scmp.eq.s32.totalorder %s11, 0
    %p141 = por %p139, %p140
    %p142 = scmp.ne.s32.totalorder %s131, %s134
    %p143 = scmp.eq.s32.totalorder %s16, 1
    %p144 = por %p142, %p143
    %p145 = scmp.ne.s32.totalorder %s134, %s135
    %p146 = scmp.eq.s32.totalorder %s16, 0
    %p147 = por %p145, %p146
    %p148 = scmp.ne.s32.totalorder %s134, %s135
    %p149 = scmp.eq.s32.totalorder %s17, 1
    %p150 = por %p148, %p149
    %p152 = scmp.ne.s32.totalorder %s135, %s151
    %p153 = scmp.eq.s32.totalorder %s17, 0
    %p154 = por %p152, %p153
    %p155 = scmp.le.s32.totalorder 1, %s11
    %p156 = scmp.lt.s32.totalorder %s11, 3
    %p157 = pnand %p155, %p156
    %p158 = pneg %p157
    // Predicated region
    $region9: #{improved_cnn_forward.2} parent=5 // pred_check
      _
    $region10: #{improved_cnn_forward.2} parent=5 // pred_check_branch
      %160 = sbr.rel (%p157) target = $region12
    $region11: #{improved_cnn_forward.2} parent=5 // pred_region
      %s161 = ssub.s32 %s11, 1
      // Predicated region
      $region13: #{improved_cnn_forward.2} parent=11 // pred_check
        %p162 = pneg %p58
      $region14: #{improved_cnn_forward.2} parent=11 // pred_check_branch
        %164 = sbr.rel (%p162) target = $region16
      $region15: #{improved_cnn_forward.2} parent=11 // pred_region
        _
      $region16: #{improved_cnn_forward.2} parent=11 // pred_fallthru
        _
      // Predicated region
      $region17: #{improved_cnn_forward.2} parent=11 // pred_check
        %p165 = pneg %p79
      $region18: #{improved_cnn_forward.2} parent=11 // pred_check_branch
        %167 = sbr.rel (%p165) target = $region20
      $region19: #{improved_cnn_forward.2} parent=11 // pred_region
        _
      $region20: #{improved_cnn_forward.2} parent=11 // pred_fallthru
        _
      // Predicated region
      $region21: #{improved_cnn_forward.2} parent=11 // pred_check
        %p168 = pneg %p100
      $region22: #{improved_cnn_forward.2} parent=11 // pred_check_branch
        %170 = sbr.rel (%p168) target = $region24
      $region23: #{improved_cnn_forward.2} parent=11 // pred_region
        _
      $region24: #{improved_cnn_forward.2} parent=11 // pred_fallthru
        _
      // Predicated region
      $region25: #{improved_cnn_forward.2} parent=11 // pred_check
        %p171 = pneg %p121
      $region26: #{improved_cnn_forward.2} parent=11 // pred_check_branch
        %173 = sbr.rel (%p171) target = $region28
      $region27: #{improved_cnn_forward.2} parent=11 // pred_region
        _
      $region28: #{improved_cnn_forward.2} parent=11 // pred_fallthru
        _
    $region12: #{improved_cnn_forward.2} parent=5 // pred_fallthru
      _
    %p174 = scmp.lt.s32.totalorder %s11, 2
    // Predicated region
    $region29: #{improved_cnn_forward.2} parent=5 // pred_check
      %p175 = pneg %p174
    $region30: #{improved_cnn_forward.2} parent=5 // pred_check_branch
      %177 = sbr.rel (%p175) target = $region32
    $region31: #{improved_cnn_forward.2} parent=5 // pred_region
      // Predicated region
      $region33: #{improved_cnn_forward.2} parent=31 // pred_check
        %p178 = pneg %p31
      $region34: #{improved_cnn_forward.2} parent=31 // pred_check_branch
        %180 = sbr.rel (%p178) target = $region36
      $region35: #{improved_cnn_forward.2} parent=31 // pred_region
        %p181 = scmp.lt.s32.totalorder %s11, 1
        %s182 = scalar_select %p181, %s11, 1
        %s183 = smul.addr %s182, 112
        %s184 = smul.addr %s183, 8
        %s185 = scalar_lea.vmem %s0, %s184
      $region36: #{improved_cnn_forward.2} parent=31 // pred_fallthru
        _
    $region32: #{improved_cnn_forward.2} parent=5 // pred_fallthru
      _
    %p186 = scmp.le.s32.totalorder 1, %s11
    %p187 = scmp.lt.s32.totalorder %s11, 3
    %p188 = pnand %p186, %p187
    %p189 = pneg %p188
    // Predicated region
    $region37: #{improved_cnn_forward.2} parent=5 // pred_check
      _
    $region38: #{improved_cnn_forward.2} parent=5 // pred_check_branch
      %191 = sbr.rel (%p188) target = $region40
    $region39: #{improved_cnn_forward.2} parent=5 // pred_region
      %s192 = ssub.s32 %s11, 1
      %p193 = scmp.lt.s32.totalorder %s16, 1
      %s194 = scalar_select %p193, %s16, 1
      %s195 = smul.addr %s194, 112
      %s196 = smul.addr %s195, 8
      %s197 = scalar_lea.vmem %s0, %s196
      %p198 = pneg %p37
      %p199 = pneg %p34
      %p200 = pneg %p58
      %p201 = pneg %p55
      %p202 = pneg %p79
      %p203 = pneg %p76
      %p204 = pneg %p100
      %p205 = pneg %p97
      %p206 = pneg %p121
      %p207 = pneg %p118
      %p208 = pneg %p147
      %p209 = pneg %p144
      %p210 = scmp.lt.s32.totalorder %s16, 1
      %s211 = scalar_select %p210, %s16, 1
      %s212 = smul.addr %s211, 7
      %s213 = smul.addr %s212, 4
      %s214 = scalar_lea.vmem %s5, %s213
      %p215 = scmp.lt.s32.totalorder %s16, 1
      %s216 = scalar_select %p215, %s16, 1
      %s217 = smul.addr %s216, 112
      %s218 = smul.addr %s217, 8
      %s219 = scalar_lea.vmem %s0, %s218
      %p220 = scmp.lt.s32.totalorder %s16, 1
      %s221 = scalar_select %p220, %s16, 1
      %s222 = smul.addr %s221, 7
      %s223 = smul.addr %s222, 4
      %s224 = scalar_lea.vmem %s5, %s223
      %vm226 = vcmask 261120
      %227 = vst.msk [vmem:[#allocation2] sm:$0xff] %vm226, 0.0
      %228 = vst.msk [vmem:[#allocation2 + $0x8] sm:$0xff] %vm226, 0.0
      %229 = vst.msk [vmem:[#allocation2 + $0x10] sm:$0xff] %vm226, 0.0
      %vm230 = vcmask 259072
      %231 = vst.msk [vmem:[#allocation2 + $0x18] sm:$0x3f] %vm230, 0.0
      %232 = vst.msk [vmem:[#allocation2 + $0x20] sm:$0xff] %vm226, 0.0
      %233 = vst.msk [vmem:[#allocation2 + $0x28] sm:$0xff] %vm226, 0.0
      %234 = vst.msk [vmem:[#allocation2 + $0x30] sm:$0xff] %vm226, 0.0
      %235 = vst.msk [vmem:[#allocation2 + $0x38] sm:$0x3f] %vm230, 0.0
      %236 = vst.msk [vmem:[#allocation2 + $0x40] sm:$0xff] %vm226, 0.0
      %237 = vst.msk [vmem:[#allocation2 + $0x48] sm:$0xff] %vm226, 0.0
      %238 = vst.msk [vmem:[#allocation2 + $0x50] sm:$0xff] %vm226, 0.0
      %239 = vst.msk [vmem:[#allocation2 + $0x58] sm:$0x3f] %vm230, 0.0
      %240 = vst.msk [vmem:[#allocation2 + $0x60] sm:$0xff] %vm226, 0.0
      %241 = vst.msk [vmem:[#allocation2 + $0x68] sm:$0xff] %vm226, 0.0
      %242 = vst.msk [vmem:[#allocation2 + $0x70] sm:$0xff] %vm226, 0.0
      %243 = vst.msk [vmem:[#allocation2 + $0x78] sm:$0x3f] %vm230, 0.0
      %244 = vst.msk [vmem:[#allocation2 + $0x80] sm:$0xff] %vm226, 0.0
      %245 = vst.msk [vmem:[#allocation2 + $0x88] sm:$0xff] %vm226, 0.0
      %246 = vst.msk [vmem:[#allocation2 + $0x90] sm:$0xff] %vm226, 0.0
      %247 = vst.msk [vmem:[#allocation2 + $0x98] sm:$0x3f] %vm230, 0.0
      %248 = vst.msk [vmem:[#allocation2 + $0xa0] sm:$0xff] %vm226, 0.0
      %249 = vst.msk [vmem:[#allocation2 + $0xa8] sm:$0xff] %vm226, 0.0
      %250 = vst.msk [vmem:[#allocation2 + $0xb0] sm:$0xff] %vm226, 0.0
      %251 = vst.msk [vmem:[#allocation2 + $0xb8] sm:$0x3f] %vm230, 0.0
      %252 = vst.msk [vmem:[#allocation2 + $0xc0] sm:$0xff] %vm226, 0.0
      %253 = vst.msk [vmem:[#allocation2 + $0xc8] sm:$0xff] %vm226, 0.0
      %254 = vst.msk [vmem:[#allocation2 + $0xd0] sm:$0xff] %vm226, 0.0
      %255 = vst.msk [vmem:[#allocation2 + $0xd8] sm:$0x3f] %vm230, 0.0
      %256 = vst.msk [vmem:[#allocation2 + $0xe0] sm:$0xff] %vm226, 0.0
      %257 = vst.msk [vmem:[#allocation2 + $0xe8] sm:$0xff] %vm226, 0.0
      %258 = vst.msk [vmem:[#allocation2 + $0xf0] sm:$0xff] %vm226, 0.0
      %259 = vst.msk [vmem:[#allocation2 + $0xf8] sm:$0x3f] %vm230, 0.0
      %260 = vst.msk [vmem:[#allocation2 + $0x100] sm:$0xff] %vm226, 0.0
      %261 = vst.msk [vmem:[#allocation2 + $0x108] sm:$0xff] %vm226, 0.0
      %262 = vst.msk [vmem:[#allocation2 + $0x110] sm:$0xff] %vm226, 0.0
      %263 = vst.msk [vmem:[#allocation2 + $0x118] sm:$0x3f] %vm230, 0.0
      %264 = vst.msk [vmem:[#allocation2 + $0x120] sm:$0xff] %vm226, 0.0
      %265 = vst.msk [vmem:[#allocation2 + $0x128] sm:$0xff] %vm226, 0.0
      %266 = vst.msk [vmem:[#allocation2 + $0x130] sm:$0xff] %vm226, 0.0
      %267 = vst.msk [vmem:[#allocation2 + $0x138] sm:$0x3f] %vm230, 0.0
      %268 = vst.msk [vmem:[#allocation2 + $0x140] sm:$0xff] %vm226, 0.0
      %269 = vst.msk [vmem:[#allocation2 + $0x148] sm:$0xff] %vm226, 0.0
      %270 = vst.msk [vmem:[#allocation2 + $0x150] sm:$0xff] %vm226, 0.0
      %271 = vst.msk [vmem:[#allocation2 + $0x158] sm:$0x3f] %vm230, 0.0
      %272 = vst.msk [vmem:[#allocation2 + $0x160] sm:$0xff] %vm226, 0.0
      %273 = vst.msk [vmem:[#allocation2 + $0x168] sm:$0xff] %vm226, 0.0
      %274 = vst.msk [vmem:[#allocation2 + $0x170] sm:$0xff] %vm226, 0.0
      %275 = vst.msk [vmem:[#allocation2 + $0x178] sm:$0x3f] %vm230, 0.0
      %276 = vst.msk [vmem:[#allocation2 + $0x180] sm:$0xff] %vm226, 0.0
      %277 = vst.msk [vmem:[#allocation2 + $0x188] sm:$0xff] %vm226, 0.0
      %278 = vst.msk [vmem:[#allocation2 + $0x190] sm:$0xff] %vm226, 0.0
      %279 = vst.msk [vmem:[#allocation2 + $0x198] sm:$0x3f] %vm230, 0.0
      %280 = vst.msk [vmem:[#allocation2 + $0x1a0] sm:$0xff] %vm226, 0.0
      %281 = vst.msk [vmem:[#allocation2 + $0x1a8] sm:$0xff] %vm226, 0.0
      %282 = vst.msk [vmem:[#allocation2 + $0x1b0] sm:$0xff] %vm226, 0.0
      %283 = vst.msk [vmem:[#allocation2 + $0x1b8] sm:$0x3f] %vm230, 0.0
      %284 = vst.msk [vmem:[#allocation2 + $0x1c0] sm:$0xff] %vm226, 0.0
      %285 = vst.msk [vmem:[#allocation2 + $0x1c8] sm:$0xff] %vm226, 0.0
      %286 = vst.msk [vmem:[#allocation2 + $0x1d0] sm:$0xff] %vm226, 0.0
      %287 = vst.msk [vmem:[#allocation2 + $0x1d8] sm:$0x3f] %vm230, 0.0
      %288 = vst.msk [vmem:[#allocation2 + $0x1e0] sm:$0xff] %vm226, 0.0
      %289 = vst.msk [vmem:[#allocation2 + $0x1e8] sm:$0xff] %vm226, 0.0
      %290 = vst.msk [vmem:[#allocation2 + $0x1f0] sm:$0xff] %vm226, 0.0
      %291 = vst.msk [vmem:[#allocation2 + $0x1f8] sm:$0x3f] %vm230, 0.0
      %292 = vst.msk [vmem:[#allocation2 + $0x200] sm:$0xff] %vm226, 0.0
      %293 = vst.msk [vmem:[#allocation2 + $0x208] sm:$0xff] %vm226, 0.0
      %294 = vst.msk [vmem:[#allocation2 + $0x210] sm:$0xff] %vm226, 0.0
      %295 = vst.msk [vmem:[#allocation2 + $0x218] sm:$0x3f] %vm230, 0.0
      %296 = vst.msk [vmem:[#allocation2 + $0x220] sm:$0xff] %vm226, 0.0
      %297 = vst.msk [vmem:[#allocation2 + $0x228] sm:$0xff] %vm226, 0.0
      %298 = vst.msk [vmem:[#allocation2 + $0x230] sm:$0xff] %vm226, 0.0
      %299 = vst.msk [vmem:[#allocation2 + $0x238] sm:$0x3f] %vm230, 0.0
      %300 = vst.msk [vmem:[#allocation2 + $0x240] sm:$0xff] %vm226, 0.0
      %301 = vst.msk [vmem:[#allocation2 + $0x248] sm:$0xff] %vm226, 0.0
      %302 = vst.msk [vmem:[#allocation2 + $0x250] sm:$0xff] %vm226, 0.0
      %303 = vst.msk [vmem:[#allocation2 + $0x258] sm:$0x3f] %vm230, 0.0
      %304 = vst.msk [vmem:[#allocation2 + $0x260] sm:$0xff] %vm226, 0.0
      %305 = vst.msk [vmem:[#allocation2 + $0x268] sm:$0xff] %vm226, 0.0
      %306 = vst.msk [vmem:[#allocation2 + $0x270] sm:$0xff] %vm226, 0.0
      %307 = vst.msk [vmem:[#allocation2 + $0x278] sm:$0x3f] %vm230, 0.0
      %308 = vst.msk [vmem:[#allocation2 + $0x280] sm:$0xff] %vm226, 0.0
      %309 = vst.msk [vmem:[#allocation2 + $0x288] sm:$0xff] %vm226, 0.0
      %310 = vst.msk [vmem:[#allocation2 + $0x290] sm:$0xff] %vm226, 0.0
      %311 = vst.msk [vmem:[#allocation2 + $0x298] sm:$0x3f] %vm230, 0.0
      %312 = vst.msk [vmem:[#allocation2 + $0x2a0] sm:$0xff] %vm226, 0.0
      %313 = vst.msk [vmem:[#allocation2 + $0x2a8] sm:$0xff] %vm226, 0.0
      %314 = vst.msk [vmem:[#allocation2 + $0x2b0] sm:$0xff] %vm226, 0.0
      %315 = vst.msk [vmem:[#allocation2 + $0x2b8] sm:$0x3f] %vm230, 0.0
      %316 = vst.msk [vmem:[#allocation2 + $0x2c0] sm:$0xff] %vm226, 0.0
      %317 = vst.msk [vmem:[#allocation2 + $0x2c8] sm:$0xff] %vm226, 0.0
      %318 = vst.msk [vmem:[#allocation2 + $0x2d0] sm:$0xff] %vm226, 0.0
      %319 = vst.msk [vmem:[#allocation2 + $0x2d8] sm:$0x3f] %vm230, 0.0
      %320 = vst.msk [vmem:[#allocation2 + $0x2e0] sm:$0xff] %vm226, 0.0
      %321 = vst.msk [vmem:[#allocation2 + $0x2e8] sm:$0xff] %vm226, 0.0
      %322 = vst.msk [vmem:[#allocation2 + $0x2f0] sm:$0xff] %vm226, 0.0
      %323 = vst.msk [vmem:[#allocation2 + $0x2f8] sm:$0x3f] %vm230, 0.0
      %324 = vst.msk [vmem:[#allocation2 + $0x300] sm:$0xff] %vm226, 0.0
      %325 = vst.msk [vmem:[#allocation2 + $0x308] sm:$0xff] %vm226, 0.0
      %326 = vst.msk [vmem:[#allocation2 + $0x310] sm:$0xff] %vm226, 0.0
      %327 = vst.msk [vmem:[#allocation2 + $0x318] sm:$0x3f] %vm230, 0.0
      %328 = vst.msk [vmem:[#allocation2 + $0x320] sm:$0xff] %vm226, 0.0
      %329 = vst.msk [vmem:[#allocation2 + $0x328] sm:$0xff] %vm226, 0.0
      %330 = vst.msk [vmem:[#allocation2 + $0x330] sm:$0xff] %vm226, 0.0
      %331 = vst.msk [vmem:[#allocation2 + $0x338] sm:$0x3f] %vm230, 0.0
      %332 = vst.msk [vmem:[#allocation2 + $0x340] sm:$0xff] %vm226, 0.0
      %333 = vst.msk [vmem:[#allocation2 + $0x348] sm:$0xff] %vm226, 0.0
      %334 = vst.msk [vmem:[#allocation2 + $0x350] sm:$0xff] %vm226, 0.0
      %335 = vst.msk [vmem:[#allocation2 + $0x358] sm:$0x3f] %vm230, 0.0
      %336 = vst.msk [vmem:[#allocation2 + $0x360] sm:$0xff] %vm226, 0.0
      %337 = vst.msk [vmem:[#allocation2 + $0x368] sm:$0xff] %vm226, 0.0
      %338 = vst.msk [vmem:[#allocation2 + $0x370] sm:$0xff] %vm226, 0.0
      %339 = vst.msk [vmem:[#allocation2 + $0x378] sm:$0x3f] %vm230, 0.0
      %340 = vst.msk [vmem:[#allocation2 + $0x380] sm:$0xff] %vm226, 0.0
      %341 = vst.msk [vmem:[#allocation2 + $0x388] sm:$0xff] %vm226, 0.0
      %342 = vst.msk [vmem:[#allocation2 + $0x390] sm:$0xff] %vm226, 0.0
      %343 = vst.msk [vmem:[#allocation2 + $0x398] sm:$0x3f] %vm230, 0.0
      %344 = vst.msk [vmem:[#allocation2 + $0x3a0] sm:$0xff] %vm226, 0.0
      %345 = vst.msk [vmem:[#allocation2 + $0x3a8] sm:$0xff] %vm226, 0.0
      %346 = vst.msk [vmem:[#allocation2 + $0x3b0] sm:$0xff] %vm226, 0.0
      %347 = vst.msk [vmem:[#allocation2 + $0x3b8] sm:$0x3f] %vm230, 0.0
      %348 = vst.msk [vmem:[#allocation4] sm:$0xff] %vm226, 0.0
      %349 = vst.msk [vmem:[#allocation4 + $0x8] sm:$0xff] %vm226, 0.0
      %350 = vst.msk [vmem:[#allocation4 + $0x10] sm:$0xff] %vm226, 0.0
      %351 = vst.msk [vmem:[#allocation4 + $0x18] sm:$0xff] %vm226, 0.0
      %352 = vst.msk [vmem:[#allocation4 + $0x20] sm:$0xff] %vm226, 0.0
      %353 = vst.msk [vmem:[#allocation4 + $0x28] sm:$0xff] %vm226, 0.0
      %354 = vst.msk [vmem:[#allocation4 + $0x30] sm:$0xff] %vm226, 0.0
      %355 = vst.msk [vmem:[#allocation4 + $0x38] sm:$0xff] %vm226, 0.0
      %356 = vst.msk [vmem:[#allocation4 + $0x40] sm:$0xff] %vm226, 0.0
      %357 = vst.msk [vmem:[#allocation4 + $0x48] sm:$0xff] %vm226, 0.0
      %358 = vst.msk [vmem:[#allocation4 + $0x50] sm:$0xff] %vm226, 0.0
      %359 = vst.msk [vmem:[#allocation4 + $0x58] sm:$0xff] %vm226, 0.0
      %360 = vst.msk [vmem:[#allocation4 + $0x60] sm:$0xff] %vm226, 0.0
      %361 = vst.msk [vmem:[#allocation4 + $0x68] sm:$0xff] %vm226, 0.0
      %362 = vst.msk [vmem:[#allocation4 + $0x70] sm:$0xff] %vm226, 0.0
      %363 = vst.msk [vmem:[#allocation4 + $0x78] sm:$0xff] %vm226, 0.0
      %364 = vst.msk [vmem:[#allocation4 + $0x80] sm:$0xff] %vm226, 0.0
      %365 = vst.msk [vmem:[#allocation4 + $0x88] sm:$0xff] %vm226, 0.0
      %366 = vst.msk [vmem:[#allocation4 + $0x90] sm:$0xff] %vm226, 0.0
      %367 = vst.msk [vmem:[#allocation4 + $0x98] sm:$0xff] %vm226, 0.0
      %368 = vst.msk [vmem:[#allocation4 + $0xa0] sm:$0xff] %vm226, 0.0
      %369 = vst.msk [vmem:[#allocation4 + $0xa8] sm:$0xff] %vm226, 0.0
      %370 = vst.msk [vmem:[#allocation4 + $0xb0] sm:$0xff] %vm226, 0.0
      %371 = vst.msk [vmem:[#allocation4 + $0xb8] sm:$0xff] %vm226, 0.0
      %372 = vst.msk [vmem:[#allocation4 + $0xc0] sm:$0xff] %vm226, 0.0
      %373 = vst.msk [vmem:[#allocation4 + $0xc8] sm:$0xff] %vm226, 0.0
      %374 = vst.msk [vmem:[#allocation4 + $0xd0] sm:$0xff] %vm226, 0.0
      %375 = vst.msk [vmem:[#allocation4 + $0xd8] sm:$0xff] %vm226, 0.0
      %376 = vst.msk [vmem:[#allocation4 + $0xe0] sm:$0xff] %vm226, 0.0
      %377 = vst.msk [vmem:[#allocation4 + $0xe8] sm:$0xff] %vm226, 0.0
      %378 = vst.msk [vmem:[#allocation4 + $0xf0] sm:$0xff] %vm226, 0.0
      %379 = vst.msk [vmem:[#allocation4 + $0xf8] sm:$0xff] %vm226, 0.0
      %380 = vst.msk [vmem:[#allocation4 + $0x100] sm:$0xff] %vm226, 0.0
      %381 = vst.msk [vmem:[#allocation4 + $0x108] sm:$0xff] %vm226, 0.0
      %382 = vst.msk [vmem:[#allocation4 + $0x110] sm:$0xff] %vm226, 0.0
      %383 = vst.msk [vmem:[#allocation4 + $0x118] sm:$0xff] %vm226, 0.0
      %v384 = vld [vmem:[%s1] sm:$0xff]
      %v385 = vld [vmem:[%s1 + $0x8] sm:$0x1]
      %v386 = vld [vmem:[%s2] sm:$0x1]
      %v387 = vld [vmem:[%s3] sm:$0xf]
      %v388 = vld [vmem:[%s3 + $0x4] sm:$0xf]
      %v389 = vld [vmem:[%s3 + $0x8] sm:$0xf]
      %v390 = vld [vmem:[%s3 + $0xc] sm:$0xf]
      %v391 = vld [vmem:[%s3 + $0x10] sm:$0xf]
      %v392 = vld [vmem:[%s3 + $0x14] sm:$0xf]
      %v393 = vld [vmem:[%s3 + $0x18] sm:$0xf]
      %v394 = vld [vmem:[%s3 + $0x1c] sm:$0xf]
      %v395 = vld [vmem:[%s3 + $0x20] sm:$0xf]
      %v396 = vld [vmem:[%s3 + $0x24] sm:$0xf]
      %v397 = vld [vmem:[%s3 + $0x28] sm:$0xf]
      %v398 = vld [vmem:[%s3 + $0x2c] sm:$0xf]
      %v399 = vld [vmem:[%s3 + $0x30] sm:$0xf]
      %v400 = vld [vmem:[%s3 + $0x34] sm:$0xf]
      %v401 = vld [vmem:[%s3 + $0x38] sm:$0xf]
      %v402 = vld [vmem:[%s3 + $0x3c] sm:$0xf]
      %v403 = vld [vmem:[%s3 + $0x40] sm:$0xf]
      %v404 = vld [vmem:[%s3 + $0x44] sm:$0xf]
      %v405 = vld [vmem:[%s3 + $0x48] sm:$0xf]
      %v406 = vld [vmem:[%s3 + $0x4c] sm:$0xf]
      %v407 = vld [vmem:[%s3 + $0x50] sm:$0xf]
      %v408 = vld [vmem:[%s3 + $0x54] sm:$0xf]
      %v409 = vld [vmem:[%s3 + $0x58] sm:$0xf]
      %v410 = vld [vmem:[%s3 + $0x5c] sm:$0xf]
      %v411 = vld [vmem:[%s3 + $0x60] sm:$0xf]
      %v412 = vld [vmem:[%s3 + $0x64] sm:$0xf]
      %v413 = vld [vmem:[%s3 + $0x68] sm:$0xf]
      %v414 = vld [vmem:[%s3 + $0x6c] sm:$0xf]
      %v415 = vld [vmem:[%s3 + $0x70] sm:$0xf]
      %v416 = vld [vmem:[%s3 + $0x74] sm:$0xf]
      %v417 = vld [vmem:[%s3 + $0x78] sm:$0xf]
      %v418 = vld [vmem:[%s3 + $0x7c] sm:$0xf]
      %v419 = vld [vmem:[%s3 + $0x80] sm:$0xf]
      %v420 = vld [vmem:[%s3 + $0x84] sm:$0xf]
      %v421 = vld [vmem:[%s3 + $0x88] sm:$0xf]
      %v422 = vld [vmem:[%s3 + $0x8c] sm:$0xf]
      %v423 = vld [vmem:[%s4] sm:$0x1]
      %v424 = vld [vmem:[%s219] sm:$0xff]
      %v425 = vld [vmem:[%s219 + $0x8] sm:$0xff]
      %v426 = vld [vmem:[%s219 + $0x10] sm:$0xff]
      %v427 = vld [vmem:[%s219 + $0x18] sm:$0xf]
      %v428 = vld [vmem:[%s219 + $0x20] sm:$0xff]
      %v429 = vld [vmem:[%s219 + $0x28] sm:$0xff]
      %v430 = vld [vmem:[%s219 + $0x30] sm:$0xff]
      %v431 = vld [vmem:[%s219 + $0x38] sm:$0xf]
      %v432 = vld [vmem:[%s219 + $0x40] sm:$0xff]
      %v433 = vld [vmem:[%s219 + $0x48] sm:$0xff]
      %v434 = vld [vmem:[%s219 + $0x50] sm:$0xff]
      %v435 = vld [vmem:[%s219 + $0x58] sm:$0xf]
      %v436 = vld [vmem:[%s219 + $0x60] sm:$0xff]
      %v437 = vld [vmem:[%s219 + $0x68] sm:$0xff]
      %v438 = vld [vmem:[%s219 + $0x70] sm:$0xff]
      %v439 = vld [vmem:[%s219 + $0x78] sm:$0xf]
      %v440 = vld [vmem:[%s219 + $0x80] sm:$0xff]
      %v441 = vld [vmem:[%s219 + $0x88] sm:$0xff]
      %v442 = vld [vmem:[%s219 + $0x90] sm:$0xff]
      %v443 = vld [vmem:[%s219 + $0x98] sm:$0xf]
      %v444 = vld [vmem:[%s219 + $0xa0] sm:$0xff]
      %v445 = vld [vmem:[%s219 + $0xa8] sm:$0xff]
      %v446 = vld [vmem:[%s219 + $0xb0] sm:$0xff]
      %v447 = vld [vmem:[%s219 + $0xb8] sm:$0xf]
      %v448 = vld [vmem:[%s219 + $0xc0] sm:$0xff]
      %v449 = vld [vmem:[%s219 + $0xc8] sm:$0xff]
      %v450 = vld [vmem:[%s219 + $0xd0] sm:$0xff]
      %v451 = vld [vmem:[%s219 + $0xd8] sm:$0xf]
      %v452 = vld [vmem:[%s219 + $0xe0] sm:$0xff]
      %v453 = vld [vmem:[%s219 + $0xe8] sm:$0xff]
      %v454 = vld [vmem:[%s219 + $0xf0] sm:$0xff]
      %v455 = vld [vmem:[%s219 + $0xf8] sm:$0xf]
      %v456 = vld [vmem:[%s219 + $0x100] sm:$0xff]
      %v457 = vld [vmem:[%s219 + $0x108] sm:$0xff]
      %v458 = vld [vmem:[%s219 + $0x110] sm:$0xff]
      %v459 = vld [vmem:[%s219 + $0x118] sm:$0xf]
      %v460 = vld [vmem:[%s219 + $0x120] sm:$0xff]
      %v461 = vld [vmem:[%s219 + $0x128] sm:$0xff]
      %v462 = vld [vmem:[%s219 + $0x130] sm:$0xff]
      %v463 = vld [vmem:[%s219 + $0x138] sm:$0xf]
      %v464 = vld [vmem:[%s219 + $0x140] sm:$0xff]
      %v465 = vld [vmem:[%s219 + $0x148] sm:$0xff]
      %v466 = vld [vmem:[%s219 + $0x150] sm:$0xff]
      %v467 = vld [vmem:[%s219 + $0x158] sm:$0xf]
      %v468 = vld [vmem:[%s219 + $0x160] sm:$0xff]
      %v469 = vld [vmem:[%s219 + $0x168] sm:$0xff]
      %v470 = vld [vmem:[%s219 + $0x170] sm:$0xff]
      %v471 = vld [vmem:[%s219 + $0x178] sm:$0xf]
      %v472 = vld [vmem:[%s219 + $0x180] sm:$0xff]
      %v473 = vld [vmem:[%s219 + $0x188] sm:$0xff]
      %v474 = vld [vmem:[%s219 + $0x190] sm:$0xff]
      %v475 = vld [vmem:[%s219 + $0x198] sm:$0xf]
      %v476 = vld [vmem:[%s219 + $0x1a0] sm:$0xff]
      %v477 = vld [vmem:[%s219 + $0x1a8] sm:$0xff]
      %v478 = vld [vmem:[%s219 + $0x1b0] sm:$0xff]
      %v479 = vld [vmem:[%s219 + $0x1b8] sm:$0xf]
      %v480 = vld [vmem:[%s219 + $0x1c0] sm:$0xff]
      %v481 = vld [vmem:[%s219 + $0x1c8] sm:$0xff]
      %v482 = vld [vmem:[%s219 + $0x1d0] sm:$0xff]
      %v483 = vld [vmem:[%s219 + $0x1d8] sm:$0xf]
      %v484 = vld [vmem:[%s219 + $0x1e0] sm:$0xff]
      %v485 = vld [vmem:[%s219 + $0x1e8] sm:$0xff]
      %v486 = vld [vmem:[%s219 + $0x1f0] sm:$0xff]
      %v487 = vld [vmem:[%s219 + $0x1f8] sm:$0xf]
      %v488 = vld [vmem:[%s219 + $0x200] sm:$0xff]
      %v489 = vld [vmem:[%s219 + $0x208] sm:$0xff]
      %v490 = vld [vmem:[%s219 + $0x210] sm:$0xff]
      %v491 = vld [vmem:[%s219 + $0x218] sm:$0xf]
      %v492 = vld [vmem:[%s219 + $0x220] sm:$0xff]
      %v493 = vld [vmem:[%s219 + $0x228] sm:$0xff]
      %v494 = vld [vmem:[%s219 + $0x230] sm:$0xff]
      %v495 = vld [vmem:[%s219 + $0x238] sm:$0xf]
      %v496 = vld [vmem:[%s219 + $0x240] sm:$0xff]
      %v497 = vld [vmem:[%s219 + $0x248] sm:$0xff]
      %v498 = vld [vmem:[%s219 + $0x250] sm:$0xff]
      %v499 = vld [vmem:[%s219 + $0x258] sm:$0xf]
      %v500 = vld [vmem:[%s219 + $0x260] sm:$0xff]
      %v501 = vld [vmem:[%s219 + $0x268] sm:$0xff]
      %v502 = vld [vmem:[%s219 + $0x270] sm:$0xff]
      %v503 = vld [vmem:[%s219 + $0x278] sm:$0xf]
      %v504 = vld [vmem:[%s219 + $0x280] sm:$0xff]
      %v505 = vld [vmem:[%s219 + $0x288] sm:$0xff]
      %v506 = vld [vmem:[%s219 + $0x290] sm:$0xff]
      %v507 = vld [vmem:[%s219 + $0x298] sm:$0xf]
      %v508 = vld [vmem:[%s219 + $0x2a0] sm:$0xff]
      %v509 = vld [vmem:[%s219 + $0x2a8] sm:$0xff]
      %v510 = vld [vmem:[%s219 + $0x2b0] sm:$0xff]
      %v511 = vld [vmem:[%s219 + $0x2b8] sm:$0xf]
      %v512 = vld [vmem:[%s219 + $0x2c0] sm:$0xff]
      %v513 = vld [vmem:[%s219 + $0x2c8] sm:$0xff]
      %v514 = vld [vmem:[%s219 + $0x2d0] sm:$0xff]
      %v515 = vld [vmem:[%s219 + $0x2d8] sm:$0xf]
      %v516 = vld [vmem:[%s219 + $0x2e0] sm:$0xff]
      %v517 = vld [vmem:[%s219 + $0x2e8] sm:$0xff]
      %v518 = vld [vmem:[%s219 + $0x2f0] sm:$0xff]
      %v519 = vld [vmem:[%s219 + $0x2f8] sm:$0xf]
      %v520 = vld [vmem:[%s219 + $0x300] sm:$0xff]
      %v521 = vld [vmem:[%s219 + $0x308] sm:$0xff]
      %v522 = vld [vmem:[%s219 + $0x310] sm:$0xff]
      %v523 = vld [vmem:[%s219 + $0x318] sm:$0xf]
      %v524 = vld [vmem:[%s219 + $0x320] sm:$0xff]
      %v525 = vld [vmem:[%s219 + $0x328] sm:$0xff]
      %v526 = vld [vmem:[%s219 + $0x330] sm:$0xff]
      %v527 = vld [vmem:[%s219 + $0x338] sm:$0xf]
      %v528 = vld [vmem:[%s219 + $0x340] sm:$0xff]
      %v529 = vld [vmem:[%s219 + $0x348] sm:$0xff]
      %v530 = vld [vmem:[%s219 + $0x350] sm:$0xff]
      %v531 = vld [vmem:[%s219 + $0x358] sm:$0xf]
      %v532 = vld [vmem:[%s219 + $0x360] sm:$0xff]
      %v533 = vld [vmem:[%s219 + $0x368] sm:$0xff]
      %v534 = vld [vmem:[%s219 + $0x370] sm:$0xff]
      %v535 = vld [vmem:[%s219 + $0x378] sm:$0xf]
      %537 = vset.pattern.permute.xlu0 0
      %538 = vperm.xlu0 %537, %v424
      %v539 = vpop.permute.xlu0 %538
      %542 = vset.pattern.permute.xlu0 0
      %543 = vperm.xlu0 %542, %v425
      %v544 = vpop.permute.xlu0 %543
      %547 = vset.pattern.permute.xlu0 0
      %548 = vperm.xlu0 %547, %v426
      %v549 = vpop.permute.xlu0 %548
      %552 = vset.pattern.permute.xlu0 0
      %553 = vperm.xlu0 %552, %v427
      %v554 = vpop.permute.xlu0 %553
      %557 = vset.pattern.permute.xlu0 0
      %558 = vperm.xlu0 %557, %v428
      %v559 = vpop.permute.xlu0 %558
      %562 = vset.pattern.permute.xlu0 0
      %563 = vperm.xlu0 %562, %v429
      %v564 = vpop.permute.xlu0 %563
      %567 = vset.pattern.permute.xlu0 0
      %568 = vperm.xlu0 %567, %v430
      %v569 = vpop.permute.xlu0 %568
      %572 = vset.pattern.permute.xlu0 0
      %573 = vperm.xlu0 %572, %v431
      %v574 = vpop.permute.xlu0 %573
      %577 = vset.pattern.permute.xlu0 0
      %578 = vperm.xlu0 %577, %v432
      %v579 = vpop.permute.xlu0 %578
      %582 = vset.pattern.permute.xlu0 0
      %583 = vperm.xlu0 %582, %v433
      %v584 = vpop.permute.xlu0 %583
      %587 = vset.pattern.permute.xlu0 0
      %588 = vperm.xlu0 %587, %v434
      %v589 = vpop.permute.xlu0 %588
      %592 = vset.pattern.permute.xlu0 0
      %593 = vperm.xlu0 %592, %v435
      %v594 = vpop.permute.xlu0 %593
      %597 = vset.pattern.permute.xlu0 0
      %598 = vperm.xlu0 %597, %v436
      %v599 = vpop.permute.xlu0 %598
      %602 = vset.pattern.permute.xlu0 0
      %603 = vperm.xlu0 %602, %v437
      %v604 = vpop.permute.xlu0 %603
      %607 = vset.pattern.permute.xlu0 0
      %608 = vperm.xlu0 %607, %v438
      %v609 = vpop.permute.xlu0 %608
      %612 = vset.pattern.permute.xlu0 0
      %613 = vperm.xlu0 %612, %v439
      %v614 = vpop.permute.xlu0 %613
      %617 = vset.pattern.permute.xlu0 0
      %618 = vperm.xlu0 %617, %v440
      %v619 = vpop.permute.xlu0 %618
      %622 = vset.pattern.permute.xlu0 0
      %623 = vperm.xlu0 %622, %v441
      %v624 = vpop.permute.xlu0 %623
      %627 = vset.pattern.permute.xlu0 0
      %628 = vperm.xlu0 %627, %v442
      %v629 = vpop.permute.xlu0 %628
      %632 = vset.pattern.permute.xlu0 0
      %633 = vperm.xlu0 %632, %v443
      %v634 = vpop.permute.xlu0 %633
      %637 = vset.pattern.permute.xlu0 0
      %638 = vperm.xlu0 %637, %v444
      %v639 = vpop.permute.xlu0 %638
      %642 = vset.pattern.permute.xlu0 0
      %643 = vperm.xlu0 %642, %v445
      %v644 = vpop.permute.xlu0 %643
      %647 = vset.pattern.permute.xlu0 0
      %648 = vperm.xlu0 %647, %v446
      %v649 = vpop.permute.xlu0 %648
      %652 = vset.pattern.permute.xlu0 0
      %653 = vperm.xlu0 %652, %v447
      %v654 = vpop.permute.xlu0 %653
      %657 = vset.pattern.permute.xlu0 0
      %658 = vperm.xlu0 %657, %v448
      %v659 = vpop.permute.xlu0 %658
      %662 = vset.pattern.permute.xlu0 0
      %663 = vperm.xlu0 %662, %v449
      %v664 = vpop.permute.xlu0 %663
      %667 = vset.pattern.permute.xlu0 0
      %668 = vperm.xlu0 %667, %v450
      %v669 = vpop.permute.xlu0 %668
      %672 = vset.pattern.permute.xlu0 0
      %673 = vperm.xlu0 %672, %v451
      %v674 = vpop.permute.xlu0 %673
      %677 = vset.pattern.permute.xlu0 0
      %678 = vperm.xlu0 %677, %v452
      %v679 = vpop.permute.xlu0 %678
      %682 = vset.pattern.permute.xlu0 0
      %683 = vperm.xlu0 %682, %v453
      %v684 = vpop.permute.xlu0 %683
      %687 = vset.pattern.permute.xlu0 0
      %688 = vperm.xlu0 %687, %v454
      %v689 = vpop.permute.xlu0 %688
      %692 = vset.pattern.permute.xlu0 0
      %693 = vperm.xlu0 %692, %v455
      %v694 = vpop.permute.xlu0 %693
      %697 = vset.pattern.permute.xlu0 0
      %698 = vperm.xlu0 %697, %v456
      %v699 = vpop.permute.xlu0 %698
      %702 = vset.pattern.permute.xlu0 0
      %703 = vperm.xlu0 %702, %v457
      %v704 = vpop.permute.xlu0 %703
      %707 = vset.pattern.permute.xlu0 0
      %708 = vperm.xlu0 %707, %v458
      %v709 = vpop.permute.xlu0 %708
      %712 = vset.pattern.permute.xlu0 0
      %713 = vperm.xlu0 %712, %v459
      %v714 = vpop.permute.xlu0 %713
      %717 = vset.pattern.permute.xlu0 0
      %718 = vperm.xlu0 %717, %v460
      %v719 = vpop.permute.xlu0 %718
      %722 = vset.pattern.permute.xlu0 0
      %723 = vperm.xlu0 %722, %v461
      %v724 = vpop.permute.xlu0 %723
      %727 = vset.pattern.permute.xlu0 0
      %728 = vperm.xlu0 %727, %v462
      %v729 = vpop.permute.xlu0 %728
      %732 = vset.pattern.permute.xlu0 0
      %733 = vperm.xlu0 %732, %v463
      %v734 = vpop.permute.xlu0 %733
      %737 = vset.pattern.permute.xlu0 0
      %738 = vperm.xlu0 %737, %v464
      %v739 = vpop.permute.xlu0 %738
      %742 = vset.pattern.permute.xlu0 0
      %743 = vperm.xlu0 %742, %v465
      %v744 = vpop.permute.xlu0 %743
      %747 = vset.pattern.permute.xlu0 0
      %748 = vperm.xlu0 %747, %v466
      %v749 = vpop.permute.xlu0 %748
      %752 = vset.pattern.permute.xlu0 0
      %753 = vperm.xlu0 %752, %v467
      %v754 = vpop.permute.xlu0 %753
      %757 = vset.pattern.permute.xlu0 0
      %758 = vperm.xlu0 %757, %v468
      %v759 = vpop.permute.xlu0 %758
      %762 = vset.pattern.permute.xlu0 0
      %763 = vperm.xlu0 %762, %v469
      %v764 = vpop.permute.xlu0 %763
      %767 = vset.pattern.permute.xlu0 0
      %768 = vperm.xlu0 %767, %v470
      %v769 = vpop.permute.xlu0 %768
      %772 = vset.pattern.permute.xlu0 0
      %773 = vperm.xlu0 %772, %v471
      %v774 = vpop.permute.xlu0 %773
      %777 = vset.pattern.permute.xlu0 0
      %778 = vperm.xlu0 %777, %v472
      %v779 = vpop.permute.xlu0 %778
      %782 = vset.pattern.permute.xlu0 0
      %783 = vperm.xlu0 %782, %v473
      %v784 = vpop.permute.xlu0 %783
      %787 = vset.pattern.permute.xlu0 0
      %788 = vperm.xlu0 %787, %v474
      %v789 = vpop.permute.xlu0 %788
      %792 = vset.pattern.permute.xlu0 0
      %793 = vperm.xlu0 %792, %v475
      %v794 = vpop.permute.xlu0 %793
      %797 = vset.pattern.permute.xlu0 0
      %798 = vperm.xlu0 %797, %v476
      %v799 = vpop.permute.xlu0 %798
      %802 = vset.pattern.permute.xlu0 0
      %803 = vperm.xlu0 %802, %v477
      %v804 = vpop.permute.xlu0 %803
      %807 = vset.pattern.permute.xlu0 0
      %808 = vperm.xlu0 %807, %v478
      %v809 = vpop.permute.xlu0 %808
      %812 = vset.pattern.permute.xlu0 0
      %813 = vperm.xlu0 %812, %v479
      %v814 = vpop.permute.xlu0 %813
      %817 = vset.pattern.permute.xlu0 0
      %818 = vperm.xlu0 %817, %v480
      %v819 = vpop.permute.xlu0 %818
      %822 = vset.pattern.permute.xlu0 0
      %823 = vperm.xlu0 %822, %v481
      %v824 = vpop.permute.xlu0 %823
      %827 = vset.pattern.permute.xlu0 0
      %828 = vperm.xlu0 %827, %v482
      %v829 = vpop.permute.xlu0 %828
      %832 = vset.pattern.permute.xlu0 0
      %833 = vperm.xlu0 %832, %v483
      %v834 = vpop.permute.xlu0 %833
      %837 = vset.pattern.permute.xlu0 0
      %838 = vperm.xlu0 %837, %v484
      %v839 = vpop.permute.xlu0 %838
      %842 = vset.pattern.permute.xlu0 0
      %843 = vperm.xlu0 %842, %v485
      %v844 = vpop.permute.xlu0 %843
      %847 = vset.pattern.permute.xlu0 0
      %848 = vperm.xlu0 %847, %v486
      %v849 = vpop.permute.xlu0 %848
      %852 = vset.pattern.permute.xlu0 0
      %853 = vperm.xlu0 %852, %v487
      %v854 = vpop.permute.xlu0 %853
      %857 = vset.pattern.permute.xlu0 0
      %858 = vperm.xlu0 %857, %v488
      %v859 = vpop.permute.xlu0 %858
      %862 = vset.pattern.permute.xlu0 0
      %863 = vperm.xlu0 %862, %v489
      %v864 = vpop.permute.xlu0 %863
      %867 = vset.pattern.permute.xlu0 0
      %868 = vperm.xlu0 %867, %v490
      %v869 = vpop.permute.xlu0 %868
      %872 = vset.pattern.permute.xlu0 0
      %873 = vperm.xlu0 %872, %v491
      %v874 = vpop.permute.xlu0 %873
      %877 = vset.pattern.permute.xlu0 0
      %878 = vperm.xlu0 %877, %v492
      %v879 = vpop.permute.xlu0 %878
      %882 = vset.pattern.permute.xlu0 0
      %883 = vperm.xlu0 %882, %v493
      %v884 = vpop.permute.xlu0 %883
      %887 = vset.pattern.permute.xlu0 0
      %888 = vperm.xlu0 %887, %v494
      %v889 = vpop.permute.xlu0 %888
      %892 = vset.pattern.permute.xlu0 0
      %893 = vperm.xlu0 %892, %v495
      %v894 = vpop.permute.xlu0 %893
      %897 = vset.pattern.permute.xlu0 0
      %898 = vperm.xlu0 %897, %v496
      %v899 = vpop.permute.xlu0 %898
      %902 = vset.pattern.permute.xlu0 0
      %903 = vperm.xlu0 %902, %v497
      %v904 = vpop.permute.xlu0 %903
      %907 = vset.pattern.permute.xlu0 0
      %908 = vperm.xlu0 %907, %v498
      %v909 = vpop.permute.xlu0 %908
      %912 = vset.pattern.permute.xlu0 0
      %913 = vperm.xlu0 %912, %v499
      %v914 = vpop.permute.xlu0 %913
      %917 = vset.pattern.permute.xlu0 0
      %918 = vperm.xlu0 %917, %v500
      %v919 = vpop.permute.xlu0 %918
      %922 = vset.pattern.permute.xlu0 0
      %923 = vperm.xlu0 %922, %v501
      %v924 = vpop.permute.xlu0 %923
      %927 = vset.pattern.permute.xlu0 0
      %928 = vperm.xlu0 %927, %v502
      %v929 = vpop.permute.xlu0 %928
      %932 = vset.pattern.permute.xlu0 0
      %933 = vperm.xlu0 %932, %v503
      %v934 = vpop.permute.xlu0 %933
      %937 = vset.pattern.permute.xlu0 0
      %938 = vperm.xlu0 %937, %v504
      %v939 = vpop.permute.xlu0 %938
      %942 = vset.pattern.permute.xlu0 0
      %943 = vperm.xlu0 %942, %v505
      %v944 = vpop.permute.xlu0 %943
      %947 = vset.pattern.permute.xlu0 0
      %948 = vperm.xlu0 %947, %v506
      %v949 = vpop.permute.xlu0 %948
      %952 = vset.pattern.permute.xlu0 0
      %953 = vperm.xlu0 %952, %v507
      %v954 = vpop.permute.xlu0 %953
      %957 = vset.pattern.permute.xlu0 0
      %958 = vperm.xlu0 %957, %v508
      %v959 = vpop.permute.xlu0 %958
      %962 = vset.pattern.permute.xlu0 0
      %963 = vperm.xlu0 %962, %v509
      %v964 = vpop.permute.xlu0 %963
      %967 = vset.pattern.permute.xlu0 0
      %968 = vperm.xlu0 %967, %v510
      %v969 = vpop.permute.xlu0 %968
      %972 = vset.pattern.permute.xlu0 0
      %973 = vperm.xlu0 %972, %v511
      %v974 = vpop.permute.xlu0 %973
      %977 = vset.pattern.permute.xlu0 0
      %978 = vperm.xlu0 %977, %v512
      %v979 = vpop.permute.xlu0 %978
      %982 = vset.pattern.permute.xlu0 0
      %983 = vperm.xlu0 %982, %v513
      %v984 = vpop.permute.xlu0 %983
      %987 = vset.pattern.permute.xlu0 0
      %988 = vperm.xlu0 %987, %v514
      %v989 = vpop.permute.xlu0 %988
      %992 = vset.pattern.permute.xlu0 0
      %993 = vperm.xlu0 %992, %v515
      %v994 = vpop.permute.xlu0 %993
      %997 = vset.pattern.permute.xlu0 0
      %998 = vperm.xlu0 %997, %v516
      %v999 = vpop.permute.xlu0 %998
      %1002 = vset.pattern.permute.xlu0 0
      %1003 = vperm.xlu0 %1002, %v517
      %v1004 = vpop.permute.xlu0 %1003
      %1007 = vset.pattern.permute.xlu0 0
      %1008 = vperm.xlu0 %1007, %v518
      %v1009 = vpop.permute.xlu0 %1008
      %1012 = vset.pattern.permute.xlu0 0
      %1013 = vperm.xlu0 %1012, %v519
      %v1014 = vpop.permute.xlu0 %1013
      %1017 = vset.pattern.permute.xlu0 0
      %1018 = vperm.xlu0 %1017, %v520
      %v1019 = vpop.permute.xlu0 %1018
      %1022 = vset.pattern.permute.xlu0 0
      %1023 = vperm.xlu0 %1022, %v521
      %v1024 = vpop.permute.xlu0 %1023
      %1027 = vset.pattern.permute.xlu0 0
      %1028 = vperm.xlu0 %1027, %v522
      %v1029 = vpop.permute.xlu0 %1028
      %1032 = vset.pattern.permute.xlu0 0
      %1033 = vperm.xlu0 %1032, %v523
      %v1034 = vpop.permute.xlu0 %1033
      %1037 = vset.pattern.permute.xlu0 0
      %1038 = vperm.xlu0 %1037, %v524
      %v1039 = vpop.permute.xlu0 %1038
      %1042 = vset.pattern.permute.xlu0 0
      %1043 = vperm.xlu0 %1042, %v525
      %v1044 = vpop.permute.xlu0 %1043
      %1047 = vset.pattern.permute.xlu0 0
      %1048 = vperm.xlu0 %1047, %v526
      %v1049 = vpop.permute.xlu0 %1048
      %1052 = vset.pattern.permute.xlu0 0
      %1053 = vperm.xlu0 %1052, %v527
      %v1054 = vpop.permute.xlu0 %1053
      %1057 = vset.pattern.permute.xlu0 0
      %1058 = vperm.xlu0 %1057, %v528
      %v1059 = vpop.permute.xlu0 %1058
      %1062 = vset.pattern.permute.xlu0 0
      %1063 = vperm.xlu0 %1062, %v529
      %v1064 = vpop.permute.xlu0 %1063
      %1067 = vset.pattern.permute.xlu0 0
      %1068 = vperm.xlu0 %1067, %v530
      %v1069 = vpop.permute.xlu0 %1068
      %1072 = vset.pattern.permute.xlu0 0
      %1073 = vperm.xlu0 %1072, %v531
      %v1074 = vpop.permute.xlu0 %1073
      %1077 = vset.pattern.permute.xlu0 0
      %1078 = vperm.xlu0 %1077, %v532
      %v1079 = vpop.permute.xlu0 %1078
      %1082 = vset.pattern.permute.xlu0 0
      %1083 = vperm.xlu0 %1082, %v533
      %v1084 = vpop.permute.xlu0 %1083
      %1087 = vset.pattern.permute.xlu0 0
      %1088 = vperm.xlu0 %1087, %v534
      %v1089 = vpop.permute.xlu0 %1088
      %1092 = vset.pattern.permute.xlu0 0
      %1093 = vperm.xlu0 %1092, %v535
      %v1094 = vpop.permute.xlu0 %1093
      %s1096 = scalar_lea.vmem [#allocation2], 32
      %1097 = vst.msk [vmem:[%s1096 + $0x1] sm:$0xff] %vm226, %v539
      %1098 = vst.msk [vmem:[%s1096 + $0x9] sm:$0xff] %vm226, %v544
      %1099 = vst.msk [vmem:[%s1096 + $0x11] sm:$0xff] %vm226, %v549
      %vm1100 = vcmask 257024
      %1101 = vst.msk [vmem:[%s1096 + $0x19] sm:$0xf] %vm1100, %v554
      %1102 = vst.msk [vmem:[%s1096 + $0x21] sm:$0xff] %vm226, %v559
      %1103 = vst.msk [vmem:[%s1096 + $0x29] sm:$0xff] %vm226, %v564
      %1104 = vst.msk [vmem:[%s1096 + $0x31] sm:$0xff] %vm226, %v569
      %1105 = vst.msk [vmem:[%s1096 + $0x39] sm:$0xf] %vm1100, %v574
      %1106 = vst.msk [vmem:[%s1096 + $0x41] sm:$0xff] %vm226, %v579
      %1107 = vst.msk [vmem:[%s1096 + $0x49] sm:$0xff] %vm226, %v584
      %1108 = vst.msk [vmem:[%s1096 + $0x51] sm:$0xff] %vm226, %v589
      %1109 = vst.msk [vmem:[%s1096 + $0x59] sm:$0xf] %vm1100, %v594
      %1110 = vst.msk [vmem:[%s1096 + $0x61] sm:$0xff] %vm226, %v599
      %1111 = vst.msk [vmem:[%s1096 + $0x69] sm:$0xff] %vm226, %v604
      %1112 = vst.msk [vmem:[%s1096 + $0x71] sm:$0xff] %vm226, %v609
      %1113 = vst.msk [vmem:[%s1096 + $0x79] sm:$0xf] %vm1100, %v614
      %1114 = vst.msk [vmem:[%s1096 + $0x81] sm:$0xff] %vm226, %v619
      %1115 = vst.msk [vmem:[%s1096 + $0x89] sm:$0xff] %vm226, %v624
      %1116 = vst.msk [vmem:[%s1096 + $0x91] sm:$0xff] %vm226, %v629
      %1117 = vst.msk [vmem:[%s1096 + $0x99] sm:$0xf] %vm1100, %v634
      %1118 = vst.msk [vmem:[%s1096 + $0xa1] sm:$0xff] %vm226, %v639
      %1119 = vst.msk [vmem:[%s1096 + $0xa9] sm:$0xff] %vm226, %v644
      %1120 = vst.msk [vmem:[%s1096 + $0xb1] sm:$0xff] %vm226, %v649
      %1121 = vst.msk [vmem:[%s1096 + $0xb9] sm:$0xf] %vm1100, %v654
      %1122 = vst.msk [vmem:[%s1096 + $0xc1] sm:$0xff] %vm226, %v659
      %1123 = vst.msk [vmem:[%s1096 + $0xc9] sm:$0xff] %vm226, %v664
      %1124 = vst.msk [vmem:[%s1096 + $0xd1] sm:$0xff] %vm226, %v669
      %1125 = vst.msk [vmem:[%s1096 + $0xd9] sm:$0xf] %vm1100, %v674
      %1126 = vst.msk [vmem:[%s1096 + $0xe1] sm:$0xff] %vm226, %v679
      %1127 = vst.msk [vmem:[%s1096 + $0xe9] sm:$0xff] %vm226, %v684
      %1128 = vst.msk [vmem:[%s1096 + $0xf1] sm:$0xff] %vm226, %v689
      %1129 = vst.msk [vmem:[%s1096 + $0xf9] sm:$0xf] %vm1100, %v694
      %1130 = vst.msk [vmem:[%s1096 + $0x101] sm:$0xff] %vm226, %v699
      %1131 = vst.msk [vmem:[%s1096 + $0x109] sm:$0xff] %vm226, %v704
      %1132 = vst.msk [vmem:[%s1096 + $0x111] sm:$0xff] %vm226, %v709
      %1133 = vst.msk [vmem:[%s1096 + $0x119] sm:$0xf] %vm1100, %v714
      %1134 = vst.msk [vmem:[%s1096 + $0x121] sm:$0xff] %vm226, %v719
      %1135 = vst.msk [vmem:[%s1096 + $0x129] sm:$0xff] %vm226, %v724
      %1136 = vst.msk [vmem:[%s1096 + $0x131] sm:$0xff] %vm226, %v729
      %1137 = vst.msk [vmem:[%s1096 + $0x139] sm:$0xf] %vm1100, %v734
      %1138 = vst.msk [vmem:[%s1096 + $0x141] sm:$0xff] %vm226, %v739
      %1139 = vst.msk [vmem:[%s1096 + $0x149] sm:$0xff] %vm226, %v744
      %1140 = vst.msk [vmem:[%s1096 + $0x151] sm:$0xff] %vm226, %v749
      %1141 = vst.msk [vmem:[%s1096 + $0x159] sm:$0xf] %vm1100, %v754
      %1142 = vst.msk [vmem:[%s1096 + $0x161] sm:$0xff] %vm226, %v759
      %1143 = vst.msk [vmem:[%s1096 + $0x169] sm:$0xff] %vm226, %v764
      %1144 = vst.msk [vmem:[%s1096 + $0x171] sm:$0xff] %vm226, %v769
      %1145 = vst.msk [vmem:[%s1096 + $0x179] sm:$0xf] %vm1100, %v774
      %1146 = vst.msk [vmem:[%s1096 + $0x181] sm:$0xff] %vm226, %v779
      %1147 = vst.msk [vmem:[%s1096 + $0x189] sm:$0xff] %vm226, %v784
      %1148 = vst.msk [vmem:[%s1096 + $0x191] sm:$0xff] %vm226, %v789
      %1149 = vst.msk [vmem:[%s1096 + $0x199] sm:$0xf] %vm1100, %v794
      %1150 = vst.msk [vmem:[%s1096 + $0x1a1] sm:$0xff] %vm226, %v799
      %1151 = vst.msk [vmem:[%s1096 + $0x1a9] sm:$0xff] %vm226, %v804
      %1152 = vst.msk [vmem:[%s1096 + $0x1b1] sm:$0xff] %vm226, %v809
      %1153 = vst.msk [vmem:[%s1096 + $0x1b9] sm:$0xf] %vm1100, %v814
      %1154 = vst.msk [vmem:[%s1096 + $0x1c1] sm:$0xff] %vm226, %v819
      %1155 = vst.msk [vmem:[%s1096 + $0x1c9] sm:$0xff] %vm226, %v824
      %1156 = vst.msk [vmem:[%s1096 + $0x1d1] sm:$0xff] %vm226, %v829
      %1157 = vst.msk [vmem:[%s1096 + $0x1d9] sm:$0xf] %vm1100, %v834
      %1158 = vst.msk [vmem:[%s1096 + $0x1e1] sm:$0xff] %vm226, %v839
      %1159 = vst.msk [vmem:[%s1096 + $0x1e9] sm:$0xff] %vm226, %v844
      %1160 = vst.msk [vmem:[%s1096 + $0x1f1] sm:$0xff] %vm226, %v849
      %1161 = vst.msk [vmem:[%s1096 + $0x1f9] sm:$0xf] %vm1100, %v854
      %1162 = vst.msk [vmem:[%s1096 + $0x201] sm:$0xff] %vm226, %v859
      %1163 = vst.msk [vmem:[%s1096 + $0x209] sm:$0xff] %vm226, %v864
      %1164 = vst.msk [vmem:[%s1096 + $0x211] sm:$0xff] %vm226, %v869
      %1165 = vst.msk [vmem:[%s1096 + $0x219] sm:$0xf] %vm1100, %v874
      %1166 = vst.msk [vmem:[%s1096 + $0x221] sm:$0xff] %vm226, %v879
      %1167 = vst.msk [vmem:[%s1096 + $0x229] sm:$0xff] %vm226, %v884
      %1168 = vst.msk [vmem:[%s1096 + $0x231] sm:$0xff] %vm226, %v889
      %1169 = vst.msk [vmem:[%s1096 + $0x239] sm:$0xf] %vm1100, %v894
      %1170 = vst.msk [vmem:[%s1096 + $0x241] sm:$0xff] %vm226, %v899
      %1171 = vst.msk [vmem:[%s1096 + $0x249] sm:$0xff] %vm226, %v904
      %1172 = vst.msk [vmem:[%s1096 + $0x251] sm:$0xff] %vm226, %v909
      %1173 = vst.msk [vmem:[%s1096 + $0x259] sm:$0xf] %vm1100, %v914
      %1174 = vst.msk [vmem:[%s1096 + $0x261] sm:$0xff] %vm226, %v919
      %1175 = vst.msk [vmem:[%s1096 + $0x269] sm:$0xff] %vm226, %v924
      %1176 = vst.msk [vmem:[%s1096 + $0x271] sm:$0xff] %vm226, %v929
      %1177 = vst.msk [vmem:[%s1096 + $0x279] sm:$0xf] %vm1100, %v934
      %1178 = vst.msk [vmem:[%s1096 + $0x281] sm:$0xff] %vm226, %v939
      %1179 = vst.msk [vmem:[%s1096 + $0x289] sm:$0xff] %vm226, %v944
      %1180 = vst.msk [vmem:[%s1096 + $0x291] sm:$0xff] %vm226, %v949
      %1181 = vst.msk [vmem:[%s1096 + $0x299] sm:$0xf] %vm1100, %v954
      %1182 = vst.msk [vmem:[%s1096 + $0x2a1] sm:$0xff] %vm226, %v959
      %1183 = vst.msk [vmem:[%s1096 + $0x2a9] sm:$0xff] %vm226, %v964
      %1184 = vst.msk [vmem:[%s1096 + $0x2b1] sm:$0xff] %vm226, %v969
      %1185 = vst.msk [vmem:[%s1096 + $0x2b9] sm:$0xf] %vm1100, %v974
      %1186 = vst.msk [vmem:[%s1096 + $0x2c1] sm:$0xff] %vm226, %v979
      %1187 = vst.msk [vmem:[%s1096 + $0x2c9] sm:$0xff] %vm226, %v984
      %1188 = vst.msk [vmem:[%s1096 + $0x2d1] sm:$0xff] %vm226, %v989
      %1189 = vst.msk [vmem:[%s1096 + $0x2d9] sm:$0xf] %vm1100, %v994
      %1190 = vst.msk [vmem:[%s1096 + $0x2e1] sm:$0xff] %vm226, %v999
      %1191 = vst.msk [vmem:[%s1096 + $0x2e9] sm:$0xff] %vm226, %v1004
      %1192 = vst.msk [vmem:[%s1096 + $0x2f1] sm:$0xff] %vm226, %v1009
      %1193 = vst.msk [vmem:[%s1096 + $0x2f9] sm:$0xf] %vm1100, %v1014
      %1194 = vst.msk [vmem:[%s1096 + $0x301] sm:$0xff] %vm226, %v1019
      %1195 = vst.msk [vmem:[%s1096 + $0x309] sm:$0xff] %vm226, %v1024
      %1196 = vst.msk [vmem:[%s1096 + $0x311] sm:$0xff] %vm226, %v1029
      %1197 = vst.msk [vmem:[%s1096 + $0x319] sm:$0xf] %vm1100, %v1034
      %1198 = vst.msk [vmem:[%s1096 + $0x321] sm:$0xff] %vm226, %v1039
      %1199 = vst.msk [vmem:[%s1096 + $0x329] sm:$0xff] %vm226, %v1044
      %1200 = vst.msk [vmem:[%s1096 + $0x331] sm:$0xff] %vm226, %v1049
      %1201 = vst.msk [vmem:[%s1096 + $0x339] sm:$0xf] %vm1100, %v1054
      %1202 = vst.msk [vmem:[%s1096 + $0x341] sm:$0xff] %vm226, %v1059
      %1203 = vst.msk [vmem:[%s1096 + $0x349] sm:$0xff] %vm226, %v1064
      %1204 = vst.msk [vmem:[%s1096 + $0x351] sm:$0xff] %vm226, %v1069
      %1205 = vst.msk [vmem:[%s1096 + $0x359] sm:$0xf] %vm1100, %v1074
      %1206 = vst.msk [vmem:[%s1096 + $0x361] sm:$0xff] %vm226, %v1079
      %1207 = vst.msk [vmem:[%s1096 + $0x369] sm:$0xff] %vm226, %v1084
      %1208 = vst.msk [vmem:[%s1096 + $0x371] sm:$0xff] %vm226, %v1089
      %1209 = vst.msk [vmem:[%s1096 + $0x379] sm:$0xf] %vm1100, %v1094
      %v1210 = vld [vmem:[#allocation2] sm:$0xff]
      %v1211 = vld [vmem:[#allocation2 + $0x8] sm:$0xff]
      %v1212 = vld [vmem:[#allocation2 + $0x10] sm:$0xff]
      %v1213 = vld [vmem:[#allocation2 + $0x18] sm:$0xf]
      %v1214 = vld [vmem:[#allocation2 + $0x20] sm:$0xff]
      %v1215 = vld [vmem:[#allocation2 + $0x28] sm:$0xff]
      %v1216 = vld [vmem:[#allocation2 + $0x30] sm:$0xff]
      %v1217 = vld [vmem:[#allocation2 + $0x38] sm:$0xf]
      %v1218 = vld [vmem:[#allocation2 + $0x40] sm:$0xff]
      %v1219 = vld [vmem:[#allocation2 + $0x48] sm:$0xff]
      %v1220 = vld [vmem:[#allocation2 + $0x50] sm:$0xff]
      %v1221 = vld [vmem:[#allocation2 + $0x58] sm:$0xf]
      %v1222 = vld [vmem:[#allocation2 + $0x60] sm:$0xff]
      %v1223 = vld [vmem:[#allocation2 + $0x68] sm:$0xff]
      %v1224 = vld [vmem:[#allocation2 + $0x70] sm:$0xff]
      %v1225 = vld [vmem:[#allocation2 + $0x78] sm:$0xf]
      %v1226 = vld [vmem:[#allocation2 + $0x80] sm:$0xff]
      %v1227 = vld [vmem:[#allocation2 + $0x88] sm:$0xff]
      %v1228 = vld [vmem:[#allocation2 + $0x90] sm:$0xff]
      %v1229 = vld [vmem:[#allocation2 + $0x98] sm:$0xf]
      %v1230 = vld [vmem:[#allocation2 + $0xa0] sm:$0xff]
      %v1231 = vld [vmem:[#allocation2 + $0xa8] sm:$0xff]
      %v1232 = vld [vmem:[#allocation2 + $0xb0] sm:$0xff]
      %v1233 = vld [vmem:[#allocation2 + $0xb8] sm:$0xf]
      %v1234 = vld [vmem:[#allocation2 + $0xc0] sm:$0xff]
      %v1235 = vld [vmem:[#allocation2 + $0xc8] sm:$0xff]
      %v1236 = vld [vmem:[#allocation2 + $0xd0] sm:$0xff]
      %v1237 = vld [vmem:[#allocation2 + $0xd8] sm:$0xf]
      %v1238 = vld [vmem:[#allocation2 + $0xe0] sm:$0xff]
      %v1239 = vld [vmem:[#allocation2 + $0xe8] sm:$0xff]
      %v1240 = vld [vmem:[#allocation2 + $0xf0] sm:$0xff]
      %v1241 = vld [vmem:[#allocation2 + $0xf8] sm:$0xf]
      %v1242 = vld [vmem:[#allocation2 + $0x100] sm:$0xff]
      %v1243 = vld [vmem:[#allocation2 + $0x108] sm:$0xff]
      %v1244 = vld [vmem:[#allocation2 + $0x110] sm:$0xff]
      %v1245 = vld [vmem:[#allocation2 + $0x118] sm:$0xf]
      %v1246 = vld [vmem:[#allocation2 + $0x120] sm:$0xff]
      %v1247 = vld [vmem:[#allocation2 + $0x128] sm:$0xff]
      %v1248 = vld [vmem:[#allocation2 + $0x130] sm:$0xff]
      %v1249 = vld [vmem:[#allocation2 + $0x138] sm:$0xf]
      %v1250 = vld [vmem:[#allocation2 + $0x140] sm:$0xff]
      %v1251 = vld [vmem:[#allocation2 + $0x148] sm:$0xff]
      %v1252 = vld [vmem:[#allocation2 + $0x150] sm:$0xff]
      %v1253 = vld [vmem:[#allocation2 + $0x158] sm:$0xf]
      %v1254 = vld [vmem:[#allocation2 + $0x160] sm:$0xff]
      %v1255 = vld [vmem:[#allocation2 + $0x168] sm:$0xff]
      %v1256 = vld [vmem:[#allocation2 + $0x170] sm:$0xff]
      %v1257 = vld [vmem:[#allocation2 + $0x178] sm:$0xf]
      %v1258 = vld [vmem:[#allocation2 + $0x180] sm:$0xff]
      %v1259 = vld [vmem:[#allocation2 + $0x188] sm:$0xff]
      %v1260 = vld [vmem:[#allocation2 + $0x190] sm:$0xff]
      %v1261 = vld [vmem:[#allocation2 + $0x198] sm:$0xf]
      %v1262 = vld [vmem:[#allocation2 + $0x1a0] sm:$0xff]
      %v1263 = vld [vmem:[#allocation2 + $0x1a8] sm:$0xff]
      %v1264 = vld [vmem:[#allocation2 + $0x1b0] sm:$0xff]
      %v1265 = vld [vmem:[#allocation2 + $0x1b8] sm:$0xf]
      %v1266 = vld [vmem:[#allocation2 + $0x1c0] sm:$0xff]
      %v1267 = vld [vmem:[#allocation2 + $0x1c8] sm:$0xff]
      %v1268 = vld [vmem:[#allocation2 + $0x1d0] sm:$0xff]
      %v1269 = vld [vmem:[#allocation2 + $0x1d8] sm:$0xf]
      %v1270 = vld [vmem:[#allocation2 + $0x1e0] sm:$0xff]
      %v1271 = vld [vmem:[#allocation2 + $0x1e8] sm:$0xff]
      %v1272 = vld [vmem:[#allocation2 + $0x1f0] sm:$0xff]
      %v1273 = vld [vmem:[#allocation2 + $0x1f8] sm:$0xf]
      %v1274 = vld [vmem:[#allocation2 + $0x200] sm:$0xff]
      %v1275 = vld [vmem:[#allocation2 + $0x208] sm:$0xff]
      %v1276 = vld [vmem:[#allocation2 + $0x210] sm:$0xff]
      %v1277 = vld [vmem:[#allocation2 + $0x218] sm:$0xf]
      %v1278 = vld [vmem:[#allocation2 + $0x220] sm:$0xff]
      %v1279 = vld [vmem:[#allocation2 + $0x228] sm:$0xff]
      %v1280 = vld [vmem:[#allocation2 + $0x230] sm:$0xff]
      %v1281 = vld [vmem:[#allocation2 + $0x238] sm:$0xf]
      %v1282 = vld [vmem:[#allocation2 + $0x240] sm:$0xff]
      %v1283 = vld [vmem:[#allocation2 + $0x248] sm:$0xff]
      %v1284 = vld [vmem:[#allocation2 + $0x250] sm:$0xff]
      %v1285 = vld [vmem:[#allocation2 + $0x258] sm:$0xf]
      %v1286 = vld [vmem:[#allocation2 + $0x260] sm:$0xff]
      %v1287 = vld [vmem:[#allocation2 + $0x268] sm:$0xff]
      %v1288 = vld [vmem:[#allocation2 + $0x270] sm:$0xff]
      %v1289 = vld [vmem:[#allocation2 + $0x278] sm:$0xf]
      %v1290 = vld [vmem:[#allocation2 + $0x280] sm:$0xff]
      %v1291 = vld [vmem:[#allocation2 + $0x288] sm:$0xff]
      %v1292 = vld [vmem:[#allocation2 + $0x290] sm:$0xff]
      %v1293 = vld [vmem:[#allocation2 + $0x298] sm:$0xf]
      %v1294 = vld [vmem:[#allocation2 + $0x2a0] sm:$0xff]
      %v1295 = vld [vmem:[#allocation2 + $0x2a8] sm:$0xff]
      %v1296 = vld [vmem:[#allocation2 + $0x2b0] sm:$0xff]
      %v1297 = vld [vmem:[#allocation2 + $0x2b8] sm:$0xf]
      %v1298 = vld [vmem:[#allocation2 + $0x2c0] sm:$0xff]
      %v1299 = vld [vmem:[#allocation2 + $0x2c8] sm:$0xff]
      %v1300 = vld [vmem:[#allocation2 + $0x2d0] sm:$0xff]
      %v1301 = vld [vmem:[#allocation2 + $0x2d8] sm:$0xf]
      %v1302 = vld [vmem:[#allocation2 + $0x2e0] sm:$0xff]
      %v1303 = vld [vmem:[#allocation2 + $0x2e8] sm:$0xff]
      %v1304 = vld [vmem:[#allocation2 + $0x2f0] sm:$0xff]
      %v1305 = vld [vmem:[#allocation2 + $0x2f8] sm:$0xf]
      %v1306 = vld [vmem:[#allocation2 + $0x300] sm:$0xff]
      %v1307 = vld [vmem:[#allocation2 + $0x308] sm:$0xff]
      %v1308 = vld [vmem:[#allocation2 + $0x310] sm:$0xff]
      %v1309 = vld [vmem:[#allocation2 + $0x318] sm:$0xf]
      %v1310 = vld [vmem:[#allocation2 + $0x320] sm:$0xff]
      %v1311 = vld [vmem:[#allocation2 + $0x328] sm:$0xff]
      %v1312 = vld [vmem:[#allocation2 + $0x330] sm:$0xff]
      %v1313 = vld [vmem:[#allocation2 + $0x338] sm:$0xf]
      %v1314 = vld [vmem:[#allocation2 + $0x340] sm:$0xff]
      %v1315 = vld [vmem:[#allocation2 + $0x348] sm:$0xff]
      %v1316 = vld [vmem:[#allocation2 + $0x350] sm:$0xff]
      %v1317 = vld [vmem:[#allocation2 + $0x358] sm:$0xf]
      %v1318 = vld [vmem:[#allocation2 + $0x360] sm:$0xff]
      %v1319 = vld [vmem:[#allocation2 + $0x368] sm:$0xff]
      %v1320 = vld [vmem:[#allocation2 + $0x370] sm:$0xff]
      %v1321 = vld [vmem:[#allocation2 + $0x378] sm:$0xf]
      %v1322 = vlaneseq
      %v1323 = vshrl.u32 %v1322, 7
      %v1324 = vsub.s32 0, %v1323
      %v1325 = vrot.slane %v384, %v1324
      %v1326 = vmul.f32 %v1210, %v1325
      %v1327 = vmul.f32 %v1211, %v1325
      %v1328 = vmul.f32 %v1212, %v1325
      %v1329 = vmul.f32 %v1213, %v1325
      %v1330 = vmul.f32 %v1214, %v1325
      %v1331 = vmul.f32 %v1215, %v1325
      %v1332 = vmul.f32 %v1216, %v1325
      %v1333 = vmul.f32 %v1217, %v1325
      %v1334 = vmul.f32 %v1218, %v1325
      %v1335 = vmul.f32 %v1219, %v1325
      %v1336 = vmul.f32 %v1220, %v1325
      %v1337 = vmul.f32 %v1221, %v1325
      %v1338 = vmul.f32 %v1222, %v1325
      %v1339 = vmul.f32 %v1223, %v1325
      %v1340 = vmul.f32 %v1224, %v1325
      %v1341 = vmul.f32 %v1225, %v1325
      %v1342 = vmul.f32 %v1226, %v1325
      %v1343 = vmul.f32 %v1227, %v1325
      %v1344 = vmul.f32 %v1228, %v1325
      %v1345 = vmul.f32 %v1229, %v1325
      %v1346 = vmul.f32 %v1230, %v1325
      %v1347 = vmul.f32 %v1231, %v1325
      %v1348 = vmul.f32 %v1232, %v1325
      %v1349 = vmul.f32 %v1233, %v1325
      %v1350 = vmul.f32 %v1234, %v1325
      %v1351 = vmul.f32 %v1235, %v1325
      %v1352 = vmul.f32 %v1236, %v1325
      %v1353 = vmul.f32 %v1237, %v1325
      %v1354 = vmul.f32 %v1238, %v1325
      %v1355 = vmul.f32 %v1239, %v1325
      %v1356 = vmul.f32 %v1240, %v1325
      %v1357 = vmul.f32 %v1241, %v1325
      %v1358 = vmul.f32 %v1242, %v1325
      %v1359 = vmul.f32 %v1243, %v1325
      %v1360 = vmul.f32 %v1244, %v1325
      %v1361 = vmul.f32 %v1245, %v1325
      %v1362 = vmul.f32 %v1246, %v1325
      %v1363 = vmul.f32 %v1247, %v1325
      %v1364 = vmul.f32 %v1248, %v1325
      %v1365 = vmul.f32 %v1249, %v1325
      %v1366 = vmul.f32 %v1250, %v1325
      %v1367 = vmul.f32 %v1251, %v1325
      %v1368 = vmul.f32 %v1252, %v1325
      %v1369 = vmul.f32 %v1253, %v1325
      %v1370 = vmul.f32 %v1254, %v1325
      %v1371 = vmul.f32 %v1255, %v1325
      %v1372 = vmul.f32 %v1256, %v1325
      %v1373 = vmul.f32 %v1257, %v1325
      %v1374 = vmul.f32 %v1258, %v1325
      %v1375 = vmul.f32 %v1259, %v1325
      %v1376 = vmul.f32 %v1260, %v1325
      %v1377 = vmul.f32 %v1261, %v1325
      %v1378 = vmul.f32 %v1262, %v1325
      %v1379 = vmul.f32 %v1263, %v1325
      %v1380 = vmul.f32 %v1264, %v1325
      %v1381 = vmul.f32 %v1265, %v1325
      %v1382 = vmul.f32 %v1266, %v1325
      %v1383 = vmul.f32 %v1267, %v1325
      %v1384 = vmul.f32 %v1268, %v1325
      %v1385 = vmul.f32 %v1269, %v1325
      %v1386 = vmul.f32 %v1270, %v1325
      %v1387 = vmul.f32 %v1271, %v1325
      %v1388 = vmul.f32 %v1272, %v1325
      %v1389 = vmul.f32 %v1273, %v1325
      %v1390 = vmul.f32 %v1274, %v1325
      %v1391 = vmul.f32 %v1275, %v1325
      %v1392 = vmul.f32 %v1276, %v1325
      %v1393 = vmul.f32 %v1277, %v1325
      %v1394 = vmul.f32 %v1278, %v1325
      %v1395 = vmul.f32 %v1279, %v1325
      %v1396 = vmul.f32 %v1280, %v1325
      %v1397 = vmul.f32 %v1281, %v1325
      %v1398 = vmul.f32 %v1282, %v1325
      %v1399 = vmul.f32 %v1283, %v1325
      %v1400 = vmul.f32 %v1284, %v1325
      %v1401 = vmul.f32 %v1285, %v1325
      %v1402 = vmul.f32 %v1286, %v1325
      %v1403 = vmul.f32 %v1287, %v1325
      %v1404 = vmul.f32 %v1288, %v1325
      %v1405 = vmul.f32 %v1289, %v1325
      %v1406 = vmul.f32 %v1290, %v1325
      %v1407 = vmul.f32 %v1291, %v1325
      %v1408 = vmul.f32 %v1292, %v1325
      %v1409 = vmul.f32 %v1293, %v1325
      %v1410 = vmul.f32 %v1294, %v1325
      %v1411 = vmul.f32 %v1295, %v1325
      %v1412 = vmul.f32 %v1296, %v1325
      %v1413 = vmul.f32 %v1297, %v1325
      %v1414 = vmul.f32 %v1298, %v1325
      %v1415 = vmul.f32 %v1299, %v1325
      %v1416 = vmul.f32 %v1300, %v1325
      %v1417 = vmul.f32 %v1301, %v1325
      %v1418 = vmul.f32 %v1302, %v1325
      %v1419 = vmul.f32 %v1303, %v1325
      %v1420 = vmul.f32 %v1304, %v1325
      %v1421 = vmul.f32 %v1305, %v1325
      %v1422 = vmul.f32 %v1306, %v1325
      %v1423 = vmul.f32 %v1307, %v1325
      %v1424 = vmul.f32 %v1308, %v1325
      %v1425 = vmul.f32 %v1309, %v1325
      %v1426 = vmul.f32 %v1310, %v1325
      %v1427 = vmul.f32 %v1311, %v1325
      %v1428 = vmul.f32 %v1312, %v1325
      %v1429 = vmul.f32 %v1313, %v1325
      %v1430 = vmul.f32 %v1314, %v1325
      %v1431 = vmul.f32 %v1315, %v1325
      %v1432 = vmul.f32 %v1316, %v1325
      %v1433 = vmul.f32 %v1317, %v1325
      %v1434 = vmul.f32 %v1318, %v1325
      %v1435 = vmul.f32 %v1319, %v1325
      %v1436 = vmul.f32 %v1320, %v1325
      %v1437 = vmul.f32 %v1321, %v1325
      %v1438 = vadd.f32 %v1326, 0.0
      %v1439 = vadd.f32 %v1327, 0.0
      %v1440 = vadd.f32 %v1328, 0.0
      %v1441 = vadd.f32 %v1329, 0.0
      %v1442 = vadd.f32 %v1330, 0.0
      %v1443 = vadd.f32 %v1331, 0.0
      %v1444 = vadd.f32 %v1332, 0.0
      %v1445 = vadd.f32 %v1333, 0.0
      %v1446 = vadd.f32 %v1334, 0.0
      %v1447 = vadd.f32 %v1335, 0.0
      %v1448 = vadd.f32 %v1336, 0.0
      %v1449 = vadd.f32 %v1337, 0.0
      %v1450 = vadd.f32 %v1338, 0.0
      %v1451 = vadd.f32 %v1339, 0.0
      %v1452 = vadd.f32 %v1340, 0.0
      %v1453 = vadd.f32 %v1341, 0.0
      %v1454 = vadd.f32 %v1342, 0.0
      %v1455 = vadd.f32 %v1343, 0.0
      %v1456 = vadd.f32 %v1344, 0.0
      %v1457 = vadd.f32 %v1345, 0.0
      %v1458 = vadd.f32 %v1346, 0.0
      %v1459 = vadd.f32 %v1347, 0.0
      %v1460 = vadd.f32 %v1348, 0.0
      %v1461 = vadd.f32 %v1349, 0.0
      %v1462 = vadd.f32 %v1350, 0.0
      %v1463 = vadd.f32 %v1351, 0.0
      %v1464 = vadd.f32 %v1352, 0.0
      %v1465 = vadd.f32 %v1353, 0.0
      %v1466 = vadd.f32 %v1354, 0.0
      %v1467 = vadd.f32 %v1355, 0.0
      %v1468 = vadd.f32 %v1356, 0.0
      %v1469 = vadd.f32 %v1357, 0.0
      %v1470 = vadd.f32 %v1358, 0.0
      %v1471 = vadd.f32 %v1359, 0.0
      %v1472 = vadd.f32 %v1360, 0.0
      %v1473 = vadd.f32 %v1361, 0.0
      %v1474 = vadd.f32 %v1362, 0.0
      %v1475 = vadd.f32 %v1363, 0.0
      %v1476 = vadd.f32 %v1364, 0.0
      %v1477 = vadd.f32 %v1365, 0.0
      %v1478 = vadd.f32 %v1366, 0.0
      %v1479 = vadd.f32 %v1367, 0.0
      %v1480 = vadd.f32 %v1368, 0.0
      %v1481 = vadd.f32 %v1369, 0.0
      %v1482 = vadd.f32 %v1370, 0.0
      %v1483 = vadd.f32 %v1371, 0.0
      %v1484 = vadd.f32 %v1372, 0.0
      %v1485 = vadd.f32 %v1373, 0.0
      %v1486 = vadd.f32 %v1374, 0.0
      %v1487 = vadd.f32 %v1375, 0.0
      %v1488 = vadd.f32 %v1376, 0.0
      %v1489 = vadd.f32 %v1377, 0.0
      %v1490 = vadd.f32 %v1378, 0.0
      %v1491 = vadd.f32 %v1379, 0.0
      %v1492 = vadd.f32 %v1380, 0.0
      %v1493 = vadd.f32 %v1381, 0.0
      %v1494 = vadd.f32 %v1382, 0.0
      %v1495 = vadd.f32 %v1383, 0.0
      %v1496 = vadd.f32 %v1384, 0.0
      %v1497 = vadd.f32 %v1385, 0.0
      %v1498 = vadd.f32 %v1386, 0.0
      %v1499 = vadd.f32 %v1387, 0.0
      %v1500 = vadd.f32 %v1388, 0.0
      %v1501 = vadd.f32 %v1389, 0.0
      %v1502 = vadd.f32 %v1390, 0.0
      %v1503 = vadd.f32 %v1391, 0.0
      %v1504 = vadd.f32 %v1392, 0.0
      %v1505 = vadd.f32 %v1393, 0.0
      %v1506 = vadd.f32 %v1394, 0.0
      %v1507 = vadd.f32 %v1395, 0.0
      %v1508 = vadd.f32 %v1396, 0.0
      %v1509 = vadd.f32 %v1397, 0.0
      %v1510 = vadd.f32 %v1398, 0.0
      %v1511 = vadd.f32 %v1399, 0.0
      %v1512 = vadd.f32 %v1400, 0.0
      %v1513 = vadd.f32 %v1401, 0.0
      %v1514 = vadd.f32 %v1402, 0.0
      %v1515 = vadd.f32 %v1403, 0.0
      %v1516 = vadd.f32 %v1404, 0.0
      %v1517 = vadd.f32 %v1405, 0.0
      %v1518 = vadd.f32 %v1406, 0.0
      %v1519 = vadd.f32 %v1407, 0.0
      %v1520 = vadd.f32 %v1408, 0.0
      %v1521 = vadd.f32 %v1409, 0.0
      %v1522 = vadd.f32 %v1410, 0.0
      %v1523 = vadd.f32 %v1411, 0.0
      %v1524 = vadd.f32 %v1412, 0.0
      %v1525 = vadd.f32 %v1413, 0.0
      %v1526 = vadd.f32 %v1414, 0.0
      %v1527 = vadd.f32 %v1415, 0.0
      %v1528 = vadd.f32 %v1416, 0.0
      %v1529 = vadd.f32 %v1417, 0.0
      %v1530 = vadd.f32 %v1418, 0.0
      %v1531 = vadd.f32 %v1419, 0.0
      %v1532 = vadd.f32 %v1420, 0.0
      %v1533 = vadd.f32 %v1421, 0.0
      %v1534 = vadd.f32 %v1422, 0.0
      %v1535 = vadd.f32 %v1423, 0.0
      %v1536 = vadd.f32 %v1424, 0.0
      %v1537 = vadd.f32 %v1425, 0.0
      %v1538 = vadd.f32 %v1426, 0.0
      %v1539 = vadd.f32 %v1427, 0.0
      %v1540 = vadd.f32 %v1428, 0.0
      %v1541 = vadd.f32 %v1429, 0.0
      %v1542 = vadd.f32 %v1430, 0.0
      %v1543 = vadd.f32 %v1431, 0.0
      %v1544 = vadd.f32 %v1432, 0.0
      %v1545 = vadd.f32 %v1433, 0.0
      %v1546 = vadd.f32 %v1434, 0.0
      %v1547 = vadd.f32 %v1435, 0.0
      %v1548 = vadd.f32 %v1436, 0.0
      %v1549 = vadd.f32 %v1437, 0.0
      %v1550 = vld [vmem:[#allocation2 + $0x1] sm:$0xff]
      %v1551 = vld [vmem:[#allocation2 + $0x9] sm:$0xff]
      %v1552 = vld [vmem:[#allocation2 + $0x11] sm:$0xff]
      %v1553 = vld [vmem:[#allocation2 + $0x19] sm:$0xf]
      %v1554 = vld [vmem:[#allocation2 + $0x21] sm:$0xff]
      %v1555 = vld [vmem:[#allocation2 + $0x29] sm:$0xff]
      %v1556 = vld [vmem:[#allocation2 + $0x31] sm:$0xff]
      %v1557 = vld [vmem:[#allocation2 + $0x39] sm:$0xf]
      %v1558 = vld [vmem:[#allocation2 + $0x41] sm:$0xff]
      %v1559 = vld [vmem:[#allocation2 + $0x49] sm:$0xff]
      %v1560 = vld [vmem:[#allocation2 + $0x51] sm:$0xff]
      %v1561 = vld [vmem:[#allocation2 + $0x59] sm:$0xf]
      %v1562 = vld [vmem:[#allocation2 + $0x61] sm:$0xff]
      %v1563 = vld [vmem:[#allocation2 + $0x69] sm:$0xff]
      %v1564 = vld [vmem:[#allocation2 + $0x71] sm:$0xff]
      %v1565 = vld [vmem:[#allocation2 + $0x79] sm:$0xf]
      %v1566 = vld [vmem:[#allocation2 + $0x81] sm:$0xff]
      %v1567 = vld [vmem:[#allocation2 + $0x89] sm:$0xff]
      %v1568 = vld [vmem:[#allocation2 + $0x91] sm:$0xff]
      %v1569 = vld [vmem:[#allocation2 + $0x99] sm:$0xf]
      %v1570 = vld [vmem:[#allocation2 + $0xa1] sm:$0xff]
      %v1571 = vld [vmem:[#allocation2 + $0xa9] sm:$0xff]
      %v1572 = vld [vmem:[#allocation2 + $0xb1] sm:$0xff]
      %v1573 = vld [vmem:[#allocation2 + $0xb9] sm:$0xf]
      %v1574 = vld [vmem:[#allocation2 + $0xc1] sm:$0xff]
      %v1575 = vld [vmem:[#allocation2 + $0xc9] sm:$0xff]
      %v1576 = vld [vmem:[#allocation2 + $0xd1] sm:$0xff]
      %v1577 = vld [vmem:[#allocation2 + $0xd9] sm:$0xf]
      %v1578 = vld [vmem:[#allocation2 + $0xe1] sm:$0xff]
      %v1579 = vld [vmem:[#allocation2 + $0xe9] sm:$0xff]
      %v1580 = vld [vmem:[#allocation2 + $0xf1] sm:$0xff]
      %v1581 = vld [vmem:[#allocation2 + $0xf9] sm:$0xf]
      %v1582 = vld [vmem:[#allocation2 + $0x101] sm:$0xff]
      %v1583 = vld [vmem:[#allocation2 + $0x109] sm:$0xff]
      %v1584 = vld [vmem:[#allocation2 + $0x111] sm:$0xff]
      %v1585 = vld [vmem:[#allocation2 + $0x119] sm:$0xf]
      %v1586 = vld [vmem:[#allocation2 + $0x121] sm:$0xff]
      %v1587 = vld [vmem:[#allocation2 + $0x129] sm:$0xff]
      %v1588 = vld [vmem:[#allocation2 + $0x131] sm:$0xff]
      %v1589 = vld [vmem:[#allocation2 + $0x139] sm:$0xf]
      %v1590 = vld [vmem:[#allocation2 + $0x141] sm:$0xff]
      %v1591 = vld [vmem:[#allocation2 + $0x149] sm:$0xff]
      %v1592 = vld [vmem:[#allocation2 + $0x151] sm:$0xff]
      %v1593 = vld [vmem:[#allocation2 + $0x159] sm:$0xf]
      %v1594 = vld [vmem:[#allocation2 + $0x161] sm:$0xff]
      %v1595 = vld [vmem:[#allocation2 + $0x169] sm:$0xff]
      %v1596 = vld [vmem:[#allocation2 + $0x171] sm:$0xff]
      %v1597 = vld [vmem:[#allocation2 + $0x179] sm:$0xf]
      %v1598 = vld [vmem:[#allocation2 + $0x181] sm:$0xff]
      %v1599 = vld [vmem:[#allocation2 + $0x189] sm:$0xff]
      %v1600 = vld [vmem:[#allocation2 + $0x191] sm:$0xff]
      %v1601 = vld [vmem:[#allocation2 + $0x199] sm:$0xf]
      %v1602 = vld [vmem:[#allocation2 + $0x1a1] sm:$0xff]
      %v1603 = vld [vmem:[#allocation2 + $0x1a9] sm:$0xff]
      %v1604 = vld [vmem:[#allocation2 + $0x1b1] sm:$0xff]
      %v1605 = vld [vmem:[#allocation2 + $0x1b9] sm:$0xf]
      %v1606 = vld [vmem:[#allocation2 + $0x1c1] sm:$0xff]
      %v1607 = vld [vmem:[#allocation2 + $0x1c9] sm:$0xff]
      %v1608 = vld [vmem:[#allocation2 + $0x1d1] sm:$0xff]
      %v1609 = vld [vmem:[#allocation2 + $0x1d9] sm:$0xf]
      %v1610 = vld [vmem:[#allocation2 + $0x1e1] sm:$0xff]
      %v1611 = vld [vmem:[#allocation2 + $0x1e9] sm:$0xff]
      %v1612 = vld [vmem:[#allocation2 + $0x1f1] sm:$0xff]
      %v1613 = vld [vmem:[#allocation2 + $0x1f9] sm:$0xf]
      %v1614 = vld [vmem:[#allocation2 + $0x201] sm:$0xff]
      %v1615 = vld [vmem:[#allocation2 + $0x209] sm:$0xff]
      %v1616 = vld [vmem:[#allocation2 + $0x211] sm:$0xff]
      %v1617 = vld [vmem:[#allocation2 + $0x219] sm:$0xf]
      %v1618 = vld [vmem:[#allocation2 + $0x221] sm:$0xff]
      %v1619 = vld [vmem:[#allocation2 + $0x229] sm:$0xff]
      %v1620 = vld [vmem:[#allocation2 + $0x231] sm:$0xff]
      %v1621 = vld [vmem:[#allocation2 + $0x239] sm:$0xf]
      %v1622 = vld [vmem:[#allocation2 + $0x241] sm:$0xff]
      %v1623 = vld [vmem:[#allocation2 + $0x249] sm:$0xff]
      %v1624 = vld [vmem:[#allocation2 + $0x251] sm:$0xff]
      %v1625 = vld [vmem:[#allocation2 + $0x259] sm:$0xf]
      %v1626 = vld [vmem:[#allocation2 + $0x261] sm:$0xff]
      %v1627 = vld [vmem:[#allocation2 + $0x269] sm:$0xff]
      %v1628 = vld [vmem:[#allocation2 + $0x271] sm:$0xff]
      %v1629 = vld [vmem:[#allocation2 + $0x279] sm:$0xf]
      %v1630 = vld [vmem:[#allocation2 + $0x281] sm:$0xff]
      %v1631 = vld [vmem:[#allocation2 + $0x289] sm:$0xff]
      %v1632 = vld [vmem:[#allocation2 + $0x291] sm:$0xff]
      %v1633 = vld [vmem:[#allocation2 + $0x299] sm:$0xf]
      %v1634 = vld [vmem:[#allocation2 + $0x2a1] sm:$0xff]
      %v1635 = vld [vmem:[#allocation2 + $0x2a9] sm:$0xff]
      %v1636 = vld [vmem:[#allocation2 + $0x2b1] sm:$0xff]
      %v1637 = vld [vmem:[#allocation2 + $0x2b9] sm:$0xf]
      %v1638 = vld [vmem:[#allocation2 + $0x2c1] sm:$0xff]
      %v1639 = vld [vmem:[#allocation2 + $0x2c9] sm:$0xff]
      %v1640 = vld [vmem:[#allocation2 + $0x2d1] sm:$0xff]
      %v1641 = vld [vmem:[#allocation2 + $0x2d9] sm:$0xf]
      %v1642 = vld [vmem:[#allocation2 + $0x2e1] sm:$0xff]
      %v1643 = vld [vmem:[#allocation2 + $0x2e9] sm:$0xff]
      %v1644 = vld [vmem:[#allocation2 + $0x2f1] sm:$0xff]
      %v1645 = vld [vmem:[#allocation2 + $0x2f9] sm:$0xf]
      %v1646 = vld [vmem:[#allocation2 + $0x301] sm:$0xff]
      %v1647 = vld [vmem:[#allocation2 + $0x309] sm:$0xff]
      %v1648 = vld [vmem:[#allocation2 + $0x311] sm:$0xff]
      %v1649 = vld [vmem:[#allocation2 + $0x319] sm:$0xf]
      %v1650 = vld [vmem:[#allocation2 + $0x321] sm:$0xff]
      %v1651 = vld [vmem:[#allocation2 + $0x329] sm:$0xff]
      %v1652 = vld [vmem:[#allocation2 + $0x331] sm:$0xff]
      %v1653 = vld [vmem:[#allocation2 + $0x339] sm:$0xf]
      %v1654 = vld [vmem:[#allocation2 + $0x341] sm:$0xff]
      %v1655 = vld [vmem:[#allocation2 + $0x349] sm:$0xff]
      %v1656 = vld [vmem:[#allocation2 + $0x351] sm:$0xff]
      %v1657 = vld [vmem:[#allocation2 + $0x359] sm:$0xf]
      %v1658 = vld [vmem:[#allocation2 + $0x361] sm:$0xff]
      %v1659 = vld [vmem:[#allocation2 + $0x369] sm:$0xff]
      %v1660 = vld [vmem:[#allocation2 + $0x371] sm:$0xff]
      %v1661 = vld [vmem:[#allocation2 + $0x379] sm:$0xf]
      %v1662 = vlaneseq
      %v1663 = vshrl.u32 %v1662, 7
      %v1664 = vsub.s32 1, %v1663
      %v1665 = vrot.slane %v384, %v1664
      %v1666 = vmul.f32 %v1550, %v1665
      %v1667 = vmul.f32 %v1551, %v1665
      %v1668 = vmul.f32 %v1552, %v1665
      %v1669 = vmul.f32 %v1553, %v1665
      %v1670 = vmul.f32 %v1554, %v1665
      %v1671 = vmul.f32 %v1555, %v1665
      %v1672 = vmul.f32 %v1556, %v1665
      %v1673 = vmul.f32 %v1557, %v1665
      %v1674 = vmul.f32 %v1558, %v1665
      %v1675 = vmul.f32 %v1559, %v1665
      %v1676 = vmul.f32 %v1560, %v1665
      %v1677 = vmul.f32 %v1561, %v1665
      %v1678 = vmul.f32 %v1562, %v1665
      %v1679 = vmul.f32 %v1563, %v1665
      %v1680 = vmul.f32 %v1564, %v1665
      %v1681 = vmul.f32 %v1565, %v1665
      %v1682 = vmul.f32 %v1566, %v1665
      %v1683 = vmul.f32 %v1567, %v1665
      %v1684 = vmul.f32 %v1568, %v1665
      %v1685 = vmul.f32 %v1569, %v1665
      %v1686 = vmul.f32 %v1570, %v1665
      %v1687 = vmul.f32 %v1571, %v1665
      %v1688 = vmul.f32 %v1572, %v1665
      %v1689 = vmul.f32 %v1573, %v1665
      %v1690 = vmul.f32 %v1574, %v1665
      %v1691 = vmul.f32 %v1575, %v1665
      %v1692 = vmul.f32 %v1576, %v1665
      %v1693 = vmul.f32 %v1577, %v1665
      %v1694 = vmul.f32 %v1578, %v1665
      %v1695 = vmul.f32 %v1579, %v1665
      %v1696 = vmul.f32 %v1580, %v1665
      %v1697 = vmul.f32 %v1581, %v1665
      %v1698 = vmul.f32 %v1582, %v1665
      %v1699 = vmul.f32 %v1583, %v1665
      %v1700 = vmul.f32 %v1584, %v1665
      %v1701 = vmul.f32 %v1585, %v1665
      %v1702 = vmul.f32 %v1586, %v1665
      %v1703 = vmul.f32 %v1587, %v1665
      %v1704 = vmul.f32 %v1588, %v1665
      %v1705 = vmul.f32 %v1589, %v1665
      %v1706 = vmul.f32 %v1590, %v1665
      %v1707 = vmul.f32 %v1591, %v1665
      %v1708 = vmul.f32 %v1592, %v1665
      %v1709 = vmul.f32 %v1593, %v1665
      %v1710 = vmul.f32 %v1594, %v1665
      %v1711 = vmul.f32 %v1595, %v1665
      %v1712 = vmul.f32 %v1596, %v1665
      %v1713 = vmul.f32 %v1597, %v1665
      %v1714 = vmul.f32 %v1598, %v1665
      %v1715 = vmul.f32 %v1599, %v1665
      %v1716 = vmul.f32 %v1600, %v1665
      %v1717 = vmul.f32 %v1601, %v1665
      %v1718 = vmul.f32 %v1602, %v1665
      %v1719 = vmul.f32 %v1603, %v1665
      %v1720 = vmul.f32 %v1604, %v1665
      %v1721 = vmul.f32 %v1605, %v1665
      %v1722 = vmul.f32 %v1606, %v1665
      %v1723 = vmul.f32 %v1607, %v1665
      %v1724 = vmul.f32 %v1608, %v1665
      %v1725 = vmul.f32 %v1609, %v1665
      %v1726 = vmul.f32 %v1610, %v1665
      %v1727 = vmul.f32 %v1611, %v1665
      %v1728 = vmul.f32 %v1612, %v1665
      %v1729 = vmul.f32 %v1613, %v1665
      %v1730 = vmul.f32 %v1614, %v1665
      %v1731 = vmul.f32 %v1615, %v1665
      %v1732 = vmul.f32 %v1616, %v1665
      %v1733 = vmul.f32 %v1617, %v1665
      %v1734 = vmul.f32 %v1618, %v1665
      %v1735 = vmul.f32 %v1619, %v1665
      %v1736 = vmul.f32 %v1620, %v1665
      %v1737 = vmul.f32 %v1621, %v1665
      %v1738 = vmul.f32 %v1622, %v1665
      %v1739 = vmul.f32 %v1623, %v1665
      %v1740 = vmul.f32 %v1624, %v1665
      %v1741 = vmul.f32 %v1625, %v1665
      %v1742 = vmul.f32 %v1626, %v1665
      %v1743 = vmul.f32 %v1627, %v1665
      %v1744 = vmul.f32 %v1628, %v1665
      %v1745 = vmul.f32 %v1629, %v1665
      %v1746 = vmul.f32 %v1630, %v1665
      %v1747 = vmul.f32 %v1631, %v1665
      %v1748 = vmul.f32 %v1632, %v1665
      %v1749 = vmul.f32 %v1633, %v1665
      %v1750 = vmul.f32 %v1634, %v1665
      %v1751 = vmul.f32 %v1635, %v1665
      %v1752 = vmul.f32 %v1636, %v1665
      %v1753 = vmul.f32 %v1637, %v1665
      %v1754 = vmul.f32 %v1638, %v1665
      %v1755 = vmul.f32 %v1639, %v1665
      %v1756 = vmul.f32 %v1640, %v1665
      %v1757 = vmul.f32 %v1641, %v1665
      %v1758 = vmul.f32 %v1642, %v1665
      %v1759 = vmul.f32 %v1643, %v1665
      %v1760 = vmul.f32 %v1644, %v1665
      %v1761 = vmul.f32 %v1645, %v1665
      %v1762 = vmul.f32 %v1646, %v1665
      %v1763 = vmul.f32 %v1647, %v1665
      %v1764 = vmul.f32 %v1648, %v1665
      %v1765 = vmul.f32 %v1649, %v1665
      %v1766 = vmul.f32 %v1650, %v1665
      %v1767 = vmul.f32 %v1651, %v1665
      %v1768 = vmul.f32 %v1652, %v1665
      %v1769 = vmul.f32 %v1653, %v1665
      %v1770 = vmul.f32 %v1654, %v1665
      %v1771 = vmul.f32 %v1655, %v1665
      %v1772 = vmul.f32 %v1656, %v1665
      %v1773 = vmul.f32 %v1657, %v1665
      %v1774 = vmul.f32 %v1658, %v1665
      %v1775 = vmul.f32 %v1659, %v1665
      %v1776 = vmul.f32 %v1660, %v1665
      %v1777 = vmul.f32 %v1661, %v1665
      %v1778 = vadd.f32 %v1438, %v1666
      %v1779 = vadd.f32 %v1439, %v1667
      %v1780 = vadd.f32 %v1440, %v1668
      %v1781 = vadd.f32 %v1441, %v1669
      %v1782 = vadd.f32 %v1442, %v1670
      %v1783 = vadd.f32 %v1443, %v1671
      %v1784 = vadd.f32 %v1444, %v1672
      %v1785 = vadd.f32 %v1445, %v1673
      %v1786 = vadd.f32 %v1446, %v1674
      %v1787 = vadd.f32 %v1447, %v1675
      %v1788 = vadd.f32 %v1448, %v1676
      %v1789 = vadd.f32 %v1449, %v1677
      %v1790 = vadd.f32 %v1450, %v1678
      %v1791 = vadd.f32 %v1451, %v1679
      %v1792 = vadd.f32 %v1452, %v1680
      %v1793 = vadd.f32 %v1453, %v1681
      %v1794 = vadd.f32 %v1454, %v1682
      %v1795 = vadd.f32 %v1455, %v1683
      %v1796 = vadd.f32 %v1456, %v1684
      %v1797 = vadd.f32 %v1457, %v1685
      %v1798 = vadd.f32 %v1458, %v1686
      %v1799 = vadd.f32 %v1459, %v1687
      %v1800 = vadd.f32 %v1460, %v1688
      %v1801 = vadd.f32 %v1461, %v1689
      %v1802 = vadd.f32 %v1462, %v1690
      %v1803 = vadd.f32 %v1463, %v1691
      %v1804 = vadd.f32 %v1464, %v1692
      %v1805 = vadd.f32 %v1465, %v1693
      %v1806 = vadd.f32 %v1466, %v1694
      %v1807 = vadd.f32 %v1467, %v1695
      %v1808 = vadd.f32 %v1468, %v1696
      %v1809 = vadd.f32 %v1469, %v1697
      %v1810 = vadd.f32 %v1470, %v1698
      %v1811 = vadd.f32 %v1471, %v1699
      %v1812 = vadd.f32 %v1472, %v1700
      %v1813 = vadd.f32 %v1473, %v1701
      %v1814 = vadd.f32 %v1474, %v1702
      %v1815 = vadd.f32 %v1475, %v1703
      %v1816 = vadd.f32 %v1476, %v1704
      %v1817 = vadd.f32 %v1477, %v1705
      %v1818 = vadd.f32 %v1478, %v1706
      %v1819 = vadd.f32 %v1479, %v1707
      %v1820 = vadd.f32 %v1480, %v1708
      %v1821 = vadd.f32 %v1481, %v1709
      %v1822 = vadd.f32 %v1482, %v1710
      %v1823 = vadd.f32 %v1483, %v1711
      %v1824 = vadd.f32 %v1484, %v1712
      %v1825 = vadd.f32 %v1485, %v1713
      %v1826 = vadd.f32 %v1486, %v1714
      %v1827 = vadd.f32 %v1487, %v1715
      %v1828 = vadd.f32 %v1488, %v1716
      %v1829 = vadd.f32 %v1489, %v1717
      %v1830 = vadd.f32 %v1490, %v1718
      %v1831 = vadd.f32 %v1491, %v1719
      %v1832 = vadd.f32 %v1492, %v1720
      %v1833 = vadd.f32 %v1493, %v1721
      %v1834 = vadd.f32 %v1494, %v1722
      %v1835 = vadd.f32 %v1495, %v1723
      %v1836 = vadd.f32 %v1496, %v1724
      %v1837 = vadd.f32 %v1497, %v1725
      %v1838 = vadd.f32 %v1498, %v1726
      %v1839 = vadd.f32 %v1499, %v1727
      %v1840 = vadd.f32 %v1500, %v1728
      %v1841 = vadd.f32 %v1501, %v1729
      %v1842 = vadd.f32 %v1502, %v1730
      %v1843 = vadd.f32 %v1503, %v1731
      %v1844 = vadd.f32 %v1504, %v1732
      %v1845 = vadd.f32 %v1505, %v1733
      %v1846 = vadd.f32 %v1506, %v1734
      %v1847 = vadd.f32 %v1507, %v1735
      %v1848 = vadd.f32 %v1508, %v1736
      %v1849 = vadd.f32 %v1509, %v1737
      %v1850 = vadd.f32 %v1510, %v1738
      %v1851 = vadd.f32 %v1511, %v1739
      %v1852 = vadd.f32 %v1512, %v1740
      %v1853 = vadd.f32 %v1513, %v1741
      %v1854 = vadd.f32 %v1514, %v1742
      %v1855 = vadd.f32 %v1515, %v1743
      %v1856 = vadd.f32 %v1516, %v1744
      %v1857 = vadd.f32 %v1517, %v1745
      %v1858 = vadd.f32 %v1518, %v1746
      %v1859 = vadd.f32 %v1519, %v1747
      %v1860 = vadd.f32 %v1520, %v1748
      %v1861 = vadd.f32 %v1521, %v1749
      %v1862 = vadd.f32 %v1522, %v1750
      %v1863 = vadd.f32 %v1523, %v1751
      %v1864 = vadd.f32 %v1524, %v1752
      %v1865 = vadd.f32 %v1525, %v1753
      %v1866 = vadd.f32 %v1526, %v1754
      %v1867 = vadd.f32 %v1527, %v1755
      %v1868 = vadd.f32 %v1528, %v1756
      %v1869 = vadd.f32 %v1529, %v1757
      %v1870 = vadd.f32 %v1530, %v1758
      %v1871 = vadd.f32 %v1531, %v1759
      %v1872 = vadd.f32 %v1532, %v1760
      %v1873 = vadd.f32 %v1533, %v1761
      %v1874 = vadd.f32 %v1534, %v1762
      %v1875 = vadd.f32 %v1535, %v1763
      %v1876 = vadd.f32 %v1536, %v1764
      %v1877 = vadd.f32 %v1537, %v1765
      %v1878 = vadd.f32 %v1538, %v1766
      %v1879 = vadd.f32 %v1539, %v1767
      %v1880 = vadd.f32 %v1540, %v1768
      %v1881 = vadd.f32 %v1541, %v1769
      %v1882 = vadd.f32 %v1542, %v1770
      %v1883 = vadd.f32 %v1543, %v1771
      %v1884 = vadd.f32 %v1544, %v1772
      %v1885 = vadd.f32 %v1545, %v1773
      %v1886 = vadd.f32 %v1546, %v1774
      %v1887 = vadd.f32 %v1547, %v1775
      %v1888 = vadd.f32 %v1548, %v1776
      %v1889 = vadd.f32 %v1549, %v1777
      %v1890 = vld [vmem:[#allocation2 + $0x2] sm:$0xff]
      %v1891 = vld [vmem:[#allocation2 + $0xa] sm:$0xff]
      %v1892 = vld [vmem:[#allocation2 + $0x12] sm:$0xff]
      %v1893 = vld [vmem:[#allocation2 + $0x1a] sm:$0xf]
      %v1894 = vld [vmem:[#allocation2 + $0x22] sm:$0xff]
      %v1895 = vld [vmem:[#allocation2 + $0x2a] sm:$0xff]
      %v1896 = vld [vmem:[#allocation2 + $0x32] sm:$0xff]
      %v1897 = vld [vmem:[#allocation2 + $0x3a] sm:$0xf]
      %v1898 = vld [vmem:[#allocation2 + $0x42] sm:$0xff]
      %v1899 = vld [vmem:[#allocation2 + $0x4a] sm:$0xff]
      %v1900 = vld [vmem:[#allocation2 + $0x52] sm:$0xff]
      %v1901 = vld [vmem:[#allocation2 + $0x5a] sm:$0xf]
      %v1902 = vld [vmem:[#allocation2 + $0x62] sm:$0xff]
      %v1903 = vld [vmem:[#allocation2 + $0x6a] sm:$0xff]
      %v1904 = vld [vmem:[#allocation2 + $0x72] sm:$0xff]
      %v1905 = vld [vmem:[#allocation2 + $0x7a] sm:$0xf]
      %v1906 = vld [vmem:[#allocation2 + $0x82] sm:$0xff]
      %v1907 = vld [vmem:[#allocation2 + $0x8a] sm:$0xff]
      %v1908 = vld [vmem:[#allocation2 + $0x92] sm:$0xff]
      %v1909 = vld [vmem:[#allocation2 + $0x9a] sm:$0xf]
      %v1910 = vld [vmem:[#allocation2 + $0xa2] sm:$0xff]
      %v1911 = vld [vmem:[#allocation2 + $0xaa] sm:$0xff]
      %v1912 = vld [vmem:[#allocation2 + $0xb2] sm:$0xff]
      %v1913 = vld [vmem:[#allocation2 + $0xba] sm:$0xf]
      %v1914 = vld [vmem:[#allocation2 + $0xc2] sm:$0xff]
      %v1915 = vld [vmem:[#allocation2 + $0xca] sm:$0xff]
      %v1916 = vld [vmem:[#allocation2 + $0xd2] sm:$0xff]
      %v1917 = vld [vmem:[#allocation2 + $0xda] sm:$0xf]
      %v1918 = vld [vmem:[#allocation2 + $0xe2] sm:$0xff]
      %v1919 = vld [vmem:[#allocation2 + $0xea] sm:$0xff]
      %v1920 = vld [vmem:[#allocation2 + $0xf2] sm:$0xff]
      %v1921 = vld [vmem:[#allocation2 + $0xfa] sm:$0xf]
      %v1922 = vld [vmem:[#allocation2 + $0x102] sm:$0xff]
      %v1923 = vld [vmem:[#allocation2 + $0x10a] sm:$0xff]
      %v1924 = vld [vmem:[#allocation2 + $0x112] sm:$0xff]
      %v1925 = vld [vmem:[#allocation2 + $0x11a] sm:$0xf]
      %v1926 = vld [vmem:[#allocation2 + $0x122] sm:$0xff]
      %v1927 = vld [vmem:[#allocation2 + $0x12a] sm:$0xff]
      %v1928 = vld [vmem:[#allocation2 + $0x132] sm:$0xff]
      %v1929 = vld [vmem:[#allocation2 + $0x13a] sm:$0xf]
      %v1930 = vld [vmem:[#allocation2 + $0x142] sm:$0xff]
      %v1931 = vld [vmem:[#allocation2 + $0x14a] sm:$0xff]
      %v1932 = vld [vmem:[#allocation2 + $0x152] sm:$0xff]
      %v1933 = vld [vmem:[#allocation2 + $0x15a] sm:$0xf]
      %v1934 = vld [vmem:[#allocation2 + $0x162] sm:$0xff]
      %v1935 = vld [vmem:[#allocation2 + $0x16a] sm:$0xff]
      %v1936 = vld [vmem:[#allocation2 + $0x172] sm:$0xff]
      %v1937 = vld [vmem:[#allocation2 + $0x17a] sm:$0xf]
      %v1938 = vld [vmem:[#allocation2 + $0x182] sm:$0xff]
      %v1939 = vld [vmem:[#allocation2 + $0x18a] sm:$0xff]
      %v1940 = vld [vmem:[#allocation2 + $0x192] sm:$0xff]
      %v1941 = vld [vmem:[#allocation2 + $0x19a] sm:$0xf]
      %v1942 = vld [vmem:[#allocation2 + $0x1a2] sm:$0xff]
      %v1943 = vld [vmem:[#allocation2 + $0x1aa] sm:$0xff]
      %v1944 = vld [vmem:[#allocation2 + $0x1b2] sm:$0xff]
      %v1945 = vld [vmem:[#allocation2 + $0x1ba] sm:$0xf]
      %v1946 = vld [vmem:[#allocation2 + $0x1c2] sm:$0xff]
      %v1947 = vld [vmem:[#allocation2 + $0x1ca] sm:$0xff]
      %v1948 = vld [vmem:[#allocation2 + $0x1d2] sm:$0xff]
      %v1949 = vld [vmem:[#allocation2 + $0x1da] sm:$0xf]
      %v1950 = vld [vmem:[#allocation2 + $0x1e2] sm:$0xff]
      %v1951 = vld [vmem:[#allocation2 + $0x1ea] sm:$0xff]
      %v1952 = vld [vmem:[#allocation2 + $0x1f2] sm:$0xff]
      %v1953 = vld [vmem:[#allocation2 + $0x1fa] sm:$0xf]
      %v1954 = vld [vmem:[#allocation2 + $0x202] sm:$0xff]
      %v1955 = vld [vmem:[#allocation2 + $0x20a] sm:$0xff]
      %v1956 = vld [vmem:[#allocation2 + $0x212] sm:$0xff]
      %v1957 = vld [vmem:[#allocation2 + $0x21a] sm:$0xf]
      %v1958 = vld [vmem:[#allocation2 + $0x222] sm:$0xff]
      %v1959 = vld [vmem:[#allocation2 + $0x22a] sm:$0xff]
      %v1960 = vld [vmem:[#allocation2 + $0x232] sm:$0xff]
      %v1961 = vld [vmem:[#allocation2 + $0x23a] sm:$0xf]
      %v1962 = vld [vmem:[#allocation2 + $0x242] sm:$0xff]
      %v1963 = vld [vmem:[#allocation2 + $0x24a] sm:$0xff]
      %v1964 = vld [vmem:[#allocation2 + $0x252] sm:$0xff]
      %v1965 = vld [vmem:[#allocation2 + $0x25a] sm:$0xf]
      %v1966 = vld [vmem:[#allocation2 + $0x262] sm:$0xff]
      %v1967 = vld [vmem:[#allocation2 + $0x26a] sm:$0xff]
      %v1968 = vld [vmem:[#allocation2 + $0x272] sm:$0xff]
      %v1969 = vld [vmem:[#allocation2 + $0x27a] sm:$0xf]
      %v1970 = vld [vmem:[#allocation2 + $0x282] sm:$0xff]
      %v1971 = vld [vmem:[#allocation2 + $0x28a] sm:$0xff]
      %v1972 = vld [vmem:[#allocation2 + $0x292] sm:$0xff]
      %v1973 = vld [vmem:[#allocation2 + $0x29a] sm:$0xf]
      %v1974 = vld [vmem:[#allocation2 + $0x2a2] sm:$0xff]
      %v1975 = vld [vmem:[#allocation2 + $0x2aa] sm:$0xff]
      %v1976 = vld [vmem:[#allocation2 + $0x2b2] sm:$0xff]
      %v1977 = vld [vmem:[#allocation2 + $0x2ba] sm:$0xf]
      %v1978 = vld [vmem:[#allocation2 + $0x2c2] sm:$0xff]
      %v1979 = vld [vmem:[#allocation2 + $0x2ca] sm:$0xff]
      %v1980 = vld [vmem:[#allocation2 + $0x2d2] sm:$0xff]
      %v1981 = vld [vmem:[#allocation2 + $0x2da] sm:$0xf]
      %v1982 = vld [vmem:[#allocation2 + $0x2e2] sm:$0xff]
      %v1983 = vld [vmem:[#allocation2 + $0x2ea] sm:$0xff]
      %v1984 = vld [vmem:[#allocation2 + $0x2f2] sm:$0xff]
      %v1985 = vld [vmem:[#allocation2 + $0x2fa] sm:$0xf]
      %v1986 = vld [vmem:[#allocation2 + $0x302] sm:$0xff]
      %v1987 = vld [vmem:[#allocation2 + $0x30a] sm:$0xff]
      %v1988 = vld [vmem:[#allocation2 + $0x312] sm:$0xff]
      %v1989 = vld [vmem:[#allocation2 + $0x31a] sm:$0xf]
      %v1990 = vld [vmem:[#allocation2 + $0x322] sm:$0xff]
      %v1991 = vld [vmem:[#allocation2 + $0x32a] sm:$0xff]
      %v1992 = vld [vmem:[#allocation2 + $0x332] sm:$0xff]
      %v1993 = vld [vmem:[#allocation2 + $0x33a] sm:$0xf]
      %v1994 = vld [vmem:[#allocation2 + $0x342] sm:$0xff]
      %v1995 = vld [vmem:[#allocation2 + $0x34a] sm:$0xff]
      %v1996 = vld [vmem:[#allocation2 + $0x352] sm:$0xff]
      %v1997 = vld [vmem:[#allocation2 + $0x35a] sm:$0xf]
      %v1998 = vld [vmem:[#allocation2 + $0x362] sm:$0xff]
      %v1999 = vld [vmem:[#allocation2 + $0x36a] sm:$0xff]
      %v2000 = vld [vmem:[#allocation2 + $0x372] sm:$0xff]
      %v2001 = vld [vmem:[#allocation2 + $0x37a] sm:$0xf]
      %v2002 = vlaneseq
      %v2003 = vshrl.u32 %v2002, 7
      %v2004 = vsub.s32 2, %v2003
      %v2005 = vrot.slane %v384, %v2004
      %v2006 = vmul.f32 %v1890, %v2005
      %v2007 = vmul.f32 %v1891, %v2005
      %v2008 = vmul.f32 %v1892, %v2005
      %v2009 = vmul.f32 %v1893, %v2005
      %v2010 = vmul.f32 %v1894, %v2005
      %v2011 = vmul.f32 %v1895, %v2005
      %v2012 = vmul.f32 %v1896, %v2005
      %v2013 = vmul.f32 %v1897, %v2005
      %v2014 = vmul.f32 %v1898, %v2005
      %v2015 = vmul.f32 %v1899, %v2005
      %v2016 = vmul.f32 %v1900, %v2005
      %v2017 = vmul.f32 %v1901, %v2005
      %v2018 = vmul.f32 %v1902, %v2005
      %v2019 = vmul.f32 %v1903, %v2005
      %v2020 = vmul.f32 %v1904, %v2005
      %v2021 = vmul.f32 %v1905, %v2005
      %v2022 = vmul.f32 %v1906, %v2005
      %v2023 = vmul.f32 %v1907, %v2005
      %v2024 = vmul.f32 %v1908, %v2005
      %v2025 = vmul.f32 %v1909, %v2005
      %v2026 = vmul.f32 %v1910, %v2005
      %v2027 = vmul.f32 %v1911, %v2005
      %v2028 = vmul.f32 %v1912, %v2005
      %v2029 = vmul.f32 %v1913, %v2005
      %v2030 = vmul.f32 %v1914, %v2005
      %v2031 = vmul.f32 %v1915, %v2005
      %v2032 = vmul.f32 %v1916, %v2005
      %v2033 = vmul.f32 %v1917, %v2005
      %v2034 = vmul.f32 %v1918, %v2005
      %v2035 = vmul.f32 %v1919, %v2005
      %v2036 = vmul.f32 %v1920, %v2005
      %v2037 = vmul.f32 %v1921, %v2005
      %v2038 = vmul.f32 %v1922, %v2005
      %v2039 = vmul.f32 %v1923, %v2005
      %v2040 = vmul.f32 %v1924, %v2005
      %v2041 = vmul.f32 %v1925, %v2005
      %v2042 = vmul.f32 %v1926, %v2005
      %v2043 = vmul.f32 %v1927, %v2005
      %v2044 = vmul.f32 %v1928, %v2005
      %v2045 = vmul.f32 %v1929, %v2005
      %v2046 = vmul.f32 %v1930, %v2005
      %v2047 = vmul.f32 %v1931, %v2005
      %v2048 = vmul.f32 %v1932, %v2005
      %v2049 = vmul.f32 %v1933, %v2005
      %v2050 = vmul.f32 %v1934, %v2005
      %v2051 = vmul.f32 %v1935, %v2005
      %v2052 = vmul.f32 %v1936, %v2005
      %v2053 = vmul.f32 %v1937, %v2005
      %v2054 = vmul.f32 %v1938, %v2005
      %v2055 = vmul.f32 %v1939, %v2005
      %v2056 = vmul.f32 %v1940, %v2005
      %v2057 = vmul.f32 %v1941, %v2005
      %v2058 = vmul.f32 %v1942, %v2005
      %v2059 = vmul.f32 %v1943, %v2005
      %v2060 = vmul.f32 %v1944, %v2005
      %v2061 = vmul.f32 %v1945, %v2005
      %v2062 = vmul.f32 %v1946, %v2005
      %v2063 = vmul.f32 %v1947, %v2005
      %v2064 = vmul.f32 %v1948, %v2005
      %v2065 = vmul.f32 %v1949, %v2005
      %v2066 = vmul.f32 %v1950, %v2005
      %v2067 = vmul.f32 %v1951, %v2005
      %v2068 = vmul.f32 %v1952, %v2005
      %v2069 = vmul.f32 %v1953, %v2005
      %v2070 = vmul.f32 %v1954, %v2005
      %v2071 = vmul.f32 %v1955, %v2005
      %v2072 = vmul.f32 %v1956, %v2005
      %v2073 = vmul.f32 %v1957, %v2005
      %v2074 = vmul.f32 %v1958, %v2005
      %v2075 = vmul.f32 %v1959, %v2005
      %v2076 = vmul.f32 %v1960, %v2005
      %v2077 = vmul.f32 %v1961, %v2005
      %v2078 = vmul.f32 %v1962, %v2005
      %v2079 = vmul.f32 %v1963, %v2005
      %v2080 = vmul.f32 %v1964, %v2005
      %v2081 = vmul.f32 %v1965, %v2005
      %v2082 = vmul.f32 %v1966, %v2005
      %v2083 = vmul.f32 %v1967, %v2005
      %v2084 = vmul.f32 %v1968, %v2005
      %v2085 = vmul.f32 %v1969, %v2005
      %v2086 = vmul.f32 %v1970, %v2005
      %v2087 = vmul.f32 %v1971, %v2005
      %v2088 = vmul.f32 %v1972, %v2005
      %v2089 = vmul.f32 %v1973, %v2005
      %v2090 = vmul.f32 %v1974, %v2005
      %v2091 = vmul.f32 %v1975, %v2005
      %v2092 = vmul.f32 %v1976, %v2005
      %v2093 = vmul.f32 %v1977, %v2005
      %v2094 = vmul.f32 %v1978, %v2005
      %v2095 = vmul.f32 %v1979, %v2005
      %v2096 = vmul.f32 %v1980, %v2005
      %v2097 = vmul.f32 %v1981, %v2005
      %v2098 = vmul.f32 %v1982, %v2005
      %v2099 = vmul.f32 %v1983, %v2005
      %v2100 = vmul.f32 %v1984, %v2005
      %v2101 = vmul.f32 %v1985, %v2005
      %v2102 = vmul.f32 %v1986, %v2005
      %v2103 = vmul.f32 %v1987, %v2005
      %v2104 = vmul.f32 %v1988, %v2005
      %v2105 = vmul.f32 %v1989, %v2005
      %v2106 = vmul.f32 %v1990, %v2005
      %v2107 = vmul.f32 %v1991, %v2005
      %v2108 = vmul.f32 %v1992, %v2005
      %v2109 = vmul.f32 %v1993, %v2005
      %v2110 = vmul.f32 %v1994, %v2005
      %v2111 = vmul.f32 %v1995, %v2005
      %v2112 = vmul.f32 %v1996, %v2005
      %v2113 = vmul.f32 %v1997, %v2005
      %v2114 = vmul.f32 %v1998, %v2005
      %v2115 = vmul.f32 %v1999, %v2005
      %v2116 = vmul.f32 %v2000, %v2005
      %v2117 = vmul.f32 %v2001, %v2005
      %v2118 = vadd.f32 %v1778, %v2006
      %v2119 = vadd.f32 %v1779, %v2007
      %v2120 = vadd.f32 %v1780, %v2008
      %v2121 = vadd.f32 %v1781, %v2009
      %v2122 = vadd.f32 %v1782, %v2010
      %v2123 = vadd.f32 %v1783, %v2011
      %v2124 = vadd.f32 %v1784, %v2012
      %v2125 = vadd.f32 %v1785, %v2013
      %v2126 = vadd.f32 %v1786, %v2014
      %v2127 = vadd.f32 %v1787, %v2015
      %v2128 = vadd.f32 %v1788, %v2016
      %v2129 = vadd.f32 %v1789, %v2017
      %v2130 = vadd.f32 %v1790, %v2018
      %v2131 = vadd.f32 %v1791, %v2019
      %v2132 = vadd.f32 %v1792, %v2020
      %v2133 = vadd.f32 %v1793, %v2021
      %v2134 = vadd.f32 %v1794, %v2022
      %v2135 = vadd.f32 %v1795, %v2023
      %v2136 = vadd.f32 %v1796, %v2024
      %v2137 = vadd.f32 %v1797, %v2025
      %v2138 = vadd.f32 %v1798, %v2026
      %v2139 = vadd.f32 %v1799, %v2027
      %v2140 = vadd.f32 %v1800, %v2028
      %v2141 = vadd.f32 %v1801, %v2029
      %v2142 = vadd.f32 %v1802, %v2030
      %v2143 = vadd.f32 %v1803, %v2031
      %v2144 = vadd.f32 %v1804, %v2032
      %v2145 = vadd.f32 %v1805, %v2033
      %v2146 = vadd.f32 %v1806, %v2034
      %v2147 = vadd.f32 %v1807, %v2035
      %v2148 = vadd.f32 %v1808, %v2036
      %v2149 = vadd.f32 %v1809, %v2037
      %v2150 = vadd.f32 %v1810, %v2038
      %v2151 = vadd.f32 %v1811, %v2039
      %v2152 = vadd.f32 %v1812, %v2040
      %v2153 = vadd.f32 %v1813, %v2041
      %v2154 = vadd.f32 %v1814, %v2042
      %v2155 = vadd.f32 %v1815, %v2043
      %v2156 = vadd.f32 %v1816, %v2044
      %v2157 = vadd.f32 %v1817, %v2045
      %v2158 = vadd.f32 %v1818, %v2046
      %v2159 = vadd.f32 %v1819, %v2047
      %v2160 = vadd.f32 %v1820, %v2048
      %v2161 = vadd.f32 %v1821, %v2049
      %v2162 = vadd.f32 %v1822, %v2050
      %v2163 = vadd.f32 %v1823, %v2051
      %v2164 = vadd.f32 %v1824, %v2052
      %v2165 = vadd.f32 %v1825, %v2053
      %v2166 = vadd.f32 %v1826, %v2054
      %v2167 = vadd.f32 %v1827, %v2055
      %v2168 = vadd.f32 %v1828, %v2056
      %v2169 = vadd.f32 %v1829, %v2057
      %v2170 = vadd.f32 %v1830, %v2058
      %v2171 = vadd.f32 %v1831, %v2059
      %v2172 = vadd.f32 %v1832, %v2060
      %v2173 = vadd.f32 %v1833, %v2061
      %v2174 = vadd.f32 %v1834, %v2062
      %v2175 = vadd.f32 %v1835, %v2063
      %v2176 = vadd.f32 %v1836, %v2064
      %v2177 = vadd.f32 %v1837, %v2065
      %v2178 = vadd.f32 %v1838, %v2066
      %v2179 = vadd.f32 %v1839, %v2067
      %v2180 = vadd.f32 %v1840, %v2068
      %v2181 = vadd.f32 %v1841, %v2069
      %v2182 = vadd.f32 %v1842, %v2070
      %v2183 = vadd.f32 %v1843, %v2071
      %v2184 = vadd.f32 %v1844, %v2072
      %v2185 = vadd.f32 %v1845, %v2073
      %v2186 = vadd.f32 %v1846, %v2074
      %v2187 = vadd.f32 %v1847, %v2075
      %v2188 = vadd.f32 %v1848, %v2076
      %v2189 = vadd.f32 %v1849, %v2077
      %v2190 = vadd.f32 %v1850, %v2078
      %v2191 = vadd.f32 %v1851, %v2079
      %v2192 = vadd.f32 %v1852, %v2080
      %v2193 = vadd.f32 %v1853, %v2081
      %v2194 = vadd.f32 %v1854, %v2082
      %v2195 = vadd.f32 %v1855, %v2083
      %v2196 = vadd.f32 %v1856, %v2084
      %v2197 = vadd.f32 %v1857, %v2085
      %v2198 = vadd.f32 %v1858, %v2086
      %v2199 = vadd.f32 %v1859, %v2087
      %v2200 = vadd.f32 %v1860, %v2088
      %v2201 = vadd.f32 %v1861, %v2089
      %v2202 = vadd.f32 %v1862, %v2090
      %v2203 = vadd.f32 %v1863, %v2091
      %v2204 = vadd.f32 %v1864, %v2092
      %v2205 = vadd.f32 %v1865, %v2093
      %v2206 = vadd.f32 %v1866, %v2094
      %v2207 = vadd.f32 %v1867, %v2095
      %v2208 = vadd.f32 %v1868, %v2096
      %v2209 = vadd.f32 %v1869, %v2097
      %v2210 = vadd.f32 %v1870, %v2098
      %v2211 = vadd.f32 %v1871, %v2099
      %v2212 = vadd.f32 %v1872, %v2100
      %v2213 = vadd.f32 %v1873, %v2101
      %v2214 = vadd.f32 %v1874, %v2102
      %v2215 = vadd.f32 %v1875, %v2103
      %v2216 = vadd.f32 %v1876, %v2104
      %v2217 = vadd.f32 %v1877, %v2105
      %v2218 = vadd.f32 %v1878, %v2106
      %v2219 = vadd.f32 %v1879, %v2107
      %v2220 = vadd.f32 %v1880, %v2108
      %v2221 = vadd.f32 %v1881, %v2109
      %v2222 = vadd.f32 %v1882, %v2110
      %v2223 = vadd.f32 %v1883, %v2111
      %v2224 = vadd.f32 %v1884, %v2112
      %v2225 = vadd.f32 %v1885, %v2113
      %v2226 = vadd.f32 %v1886, %v2114
      %v2227 = vadd.f32 %v1887, %v2115
      %v2228 = vadd.f32 %v1888, %v2116
      %v2229 = vadd.f32 %v1889, %v2117
      %v2230 = vld [vmem:[%s1096] sm:$0xff]
      %v2231 = vld [vmem:[%s1096 + $0x8] sm:$0xff]
      %v2232 = vld [vmem:[%s1096 + $0x10] sm:$0xff]
      %v2233 = vld [vmem:[%s1096 + $0x18] sm:$0xf]
      %v2234 = vld [vmem:[%s1096 + $0x20] sm:$0xff]
      %v2235 = vld [vmem:[%s1096 + $0x28] sm:$0xff]
      %v2236 = vld [vmem:[%s1096 + $0x30] sm:$0xff]
      %v2237 = vld [vmem:[%s1096 + $0x38] sm:$0xf]
      %v2238 = vld [vmem:[%s1096 + $0x40] sm:$0xff]
      %v2239 = vld [vmem:[%s1096 + $0x48] sm:$0xff]
      %v2240 = vld [vmem:[%s1096 + $0x50] sm:$0xff]
      %v2241 = vld [vmem:[%s1096 + $0x58] sm:$0xf]
      %v2242 = vld [vmem:[%s1096 + $0x60] sm:$0xff]
      %v2243 = vld [vmem:[%s1096 + $0x68] sm:$0xff]
      %v2244 = vld [vmem:[%s1096 + $0x70] sm:$0xff]
      %v2245 = vld [vmem:[%s1096 + $0x78] sm:$0xf]
      %v2246 = vld [vmem:[%s1096 + $0x80] sm:$0xff]
      %v2247 = vld [vmem:[%s1096 + $0x88] sm:$0xff]
      %v2248 = vld [vmem:[%s1096 + $0x90] sm:$0xff]
      %v2249 = vld [vmem:[%s1096 + $0x98] sm:$0xf]
      %v2250 = vld [vmem:[%s1096 + $0xa0] sm:$0xff]
      %v2251 = vld [vmem:[%s1096 + $0xa8] sm:$0xff]
      %v2252 = vld [vmem:[%s1096 + $0xb0] sm:$0xff]
      %v2253 = vld [vmem:[%s1096 + $0xb8] sm:$0xf]
      %v2254 = vld [vmem:[%s1096 + $0xc0] sm:$0xff]
      %v2255 = vld [vmem:[%s1096 + $0xc8] sm:$0xff]
      %v2256 = vld [vmem:[%s1096 + $0xd0] sm:$0xff]
      %v2257 = vld [vmem:[%s1096 + $0xd8] sm:$0xf]
      %v2258 = vld [vmem:[%s1096 + $0xe0] sm:$0xff]
      %v2259 = vld [vmem:[%s1096 + $0xe8] sm:$0xff]
      %v2260 = vld [vmem:[%s1096 + $0xf0] sm:$0xff]
      %v2261 = vld [vmem:[%s1096 + $0xf8] sm:$0xf]
      %v2262 = vld [vmem:[%s1096 + $0x100] sm:$0xff]
      %v2263 = vld [vmem:[%s1096 + $0x108] sm:$0xff]
      %v2264 = vld [vmem:[%s1096 + $0x110] sm:$0xff]
      %v2265 = vld [vmem:[%s1096 + $0x118] sm:$0xf]
      %v2266 = vld [vmem:[%s1096 + $0x120] sm:$0xff]
      %v2267 = vld [vmem:[%s1096 + $0x128] sm:$0xff]
      %v2268 = vld [vmem:[%s1096 + $0x130] sm:$0xff]
      %v2269 = vld [vmem:[%s1096 + $0x138] sm:$0xf]
      %v2270 = vld [vmem:[%s1096 + $0x140] sm:$0xff]
      %v2271 = vld [vmem:[%s1096 + $0x148] sm:$0xff]
      %v2272 = vld [vmem:[%s1096 + $0x150] sm:$0xff]
      %v2273 = vld [vmem:[%s1096 + $0x158] sm:$0xf]
      %v2274 = vld [vmem:[%s1096 + $0x160] sm:$0xff]
      %v2275 = vld [vmem:[%s1096 + $0x168] sm:$0xff]
      %v2276 = vld [vmem:[%s1096 + $0x170] sm:$0xff]
      %v2277 = vld [vmem:[%s1096 + $0x178] sm:$0xf]
      %v2278 = vld [vmem:[%s1096 + $0x180] sm:$0xff]
      %v2279 = vld [vmem:[%s1096 + $0x188] sm:$0xff]
      %v2280 = vld [vmem:[%s1096 + $0x190] sm:$0xff]
      %v2281 = vld [vmem:[%s1096 + $0x198] sm:$0xf]
      %v2282 = vld [vmem:[%s1096 + $0x1a0] sm:$0xff]
      %v2283 = vld [vmem:[%s1096 + $0x1a8] sm:$0xff]
      %v2284 = vld [vmem:[%s1096 + $0x1b0] sm:$0xff]
      %v2285 = vld [vmem:[%s1096 + $0x1b8] sm:$0xf]
      %v2286 = vld [vmem:[%s1096 + $0x1c0] sm:$0xff]
      %v2287 = vld [vmem:[%s1096 + $0x1c8] sm:$0xff]
      %v2288 = vld [vmem:[%s1096 + $0x1d0] sm:$0xff]
      %v2289 = vld [vmem:[%s1096 + $0x1d8] sm:$0xf]
      %v2290 = vld [vmem:[%s1096 + $0x1e0] sm:$0xff]
      %v2291 = vld [vmem:[%s1096 + $0x1e8] sm:$0xff]
      %v2292 = vld [vmem:[%s1096 + $0x1f0] sm:$0xff]
      %v2293 = vld [vmem:[%s1096 + $0x1f8] sm:$0xf]
      %v2294 = vld [vmem:[%s1096 + $0x200] sm:$0xff]
      %v2295 = vld [vmem:[%s1096 + $0x208] sm:$0xff]
      %v2296 = vld [vmem:[%s1096 + $0x210] sm:$0xff]
      %v2297 = vld [vmem:[%s1096 + $0x218] sm:$0xf]
      %v2298 = vld [vmem:[%s1096 + $0x220] sm:$0xff]
      %v2299 = vld [vmem:[%s1096 + $0x228] sm:$0xff]
      %v2300 = vld [vmem:[%s1096 + $0x230] sm:$0xff]
      %v2301 = vld [vmem:[%s1096 + $0x238] sm:$0xf]
      %v2302 = vld [vmem:[%s1096 + $0x240] sm:$0xff]
      %v2303 = vld [vmem:[%s1096 + $0x248] sm:$0xff]
      %v2304 = vld [vmem:[%s1096 + $0x250] sm:$0xff]
      %v2305 = vld [vmem:[%s1096 + $0x258] sm:$0xf]
      %v2306 = vld [vmem:[%s1096 + $0x260] sm:$0xff]
      %v2307 = vld [vmem:[%s1096 + $0x268] sm:$0xff]
      %v2308 = vld [vmem:[%s1096 + $0x270] sm:$0xff]
      %v2309 = vld [vmem:[%s1096 + $0x278] sm:$0xf]
      %v2310 = vld [vmem:[%s1096 + $0x280] sm:$0xff]
      %v2311 = vld [vmem:[%s1096 + $0x288] sm:$0xff]
      %v2312 = vld [vmem:[%s1096 + $0x290] sm:$0xff]
      %v2313 = vld [vmem:[%s1096 + $0x298] sm:$0xf]
      %v2314 = vld [vmem:[%s1096 + $0x2a0] sm:$0xff]
      %v2315 = vld [vmem:[%s1096 + $0x2a8] sm:$0xff]
      %v2316 = vld [vmem:[%s1096 + $0x2b0] sm:$0xff]
      %v2317 = vld [vmem:[%s1096 + $0x2b8] sm:$0xf]
      %v2318 = vld [vmem:[%s1096 + $0x2c0] sm:$0xff]
      %v2319 = vld [vmem:[%s1096 + $0x2c8] sm:$0xff]
      %v2320 = vld [vmem:[%s1096 + $0x2d0] sm:$0xff]
      %v2321 = vld [vmem:[%s1096 + $0x2d8] sm:$0xf]
      %v2322 = vld [vmem:[%s1096 + $0x2e0] sm:$0xff]
      %v2323 = vld [vmem:[%s1096 + $0x2e8] sm:$0xff]
      %v2324 = vld [vmem:[%s1096 + $0x2f0] sm:$0xff]
      %v2325 = vld [vmem:[%s1096 + $0x2f8] sm:$0xf]
      %v2326 = vld [vmem:[%s1096 + $0x300] sm:$0xff]
      %v2327 = vld [vmem:[%s1096 + $0x308] sm:$0xff]
      %v2328 = vld [vmem:[%s1096 + $0x310] sm:$0xff]
      %v2329 = vld [vmem:[%s1096 + $0x318] sm:$0xf]
      %v2330 = vld [vmem:[%s1096 + $0x320] sm:$0xff]
      %v2331 = vld [vmem:[%s1096 + $0x328] sm:$0xff]
      %v2332 = vld [vmem:[%s1096 + $0x330] sm:$0xff]
      %v2333 = vld [vmem:[%s1096 + $0x338] sm:$0xf]
      %v2334 = vld [vmem:[%s1096 + $0x340] sm:$0xff]
      %v2335 = vld [vmem:[%s1096 + $0x348] sm:$0xff]
      %v2336 = vld [vmem:[%s1096 + $0x350] sm:$0xff]
      %v2337 = vld [vmem:[%s1096 + $0x358] sm:$0xf]
      %v2338 = vld [vmem:[%s1096 + $0x360] sm:$0xff]
      %v2339 = vld [vmem:[%s1096 + $0x368] sm:$0xff]
      %v2340 = vld [vmem:[%s1096 + $0x370] sm:$0xff]
      %v2341 = vld [vmem:[%s1096 + $0x378] sm:$0xf]
      %v2342 = vlaneseq
      %v2343 = vshrl.u32 %v2342, 7
      %v2344 = vsub.s32 3, %v2343
      %v2345 = vrot.slane %v384, %v2344
      %v2346 = vmul.f32 %v2230, %v2345
      %v2347 = vmul.f32 %v2231, %v2345
      %v2348 = vmul.f32 %v2232, %v2345
      %v2349 = vmul.f32 %v2233, %v2345
      %v2350 = vmul.f32 %v2234, %v2345
      %v2351 = vmul.f32 %v2235, %v2345
      %v2352 = vmul.f32 %v2236, %v2345
      %v2353 = vmul.f32 %v2237, %v2345
      %v2354 = vmul.f32 %v2238, %v2345
      %v2355 = vmul.f32 %v2239, %v2345
      %v2356 = vmul.f32 %v2240, %v2345
      %v2357 = vmul.f32 %v2241, %v2345
      %v2358 = vmul.f32 %v2242, %v2345
      %v2359 = vmul.f32 %v2243, %v2345
      %v2360 = vmul.f32 %v2244, %v2345
      %v2361 = vmul.f32 %v2245, %v2345
      %v2362 = vmul.f32 %v2246, %v2345
      %v2363 = vmul.f32 %v2247, %v2345
      %v2364 = vmul.f32 %v2248, %v2345
      %v2365 = vmul.f32 %v2249, %v2345
      %v2366 = vmul.f32 %v2250, %v2345
      %v2367 = vmul.f32 %v2251, %v2345
      %v2368 = vmul.f32 %v2252, %v2345
      %v2369 = vmul.f32 %v2253, %v2345
      %v2370 = vmul.f32 %v2254, %v2345
      %v2371 = vmul.f32 %v2255, %v2345
      %v2372 = vmul.f32 %v2256, %v2345
      %v2373 = vmul.f32 %v2257, %v2345
      %v2374 = vmul.f32 %v2258, %v2345
      %v2375 = vmul.f32 %v2259, %v2345
      %v2376 = vmul.f32 %v2260, %v2345
      %v2377 = vmul.f32 %v2261, %v2345
      %v2378 = vmul.f32 %v2262, %v2345
      %v2379 = vmul.f32 %v2263, %v2345
      %v2380 = vmul.f32 %v2264, %v2345
      %v2381 = vmul.f32 %v2265, %v2345
      %v2382 = vmul.f32 %v2266, %v2345
      %v2383 = vmul.f32 %v2267, %v2345
      %v2384 = vmul.f32 %v2268, %v2345
      %v2385 = vmul.f32 %v2269, %v2345
      %v2386 = vmul.f32 %v2270, %v2345
      %v2387 = vmul.f32 %v2271, %v2345
      %v2388 = vmul.f32 %v2272, %v2345
      %v2389 = vmul.f32 %v2273, %v2345
      %v2390 = vmul.f32 %v2274, %v2345
      %v2391 = vmul.f32 %v2275, %v2345
      %v2392 = vmul.f32 %v2276, %v2345
      %v2393 = vmul.f32 %v2277, %v2345
      %v2394 = vmul.f32 %v2278, %v2345
      %v2395 = vmul.f32 %v2279, %v2345
      %v2396 = vmul.f32 %v2280, %v2345
      %v2397 = vmul.f32 %v2281, %v2345
      %v2398 = vmul.f32 %v2282, %v2345
      %v2399 = vmul.f32 %v2283, %v2345
      %v2400 = vmul.f32 %v2284, %v2345
      %v2401 = vmul.f32 %v2285, %v2345
      %v2402 = vmul.f32 %v2286, %v2345
      %v2403 = vmul.f32 %v2287, %v2345
      %v2404 = vmul.f32 %v2288, %v2345
      %v2405 = vmul.f32 %v2289, %v2345
      %v2406 = vmul.f32 %v2290, %v2345
      %v2407 = vmul.f32 %v2291, %v2345
      %v2408 = vmul.f32 %v2292, %v2345
      %v2409 = vmul.f32 %v2293, %v2345
      %v2410 = vmul.f32 %v2294, %v2345
      %v2411 = vmul.f32 %v2295, %v2345
      %v2412 = vmul.f32 %v2296, %v2345
      %v2413 = vmul.f32 %v2297, %v2345
      %v2414 = vmul.f32 %v2298, %v2345
      %v2415 = vmul.f32 %v2299, %v2345
      %v2416 = vmul.f32 %v2300, %v2345
      %v2417 = vmul.f32 %v2301, %v2345
      %v2418 = vmul.f32 %v2302, %v2345
      %v2419 = vmul.f32 %v2303, %v2345
      %v2420 = vmul.f32 %v2304, %v2345
      %v2421 = vmul.f32 %v2305, %v2345
      %v2422 = vmul.f32 %v2306, %v2345
      %v2423 = vmul.f32 %v2307, %v2345
      %v2424 = vmul.f32 %v2308, %v2345
      %v2425 = vmul.f32 %v2309, %v2345
      %v2426 = vmul.f32 %v2310, %v2345
      %v2427 = vmul.f32 %v2311, %v2345
      %v2428 = vmul.f32 %v2312, %v2345
      %v2429 = vmul.f32 %v2313, %v2345
      %v2430 = vmul.f32 %v2314, %v2345
      %v2431 = vmul.f32 %v2315, %v2345
      %v2432 = vmul.f32 %v2316, %v2345
      %v2433 = vmul.f32 %v2317, %v2345
      %v2434 = vmul.f32 %v2318, %v2345
      %v2435 = vmul.f32 %v2319, %v2345
      %v2436 = vmul.f32 %v2320, %v2345
      %v2437 = vmul.f32 %v2321, %v2345
      %v2438 = vmul.f32 %v2322, %v2345
      %v2439 = vmul.f32 %v2323, %v2345
      %v2440 = vmul.f32 %v2324, %v2345
      %v2441 = vmul.f32 %v2325, %v2345
      %v2442 = vmul.f32 %v2326, %v2345
      %v2443 = vmul.f32 %v2327, %v2345
      %v2444 = vmul.f32 %v2328, %v2345
      %v2445 = vmul.f32 %v2329, %v2345
      %v2446 = vmul.f32 %v2330, %v2345
      %v2447 = vmul.f32 %v2331, %v2345
      %v2448 = vmul.f32 %v2332, %v2345
      %v2449 = vmul.f32 %v2333, %v2345
      %v2450 = vmul.f32 %v2334, %v2345
      %v2451 = vmul.f32 %v2335, %v2345
      %v2452 = vmul.f32 %v2336, %v2345
      %v2453 = vmul.f32 %v2337, %v2345
      %v2454 = vmul.f32 %v2338, %v2345
      %v2455 = vmul.f32 %v2339, %v2345
      %v2456 = vmul.f32 %v2340, %v2345
      %v2457 = vmul.f32 %v2341, %v2345
      %v2458 = vadd.f32 %v2118, %v2346
      %v2459 = vadd.f32 %v2119, %v2347
      %v2460 = vadd.f32 %v2120, %v2348
      %v2461 = vadd.f32 %v2121, %v2349
      %v2462 = vadd.f32 %v2122, %v2350
      %v2463 = vadd.f32 %v2123, %v2351
      %v2464 = vadd.f32 %v2124, %v2352
      %v2465 = vadd.f32 %v2125, %v2353
      %v2466 = vadd.f32 %v2126, %v2354
      %v2467 = vadd.f32 %v2127, %v2355
      %v2468 = vadd.f32 %v2128, %v2356
      %v2469 = vadd.f32 %v2129, %v2357
      %v2470 = vadd.f32 %v2130, %v2358
      %v2471 = vadd.f32 %v2131, %v2359
      %v2472 = vadd.f32 %v2132, %v2360
      %v2473 = vadd.f32 %v2133, %v2361
      %v2474 = vadd.f32 %v2134, %v2362
      %v2475 = vadd.f32 %v2135, %v2363
      %v2476 = vadd.f32 %v2136, %v2364
      %v2477 = vadd.f32 %v2137, %v2365
      %v2478 = vadd.f32 %v2138, %v2366
      %v2479 = vadd.f32 %v2139, %v2367
      %v2480 = vadd.f32 %v2140, %v2368
      %v2481 = vadd.f32 %v2141, %v2369
      %v2482 = vadd.f32 %v2142, %v2370
      %v2483 = vadd.f32 %v2143, %v2371
      %v2484 = vadd.f32 %v2144, %v2372
      %v2485 = vadd.f32 %v2145, %v2373
      %v2486 = vadd.f32 %v2146, %v2374
      %v2487 = vadd.f32 %v2147, %v2375
      %v2488 = vadd.f32 %v2148, %v2376
      %v2489 = vadd.f32 %v2149, %v2377
      %v2490 = vadd.f32 %v2150, %v2378
      %v2491 = vadd.f32 %v2151, %v2379
      %v2492 = vadd.f32 %v2152, %v2380
      %v2493 = vadd.f32 %v2153, %v2381
      %v2494 = vadd.f32 %v2154, %v2382
      %v2495 = vadd.f32 %v2155, %v2383
      %v2496 = vadd.f32 %v2156, %v2384
      %v2497 = vadd.f32 %v2157, %v2385
      %v2498 = vadd.f32 %v2158, %v2386
      %v2499 = vadd.f32 %v2159, %v2387
      %v2500 = vadd.f32 %v2160, %v2388
      %v2501 = vadd.f32 %v2161, %v2389
      %v2502 = vadd.f32 %v2162, %v2390
      %v2503 = vadd.f32 %v2163, %v2391
      %v2504 = vadd.f32 %v2164, %v2392
      %v2505 = vadd.f32 %v2165, %v2393
      %v2506 = vadd.f32 %v2166, %v2394
      %v2507 = vadd.f32 %v2167, %v2395
      %v2508 = vadd.f32 %v2168, %v2396
      %v2509 = vadd.f32 %v2169, %v2397
      %v2510 = vadd.f32 %v2170, %v2398
      %v2511 = vadd.f32 %v2171, %v2399
      %v2512 = vadd.f32 %v2172, %v2400
      %v2513 = vadd.f32 %v2173, %v2401
      %v2514 = vadd.f32 %v2174, %v2402
      %v2515 = vadd.f32 %v2175, %v2403
      %v2516 = vadd.f32 %v2176, %v2404
      %v2517 = vadd.f32 %v2177, %v2405
      %v2518 = vadd.f32 %v2178, %v2406
      %v2519 = vadd.f32 %v2179, %v2407
      %v2520 = vadd.f32 %v2180, %v2408
      %v2521 = vadd.f32 %v2181, %v2409
      %v2522 = vadd.f32 %v2182, %v2410
      %v2523 = vadd.f32 %v2183, %v2411
      %v2524 = vadd.f32 %v2184, %v2412
      %v2525 = vadd.f32 %v2185, %v2413
      %v2526 = vadd.f32 %v2186, %v2414
      %v2527 = vadd.f32 %v2187, %v2415
      %v2528 = vadd.f32 %v2188, %v2416
      %v2529 = vadd.f32 %v2189, %v2417
      %v2530 = vadd.f32 %v2190, %v2418
      %v2531 = vadd.f32 %v2191, %v2419
      %v2532 = vadd.f32 %v2192, %v2420
      %v2533 = vadd.f32 %v2193, %v2421
      %v2534 = vadd.f32 %v2194, %v2422
      %v2535 = vadd.f32 %v2195, %v2423
      %v2536 = vadd.f32 %v2196, %v2424
      %v2537 = vadd.f32 %v2197, %v2425
      %v2538 = vadd.f32 %v2198, %v2426
      %v2539 = vadd.f32 %v2199, %v2427
      %v2540 = vadd.f32 %v2200, %v2428
      %v2541 = vadd.f32 %v2201, %v2429
      %v2542 = vadd.f32 %v2202, %v2430
      %v2543 = vadd.f32 %v2203, %v2431
      %v2544 = vadd.f32 %v2204, %v2432
      %v2545 = vadd.f32 %v2205, %v2433
      %v2546 = vadd.f32 %v2206, %v2434
      %v2547 = vadd.f32 %v2207, %v2435
      %v2548 = vadd.f32 %v2208, %v2436
      %v2549 = vadd.f32 %v2209, %v2437
      %v2550 = vadd.f32 %v2210, %v2438
      %v2551 = vadd.f32 %v2211, %v2439
      %v2552 = vadd.f32 %v2212, %v2440
      %v2553 = vadd.f32 %v2213, %v2441
      %v2554 = vadd.f32 %v2214, %v2442
      %v2555 = vadd.f32 %v2215, %v2443
      %v2556 = vadd.f32 %v2216, %v2444
      %v2557 = vadd.f32 %v2217, %v2445
      %v2558 = vadd.f32 %v2218, %v2446
      %v2559 = vadd.f32 %v2219, %v2447
      %v2560 = vadd.f32 %v2220, %v2448
      %v2561 = vadd.f32 %v2221, %v2449
      %v2562 = vadd.f32 %v2222, %v2450
      %v2563 = vadd.f32 %v2223, %v2451
      %v2564 = vadd.f32 %v2224, %v2452
      %v2565 = vadd.f32 %v2225, %v2453
      %v2566 = vadd.f32 %v2226, %v2454
      %v2567 = vadd.f32 %v2227, %v2455
      %v2568 = vadd.f32 %v2228, %v2456
      %v2569 = vadd.f32 %v2229, %v2457
      %v2570 = vld [vmem:[%s1096 + $0x1] sm:$0xff]
      %v2571 = vld [vmem:[%s1096 + $0x9] sm:$0xff]
      %v2572 = vld [vmem:[%s1096 + $0x11] sm:$0xff]
      %v2573 = vld [vmem:[%s1096 + $0x19] sm:$0xf]
      %v2574 = vld [vmem:[%s1096 + $0x21] sm:$0xff]
      %v2575 = vld [vmem:[%s1096 + $0x29] sm:$0xff]
      %v2576 = vld [vmem:[%s1096 + $0x31] sm:$0xff]
      %v2577 = vld [vmem:[%s1096 + $0x39] sm:$0xf]
      %v2578 = vld [vmem:[%s1096 + $0x41] sm:$0xff]
      %v2579 = vld [vmem:[%s1096 + $0x49] sm:$0xff]
      %v2580 = vld [vmem:[%s1096 + $0x51] sm:$0xff]
      %v2581 = vld [vmem:[%s1096 + $0x59] sm:$0xf]
      %v2582 = vld [vmem:[%s1096 + $0x61] sm:$0xff]
      %v2583 = vld [vmem:[%s1096 + $0x69] sm:$0xff]
      %v2584 = vld [vmem:[%s1096 + $0x71] sm:$0xff]
      %v2585 = vld [vmem:[%s1096 + $0x79] sm:$0xf]
      %v2586 = vld [vmem:[%s1096 + $0x81] sm:$0xff]
      %v2587 = vld [vmem:[%s1096 + $0x89] sm:$0xff]
      %v2588 = vld [vmem:[%s1096 + $0x91] sm:$0xff]
      %v2589 = vld [vmem:[%s1096 + $0x99] sm:$0xf]
      %v2590 = vld [vmem:[%s1096 + $0xa1] sm:$0xff]
      %v2591 = vld [vmem:[%s1096 + $0xa9] sm:$0xff]
      %v2592 = vld [vmem:[%s1096 + $0xb1] sm:$0xff]
      %v2593 = vld [vmem:[%s1096 + $0xb9] sm:$0xf]
      %v2594 = vld [vmem:[%s1096 + $0xc1] sm:$0xff]
      %v2595 = vld [vmem:[%s1096 + $0xc9] sm:$0xff]
      %v2596 = vld [vmem:[%s1096 + $0xd1] sm:$0xff]
      %v2597 = vld [vmem:[%s1096 + $0xd9] sm:$0xf]
      %v2598 = vld [vmem:[%s1096 + $0xe1] sm:$0xff]
      %v2599 = vld [vmem:[%s1096 + $0xe9] sm:$0xff]
      %v2600 = vld [vmem:[%s1096 + $0xf1] sm:$0xff]
      %v2601 = vld [vmem:[%s1096 + $0xf9] sm:$0xf]
      %v2602 = vld [vmem:[%s1096 + $0x101] sm:$0xff]
      %v2603 = vld [vmem:[%s1096 + $0x109] sm:$0xff]
      %v2604 = vld [vmem:[%s1096 + $0x111] sm:$0xff]
      %v2605 = vld [vmem:[%s1096 + $0x119] sm:$0xf]
      %v2606 = vld [vmem:[%s1096 + $0x121] sm:$0xff]
      %v2607 = vld [vmem:[%s1096 + $0x129] sm:$0xff]
      %v2608 = vld [vmem:[%s1096 + $0x131] sm:$0xff]
      %v2609 = vld [vmem:[%s1096 + $0x139] sm:$0xf]
      %v2610 = vld [vmem:[%s1096 + $0x141] sm:$0xff]
      %v2611 = vld [vmem:[%s1096 + $0x149] sm:$0xff]
      %v2612 = vld [vmem:[%s1096 + $0x151] sm:$0xff]
      %v2613 = vld [vmem:[%s1096 + $0x159] sm:$0xf]
      %v2614 = vld [vmem:[%s1096 + $0x161] sm:$0xff]
      %v2615 = vld [vmem:[%s1096 + $0x169] sm:$0xff]
      %v2616 = vld [vmem:[%s1096 + $0x171] sm:$0xff]
      %v2617 = vld [vmem:[%s1096 + $0x179] sm:$0xf]
      %v2618 = vld [vmem:[%s1096 + $0x181] sm:$0xff]
      %v2619 = vld [vmem:[%s1096 + $0x189] sm:$0xff]
      %v2620 = vld [vmem:[%s1096 + $0x191] sm:$0xff]
      %v2621 = vld [vmem:[%s1096 + $0x199] sm:$0xf]
      %v2622 = vld [vmem:[%s1096 + $0x1a1] sm:$0xff]
      %v2623 = vld [vmem:[%s1096 + $0x1a9] sm:$0xff]
      %v2624 = vld [vmem:[%s1096 + $0x1b1] sm:$0xff]
      %v2625 = vld [vmem:[%s1096 + $0x1b9] sm:$0xf]
      %v2626 = vld [vmem:[%s1096 + $0x1c1] sm:$0xff]
      %v2627 = vld [vmem:[%s1096 + $0x1c9] sm:$0xff]
      %v2628 = vld [vmem:[%s1096 + $0x1d1] sm:$0xff]
      %v2629 = vld [vmem:[%s1096 + $0x1d9] sm:$0xf]
      %v2630 = vld [vmem:[%s1096 + $0x1e1] sm:$0xff]
      %v2631 = vld [vmem:[%s1096 + $0x1e9] sm:$0xff]
      %v2632 = vld [vmem:[%s1096 + $0x1f1] sm:$0xff]
      %v2633 = vld [vmem:[%s1096 + $0x1f9] sm:$0xf]
      %v2634 = vld [vmem:[%s1096 + $0x201] sm:$0xff]
      %v2635 = vld [vmem:[%s1096 + $0x209] sm:$0xff]
      %v2636 = vld [vmem:[%s1096 + $0x211] sm:$0xff]
      %v2637 = vld [vmem:[%s1096 + $0x219] sm:$0xf]
      %v2638 = vld [vmem:[%s1096 + $0x221] sm:$0xff]
      %v2639 = vld [vmem:[%s1096 + $0x229] sm:$0xff]
      %v2640 = vld [vmem:[%s1096 + $0x231] sm:$0xff]
      %v2641 = vld [vmem:[%s1096 + $0x239] sm:$0xf]
      %v2642 = vld [vmem:[%s1096 + $0x241] sm:$0xff]
      %v2643 = vld [vmem:[%s1096 + $0x249] sm:$0xff]
      %v2644 = vld [vmem:[%s1096 + $0x251] sm:$0xff]
      %v2645 = vld [vmem:[%s1096 + $0x259] sm:$0xf]
      %v2646 = vld [vmem:[%s1096 + $0x261] sm:$0xff]
      %v2647 = vld [vmem:[%s1096 + $0x269] sm:$0xff]
      %v2648 = vld [vmem:[%s1096 + $0x271] sm:$0xff]
      %v2649 = vld [vmem:[%s1096 + $0x279] sm:$0xf]
      %v2650 = vld [vmem:[%s1096 + $0x281] sm:$0xff]
      %v2651 = vld [vmem:[%s1096 + $0x289] sm:$0xff]
      %v2652 = vld [vmem:[%s1096 + $0x291] sm:$0xff]
      %v2653 = vld [vmem:[%s1096 + $0x299] sm:$0xf]
      %v2654 = vld [vmem:[%s1096 + $0x2a1] sm:$0xff]
      %v2655 = vld [vmem:[%s1096 + $0x2a9] sm:$0xff]
      %v2656 = vld [vmem:[%s1096 + $0x2b1] sm:$0xff]
      %v2657 = vld [vmem:[%s1096 + $0x2b9] sm:$0xf]
      %v2658 = vld [vmem:[%s1096 + $0x2c1] sm:$0xff]
      %v2659 = vld [vmem:[%s1096 + $0x2c9] sm:$0xff]
      %v2660 = vld [vmem:[%s1096 + $0x2d1] sm:$0xff]
      %v2661 = vld [vmem:[%s1096 + $0x2d9] sm:$0xf]
      %v2662 = vld [vmem:[%s1096 + $0x2e1] sm:$0xff]
      %v2663 = vld [vmem:[%s1096 + $0x2e9] sm:$0xff]
      %v2664 = vld [vmem:[%s1096 + $0x2f1] sm:$0xff]
      %v2665 = vld [vmem:[%s1096 + $0x2f9] sm:$0xf]
      %v2666 = vld [vmem:[%s1096 + $0x301] sm:$0xff]
      %v2667 = vld [vmem:[%s1096 + $0x309] sm:$0xff]
      %v2668 = vld [vmem:[%s1096 + $0x311] sm:$0xff]
      %v2669 = vld [vmem:[%s1096 + $0x319] sm:$0xf]
      %v2670 = vld [vmem:[%s1096 + $0x321] sm:$0xff]
      %v2671 = vld [vmem:[%s1096 + $0x329] sm:$0xff]
      %v2672 = vld [vmem:[%s1096 + $0x331] sm:$0xff]
      %v2673 = vld [vmem:[%s1096 + $0x339] sm:$0xf]
      %v2674 = vld [vmem:[%s1096 + $0x341] sm:$0xff]
      %v2675 = vld [vmem:[%s1096 + $0x349] sm:$0xff]
      %v2676 = vld [vmem:[%s1096 + $0x351] sm:$0xff]
      %v2677 = vld [vmem:[%s1096 + $0x359] sm:$0xf]
      %v2678 = vld [vmem:[%s1096 + $0x361] sm:$0xff]
      %v2679 = vld [vmem:[%s1096 + $0x369] sm:$0xff]
      %v2680 = vld [vmem:[%s1096 + $0x371] sm:$0xff]
      %v2681 = vld [vmem:[%s1096 + $0x379] sm:$0xf]
      %v2682 = vlaneseq
      %v2683 = vshrl.u32 %v2682, 7
      %v2684 = vsub.s32 4, %v2683
      %v2685 = vrot.slane %v384, %v2684
      %v2686 = vmul.f32 %v2570, %v2685
      %v2687 = vmul.f32 %v2571, %v2685
      %v2688 = vmul.f32 %v2572, %v2685
      %v2689 = vmul.f32 %v2573, %v2685
      %v2690 = vmul.f32 %v2574, %v2685
      %v2691 = vmul.f32 %v2575, %v2685
      %v2692 = vmul.f32 %v2576, %v2685
      %v2693 = vmul.f32 %v2577, %v2685
      %v2694 = vmul.f32 %v2578, %v2685
      %v2695 = vmul.f32 %v2579, %v2685
      %v2696 = vmul.f32 %v2580, %v2685
      %v2697 = vmul.f32 %v2581, %v2685
      %v2698 = vmul.f32 %v2582, %v2685
      %v2699 = vmul.f32 %v2583, %v2685
      %v2700 = vmul.f32 %v2584, %v2685
      %v2701 = vmul.f32 %v2585, %v2685
      %v2702 = vmul.f32 %v2586, %v2685
      %v2703 = vmul.f32 %v2587, %v2685
      %v2704 = vmul.f32 %v2588, %v2685
      %v2705 = vmul.f32 %v2589, %v2685
      %v2706 = vmul.f32 %v2590, %v2685
      %v2707 = vmul.f32 %v2591, %v2685
      %v2708 = vmul.f32 %v2592, %v2685
      %v2709 = vmul.f32 %v2593, %v2685
      %v2710 = vmul.f32 %v2594, %v2685
      %v2711 = vmul.f32 %v2595, %v2685
      %v2712 = vmul.f32 %v2596, %v2685
      %v2713 = vmul.f32 %v2597, %v2685
      %v2714 = vmul.f32 %v2598, %v2685
      %v2715 = vmul.f32 %v2599, %v2685
      %v2716 = vmul.f32 %v2600, %v2685
      %v2717 = vmul.f32 %v2601, %v2685
      %v2718 = vmul.f32 %v2602, %v2685
      %v2719 = vmul.f32 %v2603, %v2685
      %v2720 = vmul.f32 %v2604, %v2685
      %v2721 = vmul.f32 %v2605, %v2685
      %v2722 = vmul.f32 %v2606, %v2685
      %v2723 = vmul.f32 %v2607, %v2685
      %v2724 = vmul.f32 %v2608, %v2685
      %v2725 = vmul.f32 %v2609, %v2685
      %v2726 = vmul.f32 %v2610, %v2685
      %v2727 = vmul.f32 %v2611, %v2685
      %v2728 = vmul.f32 %v2612, %v2685
      %v2729 = vmul.f32 %v2613, %v2685
      %v2730 = vmul.f32 %v2614, %v2685
      %v2731 = vmul.f32 %v2615, %v2685
      %v2732 = vmul.f32 %v2616, %v2685
      %v2733 = vmul.f32 %v2617, %v2685
      %v2734 = vmul.f32 %v2618, %v2685
      %v2735 = vmul.f32 %v2619, %v2685
      %v2736 = vmul.f32 %v2620, %v2685
      %v2737 = vmul.f32 %v2621, %v2685
      %v2738 = vmul.f32 %v2622, %v2685
      %v2739 = vmul.f32 %v2623, %v2685
      %v2740 = vmul.f32 %v2624, %v2685
      %v2741 = vmul.f32 %v2625, %v2685
      %v2742 = vmul.f32 %v2626, %v2685
      %v2743 = vmul.f32 %v2627, %v2685
      %v2744 = vmul.f32 %v2628, %v2685
      %v2745 = vmul.f32 %v2629, %v2685
      %v2746 = vmul.f32 %v2630, %v2685
      %v2747 = vmul.f32 %v2631, %v2685
      %v2748 = vmul.f32 %v2632, %v2685
      %v2749 = vmul.f32 %v2633, %v2685
      %v2750 = vmul.f32 %v2634, %v2685
      %v2751 = vmul.f32 %v2635, %v2685
      %v2752 = vmul.f32 %v2636, %v2685
      %v2753 = vmul.f32 %v2637, %v2685
      %v2754 = vmul.f32 %v2638, %v2685
      %v2755 = vmul.f32 %v2639, %v2685
      %v2756 = vmul.f32 %v2640, %v2685
      %v2757 = vmul.f32 %v2641, %v2685
      %v2758 = vmul.f32 %v2642, %v2685
      %v2759 = vmul.f32 %v2643, %v2685
      %v2760 = vmul.f32 %v2644, %v2685
      %v2761 = vmul.f32 %v2645, %v2685
      %v2762 = vmul.f32 %v2646, %v2685
      %v2763 = vmul.f32 %v2647, %v2685
      %v2764 = vmul.f32 %v2648, %v2685
      %v2765 = vmul.f32 %v2649, %v2685
      %v2766 = vmul.f32 %v2650, %v2685
      %v2767 = vmul.f32 %v2651, %v2685
      %v2768 = vmul.f32 %v2652, %v2685
      %v2769 = vmul.f32 %v2653, %v2685
      %v2770 = vmul.f32 %v2654, %v2685
      %v2771 = vmul.f32 %v2655, %v2685
      %v2772 = vmul.f32 %v2656, %v2685
      %v2773 = vmul.f32 %v2657, %v2685
      %v2774 = vmul.f32 %v2658, %v2685
      %v2775 = vmul.f32 %v2659, %v2685
      %v2776 = vmul.f32 %v2660, %v2685
      %v2777 = vmul.f32 %v2661, %v2685
      %v2778 = vmul.f32 %v2662, %v2685
      %v2779 = vmul.f32 %v2663, %v2685
      %v2780 = vmul.f32 %v2664, %v2685
      %v2781 = vmul.f32 %v2665, %v2685
      %v2782 = vmul.f32 %v2666, %v2685
      %v2783 = vmul.f32 %v2667, %v2685
      %v2784 = vmul.f32 %v2668, %v2685
      %v2785 = vmul.f32 %v2669, %v2685
      %v2786 = vmul.f32 %v2670, %v2685
      %v2787 = vmul.f32 %v2671, %v2685
      %v2788 = vmul.f32 %v2672, %v2685
      %v2789 = vmul.f32 %v2673, %v2685
      %v2790 = vmul.f32 %v2674, %v2685
      %v2791 = vmul.f32 %v2675, %v2685
      %v2792 = vmul.f32 %v2676, %v2685
      %v2793 = vmul.f32 %v2677, %v2685
      %v2794 = vmul.f32 %v2678, %v2685
      %v2795 = vmul.f32 %v2679, %v2685
      %v2796 = vmul.f32 %v2680, %v2685
      %v2797 = vmul.f32 %v2681, %v2685
      %v2798 = vadd.f32 %v2458, %v2686
      %v2799 = vadd.f32 %v2459, %v2687
      %v2800 = vadd.f32 %v2460, %v2688
      %v2801 = vadd.f32 %v2461, %v2689
      %v2802 = vadd.f32 %v2462, %v2690
      %v2803 = vadd.f32 %v2463, %v2691
      %v2804 = vadd.f32 %v2464, %v2692
      %v2805 = vadd.f32 %v2465, %v2693
      %v2806 = vadd.f32 %v2466, %v2694
      %v2807 = vadd.f32 %v2467, %v2695
      %v2808 = vadd.f32 %v2468, %v2696
      %v2809 = vadd.f32 %v2469, %v2697
      %v2810 = vadd.f32 %v2470, %v2698
      %v2811 = vadd.f32 %v2471, %v2699
      %v2812 = vadd.f32 %v2472, %v2700
      %v2813 = vadd.f32 %v2473, %v2701
      %v2814 = vadd.f32 %v2474, %v2702
      %v2815 = vadd.f32 %v2475, %v2703
      %v2816 = vadd.f32 %v2476, %v2704
      %v2817 = vadd.f32 %v2477, %v2705
      %v2818 = vadd.f32 %v2478, %v2706
      %v2819 = vadd.f32 %v2479, %v2707
      %v2820 = vadd.f32 %v2480, %v2708
      %v2821 = vadd.f32 %v2481, %v2709
      %v2822 = vadd.f32 %v2482, %v2710
      %v2823 = vadd.f32 %v2483, %v2711
      %v2824 = vadd.f32 %v2484, %v2712
      %v2825 = vadd.f32 %v2485, %v2713
      %v2826 = vadd.f32 %v2486, %v2714
      %v2827 = vadd.f32 %v2487, %v2715
      %v2828 = vadd.f32 %v2488, %v2716
      %v2829 = vadd.f32 %v2489, %v2717
      %v2830 = vadd.f32 %v2490, %v2718
      %v2831 = vadd.f32 %v2491, %v2719
      %v2832 = vadd.f32 %v2492, %v2720
      %v2833 = vadd.f32 %v2493, %v2721
      %v2834 = vadd.f32 %v2494, %v2722
      %v2835 = vadd.f32 %v2495, %v2723
      %v2836 = vadd.f32 %v2496, %v2724
      %v2837 = vadd.f32 %v2497, %v2725
      %v2838 = vadd.f32 %v2498, %v2726
      %v2839 = vadd.f32 %v2499, %v2727
      %v2840 = vadd.f32 %v2500, %v2728
      %v2841 = vadd.f32 %v2501, %v2729
      %v2842 = vadd.f32 %v2502, %v2730
      %v2843 = vadd.f32 %v2503, %v2731
      %v2844 = vadd.f32 %v2504, %v2732
      %v2845 = vadd.f32 %v2505, %v2733
      %v2846 = vadd.f32 %v2506, %v2734
      %v2847 = vadd.f32 %v2507, %v2735
      %v2848 = vadd.f32 %v2508, %v2736
      %v2849 = vadd.f32 %v2509, %v2737
      %v2850 = vadd.f32 %v2510, %v2738
      %v2851 = vadd.f32 %v2511, %v2739
      %v2852 = vadd.f32 %v2512, %v2740
      %v2853 = vadd.f32 %v2513, %v2741
      %v2854 = vadd.f32 %v2514, %v2742
      %v2855 = vadd.f32 %v2515, %v2743
      %v2856 = vadd.f32 %v2516, %v2744
      %v2857 = vadd.f32 %v2517, %v2745
      %v2858 = vadd.f32 %v2518, %v2746
      %v2859 = vadd.f32 %v2519, %v2747
      %v2860 = vadd.f32 %v2520, %v2748
      %v2861 = vadd.f32 %v2521, %v2749
      %v2862 = vadd.f32 %v2522, %v2750
      %v2863 = vadd.f32 %v2523, %v2751
      %v2864 = vadd.f32 %v2524, %v2752
      %v2865 = vadd.f32 %v2525, %v2753
      %v2866 = vadd.f32 %v2526, %v2754
      %v2867 = vadd.f32 %v2527, %v2755
      %v2868 = vadd.f32 %v2528, %v2756
      %v2869 = vadd.f32 %v2529, %v2757
      %v2870 = vadd.f32 %v2530, %v2758
      %v2871 = vadd.f32 %v2531, %v2759
      %v2872 = vadd.f32 %v2532, %v2760
      %v2873 = vadd.f32 %v2533, %v2761
      %v2874 = vadd.f32 %v2534, %v2762
      %v2875 = vadd.f32 %v2535, %v2763
      %v2876 = vadd.f32 %v2536, %v2764
      %v2877 = vadd.f32 %v2537, %v2765
      %v2878 = vadd.f32 %v2538, %v2766
      %v2879 = vadd.f32 %v2539, %v2767
      %v2880 = vadd.f32 %v2540, %v2768
      %v2881 = vadd.f32 %v2541, %v2769
      %v2882 = vadd.f32 %v2542, %v2770
      %v2883 = vadd.f32 %v2543, %v2771
      %v2884 = vadd.f32 %v2544, %v2772
      %v2885 = vadd.f32 %v2545, %v2773
      %v2886 = vadd.f32 %v2546, %v2774
      %v2887 = vadd.f32 %v2547, %v2775
      %v2888 = vadd.f32 %v2548, %v2776
      %v2889 = vadd.f32 %v2549, %v2777
      %v2890 = vadd.f32 %v2550, %v2778
      %v2891 = vadd.f32 %v2551, %v2779
      %v2892 = vadd.f32 %v2552, %v2780
      %v2893 = vadd.f32 %v2553, %v2781
      %v2894 = vadd.f32 %v2554, %v2782
      %v2895 = vadd.f32 %v2555, %v2783
      %v2896 = vadd.f32 %v2556, %v2784
      %v2897 = vadd.f32 %v2557, %v2785
      %v2898 = vadd.f32 %v2558, %v2786
      %v2899 = vadd.f32 %v2559, %v2787
      %v2900 = vadd.f32 %v2560, %v2788
      %v2901 = vadd.f32 %v2561, %v2789
      %v2902 = vadd.f32 %v2562, %v2790
      %v2903 = vadd.f32 %v2563, %v2791
      %v2904 = vadd.f32 %v2564, %v2792
      %v2905 = vadd.f32 %v2565, %v2793
      %v2906 = vadd.f32 %v2566, %v2794
      %v2907 = vadd.f32 %v2567, %v2795
      %v2908 = vadd.f32 %v2568, %v2796
      %v2909 = vadd.f32 %v2569, %v2797
      %v2910 = vld [vmem:[%s1096 + $0x2] sm:$0xff]
      %v2911 = vld [vmem:[%s1096 + $0xa] sm:$0xff]
      %v2912 = vld [vmem:[%s1096 + $0x12] sm:$0xff]
      %v2913 = vld [vmem:[%s1096 + $0x1a] sm:$0xf]
      %v2914 = vld [vmem:[%s1096 + $0x22] sm:$0xff]
      %v2915 = vld [vmem:[%s1096 + $0x2a] sm:$0xff]
      %v2916 = vld [vmem:[%s1096 + $0x32] sm:$0xff]
      %v2917 = vld [vmem:[%s1096 + $0x3a] sm:$0xf]
      %v2918 = vld [vmem:[%s1096 + $0x42] sm:$0xff]
      %v2919 = vld [vmem:[%s1096 + $0x4a] sm:$0xff]
      %v2920 = vld [vmem:[%s1096 + $0x52] sm:$0xff]
      %v2921 = vld [vmem:[%s1096 + $0x5a] sm:$0xf]
      %v2922 = vld [vmem:[%s1096 + $0x62] sm:$0xff]
      %v2923 = vld [vmem:[%s1096 + $0x6a] sm:$0xff]
      %v2924 = vld [vmem:[%s1096 + $0x72] sm:$0xff]
      %v2925 = vld [vmem:[%s1096 + $0x7a] sm:$0xf]
      %v2926 = vld [vmem:[%s1096 + $0x82] sm:$0xff]
      %v2927 = vld [vmem:[%s1096 + $0x8a] sm:$0xff]
      %v2928 = vld [vmem:[%s1096 + $0x92] sm:$0xff]
      %v2929 = vld [vmem:[%s1096 + $0x9a] sm:$0xf]
      %v2930 = vld [vmem:[%s1096 + $0xa2] sm:$0xff]
      %v2931 = vld [vmem:[%s1096 + $0xaa] sm:$0xff]
      %v2932 = vld [vmem:[%s1096 + $0xb2] sm:$0xff]
      %v2933 = vld [vmem:[%s1096 + $0xba] sm:$0xf]
      %v2934 = vld [vmem:[%s1096 + $0xc2] sm:$0xff]
      %v2935 = vld [vmem:[%s1096 + $0xca] sm:$0xff]
      %v2936 = vld [vmem:[%s1096 + $0xd2] sm:$0xff]
      %v2937 = vld [vmem:[%s1096 + $0xda] sm:$0xf]
      %v2938 = vld [vmem:[%s1096 + $0xe2] sm:$0xff]
      %v2939 = vld [vmem:[%s1096 + $0xea] sm:$0xff]
      %v2940 = vld [vmem:[%s1096 + $0xf2] sm:$0xff]
      %v2941 = vld [vmem:[%s1096 + $0xfa] sm:$0xf]
      %v2942 = vld [vmem:[%s1096 + $0x102] sm:$0xff]
      %v2943 = vld [vmem:[%s1096 + $0x10a] sm:$0xff]
      %v2944 = vld [vmem:[%s1096 + $0x112] sm:$0xff]
      %v2945 = vld [vmem:[%s1096 + $0x11a] sm:$0xf]
      %v2946 = vld [vmem:[%s1096 + $0x122] sm:$0xff]
      %v2947 = vld [vmem:[%s1096 + $0x12a] sm:$0xff]
      %v2948 = vld [vmem:[%s1096 + $0x132] sm:$0xff]
      %v2949 = vld [vmem:[%s1096 + $0x13a] sm:$0xf]
      %v2950 = vld [vmem:[%s1096 + $0x142] sm:$0xff]
      %v2951 = vld [vmem:[%s1096 + $0x14a] sm:$0xff]
      %v2952 = vld [vmem:[%s1096 + $0x152] sm:$0xff]
      %v2953 = vld [vmem:[%s1096 + $0x15a] sm:$0xf]
      %v2954 = vld [vmem:[%s1096 + $0x162] sm:$0xff]
      %v2955 = vld [vmem:[%s1096 + $0x16a] sm:$0xff]
      %v2956 = vld [vmem:[%s1096 + $0x172] sm:$0xff]
      %v2957 = vld [vmem:[%s1096 + $0x17a] sm:$0xf]
      %v2958 = vld [vmem:[%s1096 + $0x182] sm:$0xff]
      %v2959 = vld [vmem:[%s1096 + $0x18a] sm:$0xff]
      %v2960 = vld [vmem:[%s1096 + $0x192] sm:$0xff]
      %v2961 = vld [vmem:[%s1096 + $0x19a] sm:$0xf]
      %v2962 = vld [vmem:[%s1096 + $0x1a2] sm:$0xff]
      %v2963 = vld [vmem:[%s1096 + $0x1aa] sm:$0xff]
      %v2964 = vld [vmem:[%s1096 + $0x1b2] sm:$0xff]
      %v2965 = vld [vmem:[%s1096 + $0x1ba] sm:$0xf]
      %v2966 = vld [vmem:[%s1096 + $0x1c2] sm:$0xff]
      %v2967 = vld [vmem:[%s1096 + $0x1ca] sm:$0xff]
      %v2968 = vld [vmem:[%s1096 + $0x1d2] sm:$0xff]
      %v2969 = vld [vmem:[%s1096 + $0x1da] sm:$0xf]
      %v2970 = vld [vmem:[%s1096 + $0x1e2] sm:$0xff]
      %v2971 = vld [vmem:[%s1096 + $0x1ea] sm:$0xff]
      %v2972 = vld [vmem:[%s1096 + $0x1f2] sm:$0xff]
      %v2973 = vld [vmem:[%s1096 + $0x1fa] sm:$0xf]
      %v2974 = vld [vmem:[%s1096 + $0x202] sm:$0xff]
      %v2975 = vld [vmem:[%s1096 + $0x20a] sm:$0xff]
      %v2976 = vld [vmem:[%s1096 + $0x212] sm:$0xff]
      %v2977 = vld [vmem:[%s1096 + $0x21a] sm:$0xf]
      %v2978 = vld [vmem:[%s1096 + $0x222] sm:$0xff]
      %v2979 = vld [vmem:[%s1096 + $0x22a] sm:$0xff]
      %v2980 = vld [vmem:[%s1096 + $0x232] sm:$0xff]
      %v2981 = vld [vmem:[%s1096 + $0x23a] sm:$0xf]
      %v2982 = vld [vmem:[%s1096 + $0x242] sm:$0xff]
      %v2983 = vld [vmem:[%s1096 + $0x24a] sm:$0xff]
      %v2984 = vld [vmem:[%s1096 + $0x252] sm:$0xff]
      %v2985 = vld [vmem:[%s1096 + $0x25a] sm:$0xf]
      %v2986 = vld [vmem:[%s1096 + $0x262] sm:$0xff]
      %v2987 = vld [vmem:[%s1096 + $0x26a] sm:$0xff]
      %v2988 = vld [vmem:[%s1096 + $0x272] sm:$0xff]
      %v2989 = vld [vmem:[%s1096 + $0x27a] sm:$0xf]
      %v2990 = vld [vmem:[%s1096 + $0x282] sm:$0xff]
      %v2991 = vld [vmem:[%s1096 + $0x28a] sm:$0xff]
      %v2992 = vld [vmem:[%s1096 + $0x292] sm:$0xff]
      %v2993 = vld [vmem:[%s1096 + $0x29a] sm:$0xf]
      %v2994 = vld [vmem:[%s1096 + $0x2a2] sm:$0xff]
      %v2995 = vld [vmem:[%s1096 + $0x2aa] sm:$0xff]
      %v2996 = vld [vmem:[%s1096 + $0x2b2] sm:$0xff]
      %v2997 = vld [vmem:[%s1096 + $0x2ba] sm:$0xf]
      %v2998 = vld [vmem:[%s1096 + $0x2c2] sm:$0xff]
      %v2999 = vld [vmem:[%s1096 + $0x2ca] sm:$0xff]
      %v3000 = vld [vmem:[%s1096 + $0x2d2] sm:$0xff]
      %v3001 = vld [vmem:[%s1096 + $0x2da] sm:$0xf]
      %v3002 = vld [vmem:[%s1096 + $0x2e2] sm:$0xff]
      %v3003 = vld [vmem:[%s1096 + $0x2ea] sm:$0xff]
      %v3004 = vld [vmem:[%s1096 + $0x2f2] sm:$0xff]
      %v3005 = vld [vmem:[%s1096 + $0x2fa] sm:$0xf]
      %v3006 = vld [vmem:[%s1096 + $0x302] sm:$0xff]
      %v3007 = vld [vmem:[%s1096 + $0x30a] sm:$0xff]
      %v3008 = vld [vmem:[%s1096 + $0x312] sm:$0xff]
      %v3009 = vld [vmem:[%s1096 + $0x31a] sm:$0xf]
      %v3010 = vld [vmem:[%s1096 + $0x322] sm:$0xff]
      %v3011 = vld [vmem:[%s1096 + $0x32a] sm:$0xff]
      %v3012 = vld [vmem:[%s1096 + $0x332] sm:$0xff]
      %v3013 = vld [vmem:[%s1096 + $0x33a] sm:$0xf]
      %v3014 = vld [vmem:[%s1096 + $0x342] sm:$0xff]
      %v3015 = vld [vmem:[%s1096 + $0x34a] sm:$0xff]
      %v3016 = vld [vmem:[%s1096 + $0x352] sm:$0xff]
      %v3017 = vld [vmem:[%s1096 + $0x35a] sm:$0xf]
      %v3018 = vld [vmem:[%s1096 + $0x362] sm:$0xff]
      %v3019 = vld [vmem:[%s1096 + $0x36a] sm:$0xff]
      %v3020 = vld [vmem:[%s1096 + $0x372] sm:$0xff]
      %v3021 = vld [vmem:[%s1096 + $0x37a] sm:$0xf]
      %v3022 = vlaneseq
      %v3023 = vshrl.u32 %v3022, 7
      %v3024 = vsub.s32 5, %v3023
      %v3025 = vrot.slane %v384, %v3024
      %v3026 = vmul.f32 %v2910, %v3025
      %v3027 = vmul.f32 %v2911, %v3025
      %v3028 = vmul.f32 %v2912, %v3025
      %v3029 = vmul.f32 %v2913, %v3025
      %v3030 = vmul.f32 %v2914, %v3025
      %v3031 = vmul.f32 %v2915, %v3025
      %v3032 = vmul.f32 %v2916, %v3025
      %v3033 = vmul.f32 %v2917, %v3025
      %v3034 = vmul.f32 %v2918, %v3025
      %v3035 = vmul.f32 %v2919, %v3025
      %v3036 = vmul.f32 %v2920, %v3025
      %v3037 = vmul.f32 %v2921, %v3025
      %v3038 = vmul.f32 %v2922, %v3025
      %v3039 = vmul.f32 %v2923, %v3025
      %v3040 = vmul.f32 %v2924, %v3025
      %v3041 = vmul.f32 %v2925, %v3025
      %v3042 = vmul.f32 %v2926, %v3025
      %v3043 = vmul.f32 %v2927, %v3025
      %v3044 = vmul.f32 %v2928, %v3025
      %v3045 = vmul.f32 %v2929, %v3025
      %v3046 = vmul.f32 %v2930, %v3025
      %v3047 = vmul.f32 %v2931, %v3025
      %v3048 = vmul.f32 %v2932, %v3025
      %v3049 = vmul.f32 %v2933, %v3025
      %v3050 = vmul.f32 %v2934, %v3025
      %v3051 = vmul.f32 %v2935, %v3025
      %v3052 = vmul.f32 %v2936, %v3025
      %v3053 = vmul.f32 %v2937, %v3025
      %v3054 = vmul.f32 %v2938, %v3025
      %v3055 = vmul.f32 %v2939, %v3025
      %v3056 = vmul.f32 %v2940, %v3025
      %v3057 = vmul.f32 %v2941, %v3025
      %v3058 = vmul.f32 %v2942, %v3025
      %v3059 = vmul.f32 %v2943, %v3025
      %v3060 = vmul.f32 %v2944, %v3025
      %v3061 = vmul.f32 %v2945, %v3025
      %v3062 = vmul.f32 %v2946, %v3025
      %v3063 = vmul.f32 %v2947, %v3025
      %v3064 = vmul.f32 %v2948, %v3025
      %v3065 = vmul.f32 %v2949, %v3025
      %v3066 = vmul.f32 %v2950, %v3025
      %v3067 = vmul.f32 %v2951, %v3025
      %v3068 = vmul.f32 %v2952, %v3025
      %v3069 = vmul.f32 %v2953, %v3025
      %v3070 = vmul.f32 %v2954, %v3025
      %v3071 = vmul.f32 %v2955, %v3025
      %v3072 = vmul.f32 %v2956, %v3025
      %v3073 = vmul.f32 %v2957, %v3025
      %v3074 = vmul.f32 %v2958, %v3025
      %v3075 = vmul.f32 %v2959, %v3025
      %v3076 = vmul.f32 %v2960, %v3025
      %v3077 = vmul.f32 %v2961, %v3025
      %v3078 = vmul.f32 %v2962, %v3025
      %v3079 = vmul.f32 %v2963, %v3025
      %v3080 = vmul.f32 %v2964, %v3025
      %v3081 = vmul.f32 %v2965, %v3025
      %v3082 = vmul.f32 %v2966, %v3025
      %v3083 = vmul.f32 %v2967, %v3025
      %v3084 = vmul.f32 %v2968, %v3025
      %v3085 = vmul.f32 %v2969, %v3025
      %v3086 = vmul.f32 %v2970, %v3025
      %v3087 = vmul.f32 %v2971, %v3025
      %v3088 = vmul.f32 %v2972, %v3025
      %v3089 = vmul.f32 %v2973, %v3025
      %v3090 = vmul.f32 %v2974, %v3025
      %v3091 = vmul.f32 %v2975, %v3025
      %v3092 = vmul.f32 %v2976, %v3025
      %v3093 = vmul.f32 %v2977, %v3025
      %v3094 = vmul.f32 %v2978, %v3025
      %v3095 = vmul.f32 %v2979, %v3025
      %v3096 = vmul.f32 %v2980, %v3025
      %v3097 = vmul.f32 %v2981, %v3025
      %v3098 = vmul.f32 %v2982, %v3025
      %v3099 = vmul.f32 %v2983, %v3025
      %v3100 = vmul.f32 %v2984, %v3025
      %v3101 = vmul.f32 %v2985, %v3025
      %v3102 = vmul.f32 %v2986, %v3025
      %v3103 = vmul.f32 %v2987, %v3025
      %v3104 = vmul.f32 %v2988, %v3025
      %v3105 = vmul.f32 %v2989, %v3025
      %v3106 = vmul.f32 %v2990, %v3025
      %v3107 = vmul.f32 %v2991, %v3025
      %v3108 = vmul.f32 %v2992, %v3025
      %v3109 = vmul.f32 %v2993, %v3025
      %v3110 = vmul.f32 %v2994, %v3025
      %v3111 = vmul.f32 %v2995, %v3025
      %v3112 = vmul.f32 %v2996, %v3025
      %v3113 = vmul.f32 %v2997, %v3025
      %v3114 = vmul.f32 %v2998, %v3025
      %v3115 = vmul.f32 %v2999, %v3025
      %v3116 = vmul.f32 %v3000, %v3025
      %v3117 = vmul.f32 %v3001, %v3025
      %v3118 = vmul.f32 %v3002, %v3025
      %v3119 = vmul.f32 %v3003, %v3025
      %v3120 = vmul.f32 %v3004, %v3025
      %v3121 = vmul.f32 %v3005, %v3025
      %v3122 = vmul.f32 %v3006, %v3025
      %v3123 = vmul.f32 %v3007, %v3025
      %v3124 = vmul.f32 %v3008, %v3025
      %v3125 = vmul.f32 %v3009, %v3025
      %v3126 = vmul.f32 %v3010, %v3025
      %v3127 = vmul.f32 %v3011, %v3025
      %v3128 = vmul.f32 %v3012, %v3025
      %v3129 = vmul.f32 %v3013, %v3025
      %v3130 = vmul.f32 %v3014, %v3025
      %v3131 = vmul.f32 %v3015, %v3025
      %v3132 = vmul.f32 %v3016, %v3025
      %v3133 = vmul.f32 %v3017, %v3025
      %v3134 = vmul.f32 %v3018, %v3025
      %v3135 = vmul.f32 %v3019, %v3025
      %v3136 = vmul.f32 %v3020, %v3025
      %v3137 = vmul.f32 %v3021, %v3025
      %v3138 = vadd.f32 %v2798, %v3026
      %v3139 = vadd.f32 %v2799, %v3027
      %v3140 = vadd.f32 %v2800, %v3028
      %v3141 = vadd.f32 %v2801, %v3029
      %v3142 = vadd.f32 %v2802, %v3030
      %v3143 = vadd.f32 %v2803, %v3031
      %v3144 = vadd.f32 %v2804, %v3032
      %v3145 = vadd.f32 %v2805, %v3033
      %v3146 = vadd.f32 %v2806, %v3034
      %v3147 = vadd.f32 %v2807, %v3035
      %v3148 = vadd.f32 %v2808, %v3036
      %v3149 = vadd.f32 %v2809, %v3037
      %v3150 = vadd.f32 %v2810, %v3038
      %v3151 = vadd.f32 %v2811, %v3039
      %v3152 = vadd.f32 %v2812, %v3040
      %v3153 = vadd.f32 %v2813, %v3041
      %v3154 = vadd.f32 %v2814, %v3042
      %v3155 = vadd.f32 %v2815, %v3043
      %v3156 = vadd.f32 %v2816, %v3044
      %v3157 = vadd.f32 %v2817, %v3045
      %v3158 = vadd.f32 %v2818, %v3046
      %v3159 = vadd.f32 %v2819, %v3047
      %v3160 = vadd.f32 %v2820, %v3048
      %v3161 = vadd.f32 %v2821, %v3049
      %v3162 = vadd.f32 %v2822, %v3050
      %v3163 = vadd.f32 %v2823, %v3051
      %v3164 = vadd.f32 %v2824, %v3052
      %v3165 = vadd.f32 %v2825, %v3053
      %v3166 = vadd.f32 %v2826, %v3054
      %v3167 = vadd.f32 %v2827, %v3055
      %v3168 = vadd.f32 %v2828, %v3056
      %v3169 = vadd.f32 %v2829, %v3057
      %v3170 = vadd.f32 %v2830, %v3058
      %v3171 = vadd.f32 %v2831, %v3059
      %v3172 = vadd.f32 %v2832, %v3060
      %v3173 = vadd.f32 %v2833, %v3061
      %v3174 = vadd.f32 %v2834, %v3062
      %v3175 = vadd.f32 %v2835, %v3063
      %v3176 = vadd.f32 %v2836, %v3064
      %v3177 = vadd.f32 %v2837, %v3065
      %v3178 = vadd.f32 %v2838, %v3066
      %v3179 = vadd.f32 %v2839, %v3067
      %v3180 = vadd.f32 %v2840, %v3068
      %v3181 = vadd.f32 %v2841, %v3069
      %v3182 = vadd.f32 %v2842, %v3070
      %v3183 = vadd.f32 %v2843, %v3071
      %v3184 = vadd.f32 %v2844, %v3072
      %v3185 = vadd.f32 %v2845, %v3073
      %v3186 = vadd.f32 %v2846, %v3074
      %v3187 = vadd.f32 %v2847, %v3075
      %v3188 = vadd.f32 %v2848, %v3076
      %v3189 = vadd.f32 %v2849, %v3077
      %v3190 = vadd.f32 %v2850, %v3078
      %v3191 = vadd.f32 %v2851, %v3079
      %v3192 = vadd.f32 %v2852, %v3080
      %v3193 = vadd.f32 %v2853, %v3081
      %v3194 = vadd.f32 %v2854, %v3082
      %v3195 = vadd.f32 %v2855, %v3083
      %v3196 = vadd.f32 %v2856, %v3084
      %v3197 = vadd.f32 %v2857, %v3085
      %v3198 = vadd.f32 %v2858, %v3086
      %v3199 = vadd.f32 %v2859, %v3087
      %v3200 = vadd.f32 %v2860, %v3088
      %v3201 = vadd.f32 %v2861, %v3089
      %v3202 = vadd.f32 %v2862, %v3090
      %v3203 = vadd.f32 %v2863, %v3091
      %v3204 = vadd.f32 %v2864, %v3092
      %v3205 = vadd.f32 %v2865, %v3093
      %v3206 = vadd.f32 %v2866, %v3094
      %v3207 = vadd.f32 %v2867, %v3095
      %v3208 = vadd.f32 %v2868, %v3096
      %v3209 = vadd.f32 %v2869, %v3097
      %v3210 = vadd.f32 %v2870, %v3098
      %v3211 = vadd.f32 %v2871, %v3099
      %v3212 = vadd.f32 %v2872, %v3100
      %v3213 = vadd.f32 %v2873, %v3101
      %v3214 = vadd.f32 %v2874, %v3102
      %v3215 = vadd.f32 %v2875, %v3103
      %v3216 = vadd.f32 %v2876, %v3104
      %v3217 = vadd.f32 %v2877, %v3105
      %v3218 = vadd.f32 %v2878, %v3106
      %v3219 = vadd.f32 %v2879, %v3107
      %v3220 = vadd.f32 %v2880, %v3108
      %v3221 = vadd.f32 %v2881, %v3109
      %v3222 = vadd.f32 %v2882, %v3110
      %v3223 = vadd.f32 %v2883, %v3111
      %v3224 = vadd.f32 %v2884, %v3112
      %v3225 = vadd.f32 %v2885, %v3113
      %v3226 = vadd.f32 %v2886, %v3114
      %v3227 = vadd.f32 %v2887, %v3115
      %v3228 = vadd.f32 %v2888, %v3116
      %v3229 = vadd.f32 %v2889, %v3117
      %v3230 = vadd.f32 %v2890, %v3118
      %v3231 = vadd.f32 %v2891, %v3119
      %v3232 = vadd.f32 %v2892, %v3120
      %v3233 = vadd.f32 %v2893, %v3121
      %v3234 = vadd.f32 %v2894, %v3122
      %v3235 = vadd.f32 %v2895, %v3123
      %v3236 = vadd.f32 %v2896, %v3124
      %v3237 = vadd.f32 %v2897, %v3125
      %v3238 = vadd.f32 %v2898, %v3126
      %v3239 = vadd.f32 %v2899, %v3127
      %v3240 = vadd.f32 %v2900, %v3128
      %v3241 = vadd.f32 %v2901, %v3129
      %v3242 = vadd.f32 %v2902, %v3130
      %v3243 = vadd.f32 %v2903, %v3131
      %v3244 = vadd.f32 %v2904, %v3132
      %v3245 = vadd.f32 %v2905, %v3133
      %v3246 = vadd.f32 %v2906, %v3134
      %v3247 = vadd.f32 %v2907, %v3135
      %v3248 = vadd.f32 %v2908, %v3136
      %v3249 = vadd.f32 %v2909, %v3137
      %s3250 = scalar_lea.vmem [#allocation2], 64
      %v3251 = vld [vmem:[%s3250] sm:$0xff]
      %v3252 = vld [vmem:[%s3250 + $0x8] sm:$0xff]
      %v3253 = vld [vmem:[%s3250 + $0x10] sm:$0xff]
      %v3254 = vld [vmem:[%s3250 + $0x18] sm:$0xf]
      %v3255 = vld [vmem:[%s3250 + $0x20] sm:$0xff]
      %v3256 = vld [vmem:[%s3250 + $0x28] sm:$0xff]
      %v3257 = vld [vmem:[%s3250 + $0x30] sm:$0xff]
      %v3258 = vld [vmem:[%s3250 + $0x38] sm:$0xf]
      %v3259 = vld [vmem:[%s3250 + $0x40] sm:$0xff]
      %v3260 = vld [vmem:[%s3250 + $0x48] sm:$0xff]
      %v3261 = vld [vmem:[%s3250 + $0x50] sm:$0xff]
      %v3262 = vld [vmem:[%s3250 + $0x58] sm:$0xf]
      %v3263 = vld [vmem:[%s3250 + $0x60] sm:$0xff]
      %v3264 = vld [vmem:[%s3250 + $0x68] sm:$0xff]
      %v3265 = vld [vmem:[%s3250 + $0x70] sm:$0xff]
      %v3266 = vld [vmem:[%s3250 + $0x78] sm:$0xf]
      %v3267 = vld [vmem:[%s3250 + $0x80] sm:$0xff]
      %v3268 = vld [vmem:[%s3250 + $0x88] sm:$0xff]
      %v3269 = vld [vmem:[%s3250 + $0x90] sm:$0xff]
      %v3270 = vld [vmem:[%s3250 + $0x98] sm:$0xf]
      %v3271 = vld [vmem:[%s3250 + $0xa0] sm:$0xff]
      %v3272 = vld [vmem:[%s3250 + $0xa8] sm:$0xff]
      %v3273 = vld [vmem:[%s3250 + $0xb0] sm:$0xff]
      %v3274 = vld [vmem:[%s3250 + $0xb8] sm:$0xf]
      %v3275 = vld [vmem:[%s3250 + $0xc0] sm:$0xff]
      %v3276 = vld [vmem:[%s3250 + $0xc8] sm:$0xff]
      %v3277 = vld [vmem:[%s3250 + $0xd0] sm:$0xff]
      %v3278 = vld [vmem:[%s3250 + $0xd8] sm:$0xf]
      %v3279 = vld [vmem:[%s3250 + $0xe0] sm:$0xff]
      %v3280 = vld [vmem:[%s3250 + $0xe8] sm:$0xff]
      %v3281 = vld [vmem:[%s3250 + $0xf0] sm:$0xff]
      %v3282 = vld [vmem:[%s3250 + $0xf8] sm:$0xf]
      %v3283 = vld [vmem:[%s3250 + $0x100] sm:$0xff]
      %v3284 = vld [vmem:[%s3250 + $0x108] sm:$0xff]
      %v3285 = vld [vmem:[%s3250 + $0x110] sm:$0xff]
      %v3286 = vld [vmem:[%s3250 + $0x118] sm:$0xf]
      %v3287 = vld [vmem:[%s3250 + $0x120] sm:$0xff]
      %v3288 = vld [vmem:[%s3250 + $0x128] sm:$0xff]
      %v3289 = vld [vmem:[%s3250 + $0x130] sm:$0xff]
      %v3290 = vld [vmem:[%s3250 + $0x138] sm:$0xf]
      %v3291 = vld [vmem:[%s3250 + $0x140] sm:$0xff]
      %v3292 = vld [vmem:[%s3250 + $0x148] sm:$0xff]
      %v3293 = vld [vmem:[%s3250 + $0x150] sm:$0xff]
      %v3294 = vld [vmem:[%s3250 + $0x158] sm:$0xf]
      %v3295 = vld [vmem:[%s3250 + $0x160] sm:$0xff]
      %v3296 = vld [vmem:[%s3250 + $0x168] sm:$0xff]
      %v3297 = vld [vmem:[%s3250 + $0x170] sm:$0xff]
      %v3298 = vld [vmem:[%s3250 + $0x178] sm:$0xf]
      %v3299 = vld [vmem:[%s3250 + $0x180] sm:$0xff]
      %v3300 = vld [vmem:[%s3250 + $0x188] sm:$0xff]
      %v3301 = vld [vmem:[%s3250 + $0x190] sm:$0xff]
      %v3302 = vld [vmem:[%s3250 + $0x198] sm:$0xf]
      %v3303 = vld [vmem:[%s3250 + $0x1a0] sm:$0xff]
      %v3304 = vld [vmem:[%s3250 + $0x1a8] sm:$0xff]
      %v3305 = vld [vmem:[%s3250 + $0x1b0] sm:$0xff]
      %v3306 = vld [vmem:[%s3250 + $0x1b8] sm:$0xf]
      %v3307 = vld [vmem:[%s3250 + $0x1c0] sm:$0xff]
      %v3308 = vld [vmem:[%s3250 + $0x1c8] sm:$0xff]
      %v3309 = vld [vmem:[%s3250 + $0x1d0] sm:$0xff]
      %v3310 = vld [vmem:[%s3250 + $0x1d8] sm:$0xf]
      %v3311 = vld [vmem:[%s3250 + $0x1e0] sm:$0xff]
      %v3312 = vld [vmem:[%s3250 + $0x1e8] sm:$0xff]
      %v3313 = vld [vmem:[%s3250 + $0x1f0] sm:$0xff]
      %v3314 = vld [vmem:[%s3250 + $0x1f8] sm:$0xf]
      %v3315 = vld [vmem:[%s3250 + $0x200] sm:$0xff]
      %v3316 = vld [vmem:[%s3250 + $0x208] sm:$0xff]
      %v3317 = vld [vmem:[%s3250 + $0x210] sm:$0xff]
      %v3318 = vld [vmem:[%s3250 + $0x218] sm:$0xf]
      %v3319 = vld [vmem:[%s3250 + $0x220] sm:$0xff]
      %v3320 = vld [vmem:[%s3250 + $0x228] sm:$0xff]
      %v3321 = vld [vmem:[%s3250 + $0x230] sm:$0xff]
      %v3322 = vld [vmem:[%s3250 + $0x238] sm:$0xf]
      %v3323 = vld [vmem:[%s3250 + $0x240] sm:$0xff]
      %v3324 = vld [vmem:[%s3250 + $0x248] sm:$0xff]
      %v3325 = vld [vmem:[%s3250 + $0x250] sm:$0xff]
      %v3326 = vld [vmem:[%s3250 + $0x258] sm:$0xf]
      %v3327 = vld [vmem:[%s3250 + $0x260] sm:$0xff]
      %v3328 = vld [vmem:[%s3250 + $0x268] sm:$0xff]
      %v3329 = vld [vmem:[%s3250 + $0x270] sm:$0xff]
      %v3330 = vld [vmem:[%s3250 + $0x278] sm:$0xf]
      %v3331 = vld [vmem:[%s3250 + $0x280] sm:$0xff]
      %v3332 = vld [vmem:[%s3250 + $0x288] sm:$0xff]
      %v3333 = vld [vmem:[%s3250 + $0x290] sm:$0xff]
      %v3334 = vld [vmem:[%s3250 + $0x298] sm:$0xf]
      %v3335 = vld [vmem:[%s3250 + $0x2a0] sm:$0xff]
      %v3336 = vld [vmem:[%s3250 + $0x2a8] sm:$0xff]
      %v3337 = vld [vmem:[%s3250 + $0x2b0] sm:$0xff]
      %v3338 = vld [vmem:[%s3250 + $0x2b8] sm:$0xf]
      %v3339 = vld [vmem:[%s3250 + $0x2c0] sm:$0xff]
      %v3340 = vld [vmem:[%s3250 + $0x2c8] sm:$0xff]
      %v3341 = vld [vmem:[%s3250 + $0x2d0] sm:$0xff]
      %v3342 = vld [vmem:[%s3250 + $0x2d8] sm:$0xf]
      %v3343 = vld [vmem:[%s3250 + $0x2e0] sm:$0xff]
      %v3344 = vld [vmem:[%s3250 + $0x2e8] sm:$0xff]
      %v3345 = vld [vmem:[%s3250 + $0x2f0] sm:$0xff]
      %v3346 = vld [vmem:[%s3250 + $0x2f8] sm:$0xf]
      %v3347 = vld [vmem:[%s3250 + $0x300] sm:$0xff]
      %v3348 = vld [vmem:[%s3250 + $0x308] sm:$0xff]
      %v3349 = vld [vmem:[%s3250 + $0x310] sm:$0xff]
      %v3350 = vld [vmem:[%s3250 + $0x318] sm:$0xf]
      %v3351 = vld [vmem:[%s3250 + $0x320] sm:$0xff]
      %v3352 = vld [vmem:[%s3250 + $0x328] sm:$0xff]
      %v3353 = vld [vmem:[%s3250 + $0x330] sm:$0xff]
      %v3354 = vld [vmem:[%s3250 + $0x338] sm:$0xf]
      %v3355 = vld [vmem:[%s3250 + $0x340] sm:$0xff]
      %v3356 = vld [vmem:[%s3250 + $0x348] sm:$0xff]
      %v3357 = vld [vmem:[%s3250 + $0x350] sm:$0xff]
      %v3358 = vld [vmem:[%s3250 + $0x358] sm:$0xf]
      %v3359 = vld [vmem:[%s3250 + $0x360] sm:$0xff]
      %v3360 = vld [vmem:[%s3250 + $0x368] sm:$0xff]
      %v3361 = vld [vmem:[%s3250 + $0x370] sm:$0xff]
      %v3362 = vld [vmem:[%s3250 + $0x378] sm:$0xf]
      %v3363 = vlaneseq
      %v3364 = vshrl.u32 %v3363, 7
      %v3365 = vsub.s32 6, %v3364
      %v3366 = vrot.slane %v384, %v3365
      %v3367 = vmul.f32 %v3251, %v3366
      %v3368 = vmul.f32 %v3252, %v3366
      %v3369 = vmul.f32 %v3253, %v3366
      %v3370 = vmul.f32 %v3254, %v3366
      %v3371 = vmul.f32 %v3255, %v3366
      %v3372 = vmul.f32 %v3256, %v3366
      %v3373 = vmul.f32 %v3257, %v3366
      %v3374 = vmul.f32 %v3258, %v3366
      %v3375 = vmul.f32 %v3259, %v3366
      %v3376 = vmul.f32 %v3260, %v3366
      %v3377 = vmul.f32 %v3261, %v3366
      %v3378 = vmul.f32 %v3262, %v3366
      %v3379 = vmul.f32 %v3263, %v3366
      %v3380 = vmul.f32 %v3264, %v3366
      %v3381 = vmul.f32 %v3265, %v3366
      %v3382 = vmul.f32 %v3266, %v3366
      %v3383 = vmul.f32 %v3267, %v3366
      %v3384 = vmul.f32 %v3268, %v3366
      %v3385 = vmul.f32 %v3269, %v3366
      %v3386 = vmul.f32 %v3270, %v3366
      %v3387 = vmul.f32 %v3271, %v3366
      %v3388 = vmul.f32 %v3272, %v3366
      %v3389 = vmul.f32 %v3273, %v3366
      %v3390 = vmul.f32 %v3274, %v3366
      %v3391 = vmul.f32 %v3275, %v3366
      %v3392 = vmul.f32 %v3276, %v3366
      %v3393 = vmul.f32 %v3277, %v3366
      %v3394 = vmul.f32 %v3278, %v3366
      %v3395 = vmul.f32 %v3279, %v3366
      %v3396 = vmul.f32 %v3280, %v3366
      %v3397 = vmul.f32 %v3281, %v3366
      %v3398 = vmul.f32 %v3282, %v3366
      %v3399 = vmul.f32 %v3283, %v3366
      %v3400 = vmul.f32 %v3284, %v3366
      %v3401 = vmul.f32 %v3285, %v3366
      %v3402 = vmul.f32 %v3286, %v3366
      %v3403 = vmul.f32 %v3287, %v3366
      %v3404 = vmul.f32 %v3288, %v3366
      %v3405 = vmul.f32 %v3289, %v3366
      %v3406 = vmul.f32 %v3290, %v3366
      %v3407 = vmul.f32 %v3291, %v3366
      %v3408 = vmul.f32 %v3292, %v3366
      %v3409 = vmul.f32 %v3293, %v3366
      %v3410 = vmul.f32 %v3294, %v3366
      %v3411 = vmul.f32 %v3295, %v3366
      %v3412 = vmul.f32 %v3296, %v3366
      %v3413 = vmul.f32 %v3297, %v3366
      %v3414 = vmul.f32 %v3298, %v3366
      %v3415 = vmul.f32 %v3299, %v3366
      %v3416 = vmul.f32 %v3300, %v3366
      %v3417 = vmul.f32 %v3301, %v3366
      %v3418 = vmul.f32 %v3302, %v3366
      %v3419 = vmul.f32 %v3303, %v3366
      %v3420 = vmul.f32 %v3304, %v3366
      %v3421 = vmul.f32 %v3305, %v3366
      %v3422 = vmul.f32 %v3306, %v3366
      %v3423 = vmul.f32 %v3307, %v3366
      %v3424 = vmul.f32 %v3308, %v3366
      %v3425 = vmul.f32 %v3309, %v3366
      %v3426 = vmul.f32 %v3310, %v3366
      %v3427 = vmul.f32 %v3311, %v3366
      %v3428 = vmul.f32 %v3312, %v3366
      %v3429 = vmul.f32 %v3313, %v3366
      %v3430 = vmul.f32 %v3314, %v3366
      %v3431 = vmul.f32 %v3315, %v3366
      %v3432 = vmul.f32 %v3316, %v3366
      %v3433 = vmul.f32 %v3317, %v3366
      %v3434 = vmul.f32 %v3318, %v3366
      %v3435 = vmul.f32 %v3319, %v3366
      %v3436 = vmul.f32 %v3320, %v3366
      %v3437 = vmul.f32 %v3321, %v3366
      %v3438 = vmul.f32 %v3322, %v3366
      %v3439 = vmul.f32 %v3323, %v3366
      %v3440 = vmul.f32 %v3324, %v3366
      %v3441 = vmul.f32 %v3325, %v3366
      %v3442 = vmul.f32 %v3326, %v3366
      %v3443 = vmul.f32 %v3327, %v3366
      %v3444 = vmul.f32 %v3328, %v3366
      %v3445 = vmul.f32 %v3329, %v3366
      %v3446 = vmul.f32 %v3330, %v3366
      %v3447 = vmul.f32 %v3331, %v3366
      %v3448 = vmul.f32 %v3332, %v3366
      %v3449 = vmul.f32 %v3333, %v3366
      %v3450 = vmul.f32 %v3334, %v3366
      %v3451 = vmul.f32 %v3335, %v3366
      %v3452 = vmul.f32 %v3336, %v3366
      %v3453 = vmul.f32 %v3337, %v3366
      %v3454 = vmul.f32 %v3338, %v3366
      %v3455 = vmul.f32 %v3339, %v3366
      %v3456 = vmul.f32 %v3340, %v3366
      %v3457 = vmul.f32 %v3341, %v3366
      %v3458 = vmul.f32 %v3342, %v3366
      %v3459 = vmul.f32 %v3343, %v3366
      %v3460 = vmul.f32 %v3344, %v3366
      %v3461 = vmul.f32 %v3345, %v3366
      %v3462 = vmul.f32 %v3346, %v3366
      %v3463 = vmul.f32 %v3347, %v3366
      %v3464 = vmul.f32 %v3348, %v3366
      %v3465 = vmul.f32 %v3349, %v3366
      %v3466 = vmul.f32 %v3350, %v3366
      %v3467 = vmul.f32 %v3351, %v3366
      %v3468 = vmul.f32 %v3352, %v3366
      %v3469 = vmul.f32 %v3353, %v3366
      %v3470 = vmul.f32 %v3354, %v3366
      %v3471 = vmul.f32 %v3355, %v3366
      %v3472 = vmul.f32 %v3356, %v3366
      %v3473 = vmul.f32 %v3357, %v3366
      %v3474 = vmul.f32 %v3358, %v3366
      %v3475 = vmul.f32 %v3359, %v3366
      %v3476 = vmul.f32 %v3360, %v3366
      %v3477 = vmul.f32 %v3361, %v3366
      %v3478 = vmul.f32 %v3362, %v3366
      %v3479 = vadd.f32 %v3138, %v3367
      %v3480 = vadd.f32 %v3139, %v3368
      %v3481 = vadd.f32 %v3140, %v3369
      %v3482 = vadd.f32 %v3141, %v3370
      %v3483 = vadd.f32 %v3142, %v3371
      %v3484 = vadd.f32 %v3143, %v3372
      %v3485 = vadd.f32 %v3144, %v3373
      %v3486 = vadd.f32 %v3145, %v3374
      %v3487 = vadd.f32 %v3146, %v3375
      %v3488 = vadd.f32 %v3147, %v3376
      %v3489 = vadd.f32 %v3148, %v3377
      %v3490 = vadd.f32 %v3149, %v3378
      %v3491 = vadd.f32 %v3150, %v3379
      %v3492 = vadd.f32 %v3151, %v3380
      %v3493 = vadd.f32 %v3152, %v3381
      %v3494 = vadd.f32 %v3153, %v3382
      %v3495 = vadd.f32 %v3154, %v3383
      %v3496 = vadd.f32 %v3155, %v3384
      %v3497 = vadd.f32 %v3156, %v3385
      %v3498 = vadd.f32 %v3157, %v3386
      %v3499 = vadd.f32 %v3158, %v3387
      %v3500 = vadd.f32 %v3159, %v3388
      %v3501 = vadd.f32 %v3160, %v3389
      %v3502 = vadd.f32 %v3161, %v3390
      %v3503 = vadd.f32 %v3162, %v3391
      %v3504 = vadd.f32 %v3163, %v3392
      %v3505 = vadd.f32 %v3164, %v3393
      %v3506 = vadd.f32 %v3165, %v3394
      %v3507 = vadd.f32 %v3166, %v3395
      %v3508 = vadd.f32 %v3167, %v3396
      %v3509 = vadd.f32 %v3168, %v3397
      %v3510 = vadd.f32 %v3169, %v3398
      %v3511 = vadd.f32 %v3170, %v3399
      %v3512 = vadd.f32 %v3171, %v3400
      %v3513 = vadd.f32 %v3172, %v3401
      %v3514 = vadd.f32 %v3173, %v3402
      %v3515 = vadd.f32 %v3174, %v3403
      %v3516 = vadd.f32 %v3175, %v3404
      %v3517 = vadd.f32 %v3176, %v3405
      %v3518 = vadd.f32 %v3177, %v3406
      %v3519 = vadd.f32 %v3178, %v3407
      %v3520 = vadd.f32 %v3179, %v3408
      %v3521 = vadd.f32 %v3180, %v3409
      %v3522 = vadd.f32 %v3181, %v3410
      %v3523 = vadd.f32 %v3182, %v3411
      %v3524 = vadd.f32 %v3183, %v3412
      %v3525 = vadd.f32 %v3184, %v3413
      %v3526 = vadd.f32 %v3185, %v3414
      %v3527 = vadd.f32 %v3186, %v3415
      %v3528 = vadd.f32 %v3187, %v3416
      %v3529 = vadd.f32 %v3188, %v3417
      %v3530 = vadd.f32 %v3189, %v3418
      %v3531 = vadd.f32 %v3190, %v3419
      %v3532 = vadd.f32 %v3191, %v3420
      %v3533 = vadd.f32 %v3192, %v3421
      %v3534 = vadd.f32 %v3193, %v3422
      %v3535 = vadd.f32 %v3194, %v3423
      %v3536 = vadd.f32 %v3195, %v3424
      %v3537 = vadd.f32 %v3196, %v3425
      %v3538 = vadd.f32 %v3197, %v3426
      %v3539 = vadd.f32 %v3198, %v3427
      %v3540 = vadd.f32 %v3199, %v3428
      %v3541 = vadd.f32 %v3200, %v3429
      %v3542 = vadd.f32 %v3201, %v3430
      %v3543 = vadd.f32 %v3202, %v3431
      %v3544 = vadd.f32 %v3203, %v3432
      %v3545 = vadd.f32 %v3204, %v3433
      %v3546 = vadd.f32 %v3205, %v3434
      %v3547 = vadd.f32 %v3206, %v3435
      %v3548 = vadd.f32 %v3207, %v3436
      %v3549 = vadd.f32 %v3208, %v3437
      %v3550 = vadd.f32 %v3209, %v3438
      %v3551 = vadd.f32 %v3210, %v3439
      %v3552 = vadd.f32 %v3211, %v3440
      %v3553 = vadd.f32 %v3212, %v3441
      %v3554 = vadd.f32 %v3213, %v3442
      %v3555 = vadd.f32 %v3214, %v3443
      %v3556 = vadd.f32 %v3215, %v3444
      %v3557 = vadd.f32 %v3216, %v3445
      %v3558 = vadd.f32 %v3217, %v3446
      %v3559 = vadd.f32 %v3218, %v3447
      %v3560 = vadd.f32 %v3219, %v3448
      %v3561 = vadd.f32 %v3220, %v3449
      %v3562 = vadd.f32 %v3221, %v3450
      %v3563 = vadd.f32 %v3222, %v3451
      %v3564 = vadd.f32 %v3223, %v3452
      %v3565 = vadd.f32 %v3224, %v3453
      %v3566 = vadd.f32 %v3225, %v3454
      %v3567 = vadd.f32 %v3226, %v3455
      %v3568 = vadd.f32 %v3227, %v3456
      %v3569 = vadd.f32 %v3228, %v3457
      %v3570 = vadd.f32 %v3229, %v3458
      %v3571 = vadd.f32 %v3230, %v3459
      %v3572 = vadd.f32 %v3231, %v3460
      %v3573 = vadd.f32 %v3232, %v3461
      %v3574 = vadd.f32 %v3233, %v3462
      %v3575 = vadd.f32 %v3234, %v3463
      %v3576 = vadd.f32 %v3235, %v3464
      %v3577 = vadd.f32 %v3236, %v3465
      %v3578 = vadd.f32 %v3237, %v3466
      %v3579 = vadd.f32 %v3238, %v3467
      %v3580 = vadd.f32 %v3239, %v3468
      %v3581 = vadd.f32 %v3240, %v3469
      %v3582 = vadd.f32 %v3241, %v3470
      %v3583 = vadd.f32 %v3242, %v3471
      %v3584 = vadd.f32 %v3243, %v3472
      %v3585 = vadd.f32 %v3244, %v3473
      %v3586 = vadd.f32 %v3245, %v3474
      %v3587 = vadd.f32 %v3246, %v3475
      %v3588 = vadd.f32 %v3247, %v3476
      %v3589 = vadd.f32 %v3248, %v3477
      %v3590 = vadd.f32 %v3249, %v3478
      %v3591 = vld [vmem:[%s3250 + $0x1] sm:$0xff]
      %v3592 = vld [vmem:[%s3250 + $0x9] sm:$0xff]
      %v3593 = vld [vmem:[%s3250 + $0x11] sm:$0xff]
      %v3594 = vld [vmem:[%s3250 + $0x19] sm:$0xf]
      %v3595 = vld [vmem:[%s3250 + $0x21] sm:$0xff]
      %v3596 = vld [vmem:[%s3250 + $0x29] sm:$0xff]
      %v3597 = vld [vmem:[%s3250 + $0x31] sm:$0xff]
      %v3598 = vld [vmem:[%s3250 + $0x39] sm:$0xf]
      %v3599 = vld [vmem:[%s3250 + $0x41] sm:$0xff]
      %v3600 = vld [vmem:[%s3250 + $0x49] sm:$0xff]
      %v3601 = vld [vmem:[%s3250 + $0x51] sm:$0xff]
      %v3602 = vld [vmem:[%s3250 + $0x59] sm:$0xf]
      %v3603 = vld [vmem:[%s3250 + $0x61] sm:$0xff]
      %v3604 = vld [vmem:[%s3250 + $0x69] sm:$0xff]
      %v3605 = vld [vmem:[%s3250 + $0x71] sm:$0xff]
      %v3606 = vld [vmem:[%s3250 + $0x79] sm:$0xf]
      %v3607 = vld [vmem:[%s3250 + $0x81] sm:$0xff]
      %v3608 = vld [vmem:[%s3250 + $0x89] sm:$0xff]
      %v3609 = vld [vmem:[%s3250 + $0x91] sm:$0xff]
      %v3610 = vld [vmem:[%s3250 + $0x99] sm:$0xf]
      %v3611 = vld [vmem:[%s3250 + $0xa1] sm:$0xff]
      %v3612 = vld [vmem:[%s3250 + $0xa9] sm:$0xff]
      %v3613 = vld [vmem:[%s3250 + $0xb1] sm:$0xff]
      %v3614 = vld [vmem:[%s3250 + $0xb9] sm:$0xf]
      %v3615 = vld [vmem:[%s3250 + $0xc1] sm:$0xff]
      %v3616 = vld [vmem:[%s3250 + $0xc9] sm:$0xff]
      %v3617 = vld [vmem:[%s3250 + $0xd1] sm:$0xff]
      %v3618 = vld [vmem:[%s3250 + $0xd9] sm:$0xf]
      %v3619 = vld [vmem:[%s3250 + $0xe1] sm:$0xff]
      %v3620 = vld [vmem:[%s3250 + $0xe9] sm:$0xff]
      %v3621 = vld [vmem:[%s3250 + $0xf1] sm:$0xff]
      %v3622 = vld [vmem:[%s3250 + $0xf9] sm:$0xf]
      %v3623 = vld [vmem:[%s3250 + $0x101] sm:$0xff]
      %v3624 = vld [vmem:[%s3250 + $0x109] sm:$0xff]
      %v3625 = vld [vmem:[%s3250 + $0x111] sm:$0xff]
      %v3626 = vld [vmem:[%s3250 + $0x119] sm:$0xf]
      %v3627 = vld [vmem:[%s3250 + $0x121] sm:$0xff]
      %v3628 = vld [vmem:[%s3250 + $0x129] sm:$0xff]
      %v3629 = vld [vmem:[%s3250 + $0x131] sm:$0xff]
      %v3630 = vld [vmem:[%s3250 + $0x139] sm:$0xf]
      %v3631 = vld [vmem:[%s3250 + $0x141] sm:$0xff]
      %v3632 = vld [vmem:[%s3250 + $0x149] sm:$0xff]
      %v3633 = vld [vmem:[%s3250 + $0x151] sm:$0xff]
      %v3634 = vld [vmem:[%s3250 + $0x159] sm:$0xf]
      %v3635 = vld [vmem:[%s3250 + $0x161] sm:$0xff]
      %v3636 = vld [vmem:[%s3250 + $0x169] sm:$0xff]
      %v3637 = vld [vmem:[%s3250 + $0x171] sm:$0xff]
      %v3638 = vld [vmem:[%s3250 + $0x179] sm:$0xf]
      %v3639 = vld [vmem:[%s3250 + $0x181] sm:$0xff]
      %v3640 = vld [vmem:[%s3250 + $0x189] sm:$0xff]
      %v3641 = vld [vmem:[%s3250 + $0x191] sm:$0xff]
      %v3642 = vld [vmem:[%s3250 + $0x199] sm:$0xf]
      %v3643 = vld [vmem:[%s3250 + $0x1a1] sm:$0xff]
      %v3644 = vld [vmem:[%s3250 + $0x1a9] sm:$0xff]
      %v3645 = vld [vmem:[%s3250 + $0x1b1] sm:$0xff]
      %v3646 = vld [vmem:[%s3250 + $0x1b9] sm:$0xf]
      %v3647 = vld [vmem:[%s3250 + $0x1c1] sm:$0xff]
      %v3648 = vld [vmem:[%s3250 + $0x1c9] sm:$0xff]
      %v3649 = vld [vmem:[%s3250 + $0x1d1] sm:$0xff]
      %v3650 = vld [vmem:[%s3250 + $0x1d9] sm:$0xf]
      %v3651 = vld [vmem:[%s3250 + $0x1e1] sm:$0xff]
      %v3652 = vld [vmem:[%s3250 + $0x1e9] sm:$0xff]
      %v3653 = vld [vmem:[%s3250 + $0x1f1] sm:$0xff]
      %v3654 = vld [vmem:[%s3250 + $0x1f9] sm:$0xf]
      %v3655 = vld [vmem:[%s3250 + $0x201] sm:$0xff]
      %v3656 = vld [vmem:[%s3250 + $0x209] sm:$0xff]
      %v3657 = vld [vmem:[%s3250 + $0x211] sm:$0xff]
      %v3658 = vld [vmem:[%s3250 + $0x219] sm:$0xf]
      %v3659 = vld [vmem:[%s3250 + $0x221] sm:$0xff]
      %v3660 = vld [vmem:[%s3250 + $0x229] sm:$0xff]
      %v3661 = vld [vmem:[%s3250 + $0x231] sm:$0xff]
      %v3662 = vld [vmem:[%s3250 + $0x239] sm:$0xf]
      %v3663 = vld [vmem:[%s3250 + $0x241] sm:$0xff]
      %v3664 = vld [vmem:[%s3250 + $0x249] sm:$0xff]
      %v3665 = vld [vmem:[%s3250 + $0x251] sm:$0xff]
      %v3666 = vld [vmem:[%s3250 + $0x259] sm:$0xf]
      %v3667 = vld [vmem:[%s3250 + $0x261] sm:$0xff]
      %v3668 = vld [vmem:[%s3250 + $0x269] sm:$0xff]
      %v3669 = vld [vmem:[%s3250 + $0x271] sm:$0xff]
      %v3670 = vld [vmem:[%s3250 + $0x279] sm:$0xf]
      %v3671 = vld [vmem:[%s3250 + $0x281] sm:$0xff]
      %v3672 = vld [vmem:[%s3250 + $0x289] sm:$0xff]
      %v3673 = vld [vmem:[%s3250 + $0x291] sm:$0xff]
      %v3674 = vld [vmem:[%s3250 + $0x299] sm:$0xf]
      %v3675 = vld [vmem:[%s3250 + $0x2a1] sm:$0xff]
      %v3676 = vld [vmem:[%s3250 + $0x2a9] sm:$0xff]
      %v3677 = vld [vmem:[%s3250 + $0x2b1] sm:$0xff]
      %v3678 = vld [vmem:[%s3250 + $0x2b9] sm:$0xf]
      %v3679 = vld [vmem:[%s3250 + $0x2c1] sm:$0xff]
      %v3680 = vld [vmem:[%s3250 + $0x2c9] sm:$0xff]
      %v3681 = vld [vmem:[%s3250 + $0x2d1] sm:$0xff]
      %v3682 = vld [vmem:[%s3250 + $0x2d9] sm:$0xf]
      %v3683 = vld [vmem:[%s3250 + $0x2e1] sm:$0xff]
      %v3684 = vld [vmem:[%s3250 + $0x2e9] sm:$0xff]
      %v3685 = vld [vmem:[%s3250 + $0x2f1] sm:$0xff]
      %v3686 = vld [vmem:[%s3250 + $0x2f9] sm:$0xf]
      %v3687 = vld [vmem:[%s3250 + $0x301] sm:$0xff]
      %v3688 = vld [vmem:[%s3250 + $0x309] sm:$0xff]
      %v3689 = vld [vmem:[%s3250 + $0x311] sm:$0xff]
      %v3690 = vld [vmem:[%s3250 + $0x319] sm:$0xf]
      %v3691 = vld [vmem:[%s3250 + $0x321] sm:$0xff]
      %v3692 = vld [vmem:[%s3250 + $0x329] sm:$0xff]
      %v3693 = vld [vmem:[%s3250 + $0x331] sm:$0xff]
      %v3694 = vld [vmem:[%s3250 + $0x339] sm:$0xf]
      %v3695 = vld [vmem:[%s3250 + $0x341] sm:$0xff]
      %v3696 = vld [vmem:[%s3250 + $0x349] sm:$0xff]
      %v3697 = vld [vmem:[%s3250 + $0x351] sm:$0xff]
      %v3698 = vld [vmem:[%s3250 + $0x359] sm:$0xf]
      %v3699 = vld [vmem:[%s3250 + $0x361] sm:$0xff]
      %v3700 = vld [vmem:[%s3250 + $0x369] sm:$0xff]
      %v3701 = vld [vmem:[%s3250 + $0x371] sm:$0xff]
      %v3702 = vld [vmem:[%s3250 + $0x379] sm:$0xf]
      %v3703 = vlaneseq
      %v3704 = vshrl.u32 %v3703, 7
      %v3705 = vsub.s32 7, %v3704
      %v3706 = vrot.slane %v384, %v3705
      %v3707 = vmul.f32 %v3591, %v3706
      %v3708 = vmul.f32 %v3592, %v3706
      %v3709 = vmul.f32 %v3593, %v3706
      %v3710 = vmul.f32 %v3594, %v3706
      %v3711 = vmul.f32 %v3595, %v3706
      %v3712 = vmul.f32 %v3596, %v3706
      %v3713 = vmul.f32 %v3597, %v3706
      %v3714 = vmul.f32 %v3598, %v3706
      %v3715 = vmul.f32 %v3599, %v3706
      %v3716 = vmul.f32 %v3600, %v3706
      %v3717 = vmul.f32 %v3601, %v3706
      %v3718 = vmul.f32 %v3602, %v3706
      %v3719 = vmul.f32 %v3603, %v3706
      %v3720 = vmul.f32 %v3604, %v3706
      %v3721 = vmul.f32 %v3605, %v3706
      %v3722 = vmul.f32 %v3606, %v3706
      %v3723 = vmul.f32 %v3607, %v3706
      %v3724 = vmul.f32 %v3608, %v3706
      %v3725 = vmul.f32 %v3609, %v3706
      %v3726 = vmul.f32 %v3610, %v3706
      %v3727 = vmul.f32 %v3611, %v3706
      %v3728 = vmul.f32 %v3612, %v3706
      %v3729 = vmul.f32 %v3613, %v3706
      %v3730 = vmul.f32 %v3614, %v3706
      %v3731 = vmul.f32 %v3615, %v3706
      %v3732 = vmul.f32 %v3616, %v3706
      %v3733 = vmul.f32 %v3617, %v3706
      %v3734 = vmul.f32 %v3618, %v3706
      %v3735 = vmul.f32 %v3619, %v3706
      %v3736 = vmul.f32 %v3620, %v3706
      %v3737 = vmul.f32 %v3621, %v3706
      %v3738 = vmul.f32 %v3622, %v3706
      %v3739 = vmul.f32 %v3623, %v3706
      %v3740 = vmul.f32 %v3624, %v3706
      %v3741 = vmul.f32 %v3625, %v3706
      %v3742 = vmul.f32 %v3626, %v3706
      %v3743 = vmul.f32 %v3627, %v3706
      %v3744 = vmul.f32 %v3628, %v3706
      %v3745 = vmul.f32 %v3629, %v3706
      %v3746 = vmul.f32 %v3630, %v3706
      %v3747 = vmul.f32 %v3631, %v3706
      %v3748 = vmul.f32 %v3632, %v3706
      %v3749 = vmul.f32 %v3633, %v3706
      %v3750 = vmul.f32 %v3634, %v3706
      %v3751 = vmul.f32 %v3635, %v3706
      %v3752 = vmul.f32 %v3636, %v3706
      %v3753 = vmul.f32 %v3637, %v3706
      %v3754 = vmul.f32 %v3638, %v3706
      %v3755 = vmul.f32 %v3639, %v3706
      %v3756 = vmul.f32 %v3640, %v3706
      %v3757 = vmul.f32 %v3641, %v3706
      %v3758 = vmul.f32 %v3642, %v3706
      %v3759 = vmul.f32 %v3643, %v3706
      %v3760 = vmul.f32 %v3644, %v3706
      %v3761 = vmul.f32 %v3645, %v3706
      %v3762 = vmul.f32 %v3646, %v3706
      %v3763 = vmul.f32 %v3647, %v3706
      %v3764 = vmul.f32 %v3648, %v3706
      %v3765 = vmul.f32 %v3649, %v3706
      %v3766 = vmul.f32 %v3650, %v3706
      %v3767 = vmul.f32 %v3651, %v3706
      %v3768 = vmul.f32 %v3652, %v3706
      %v3769 = vmul.f32 %v3653, %v3706
      %v3770 = vmul.f32 %v3654, %v3706
      %v3771 = vmul.f32 %v3655, %v3706
      %v3772 = vmul.f32 %v3656, %v3706
      %v3773 = vmul.f32 %v3657, %v3706
      %v3774 = vmul.f32 %v3658, %v3706
      %v3775 = vmul.f32 %v3659, %v3706
      %v3776 = vmul.f32 %v3660, %v3706
      %v3777 = vmul.f32 %v3661, %v3706
      %v3778 = vmul.f32 %v3662, %v3706
      %v3779 = vmul.f32 %v3663, %v3706
      %v3780 = vmul.f32 %v3664, %v3706
      %v3781 = vmul.f32 %v3665, %v3706
      %v3782 = vmul.f32 %v3666, %v3706
      %v3783 = vmul.f32 %v3667, %v3706
      %v3784 = vmul.f32 %v3668, %v3706
      %v3785 = vmul.f32 %v3669, %v3706
      %v3786 = vmul.f32 %v3670, %v3706
      %v3787 = vmul.f32 %v3671, %v3706
      %v3788 = vmul.f32 %v3672, %v3706
      %v3789 = vmul.f32 %v3673, %v3706
      %v3790 = vmul.f32 %v3674, %v3706
      %v3791 = vmul.f32 %v3675, %v3706
      %v3792 = vmul.f32 %v3676, %v3706
      %v3793 = vmul.f32 %v3677, %v3706
      %v3794 = vmul.f32 %v3678, %v3706
      %v3795 = vmul.f32 %v3679, %v3706
      %v3796 = vmul.f32 %v3680, %v3706
      %v3797 = vmul.f32 %v3681, %v3706
      %v3798 = vmul.f32 %v3682, %v3706
      %v3799 = vmul.f32 %v3683, %v3706
      %v3800 = vmul.f32 %v3684, %v3706
      %v3801 = vmul.f32 %v3685, %v3706
      %v3802 = vmul.f32 %v3686, %v3706
      %v3803 = vmul.f32 %v3687, %v3706
      %v3804 = vmul.f32 %v3688, %v3706
      %v3805 = vmul.f32 %v3689, %v3706
      %v3806 = vmul.f32 %v3690, %v3706
      %v3807 = vmul.f32 %v3691, %v3706
      %v3808 = vmul.f32 %v3692, %v3706
      %v3809 = vmul.f32 %v3693, %v3706
      %v3810 = vmul.f32 %v3694, %v3706
      %v3811 = vmul.f32 %v3695, %v3706
      %v3812 = vmul.f32 %v3696, %v3706
      %v3813 = vmul.f32 %v3697, %v3706
      %v3814 = vmul.f32 %v3698, %v3706
      %v3815 = vmul.f32 %v3699, %v3706
      %v3816 = vmul.f32 %v3700, %v3706
      %v3817 = vmul.f32 %v3701, %v3706
      %v3818 = vmul.f32 %v3702, %v3706
      %v3819 = vadd.f32 %v3479, %v3707
      %v3820 = vadd.f32 %v3480, %v3708
      %v3821 = vadd.f32 %v3481, %v3709
      %v3822 = vadd.f32 %v3482, %v3710
      %v3823 = vadd.f32 %v3483, %v3711
      %v3824 = vadd.f32 %v3484, %v3712
      %v3825 = vadd.f32 %v3485, %v3713
      %v3826 = vadd.f32 %v3486, %v3714
      %v3827 = vadd.f32 %v3487, %v3715
      %v3828 = vadd.f32 %v3488, %v3716
      %v3829 = vadd.f32 %v3489, %v3717
      %v3830 = vadd.f32 %v3490, %v3718
      %v3831 = vadd.f32 %v3491, %v3719
      %v3832 = vadd.f32 %v3492, %v3720
      %v3833 = vadd.f32 %v3493, %v3721
      %v3834 = vadd.f32 %v3494, %v3722
      %v3835 = vadd.f32 %v3495, %v3723
      %v3836 = vadd.f32 %v3496, %v3724
      %v3837 = vadd.f32 %v3497, %v3725
      %v3838 = vadd.f32 %v3498, %v3726
      %v3839 = vadd.f32 %v3499, %v3727
      %v3840 = vadd.f32 %v3500, %v3728
      %v3841 = vadd.f32 %v3501, %v3729
      %v3842 = vadd.f32 %v3502, %v3730
      %v3843 = vadd.f32 %v3503, %v3731
      %v3844 = vadd.f32 %v3504, %v3732
      %v3845 = vadd.f32 %v3505, %v3733
      %v3846 = vadd.f32 %v3506, %v3734
      %v3847 = vadd.f32 %v3507, %v3735
      %v3848 = vadd.f32 %v3508, %v3736
      %v3849 = vadd.f32 %v3509, %v3737
      %v3850 = vadd.f32 %v3510, %v3738
      %v3851 = vadd.f32 %v3511, %v3739
      %v3852 = vadd.f32 %v3512, %v3740
      %v3853 = vadd.f32 %v3513, %v3741
      %v3854 = vadd.f32 %v3514, %v3742
      %v3855 = vadd.f32 %v3515, %v3743
      %v3856 = vadd.f32 %v3516, %v3744
      %v3857 = vadd.f32 %v3517, %v3745
      %v3858 = vadd.f32 %v3518, %v3746
      %v3859 = vadd.f32 %v3519, %v3747
      %v3860 = vadd.f32 %v3520, %v3748
      %v3861 = vadd.f32 %v3521, %v3749
      %v3862 = vadd.f32 %v3522, %v3750
      %v3863 = vadd.f32 %v3523, %v3751
      %v3864 = vadd.f32 %v3524, %v3752
      %v3865 = vadd.f32 %v3525, %v3753
      %v3866 = vadd.f32 %v3526, %v3754
      %v3867 = vadd.f32 %v3527, %v3755
      %v3868 = vadd.f32 %v3528, %v3756
      %v3869 = vadd.f32 %v3529, %v3757
      %v3870 = vadd.f32 %v3530, %v3758
      %v3871 = vadd.f32 %v3531, %v3759
      %v3872 = vadd.f32 %v3532, %v3760
      %v3873 = vadd.f32 %v3533, %v3761
      %v3874 = vadd.f32 %v3534, %v3762
      %v3875 = vadd.f32 %v3535, %v3763
      %v3876 = vadd.f32 %v3536, %v3764
      %v3877 = vadd.f32 %v3537, %v3765
      %v3878 = vadd.f32 %v3538, %v3766
      %v3879 = vadd.f32 %v3539, %v3767
      %v3880 = vadd.f32 %v3540, %v3768
      %v3881 = vadd.f32 %v3541, %v3769
      %v3882 = vadd.f32 %v3542, %v3770
      %v3883 = vadd.f32 %v3543, %v3771
      %v3884 = vadd.f32 %v3544, %v3772
      %v3885 = vadd.f32 %v3545, %v3773
      %v3886 = vadd.f32 %v3546, %v3774
      %v3887 = vadd.f32 %v3547, %v3775
      %v3888 = vadd.f32 %v3548, %v3776
      %v3889 = vadd.f32 %v3549, %v3777
      %v3890 = vadd.f32 %v3550, %v3778
      %v3891 = vadd.f32 %v3551, %v3779
      %v3892 = vadd.f32 %v3552, %v3780
      %v3893 = vadd.f32 %v3553, %v3781
      %v3894 = vadd.f32 %v3554, %v3782
      %v3895 = vadd.f32 %v3555, %v3783
      %v3896 = vadd.f32 %v3556, %v3784
      %v3897 = vadd.f32 %v3557, %v3785
      %v3898 = vadd.f32 %v3558, %v3786
      %v3899 = vadd.f32 %v3559, %v3787
      %v3900 = vadd.f32 %v3560, %v3788
      %v3901 = vadd.f32 %v3561, %v3789
      %v3902 = vadd.f32 %v3562, %v3790
      %v3903 = vadd.f32 %v3563, %v3791
      %v3904 = vadd.f32 %v3564, %v3792
      %v3905 = vadd.f32 %v3565, %v3793
      %v3906 = vadd.f32 %v3566, %v3794
      %v3907 = vadd.f32 %v3567, %v3795
      %v3908 = vadd.f32 %v3568, %v3796
      %v3909 = vadd.f32 %v3569, %v3797
      %v3910 = vadd.f32 %v3570, %v3798
      %v3911 = vadd.f32 %v3571, %v3799
      %v3912 = vadd.f32 %v3572, %v3800
      %v3913 = vadd.f32 %v3573, %v3801
      %v3914 = vadd.f32 %v3574, %v3802
      %v3915 = vadd.f32 %v3575, %v3803
      %v3916 = vadd.f32 %v3576, %v3804
      %v3917 = vadd.f32 %v3577, %v3805
      %v3918 = vadd.f32 %v3578, %v3806
      %v3919 = vadd.f32 %v3579, %v3807
      %v3920 = vadd.f32 %v3580, %v3808
      %v3921 = vadd.f32 %v3581, %v3809
      %v3922 = vadd.f32 %v3582, %v3810
      %v3923 = vadd.f32 %v3583, %v3811
      %v3924 = vadd.f32 %v3584, %v3812
      %v3925 = vadd.f32 %v3585, %v3813
      %v3926 = vadd.f32 %v3586, %v3814
      %v3927 = vadd.f32 %v3587, %v3815
      %v3928 = vadd.f32 %v3588, %v3816
      %v3929 = vadd.f32 %v3589, %v3817
      %v3930 = vadd.f32 %v3590, %v3818
      %v3931 = vld [vmem:[%s3250 + $0x2] sm:$0xff]
      %v3932 = vld [vmem:[%s3250 + $0xa] sm:$0xff]
      %v3933 = vld [vmem:[%s3250 + $0x12] sm:$0xff]
      %v3934 = vld [vmem:[%s3250 + $0x1a] sm:$0xf]
      %v3935 = vld [vmem:[%s3250 + $0x22] sm:$0xff]
      %v3936 = vld [vmem:[%s3250 + $0x2a] sm:$0xff]
      %v3937 = vld [vmem:[%s3250 + $0x32] sm:$0xff]
      %v3938 = vld [vmem:[%s3250 + $0x3a] sm:$0xf]
      %v3939 = vld [vmem:[%s3250 + $0x42] sm:$0xff]
      %v3940 = vld [vmem:[%s3250 + $0x4a] sm:$0xff]
      %v3941 = vld [vmem:[%s3250 + $0x52] sm:$0xff]
      %v3942 = vld [vmem:[%s3250 + $0x5a] sm:$0xf]
      %v3943 = vld [vmem:[%s3250 + $0x62] sm:$0xff]
      %v3944 = vld [vmem:[%s3250 + $0x6a] sm:$0xff]
      %v3945 = vld [vmem:[%s3250 + $0x72] sm:$0xff]
      %v3946 = vld [vmem:[%s3250 + $0x7a] sm:$0xf]
      %v3947 = vld [vmem:[%s3250 + $0x82] sm:$0xff]
      %v3948 = vld [vmem:[%s3250 + $0x8a] sm:$0xff]
      %v3949 = vld [vmem:[%s3250 + $0x92] sm:$0xff]
      %v3950 = vld [vmem:[%s3250 + $0x9a] sm:$0xf]
      %v3951 = vld [vmem:[%s3250 + $0xa2] sm:$0xff]
      %v3952 = vld [vmem:[%s3250 + $0xaa] sm:$0xff]
      %v3953 = vld [vmem:[%s3250 + $0xb2] sm:$0xff]
      %v3954 = vld [vmem:[%s3250 + $0xba] sm:$0xf]
      %v3955 = vld [vmem:[%s3250 + $0xc2] sm:$0xff]
      %v3956 = vld [vmem:[%s3250 + $0xca] sm:$0xff]
      %v3957 = vld [vmem:[%s3250 + $0xd2] sm:$0xff]
      %v3958 = vld [vmem:[%s3250 + $0xda] sm:$0xf]
      %v3959 = vld [vmem:[%s3250 + $0xe2] sm:$0xff]
      %v3960 = vld [vmem:[%s3250 + $0xea] sm:$0xff]
      %v3961 = vld [vmem:[%s3250 + $0xf2] sm:$0xff]
      %v3962 = vld [vmem:[%s3250 + $0xfa] sm:$0xf]
      %v3963 = vld [vmem:[%s3250 + $0x102] sm:$0xff]
      %v3964 = vld [vmem:[%s3250 + $0x10a] sm:$0xff]
      %v3965 = vld [vmem:[%s3250 + $0x112] sm:$0xff]
      %v3966 = vld [vmem:[%s3250 + $0x11a] sm:$0xf]
      %v3967 = vld [vmem:[%s3250 + $0x122] sm:$0xff]
      %v3968 = vld [vmem:[%s3250 + $0x12a] sm:$0xff]
      %v3969 = vld [vmem:[%s3250 + $0x132] sm:$0xff]
      %v3970 = vld [vmem:[%s3250 + $0x13a] sm:$0xf]
      %v3971 = vld [vmem:[%s3250 + $0x142] sm:$0xff]
      %v3972 = vld [vmem:[%s3250 + $0x14a] sm:$0xff]
      %v3973 = vld [vmem:[%s3250 + $0x152] sm:$0xff]
      %v3974 = vld [vmem:[%s3250 + $0x15a] sm:$0xf]
      %v3975 = vld [vmem:[%s3250 + $0x162] sm:$0xff]
      %v3976 = vld [vmem:[%s3250 + $0x16a] sm:$0xff]
      %v3977 = vld [vmem:[%s3250 + $0x172] sm:$0xff]
      %v3978 = vld [vmem:[%s3250 + $0x17a] sm:$0xf]
      %v3979 = vld [vmem:[%s3250 + $0x182] sm:$0xff]
      %v3980 = vld [vmem:[%s3250 + $0x18a] sm:$0xff]
      %v3981 = vld [vmem:[%s3250 + $0x192] sm:$0xff]
      %v3982 = vld [vmem:[%s3250 + $0x19a] sm:$0xf]
      %v3983 = vld [vmem:[%s3250 + $0x1a2] sm:$0xff]
      %v3984 = vld [vmem:[%s3250 + $0x1aa] sm:$0xff]
      %v3985 = vld [vmem:[%s3250 + $0x1b2] sm:$0xff]
      %v3986 = vld [vmem:[%s3250 + $0x1ba] sm:$0xf]
      %v3987 = vld [vmem:[%s3250 + $0x1c2] sm:$0xff]
      %v3988 = vld [vmem:[%s3250 + $0x1ca] sm:$0xff]
      %v3989 = vld [vmem:[%s3250 + $0x1d2] sm:$0xff]
      %v3990 = vld [vmem:[%s3250 + $0x1da] sm:$0xf]
      %v3991 = vld [vmem:[%s3250 + $0x1e2] sm:$0xff]
      %v3992 = vld [vmem:[%s3250 + $0x1ea] sm:$0xff]
      %v3993 = vld [vmem:[%s3250 + $0x1f2] sm:$0xff]
      %v3994 = vld [vmem:[%s3250 + $0x1fa] sm:$0xf]
      %v3995 = vld [vmem:[%s3250 + $0x202] sm:$0xff]
      %v3996 = vld [vmem:[%s3250 + $0x20a] sm:$0xff]
      %v3997 = vld [vmem:[%s3250 + $0x212] sm:$0xff]
      %v3998 = vld [vmem:[%s3250 + $0x21a] sm:$0xf]
      %v3999 = vld [vmem:[%s3250 + $0x222] sm:$0xff]
      %v4000 = vld [vmem:[%s3250 + $0x22a] sm:$0xff]
      %v4001 = vld [vmem:[%s3250 + $0x232] sm:$0xff]
      %v4002 = vld [vmem:[%s3250 + $0x23a] sm:$0xf]
      %v4003 = vld [vmem:[%s3250 + $0x242] sm:$0xff]
      %v4004 = vld [vmem:[%s3250 + $0x24a] sm:$0xff]
      %v4005 = vld [vmem:[%s3250 + $0x252] sm:$0xff]
      %v4006 = vld [vmem:[%s3250 + $0x25a] sm:$0xf]
      %v4007 = vld [vmem:[%s3250 + $0x262] sm:$0xff]
      %v4008 = vld [vmem:[%s3250 + $0x26a] sm:$0xff]
      %v4009 = vld [vmem:[%s3250 + $0x272] sm:$0xff]
      %v4010 = vld [vmem:[%s3250 + $0x27a] sm:$0xf]
      %v4011 = vld [vmem:[%s3250 + $0x282] sm:$0xff]
      %v4012 = vld [vmem:[%s3250 + $0x28a] sm:$0xff]
      %v4013 = vld [vmem:[%s3250 + $0x292] sm:$0xff]
      %v4014 = vld [vmem:[%s3250 + $0x29a] sm:$0xf]
      %v4015 = vld [vmem:[%s3250 + $0x2a2] sm:$0xff]
      %v4016 = vld [vmem:[%s3250 + $0x2aa] sm:$0xff]
      %v4017 = vld [vmem:[%s3250 + $0x2b2] sm:$0xff]
      %v4018 = vld [vmem:[%s3250 + $0x2ba] sm:$0xf]
      %v4019 = vld [vmem:[%s3250 + $0x2c2] sm:$0xff]
      %v4020 = vld [vmem:[%s3250 + $0x2ca] sm:$0xff]
      %v4021 = vld [vmem:[%s3250 + $0x2d2] sm:$0xff]
      %v4022 = vld [vmem:[%s3250 + $0x2da] sm:$0xf]
      %v4023 = vld [vmem:[%s3250 + $0x2e2] sm:$0xff]
      %v4024 = vld [vmem:[%s3250 + $0x2ea] sm:$0xff]
      %v4025 = vld [vmem:[%s3250 + $0x2f2] sm:$0xff]
      %v4026 = vld [vmem:[%s3250 + $0x2fa] sm:$0xf]
      %v4027 = vld [vmem:[%s3250 + $0x302] sm:$0xff]
      %v4028 = vld [vmem:[%s3250 + $0x30a] sm:$0xff]
      %v4029 = vld [vmem:[%s3250 + $0x312] sm:$0xff]
      %v4030 = vld [vmem:[%s3250 + $0x31a] sm:$0xf]
      %v4031 = vld [vmem:[%s3250 + $0x322] sm:$0xff]
      %v4032 = vld [vmem:[%s3250 + $0x32a] sm:$0xff]
      %v4033 = vld [vmem:[%s3250 + $0x332] sm:$0xff]
      %v4034 = vld [vmem:[%s3250 + $0x33a] sm:$0xf]
      %v4035 = vld [vmem:[%s3250 + $0x342] sm:$0xff]
      %v4036 = vld [vmem:[%s3250 + $0x34a] sm:$0xff]
      %v4037 = vld [vmem:[%s3250 + $0x352] sm:$0xff]
      %v4038 = vld [vmem:[%s3250 + $0x35a] sm:$0xf]
      %v4039 = vld [vmem:[%s3250 + $0x362] sm:$0xff]
      %v4040 = vld [vmem:[%s3250 + $0x36a] sm:$0xff]
      %v4041 = vld [vmem:[%s3250 + $0x372] sm:$0xff]
      %v4042 = vld [vmem:[%s3250 + $0x37a] sm:$0xf]
      %v4043 = vlaneseq
      %v4044 = vshrl.u32 %v4043, 7
      %v4045 = vsub.s32 0, %v4044
      %v4046 = vrot.slane %v385, %v4045
      %v4047 = vmul.f32 %v3931, %v4046
      %v4048 = vmul.f32 %v3932, %v4046
      %v4049 = vmul.f32 %v3933, %v4046
      %v4050 = vmul.f32 %v3934, %v4046
      %v4051 = vmul.f32 %v3935, %v4046
      %v4052 = vmul.f32 %v3936, %v4046
      %v4053 = vmul.f32 %v3937, %v4046
      %v4054 = vmul.f32 %v3938, %v4046
      %v4055 = vmul.f32 %v3939, %v4046
      %v4056 = vmul.f32 %v3940, %v4046
      %v4057 = vmul.f32 %v3941, %v4046
      %v4058 = vmul.f32 %v3942, %v4046
      %v4059 = vmul.f32 %v3943, %v4046
      %v4060 = vmul.f32 %v3944, %v4046
      %v4061 = vmul.f32 %v3945, %v4046
      %v4062 = vmul.f32 %v3946, %v4046
      %v4063 = vmul.f32 %v3947, %v4046
      %v4064 = vmul.f32 %v3948, %v4046
      %v4065 = vmul.f32 %v3949, %v4046
      %v4066 = vmul.f32 %v3950, %v4046
      %v4067 = vmul.f32 %v3951, %v4046
      %v4068 = vmul.f32 %v3952, %v4046
      %v4069 = vmul.f32 %v3953, %v4046
      %v4070 = vmul.f32 %v3954, %v4046
      %v4071 = vmul.f32 %v3955, %v4046
      %v4072 = vmul.f32 %v3956, %v4046
      %v4073 = vmul.f32 %v3957, %v4046
      %v4074 = vmul.f32 %v3958, %v4046
      %v4075 = vmul.f32 %v3959, %v4046
      %v4076 = vmul.f32 %v3960, %v4046
      %v4077 = vmul.f32 %v3961, %v4046
      %v4078 = vmul.f32 %v3962, %v4046
      %v4079 = vmul.f32 %v3963, %v4046
      %v4080 = vmul.f32 %v3964, %v4046
      %v4081 = vmul.f32 %v3965, %v4046
      %v4082 = vmul.f32 %v3966, %v4046
      %v4083 = vmul.f32 %v3967, %v4046
      %v4084 = vmul.f32 %v3968, %v4046
      %v4085 = vmul.f32 %v3969, %v4046
      %v4086 = vmul.f32 %v3970, %v4046
      %v4087 = vmul.f32 %v3971, %v4046
      %v4088 = vmul.f32 %v3972, %v4046
      %v4089 = vmul.f32 %v3973, %v4046
      %v4090 = vmul.f32 %v3974, %v4046
      %v4091 = vmul.f32 %v3975, %v4046
      %v4092 = vmul.f32 %v3976, %v4046
      %v4093 = vmul.f32 %v3977, %v4046
      %v4094 = vmul.f32 %v3978, %v4046
      %v4095 = vmul.f32 %v3979, %v4046
      %v4096 = vmul.f32 %v3980, %v4046
      %v4097 = vmul.f32 %v3981, %v4046
      %v4098 = vmul.f32 %v3982, %v4046
      %v4099 = vmul.f32 %v3983, %v4046
      %v4100 = vmul.f32 %v3984, %v4046
      %v4101 = vmul.f32 %v3985, %v4046
      %v4102 = vmul.f32 %v3986, %v4046
      %v4103 = vmul.f32 %v3987, %v4046
      %v4104 = vmul.f32 %v3988, %v4046
      %v4105 = vmul.f32 %v3989, %v4046
      %v4106 = vmul.f32 %v3990, %v4046
      %v4107 = vmul.f32 %v3991, %v4046
      %v4108 = vmul.f32 %v3992, %v4046
      %v4109 = vmul.f32 %v3993, %v4046
      %v4110 = vmul.f32 %v3994, %v4046
      %v4111 = vmul.f32 %v3995, %v4046
      %v4112 = vmul.f32 %v3996, %v4046
      %v4113 = vmul.f32 %v3997, %v4046
      %v4114 = vmul.f32 %v3998, %v4046
      %v4115 = vmul.f32 %v3999, %v4046
      %v4116 = vmul.f32 %v4000, %v4046
      %v4117 = vmul.f32 %v4001, %v4046
      %v4118 = vmul.f32 %v4002, %v4046
      %v4119 = vmul.f32 %v4003, %v4046
      %v4120 = vmul.f32 %v4004, %v4046
      %v4121 = vmul.f32 %v4005, %v4046
      %v4122 = vmul.f32 %v4006, %v4046
      %v4123 = vmul.f32 %v4007, %v4046
      %v4124 = vmul.f32 %v4008, %v4046
      %v4125 = vmul.f32 %v4009, %v4046
      %v4126 = vmul.f32 %v4010, %v4046
      %v4127 = vmul.f32 %v4011, %v4046
      %v4128 = vmul.f32 %v4012, %v4046
      %v4129 = vmul.f32 %v4013, %v4046
      %v4130 = vmul.f32 %v4014, %v4046
      %v4131 = vmul.f32 %v4015, %v4046
      %v4132 = vmul.f32 %v4016, %v4046
      %v4133 = vmul.f32 %v4017, %v4046
      %v4134 = vmul.f32 %v4018, %v4046
      %v4135 = vmul.f32 %v4019, %v4046
      %v4136 = vmul.f32 %v4020, %v4046
      %v4137 = vmul.f32 %v4021, %v4046
      %v4138 = vmul.f32 %v4022, %v4046
      %v4139 = vmul.f32 %v4023, %v4046
      %v4140 = vmul.f32 %v4024, %v4046
      %v4141 = vmul.f32 %v4025, %v4046
      %v4142 = vmul.f32 %v4026, %v4046
      %v4143 = vmul.f32 %v4027, %v4046
      %v4144 = vmul.f32 %v4028, %v4046
      %v4145 = vmul.f32 %v4029, %v4046
      %v4146 = vmul.f32 %v4030, %v4046
      %v4147 = vmul.f32 %v4031, %v4046
      %v4148 = vmul.f32 %v4032, %v4046
      %v4149 = vmul.f32 %v4033, %v4046
      %v4150 = vmul.f32 %v4034, %v4046
      %v4151 = vmul.f32 %v4035, %v4046
      %v4152 = vmul.f32 %v4036, %v4046
      %v4153 = vmul.f32 %v4037, %v4046
      %v4154 = vmul.f32 %v4038, %v4046
      %v4155 = vmul.f32 %v4039, %v4046
      %v4156 = vmul.f32 %v4040, %v4046
      %v4157 = vmul.f32 %v4041, %v4046
      %v4158 = vmul.f32 %v4042, %v4046
      %v4159 = vadd.f32 %v3819, %v4047
      %v4160 = vadd.f32 %v3820, %v4048
      %v4161 = vadd.f32 %v3821, %v4049
      %v4162 = vadd.f32 %v3822, %v4050
      %v4163 = vadd.f32 %v3823, %v4051
      %v4164 = vadd.f32 %v3824, %v4052
      %v4165 = vadd.f32 %v3825, %v4053
      %v4166 = vadd.f32 %v3826, %v4054
      %v4167 = vadd.f32 %v3827, %v4055
      %v4168 = vadd.f32 %v3828, %v4056
      %v4169 = vadd.f32 %v3829, %v4057
      %v4170 = vadd.f32 %v3830, %v4058
      %v4171 = vadd.f32 %v3831, %v4059
      %v4172 = vadd.f32 %v3832, %v4060
      %v4173 = vadd.f32 %v3833, %v4061
      %v4174 = vadd.f32 %v3834, %v4062
      %v4175 = vadd.f32 %v3835, %v4063
      %v4176 = vadd.f32 %v3836, %v4064
      %v4177 = vadd.f32 %v3837, %v4065
      %v4178 = vadd.f32 %v3838, %v4066
      %v4179 = vadd.f32 %v3839, %v4067
      %v4180 = vadd.f32 %v3840, %v4068
      %v4181 = vadd.f32 %v3841, %v4069
      %v4182 = vadd.f32 %v3842, %v4070
      %v4183 = vadd.f32 %v3843, %v4071
      %v4184 = vadd.f32 %v3844, %v4072
      %v4185 = vadd.f32 %v3845, %v4073
      %v4186 = vadd.f32 %v3846, %v4074
      %v4187 = vadd.f32 %v3847, %v4075
      %v4188 = vadd.f32 %v3848, %v4076
      %v4189 = vadd.f32 %v3849, %v4077
      %v4190 = vadd.f32 %v3850, %v4078
      %v4191 = vadd.f32 %v3851, %v4079
      %v4192 = vadd.f32 %v3852, %v4080
      %v4193 = vadd.f32 %v3853, %v4081
      %v4194 = vadd.f32 %v3854, %v4082
      %v4195 = vadd.f32 %v3855, %v4083
      %v4196 = vadd.f32 %v3856, %v4084
      %v4197 = vadd.f32 %v3857, %v4085
      %v4198 = vadd.f32 %v3858, %v4086
      %v4199 = vadd.f32 %v3859, %v4087
      %v4200 = vadd.f32 %v3860, %v4088
      %v4201 = vadd.f32 %v3861, %v4089
      %v4202 = vadd.f32 %v3862, %v4090
      %v4203 = vadd.f32 %v3863, %v4091
      %v4204 = vadd.f32 %v3864, %v4092
      %v4205 = vadd.f32 %v3865, %v4093
      %v4206 = vadd.f32 %v3866, %v4094
      %v4207 = vadd.f32 %v3867, %v4095
      %v4208 = vadd.f32 %v3868, %v4096
      %v4209 = vadd.f32 %v3869, %v4097
      %v4210 = vadd.f32 %v3870, %v4098
      %v4211 = vadd.f32 %v3871, %v4099
      %v4212 = vadd.f32 %v3872, %v4100
      %v4213 = vadd.f32 %v3873, %v4101
      %v4214 = vadd.f32 %v3874, %v4102
      %v4215 = vadd.f32 %v3875, %v4103
      %v4216 = vadd.f32 %v3876, %v4104
      %v4217 = vadd.f32 %v3877, %v4105
      %v4218 = vadd.f32 %v3878, %v4106
      %v4219 = vadd.f32 %v3879, %v4107
      %v4220 = vadd.f32 %v3880, %v4108
      %v4221 = vadd.f32 %v3881, %v4109
      %v4222 = vadd.f32 %v3882, %v4110
      %v4223 = vadd.f32 %v3883, %v4111
      %v4224 = vadd.f32 %v3884, %v4112
      %v4225 = vadd.f32 %v3885, %v4113
      %v4226 = vadd.f32 %v3886, %v4114
      %v4227 = vadd.f32 %v3887, %v4115
      %v4228 = vadd.f32 %v3888, %v4116
      %v4229 = vadd.f32 %v3889, %v4117
      %v4230 = vadd.f32 %v3890, %v4118
      %v4231 = vadd.f32 %v3891, %v4119
      %v4232 = vadd.f32 %v3892, %v4120
      %v4233 = vadd.f32 %v3893, %v4121
      %v4234 = vadd.f32 %v3894, %v4122
      %v4235 = vadd.f32 %v3895, %v4123
      %v4236 = vadd.f32 %v3896, %v4124
      %v4237 = vadd.f32 %v3897, %v4125
      %v4238 = vadd.f32 %v3898, %v4126
      %v4239 = vadd.f32 %v3899, %v4127
      %v4240 = vadd.f32 %v3900, %v4128
      %v4241 = vadd.f32 %v3901, %v4129
      %v4242 = vadd.f32 %v3902, %v4130
      %v4243 = vadd.f32 %v3903, %v4131
      %v4244 = vadd.f32 %v3904, %v4132
      %v4245 = vadd.f32 %v3905, %v4133
      %v4246 = vadd.f32 %v3906, %v4134
      %v4247 = vadd.f32 %v3907, %v4135
      %v4248 = vadd.f32 %v3908, %v4136
      %v4249 = vadd.f32 %v3909, %v4137
      %v4250 = vadd.f32 %v3910, %v4138
      %v4251 = vadd.f32 %v3911, %v4139
      %v4252 = vadd.f32 %v3912, %v4140
      %v4253 = vadd.f32 %v3913, %v4141
      %v4254 = vadd.f32 %v3914, %v4142
      %v4255 = vadd.f32 %v3915, %v4143
      %v4256 = vadd.f32 %v3916, %v4144
      %v4257 = vadd.f32 %v3917, %v4145
      %v4258 = vadd.f32 %v3918, %v4146
      %v4259 = vadd.f32 %v3919, %v4147
      %v4260 = vadd.f32 %v3920, %v4148
      %v4261 = vadd.f32 %v3921, %v4149
      %v4262 = vadd.f32 %v3922, %v4150
      %v4263 = vadd.f32 %v3923, %v4151
      %v4264 = vadd.f32 %v3924, %v4152
      %v4265 = vadd.f32 %v3925, %v4153
      %v4266 = vadd.f32 %v3926, %v4154
      %v4267 = vadd.f32 %v3927, %v4155
      %v4268 = vadd.f32 %v3928, %v4156
      %v4269 = vadd.f32 %v3929, %v4157
      %v4270 = vadd.f32 %v3930, %v4158
      %v4272 = vlaneseq
      %v4273 = vshrl.u32 %v4272, 7
      %v4274 = vsub.s32 0, %v4273
      %v4275 = vrot.slane %v386, %v4274
      %v4277 = vadd.f32 %v4159, %v4275
      %v4278 = vadd.f32 %v4160, %v4275
      %v4279 = vadd.f32 %v4161, %v4275
      %v4280 = vadd.f32 %v4162, %v4275
      %v4281 = vadd.f32 %v4163, %v4275
      %v4282 = vadd.f32 %v4164, %v4275
      %v4283 = vadd.f32 %v4165, %v4275
      %v4284 = vadd.f32 %v4166, %v4275
      %v4285 = vadd.f32 %v4167, %v4275
      %v4286 = vadd.f32 %v4168, %v4275
      %v4287 = vadd.f32 %v4169, %v4275
      %v4288 = vadd.f32 %v4170, %v4275
      %v4289 = vadd.f32 %v4171, %v4275
      %v4290 = vadd.f32 %v4172, %v4275
      %v4291 = vadd.f32 %v4173, %v4275
      %v4292 = vadd.f32 %v4174, %v4275
      %v4293 = vadd.f32 %v4175, %v4275
      %v4294 = vadd.f32 %v4176, %v4275
      %v4295 = vadd.f32 %v4177, %v4275
      %v4296 = vadd.f32 %v4178, %v4275
      %v4297 = vadd.f32 %v4179, %v4275
      %v4298 = vadd.f32 %v4180, %v4275
      %v4299 = vadd.f32 %v4181, %v4275
      %v4300 = vadd.f32 %v4182, %v4275
      %v4301 = vadd.f32 %v4183, %v4275
      %v4302 = vadd.f32 %v4184, %v4275
      %v4303 = vadd.f32 %v4185, %v4275
      %v4304 = vadd.f32 %v4186, %v4275
      %v4305 = vadd.f32 %v4187, %v4275
      %v4306 = vadd.f32 %v4188, %v4275
      %v4307 = vadd.f32 %v4189, %v4275
      %v4308 = vadd.f32 %v4190, %v4275
      %v4309 = vadd.f32 %v4191, %v4275
      %v4310 = vadd.f32 %v4192, %v4275
      %v4311 = vadd.f32 %v4193, %v4275
      %v4312 = vadd.f32 %v4194, %v4275
      %v4313 = vadd.f32 %v4195, %v4275
      %v4314 = vadd.f32 %v4196, %v4275
      %v4315 = vadd.f32 %v4197, %v4275
      %v4316 = vadd.f32 %v4198, %v4275
      %v4317 = vadd.f32 %v4199, %v4275
      %v4318 = vadd.f32 %v4200, %v4275
      %v4319 = vadd.f32 %v4201, %v4275
      %v4320 = vadd.f32 %v4202, %v4275
      %v4321 = vadd.f32 %v4203, %v4275
      %v4322 = vadd.f32 %v4204, %v4275
      %v4323 = vadd.f32 %v4205, %v4275
      %v4324 = vadd.f32 %v4206, %v4275
      %v4325 = vadd.f32 %v4207, %v4275
      %v4326 = vadd.f32 %v4208, %v4275
      %v4327 = vadd.f32 %v4209, %v4275
      %v4328 = vadd.f32 %v4210, %v4275
      %v4329 = vadd.f32 %v4211, %v4275
      %v4330 = vadd.f32 %v4212, %v4275
      %v4331 = vadd.f32 %v4213, %v4275
      %v4332 = vadd.f32 %v4214, %v4275
      %v4333 = vadd.f32 %v4215, %v4275
      %v4334 = vadd.f32 %v4216, %v4275
      %v4335 = vadd.f32 %v4217, %v4275
      %v4336 = vadd.f32 %v4218, %v4275
      %v4337 = vadd.f32 %v4219, %v4275
      %v4338 = vadd.f32 %v4220, %v4275
      %v4339 = vadd.f32 %v4221, %v4275
      %v4340 = vadd.f32 %v4222, %v4275
      %v4341 = vadd.f32 %v4223, %v4275
      %v4342 = vadd.f32 %v4224, %v4275
      %v4343 = vadd.f32 %v4225, %v4275
      %v4344 = vadd.f32 %v4226, %v4275
      %v4345 = vadd.f32 %v4227, %v4275
      %v4346 = vadd.f32 %v4228, %v4275
      %v4347 = vadd.f32 %v4229, %v4275
      %v4348 = vadd.f32 %v4230, %v4275
      %v4349 = vadd.f32 %v4231, %v4275
      %v4350 = vadd.f32 %v4232, %v4275
      %v4351 = vadd.f32 %v4233, %v4275
      %v4352 = vadd.f32 %v4234, %v4275
      %v4353 = vadd.f32 %v4235, %v4275
      %v4354 = vadd.f32 %v4236, %v4275
      %v4355 = vadd.f32 %v4237, %v4275
      %v4356 = vadd.f32 %v4238, %v4275
      %v4357 = vadd.f32 %v4239, %v4275
      %v4358 = vadd.f32 %v4240, %v4275
      %v4359 = vadd.f32 %v4241, %v4275
      %v4360 = vadd.f32 %v4242, %v4275
      %v4361 = vadd.f32 %v4243, %v4275
      %v4362 = vadd.f32 %v4244, %v4275
      %v4363 = vadd.f32 %v4245, %v4275
      %v4364 = vadd.f32 %v4246, %v4275
      %v4365 = vadd.f32 %v4247, %v4275
      %v4366 = vadd.f32 %v4248, %v4275
      %v4367 = vadd.f32 %v4249, %v4275
      %v4368 = vadd.f32 %v4250, %v4275
      %v4369 = vadd.f32 %v4251, %v4275
      %v4370 = vadd.f32 %v4252, %v4275
      %v4371 = vadd.f32 %v4253, %v4275
      %v4372 = vadd.f32 %v4254, %v4275
      %v4373 = vadd.f32 %v4255, %v4275
      %v4374 = vadd.f32 %v4256, %v4275
      %v4375 = vadd.f32 %v4257, %v4275
      %v4376 = vadd.f32 %v4258, %v4275
      %v4377 = vadd.f32 %v4259, %v4275
      %v4378 = vadd.f32 %v4260, %v4275
      %v4379 = vadd.f32 %v4261, %v4275
      %v4380 = vadd.f32 %v4262, %v4275
      %v4381 = vadd.f32 %v4263, %v4275
      %v4382 = vadd.f32 %v4264, %v4275
      %v4383 = vadd.f32 %v4265, %v4275
      %v4384 = vadd.f32 %v4266, %v4275
      %v4385 = vadd.f32 %v4267, %v4275
      %v4386 = vadd.f32 %v4268, %v4275
      %v4387 = vadd.f32 %v4269, %v4275
      %v4388 = vadd.f32 %v4270, %v4275
      %v4389 = vmax.f32 %v4277, 0.0
      %v4390 = vmax.f32 %v4278, 0.0
      %v4391 = vmax.f32 %v4279, 0.0
      %v4392 = vmax.f32 %v4280, 0.0
      %v4393 = vmax.f32 %v4281, 0.0
      %v4394 = vmax.f32 %v4282, 0.0
      %v4395 = vmax.f32 %v4283, 0.0
      %v4396 = vmax.f32 %v4284, 0.0
      %v4397 = vmax.f32 %v4285, 0.0
      %v4398 = vmax.f32 %v4286, 0.0
      %v4399 = vmax.f32 %v4287, 0.0
      %v4400 = vmax.f32 %v4288, 0.0
      %v4401 = vmax.f32 %v4289, 0.0
      %v4402 = vmax.f32 %v4290, 0.0
      %v4403 = vmax.f32 %v4291, 0.0
      %v4404 = vmax.f32 %v4292, 0.0
      %v4405 = vmax.f32 %v4293, 0.0
      %v4406 = vmax.f32 %v4294, 0.0
      %v4407 = vmax.f32 %v4295, 0.0
      %v4408 = vmax.f32 %v4296, 0.0
      %v4409 = vmax.f32 %v4297, 0.0
      %v4410 = vmax.f32 %v4298, 0.0
      %v4411 = vmax.f32 %v4299, 0.0
      %v4412 = vmax.f32 %v4300, 0.0
      %v4413 = vmax.f32 %v4301, 0.0
      %v4414 = vmax.f32 %v4302, 0.0
      %v4415 = vmax.f32 %v4303, 0.0
      %v4416 = vmax.f32 %v4304, 0.0
      %v4417 = vmax.f32 %v4305, 0.0
      %v4418 = vmax.f32 %v4306, 0.0
      %v4419 = vmax.f32 %v4307, 0.0
      %v4420 = vmax.f32 %v4308, 0.0
      %v4421 = vmax.f32 %v4309, 0.0
      %v4422 = vmax.f32 %v4310, 0.0
      %v4423 = vmax.f32 %v4311, 0.0
      %v4424 = vmax.f32 %v4312, 0.0
      %v4425 = vmax.f32 %v4313, 0.0
      %v4426 = vmax.f32 %v4314, 0.0
      %v4427 = vmax.f32 %v4315, 0.0
      %v4428 = vmax.f32 %v4316, 0.0
      %v4429 = vmax.f32 %v4317, 0.0
      %v4430 = vmax.f32 %v4318, 0.0
      %v4431 = vmax.f32 %v4319, 0.0
      %v4432 = vmax.f32 %v4320, 0.0
      %v4433 = vmax.f32 %v4321, 0.0
      %v4434 = vmax.f32 %v4322, 0.0
      %v4435 = vmax.f32 %v4323, 0.0
      %v4436 = vmax.f32 %v4324, 0.0
      %v4437 = vmax.f32 %v4325, 0.0
      %v4438 = vmax.f32 %v4326, 0.0
      %v4439 = vmax.f32 %v4327, 0.0
      %v4440 = vmax.f32 %v4328, 0.0
      %v4441 = vmax.f32 %v4329, 0.0
      %v4442 = vmax.f32 %v4330, 0.0
      %v4443 = vmax.f32 %v4331, 0.0
      %v4444 = vmax.f32 %v4332, 0.0
      %v4445 = vmax.f32 %v4333, 0.0
      %v4446 = vmax.f32 %v4334, 0.0
      %v4447 = vmax.f32 %v4335, 0.0
      %v4448 = vmax.f32 %v4336, 0.0
      %v4449 = vmax.f32 %v4337, 0.0
      %v4450 = vmax.f32 %v4338, 0.0
      %v4451 = vmax.f32 %v4339, 0.0
      %v4452 = vmax.f32 %v4340, 0.0
      %v4453 = vmax.f32 %v4341, 0.0
      %v4454 = vmax.f32 %v4342, 0.0
      %v4455 = vmax.f32 %v4343, 0.0
      %v4456 = vmax.f32 %v4344, 0.0
      %v4457 = vmax.f32 %v4345, 0.0
      %v4458 = vmax.f32 %v4346, 0.0
      %v4459 = vmax.f32 %v4347, 0.0
      %v4460 = vmax.f32 %v4348, 0.0
      %v4461 = vmax.f32 %v4349, 0.0
      %v4462 = vmax.f32 %v4350, 0.0
      %v4463 = vmax.f32 %v4351, 0.0
      %v4464 = vmax.f32 %v4352, 0.0
      %v4465 = vmax.f32 %v4353, 0.0
      %v4466 = vmax.f32 %v4354, 0.0
      %v4467 = vmax.f32 %v4355, 0.0
      %v4468 = vmax.f32 %v4356, 0.0
      %v4469 = vmax.f32 %v4357, 0.0
      %v4470 = vmax.f32 %v4358, 0.0
      %v4471 = vmax.f32 %v4359, 0.0
      %v4472 = vmax.f32 %v4360, 0.0
      %v4473 = vmax.f32 %v4361, 0.0
      %v4474 = vmax.f32 %v4362, 0.0
      %v4475 = vmax.f32 %v4363, 0.0
      %v4476 = vmax.f32 %v4364, 0.0
      %v4477 = vmax.f32 %v4365, 0.0
      %v4478 = vmax.f32 %v4366, 0.0
      %v4479 = vmax.f32 %v4367, 0.0
      %v4480 = vmax.f32 %v4368, 0.0
      %v4481 = vmax.f32 %v4369, 0.0
      %v4482 = vmax.f32 %v4370, 0.0
      %v4483 = vmax.f32 %v4371, 0.0
      %v4484 = vmax.f32 %v4372, 0.0
      %v4485 = vmax.f32 %v4373, 0.0
      %v4486 = vmax.f32 %v4374, 0.0
      %v4487 = vmax.f32 %v4375, 0.0
      %v4488 = vmax.f32 %v4376, 0.0
      %v4489 = vmax.f32 %v4377, 0.0
      %v4490 = vmax.f32 %v4378, 0.0
      %v4491 = vmax.f32 %v4379, 0.0
      %v4492 = vmax.f32 %v4380, 0.0
      %v4493 = vmax.f32 %v4381, 0.0
      %v4494 = vmax.f32 %v4382, 0.0
      %v4495 = vmax.f32 %v4383, 0.0
      %v4496 = vmax.f32 %v4384, 0.0
      %v4497 = vmax.f32 %v4385, 0.0
      %v4498 = vmax.f32 %v4386, 0.0
      %v4499 = vmax.f32 %v4387, 0.0
      %v4500 = vmax.f32 %v4388, 0.0
      %v4501 = vmax.f32 %v4389, %v4393
      %v4502 = vmax.f32 %v4390, %v4394
      %v4503 = vmax.f32 %v4391, %v4395
      %v4504 = vmax.f32 %v4392, %v4396
      %v4505 = vmax.f32 %v4397, %v4401
      %v4506 = vmax.f32 %v4398, %v4402
      %v4507 = vmax.f32 %v4399, %v4403
      %v4508 = vmax.f32 %v4400, %v4404
      %v4509 = vmax.f32 %v4405, %v4409
      %v4510 = vmax.f32 %v4406, %v4410
      %v4511 = vmax.f32 %v4407, %v4411
      %v4512 = vmax.f32 %v4408, %v4412
      %v4513 = vmax.f32 %v4413, %v4417
      %v4514 = vmax.f32 %v4414, %v4418
      %v4515 = vmax.f32 %v4415, %v4419
      %v4516 = vmax.f32 %v4416, %v4420
      %v4517 = vmax.f32 %v4421, %v4425
      %v4518 = vmax.f32 %v4422, %v4426
      %v4519 = vmax.f32 %v4423, %v4427
      %v4520 = vmax.f32 %v4424, %v4428
      %v4521 = vmax.f32 %v4429, %v4433
      %v4522 = vmax.f32 %v4430, %v4434
      %v4523 = vmax.f32 %v4431, %v4435
      %v4524 = vmax.f32 %v4432, %v4436
      %v4525 = vmax.f32 %v4437, %v4441
      %v4526 = vmax.f32 %v4438, %v4442
      %v4527 = vmax.f32 %v4439, %v4443
      %v4528 = vmax.f32 %v4440, %v4444
      %v4529 = vmax.f32 %v4445, %v4449
      %v4530 = vmax.f32 %v4446, %v4450
      %v4531 = vmax.f32 %v4447, %v4451
      %v4532 = vmax.f32 %v4448, %v4452
      %v4533 = vmax.f32 %v4453, %v4457
      %v4534 = vmax.f32 %v4454, %v4458
      %v4535 = vmax.f32 %v4455, %v4459
      %v4536 = vmax.f32 %v4456, %v4460
      %v4537 = vmax.f32 %v4461, %v4465
      %v4538 = vmax.f32 %v4462, %v4466
      %v4539 = vmax.f32 %v4463, %v4467
      %v4540 = vmax.f32 %v4464, %v4468
      %v4541 = vmax.f32 %v4469, %v4473
      %v4542 = vmax.f32 %v4470, %v4474
      %v4543 = vmax.f32 %v4471, %v4475
      %v4544 = vmax.f32 %v4472, %v4476
      %v4545 = vmax.f32 %v4477, %v4481
      %v4546 = vmax.f32 %v4478, %v4482
      %v4547 = vmax.f32 %v4479, %v4483
      %v4548 = vmax.f32 %v4480, %v4484
      %v4549 = vmax.f32 %v4485, %v4489
      %v4550 = vmax.f32 %v4486, %v4490
      %v4551 = vmax.f32 %v4487, %v4491
      %v4552 = vmax.f32 %v4488, %v4492
      %v4553 = vmax.f32 %v4493, %v4497
      %v4554 = vmax.f32 %v4494, %v4498
      %v4555 = vmax.f32 %v4495, %v4499
      %v4556 = vmax.f32 %v4496, %v4500
      %4557 = vst.msk [vmem:[#allocation3] sm:$0xff] %vm226, %v4501
      %4558 = vst.msk [vmem:[#allocation3 + $0x8] sm:$0xff] %vm226, %v4502
      %4559 = vst.msk [vmem:[#allocation3 + $0x10] sm:$0xff] %vm226, %v4503
      %4560 = vst.msk [vmem:[#allocation3 + $0x18] sm:$0xf] %vm1100, %v4504
      %4561 = vst.msk [vmem:[#allocation3 + $0x20] sm:$0xff] %vm226, %v4505
      %4562 = vst.msk [vmem:[#allocation3 + $0x28] sm:$0xff] %vm226, %v4506
      %4563 = vst.msk [vmem:[#allocation3 + $0x30] sm:$0xff] %vm226, %v4507
      %4564 = vst.msk [vmem:[#allocation3 + $0x38] sm:$0xf] %vm1100, %v4508
      %4565 = vst.msk [vmem:[#allocation3 + $0x40] sm:$0xff] %vm226, %v4509
      %4566 = vst.msk [vmem:[#allocation3 + $0x48] sm:$0xff] %vm226, %v4510
      %4567 = vst.msk [vmem:[#allocation3 + $0x50] sm:$0xff] %vm226, %v4511
      %4568 = vst.msk [vmem:[#allocation3 + $0x58] sm:$0xf] %vm1100, %v4512
      %4569 = vst.msk [vmem:[#allocation3 + $0x60] sm:$0xff] %vm226, %v4513
      %4570 = vst.msk [vmem:[#allocation3 + $0x68] sm:$0xff] %vm226, %v4514
      %4571 = vst.msk [vmem:[#allocation3 + $0x70] sm:$0xff] %vm226, %v4515
      %4572 = vst.msk [vmem:[#allocation3 + $0x78] sm:$0xf] %vm1100, %v4516
      %4573 = vst.msk [vmem:[#allocation3 + $0x80] sm:$0xff] %vm226, %v4517
      %4574 = vst.msk [vmem:[#allocation3 + $0x88] sm:$0xff] %vm226, %v4518
      %4575 = vst.msk [vmem:[#allocation3 + $0x90] sm:$0xff] %vm226, %v4519
      %4576 = vst.msk [vmem:[#allocation3 + $0x98] sm:$0xf] %vm1100, %v4520
      %4577 = vst.msk [vmem:[#allocation3 + $0xa0] sm:$0xff] %vm226, %v4521
      %4578 = vst.msk [vmem:[#allocation3 + $0xa8] sm:$0xff] %vm226, %v4522
      %4579 = vst.msk [vmem:[#allocation3 + $0xb0] sm:$0xff] %vm226, %v4523
      %4580 = vst.msk [vmem:[#allocation3 + $0xb8] sm:$0xf] %vm1100, %v4524
      %4581 = vst.msk [vmem:[#allocation3 + $0xc0] sm:$0xff] %vm226, %v4525
      %4582 = vst.msk [vmem:[#allocation3 + $0xc8] sm:$0xff] %vm226, %v4526
      %4583 = vst.msk [vmem:[#allocation3 + $0xd0] sm:$0xff] %vm226, %v4527
      %4584 = vst.msk [vmem:[#allocation3 + $0xd8] sm:$0xf] %vm1100, %v4528
      %4585 = vst.msk [vmem:[#allocation3 + $0xe0] sm:$0xff] %vm226, %v4529
      %4586 = vst.msk [vmem:[#allocation3 + $0xe8] sm:$0xff] %vm226, %v4530
      %4587 = vst.msk [vmem:[#allocation3 + $0xf0] sm:$0xff] %vm226, %v4531
      %4588 = vst.msk [vmem:[#allocation3 + $0xf8] sm:$0xf] %vm1100, %v4532
      %4589 = vst.msk [vmem:[#allocation3 + $0x100] sm:$0xff] %vm226, %v4533
      %4590 = vst.msk [vmem:[#allocation3 + $0x108] sm:$0xff] %vm226, %v4534
      %4591 = vst.msk [vmem:[#allocation3 + $0x110] sm:$0xff] %vm226, %v4535
      %4592 = vst.msk [vmem:[#allocation3 + $0x118] sm:$0xf] %vm1100, %v4536
      %4593 = vst.msk [vmem:[#allocation3 + $0x120] sm:$0xff] %vm226, %v4537
      %4594 = vst.msk [vmem:[#allocation3 + $0x128] sm:$0xff] %vm226, %v4538
      %4595 = vst.msk [vmem:[#allocation3 + $0x130] sm:$0xff] %vm226, %v4539
      %4596 = vst.msk [vmem:[#allocation3 + $0x138] sm:$0xf] %vm1100, %v4540
      %4597 = vst.msk [vmem:[#allocation3 + $0x140] sm:$0xff] %vm226, %v4541
      %4598 = vst.msk [vmem:[#allocation3 + $0x148] sm:$0xff] %vm226, %v4542
      %4599 = vst.msk [vmem:[#allocation3 + $0x150] sm:$0xff] %vm226, %v4543
      %4600 = vst.msk [vmem:[#allocation3 + $0x158] sm:$0xf] %vm1100, %v4544
      %4601 = vst.msk [vmem:[#allocation3 + $0x160] sm:$0xff] %vm226, %v4545
      %4602 = vst.msk [vmem:[#allocation3 + $0x168] sm:$0xff] %vm226, %v4546
      %4603 = vst.msk [vmem:[#allocation3 + $0x170] sm:$0xff] %vm226, %v4547
      %4604 = vst.msk [vmem:[#allocation3 + $0x178] sm:$0xf] %vm1100, %v4548
      %4605 = vst.msk [vmem:[#allocation3 + $0x180] sm:$0xff] %vm226, %v4549
      %4606 = vst.msk [vmem:[#allocation3 + $0x188] sm:$0xff] %vm226, %v4550
      %4607 = vst.msk [vmem:[#allocation3 + $0x190] sm:$0xff] %vm226, %v4551
      %4608 = vst.msk [vmem:[#allocation3 + $0x198] sm:$0xf] %vm1100, %v4552
      %4609 = vst.msk [vmem:[#allocation3 + $0x1a0] sm:$0xff] %vm226, %v4553
      %4610 = vst.msk [vmem:[#allocation3 + $0x1a8] sm:$0xff] %vm226, %v4554
      %4611 = vst.msk [vmem:[#allocation3 + $0x1b0] sm:$0xff] %vm226, %v4555
      %4612 = vst.msk [vmem:[#allocation3 + $0x1b8] sm:$0xf] %vm1100, %v4556
      %v4613 = vld [vmem:[#allocation3] ss:$2 sm:$0xff]
      %s4614 = scalar_lea.vmem [#allocation3], 16
      %v4615 = vld [vmem:[%s4614] ss:$2 sm:$0x3f]
      %s4616 = scalar_lea.vmem [#allocation3], 32
      %v4617 = vld [vmem:[%s4616] ss:$2 sm:$0xff]
      %s4618 = scalar_lea.vmem [#allocation3], 48
      %v4619 = vld [vmem:[%s4618] ss:$2 sm:$0x3f]
      %s4620 = scalar_lea.vmem [#allocation3], 64
      %v4621 = vld [vmem:[%s4620] ss:$2 sm:$0xff]
      %s4622 = scalar_lea.vmem [#allocation3], 80
      %v4623 = vld [vmem:[%s4622] ss:$2 sm:$0x3f]
      %s4624 = scalar_lea.vmem [#allocation3], 96
      %v4625 = vld [vmem:[%s4624] ss:$2 sm:$0xff]
      %s4626 = scalar_lea.vmem [#allocation3], 112
      %v4627 = vld [vmem:[%s4626] ss:$2 sm:$0x3f]
      %s4628 = scalar_lea.vmem [#allocation3], 128
      %v4629 = vld [vmem:[%s4628] ss:$2 sm:$0xff]
      %s4630 = scalar_lea.vmem [#allocation3], 144
      %v4631 = vld [vmem:[%s4630] ss:$2 sm:$0x3f]
      %s4632 = scalar_lea.vmem [#allocation3], 160
      %v4633 = vld [vmem:[%s4632] ss:$2 sm:$0xff]
      %s4634 = scalar_lea.vmem [#allocation3], 176
      %v4635 = vld [vmem:[%s4634] ss:$2 sm:$0x3f]
      %s4636 = scalar_lea.vmem [#allocation3], 192
      %v4637 = vld [vmem:[%s4636] ss:$2 sm:$0xff]
      %s4638 = scalar_lea.vmem [#allocation3], 208
      %v4639 = vld [vmem:[%s4638] ss:$2 sm:$0x3f]
      %s4640 = scalar_lea.vmem [#allocation3], 224
      %v4641 = vld [vmem:[%s4640] ss:$2 sm:$0xff]
      %s4642 = scalar_lea.vmem [#allocation3], 240
      %v4643 = vld [vmem:[%s4642] ss:$2 sm:$0x3f]
      %s4644 = scalar_lea.vmem [#allocation3], 256
      %v4645 = vld [vmem:[%s4644] ss:$2 sm:$0xff]
      %s4646 = scalar_lea.vmem [#allocation3], 272
      %v4647 = vld [vmem:[%s4646] ss:$2 sm:$0x3f]
      %s4648 = scalar_lea.vmem [#allocation3], 288
      %v4649 = vld [vmem:[%s4648] ss:$2 sm:$0xff]
      %s4650 = scalar_lea.vmem [#allocation3], 304
      %v4651 = vld [vmem:[%s4650] ss:$2 sm:$0x3f]
      %s4652 = scalar_lea.vmem [#allocation3], 320
      %v4653 = vld [vmem:[%s4652] ss:$2 sm:$0xff]
      %s4654 = scalar_lea.vmem [#allocation3], 336
      %v4655 = vld [vmem:[%s4654] ss:$2 sm:$0x3f]
      %s4656 = scalar_lea.vmem [#allocation3], 352
      %v4657 = vld [vmem:[%s4656] ss:$2 sm:$0xff]
      %s4658 = scalar_lea.vmem [#allocation3], 368
      %v4659 = vld [vmem:[%s4658] ss:$2 sm:$0x3f]
      %s4660 = scalar_lea.vmem [#allocation3], 384
      %v4661 = vld [vmem:[%s4660] ss:$2 sm:$0xff]
      %s4662 = scalar_lea.vmem [#allocation3], 400
      %v4663 = vld [vmem:[%s4662] ss:$2 sm:$0x3f]
      %s4664 = scalar_lea.vmem [#allocation3], 416
      %v4665 = vld [vmem:[%s4664] ss:$2 sm:$0xff]
      %s4666 = scalar_lea.vmem [#allocation3], 432
      %v4667 = vld [vmem:[%s4666] ss:$2 sm:$0x3f]
      %s4668 = scalar_lea.vmem [#allocation3], 1
      %v4669 = vld [vmem:[%s4668] ss:$2 sm:$0xff]
      %s4670 = scalar_lea.vmem [#allocation3], 17
      %v4671 = vld [vmem:[%s4670] ss:$2 sm:$0x3f]
      %s4672 = scalar_lea.vmem [#allocation3], 33
      %v4673 = vld [vmem:[%s4672] ss:$2 sm:$0xff]
      %s4674 = scalar_lea.vmem [#allocation3], 49
      %v4675 = vld [vmem:[%s4674] ss:$2 sm:$0x3f]
      %s4676 = scalar_lea.vmem [#allocation3], 65
      %v4677 = vld [vmem:[%s4676] ss:$2 sm:$0xff]
      %s4678 = scalar_lea.vmem [#allocation3], 81
      %v4679 = vld [vmem:[%s4678] ss:$2 sm:$0x3f]
      %s4680 = scalar_lea.vmem [#allocation3], 97
      %v4681 = vld [vmem:[%s4680] ss:$2 sm:$0xff]
      %s4682 = scalar_lea.vmem [#allocation3], 113
      %v4683 = vld [vmem:[%s4682] ss:$2 sm:$0x3f]
      %s4684 = scalar_lea.vmem [#allocation3], 129
      %v4685 = vld [vmem:[%s4684] ss:$2 sm:$0xff]
      %s4686 = scalar_lea.vmem [#allocation3], 145
      %v4687 = vld [vmem:[%s4686] ss:$2 sm:$0x3f]
      %s4688 = scalar_lea.vmem [#allocation3], 161
      %v4689 = vld [vmem:[%s4688] ss:$2 sm:$0xff]
      %s4690 = scalar_lea.vmem [#allocation3], 177
      %v4691 = vld [vmem:[%s4690] ss:$2 sm:$0x3f]
      %s4692 = scalar_lea.vmem [#allocation3], 193
      %v4693 = vld [vmem:[%s4692] ss:$2 sm:$0xff]
      %s4694 = scalar_lea.vmem [#allocation3], 209
      %v4695 = vld [vmem:[%s4694] ss:$2 sm:$0x3f]
      %s4696 = scalar_lea.vmem [#allocation3], 225
      %v4697 = vld [vmem:[%s4696] ss:$2 sm:$0xff]
      %s4698 = scalar_lea.vmem [#allocation3], 241
      %v4699 = vld [vmem:[%s4698] ss:$2 sm:$0x3f]
      %s4700 = scalar_lea.vmem [#allocation3], 257
      %v4701 = vld [vmem:[%s4700] ss:$2 sm:$0xff]
      %s4702 = scalar_lea.vmem [#allocation3], 273
      %v4703 = vld [vmem:[%s4702] ss:$2 sm:$0x3f]
      %s4704 = scalar_lea.vmem [#allocation3], 289
      %v4705 = vld [vmem:[%s4704] ss:$2 sm:$0xff]
      %s4706 = scalar_lea.vmem [#allocation3], 305
      %v4707 = vld [vmem:[%s4706] ss:$2 sm:$0x3f]
      %s4708 = scalar_lea.vmem [#allocation3], 321
      %v4709 = vld [vmem:[%s4708] ss:$2 sm:$0xff]
      %s4710 = scalar_lea.vmem [#allocation3], 337
      %v4711 = vld [vmem:[%s4710] ss:$2 sm:$0x3f]
      %s4712 = scalar_lea.vmem [#allocation3], 353
      %v4713 = vld [vmem:[%s4712] ss:$2 sm:$0xff]
      %s4714 = scalar_lea.vmem [#allocation3], 369
      %v4715 = vld [vmem:[%s4714] ss:$2 sm:$0x3f]
      %s4716 = scalar_lea.vmem [#allocation3], 385
      %v4717 = vld [vmem:[%s4716] ss:$2 sm:$0xff]
      %s4718 = scalar_lea.vmem [#allocation3], 401
      %v4719 = vld [vmem:[%s4718] ss:$2 sm:$0x3f]
      %s4720 = scalar_lea.vmem [#allocation3], 417
      %v4721 = vld [vmem:[%s4720] ss:$2 sm:$0xff]
      %s4722 = scalar_lea.vmem [#allocation3], 433
      %v4723 = vld [vmem:[%s4722] ss:$2 sm:$0x3f]
      %v4724 = vmax.f32 %v4613, %v4669
      %v4725 = vmax.f32 %v4615, %v4671
      %v4726 = vmax.f32 %v4617, %v4673
      %v4727 = vmax.f32 %v4619, %v4675
      %v4728 = vmax.f32 %v4621, %v4677
      %v4729 = vmax.f32 %v4623, %v4679
      %v4730 = vmax.f32 %v4625, %v4681
      %v4731 = vmax.f32 %v4627, %v4683
      %v4732 = vmax.f32 %v4629, %v4685
      %v4733 = vmax.f32 %v4631, %v4687
      %v4734 = vmax.f32 %v4633, %v4689
      %v4735 = vmax.f32 %v4635, %v4691
      %v4736 = vmax.f32 %v4637, %v4693
      %v4737 = vmax.f32 %v4639, %v4695
      %v4738 = vmax.f32 %v4641, %v4697
      %v4739 = vmax.f32 %v4643, %v4699
      %v4740 = vmax.f32 %v4645, %v4701
      %v4741 = vmax.f32 %v4647, %v4703
      %v4742 = vmax.f32 %v4649, %v4705
      %v4743 = vmax.f32 %v4651, %v4707
      %v4744 = vmax.f32 %v4653, %v4709
      %v4745 = vmax.f32 %v4655, %v4711
      %v4746 = vmax.f32 %v4657, %v4713
      %v4747 = vmax.f32 %v4659, %v4715
      %v4748 = vmax.f32 %v4661, %v4717
      %v4749 = vmax.f32 %v4663, %v4719
      %v4750 = vmax.f32 %v4665, %v4721
      %v4751 = vmax.f32 %v4667, %v4723
      %4752 = vst.msk [vmem:[#allocation4 + $0x11] sm:$0xff] %vm226, %v4724
      %4753 = vst.msk [vmem:[#allocation4 + $0x19] sm:$0x3f] %vm230, %v4725
      %4754 = vst.msk [vmem:[#allocation4 + $0x21] sm:$0xff] %vm226, %v4726
      %4755 = vst.msk [vmem:[#allocation4 + $0x29] sm:$0x3f] %vm230, %v4727
      %4756 = vst.msk [vmem:[#allocation4 + $0x31] sm:$0xff] %vm226, %v4728
      %4757 = vst.msk [vmem:[#allocation4 + $0x39] sm:$0x3f] %vm230, %v4729
      %4758 = vst.msk [vmem:[#allocation4 + $0x41] sm:$0xff] %vm226, %v4730
      %4759 = vst.msk [vmem:[#allocation4 + $0x49] sm:$0x3f] %vm230, %v4731
      %4760 = vst.msk [vmem:[#allocation4 + $0x51] sm:$0xff] %vm226, %v4732
      %4761 = vst.msk [vmem:[#allocation4 + $0x59] sm:$0x3f] %vm230, %v4733
      %4762 = vst.msk [vmem:[#allocation4 + $0x61] sm:$0xff] %vm226, %v4734
      %4763 = vst.msk [vmem:[#allocation4 + $0x69] sm:$0x3f] %vm230, %v4735
      %4764 = vst.msk [vmem:[#allocation4 + $0x71] sm:$0xff] %vm226, %v4736
      %4765 = vst.msk [vmem:[#allocation4 + $0x79] sm:$0x3f] %vm230, %v4737
      %4766 = vst.msk [vmem:[#allocation4 + $0x81] sm:$0xff] %vm226, %v4738
      %4767 = vst.msk [vmem:[#allocation4 + $0x89] sm:$0x3f] %vm230, %v4739
      %4768 = vst.msk [vmem:[#allocation4 + $0x91] sm:$0xff] %vm226, %v4740
      %4769 = vst.msk [vmem:[#allocation4 + $0x99] sm:$0x3f] %vm230, %v4741
      %4770 = vst.msk [vmem:[#allocation4 + $0xa1] sm:$0xff] %vm226, %v4742
      %4771 = vst.msk [vmem:[#allocation4 + $0xa9] sm:$0x3f] %vm230, %v4743
      %4772 = vst.msk [vmem:[#allocation4 + $0xb1] sm:$0xff] %vm226, %v4744
      %4773 = vst.msk [vmem:[#allocation4 + $0xb9] sm:$0x3f] %vm230, %v4745
      %4774 = vst.msk [vmem:[#allocation4 + $0xc1] sm:$0xff] %vm226, %v4746
      %4775 = vst.msk [vmem:[#allocation4 + $0xc9] sm:$0x3f] %vm230, %v4747
      %4776 = vst.msk [vmem:[#allocation4 + $0xd1] sm:$0xff] %vm226, %v4748
      %4777 = vst.msk [vmem:[#allocation4 + $0xd9] sm:$0x3f] %vm230, %v4749
      %4778 = vst.msk [vmem:[#allocation4 + $0xe1] sm:$0xff] %vm226, %v4750
      %4779 = vst.msk [vmem:[#allocation4 + $0xe9] sm:$0x3f] %vm230, %v4751
      %v4780 = vld [vmem:[#allocation4] sm:$0xff]
      %v4781 = vld [vmem:[#allocation4 + $0x8] sm:$0xff]
      %v4782 = vld [vmem:[#allocation4 + $0x10] sm:$0xff]
      %v4783 = vld [vmem:[#allocation4 + $0x18] sm:$0xff]
      %v4784 = vld [vmem:[#allocation4 + $0x20] sm:$0xff]
      %v4785 = vld [vmem:[#allocation4 + $0x28] sm:$0xff]
      %v4786 = vld [vmem:[#allocation4 + $0x30] sm:$0xff]
      %v4787 = vld [vmem:[#allocation4 + $0x38] sm:$0xff]
      %v4788 = vld [vmem:[#allocation4 + $0x40] sm:$0xff]
      %v4789 = vld [vmem:[#allocation4 + $0x48] sm:$0xff]
      %v4790 = vld [vmem:[#allocation4 + $0x50] sm:$0xff]
      %v4791 = vld [vmem:[#allocation4 + $0x58] sm:$0xff]
      %v4792 = vld [vmem:[#allocation4 + $0x60] sm:$0xff]
      %v4793 = vld [vmem:[#allocation4 + $0x68] sm:$0xff]
      %v4794 = vld [vmem:[#allocation4 + $0x70] sm:$0xff]
      %v4795 = vld [vmem:[#allocation4 + $0x78] sm:$0xff]
      %v4796 = vld [vmem:[#allocation4 + $0x80] sm:$0xff]
      %v4797 = vld [vmem:[#allocation4 + $0x88] sm:$0xff]
      %v4798 = vld [vmem:[#allocation4 + $0x90] sm:$0xff]
      %v4799 = vld [vmem:[#allocation4 + $0x98] sm:$0xff]
      %v4800 = vld [vmem:[#allocation4 + $0xa0] sm:$0xff]
      %v4801 = vld [vmem:[#allocation4 + $0xa8] sm:$0xff]
      %v4802 = vld [vmem:[#allocation4 + $0xb0] sm:$0xff]
      %v4803 = vld [vmem:[#allocation4 + $0xb8] sm:$0xff]
      %v4804 = vld [vmem:[#allocation4 + $0xc0] sm:$0xff]
      %v4805 = vld [vmem:[#allocation4 + $0xc8] sm:$0xff]
      %v4806 = vld [vmem:[#allocation4 + $0xd0] sm:$0xff]
      %v4807 = vld [vmem:[#allocation4 + $0xd8] sm:$0xff]
      %v4808 = vpack.c.bf16 %v4781, %v4780
      %v4809 = vpack.c.bf16 %v4783, %v4782
      %v4810 = vpack.c.bf16 %v4785, %v4784
      %v4811 = vpack.c.bf16 %v4787, %v4786
      %v4812 = vpack.c.bf16 %v4789, %v4788
      %v4813 = vpack.c.bf16 %v4791, %v4790
      %v4814 = vpack.c.bf16 %v4793, %v4792
      %v4815 = vpack.c.bf16 %v4795, %v4794
      %v4816 = vpack.c.bf16 %v4797, %v4796
      %v4817 = vpack.c.bf16 %v4799, %v4798
      %v4818 = vpack.c.bf16 %v4801, %v4800
      %v4819 = vpack.c.bf16 %v4803, %v4802
      %v4820 = vpack.c.bf16 %v4805, %v4804
      %v4821 = vpack.c.bf16 %v4807, %v4806
      %4822 = vst.msk [vmem:[#allocation5] sm:$0xff] %vm226, %v4808
      %4823 = vst.msk [vmem:[#allocation5 + $0x18] sm:$0xff] %vm226, %v4809
      %4824 = vst.msk [vmem:[#allocation5 + $0x30] sm:$0xff] %vm226, %v4810
      %4825 = vst.msk [vmem:[#allocation5 + $0x48] sm:$0xff] %vm226, %v4811
      %4826 = vst.msk [vmem:[#allocation5 + $0x60] sm:$0xff] %vm226, %v4812
      %4827 = vst.msk [vmem:[#allocation5 + $0x78] sm:$0xff] %vm226, %v4813
      %4828 = vst.msk [vmem:[#allocation5 + $0x90] sm:$0xff] %vm226, %v4814
      %4829 = vst.msk [vmem:[#allocation5 + $0xa8] sm:$0xff] %vm226, %v4815
      %4830 = vst.msk [vmem:[#allocation5 + $0xc0] sm:$0xff] %vm226, %v4816
      %4831 = vst.msk [vmem:[#allocation5 + $0xd8] sm:$0xff] %vm226, %v4817
      %4832 = vst.msk [vmem:[#allocation5 + $0xf0] sm:$0xff] %vm226, %v4818
      %4833 = vst.msk [vmem:[#allocation5 + $0x108] sm:$0xff] %vm226, %v4819
      %4834 = vst.msk [vmem:[#allocation5 + $0x120] sm:$0xff] %vm226, %v4820
      %4835 = vst.msk [vmem:[#allocation5 + $0x138] sm:$0xff] %vm226, %v4821
      %v4836 = vld [vmem:[#allocation4 + $0x1] sm:$0xff]
      %v4837 = vld [vmem:[#allocation4 + $0x9] sm:$0xff]
      %v4838 = vld [vmem:[#allocation4 + $0x11] sm:$0xff]
      %v4839 = vld [vmem:[#allocation4 + $0x19] sm:$0xff]
      %v4840 = vld [vmem:[#allocation4 + $0x21] sm:$0xff]
      %v4841 = vld [vmem:[#allocation4 + $0x29] sm:$0xff]
      %v4842 = vld [vmem:[#allocation4 + $0x31] sm:$0xff]
      %v4843 = vld [vmem:[#allocation4 + $0x39] sm:$0xff]
      %v4844 = vld [vmem:[#allocation4 + $0x41] sm:$0xff]
      %v4845 = vld [vmem:[#allocation4 + $0x49] sm:$0xff]
      %v4846 = vld [vmem:[#allocation4 + $0x51] sm:$0xff]
      %v4847 = vld [vmem:[#allocation4 + $0x59] sm:$0xff]
      %v4848 = vld [vmem:[#allocation4 + $0x61] sm:$0xff]
      %v4849 = vld [vmem:[#allocation4 + $0x69] sm:$0xff]
      %v4850 = vld [vmem:[#allocation4 + $0x71] sm:$0xff]
      %v4851 = vld [vmem:[#allocation4 + $0x79] sm:$0xff]
      %v4852 = vld [vmem:[#allocation4 + $0x81] sm:$0xff]
      %v4853 = vld [vmem:[#allocation4 + $0x89] sm:$0xff]
      %v4854 = vld [vmem:[#allocation4 + $0x91] sm:$0xff]
      %v4855 = vld [vmem:[#allocation4 + $0x99] sm:$0xff]
      %v4856 = vld [vmem:[#allocation4 + $0xa1] sm:$0xff]
      %v4857 = vld [vmem:[#allocation4 + $0xa9] sm:$0xff]
      %v4858 = vld [vmem:[#allocation4 + $0xb1] sm:$0xff]
      %v4859 = vld [vmem:[#allocation4 + $0xb9] sm:$0xff]
      %v4860 = vld [vmem:[#allocation4 + $0xc1] sm:$0xff]
      %v4861 = vld [vmem:[#allocation4 + $0xc9] sm:$0xff]
      %v4862 = vld [vmem:[#allocation4 + $0xd1] sm:$0xff]
      %v4863 = vld [vmem:[#allocation4 + $0xd9] sm:$0xff]
      %v4864 = vpack.c.bf16 %v4837, %v4836
      %v4865 = vpack.c.bf16 %v4839, %v4838
      %v4866 = vpack.c.bf16 %v4841, %v4840
      %v4867 = vpack.c.bf16 %v4843, %v4842
      %v4868 = vpack.c.bf16 %v4845, %v4844
      %v4869 = vpack.c.bf16 %v4847, %v4846
      %v4870 = vpack.c.bf16 %v4849, %v4848
      %v4871 = vpack.c.bf16 %v4851, %v4850
      %v4872 = vpack.c.bf16 %v4853, %v4852
      %v4873 = vpack.c.bf16 %v4855, %v4854
      %v4874 = vpack.c.bf16 %v4857, %v4856
      %v4875 = vpack.c.bf16 %v4859, %v4858
      %v4876 = vpack.c.bf16 %v4861, %v4860
      %v4877 = vpack.c.bf16 %v4863, %v4862
      %4892 = vrot.lane.b32.xlu0 %v4864, 32
      %v4893 = vpop.permute.xlu0 %4892
      %4894 = vrot.lane.b32.xlu0 %v4865, 32
      %v4895 = vpop.permute.xlu0 %4894
      %4896 = vrot.lane.b32.xlu0 %v4866, 32
      %v4897 = vpop.permute.xlu0 %4896
      %4898 = vrot.lane.b32.xlu0 %v4867, 32
      %v4899 = vpop.permute.xlu0 %4898
      %4900 = vrot.lane.b32.xlu0 %v4868, 32
      %v4901 = vpop.permute.xlu0 %4900
      %4902 = vrot.lane.b32.xlu0 %v4869, 32
      %v4903 = vpop.permute.xlu0 %4902
      %4904 = vrot.lane.b32.xlu0 %v4870, 32
      %v4905 = vpop.permute.xlu0 %4904
      %4906 = vrot.lane.b32.xlu0 %v4871, 32
      %v4907 = vpop.permute.xlu0 %4906
      %4908 = vrot.lane.b32.xlu0 %v4872, 32
      %v4909 = vpop.permute.xlu0 %4908
      %4910 = vrot.lane.b32.xlu0 %v4873, 32
      %v4911 = vpop.permute.xlu0 %4910
      %4912 = vrot.lane.b32.xlu0 %v4874, 32
      %v4913 = vpop.permute.xlu0 %4912
      %4914 = vrot.lane.b32.xlu0 %v4875, 32
      %v4915 = vpop.permute.xlu0 %4914
      %4916 = vrot.lane.b32.xlu0 %v4876, 32
      %v4917 = vpop.permute.xlu0 %4916
      %4918 = vrot.lane.b32.xlu0 %v4877, 32
      %v4919 = vpop.permute.xlu0 %4918
      %vm4934 = vcmask 523520
      %4935 = vst.msk [vmem:[#allocation5] sm:$0xff] %vm4934, %v4893
      %4936 = vst.msk [vmem:[#allocation5 + $0x18] sm:$0xff] %vm4934, %v4895
      %4937 = vst.msk [vmem:[#allocation5 + $0x30] sm:$0xff] %vm4934, %v4897
      %4938 = vst.msk [vmem:[#allocation5 + $0x48] sm:$0xff] %vm4934, %v4899
      %4939 = vst.msk [vmem:[#allocation5 + $0x60] sm:$0xff] %vm4934, %v4901
      %4940 = vst.msk [vmem:[#allocation5 + $0x78] sm:$0xff] %vm4934, %v4903
      %4941 = vst.msk [vmem:[#allocation5 + $0x90] sm:$0xff] %vm4934, %v4905
      %4942 = vst.msk [vmem:[#allocation5 + $0xa8] sm:$0xff] %vm4934, %v4907
      %4943 = vst.msk [vmem:[#allocation5 + $0xc0] sm:$0xff] %vm4934, %v4909
      %4944 = vst.msk [vmem:[#allocation5 + $0xd8] sm:$0xff] %vm4934, %v4911
      %4945 = vst.msk [vmem:[#allocation5 + $0xf0] sm:$0xff] %vm4934, %v4913
      %4946 = vst.msk [vmem:[#allocation5 + $0x108] sm:$0xff] %vm4934, %v4915
      %4947 = vst.msk [vmem:[#allocation5 + $0x120] sm:$0xff] %vm4934, %v4917
      %4948 = vst.msk [vmem:[#allocation5 + $0x138] sm:$0xff] %vm4934, %v4919
      %v4949 = vld [vmem:[#allocation4 + $0x2] sm:$0xff]
      %v4950 = vld [vmem:[#allocation4 + $0xa] sm:$0xff]
      %v4951 = vld [vmem:[#allocation4 + $0x12] sm:$0xff]
      %v4952 = vld [vmem:[#allocation4 + $0x1a] sm:$0xff]
      %v4953 = vld [vmem:[#allocation4 + $0x22] sm:$0xff]
      %v4954 = vld [vmem:[#allocation4 + $0x2a] sm:$0xff]
      %v4955 = vld [vmem:[#allocation4 + $0x32] sm:$0xff]
      %v4956 = vld [vmem:[#allocation4 + $0x3a] sm:$0xff]
      %v4957 = vld [vmem:[#allocation4 + $0x42] sm:$0xff]
      %v4958 = vld [vmem:[#allocation4 + $0x4a] sm:$0xff]
      %v4959 = vld [vmem:[#allocation4 + $0x52] sm:$0xff]
      %v4960 = vld [vmem:[#allocation4 + $0x5a] sm:$0xff]
      %v4961 = vld [vmem:[#allocation4 + $0x62] sm:$0xff]
      %v4962 = vld [vmem:[#allocation4 + $0x6a] sm:$0xff]
      %v4963 = vld [vmem:[#allocation4 + $0x72] sm:$0xff]
      %v4964 = vld [vmem:[#allocation4 + $0x7a] sm:$0xff]
      %v4965 = vld [vmem:[#allocation4 + $0x82] sm:$0xff]
      %v4966 = vld [vmem:[#allocation4 + $0x8a] sm:$0xff]
      %v4967 = vld [vmem:[#allocation4 + $0x92] sm:$0xff]
      %v4968 = vld [vmem:[#allocation4 + $0x9a] sm:$0xff]
      %v4969 = vld [vmem:[#allocation4 + $0xa2] sm:$0xff]
      %v4970 = vld [vmem:[#allocation4 + $0xaa] sm:$0xff]
      %v4971 = vld [vmem:[#allocation4 + $0xb2] sm:$0xff]
      %v4972 = vld [vmem:[#allocation4 + $0xba] sm:$0xff]
      %v4973 = vld [vmem:[#allocation4 + $0xc2] sm:$0xff]
      %v4974 = vld [vmem:[#allocation4 + $0xca] sm:$0xff]
      %v4975 = vld [vmem:[#allocation4 + $0xd2] sm:$0xff]
      %v4976 = vld [vmem:[#allocation4 + $0xda] sm:$0xff]
      %v4977 = vpack.c.bf16 %v4950, %v4949
      %v4978 = vpack.c.bf16 %v4952, %v4951
      %v4979 = vpack.c.bf16 %v4954, %v4953
      %v4980 = vpack.c.bf16 %v4956, %v4955
      %v4981 = vpack.c.bf16 %v4958, %v4957
      %v4982 = vpack.c.bf16 %v4960, %v4959
      %v4983 = vpack.c.bf16 %v4962, %v4961
      %v4984 = vpack.c.bf16 %v4964, %v4963
      %v4985 = vpack.c.bf16 %v4966, %v4965
      %v4986 = vpack.c.bf16 %v4968, %v4967
      %v4987 = vpack.c.bf16 %v4970, %v4969
      %v4988 = vpack.c.bf16 %v4972, %v4971
      %v4989 = vpack.c.bf16 %v4974, %v4973
      %v4990 = vpack.c.bf16 %v4976, %v4975
      %5005 = vrot.lane.b32.xlu0 %v4977, 64
      %v5006 = vpop.permute.xlu0 %5005
      %5007 = vrot.lane.b32.xlu0 %v4978, 64
      %v5008 = vpop.permute.xlu0 %5007
      %5009 = vrot.lane.b32.xlu0 %v4979, 64
      %v5010 = vpop.permute.xlu0 %5009
      %5011 = vrot.lane.b32.xlu0 %v4980, 64
      %v5012 = vpop.permute.xlu0 %5011
      %5013 = vrot.lane.b32.xlu0 %v4981, 64
      %v5014 = vpop.permute.xlu0 %5013
      %5015 = vrot.lane.b32.xlu0 %v4982, 64
      %v5016 = vpop.permute.xlu0 %5015
      %5017 = vrot.lane.b32.xlu0 %v4983, 64
      %v5018 = vpop.permute.xlu0 %5017
      %5019 = vrot.lane.b32.xlu0 %v4984, 64
      %v5020 = vpop.permute.xlu0 %5019
      %5021 = vrot.lane.b32.xlu0 %v4985, 64
      %v5022 = vpop.permute.xlu0 %5021
      %5023 = vrot.lane.b32.xlu0 %v4986, 64
      %v5024 = vpop.permute.xlu0 %5023
      %5025 = vrot.lane.b32.xlu0 %v4987, 64
      %v5026 = vpop.permute.xlu0 %5025
      %5027 = vrot.lane.b32.xlu0 %v4988, 64
      %v5028 = vpop.permute.xlu0 %5027
      %5029 = vrot.lane.b32.xlu0 %v4989, 64
      %v5030 = vpop.permute.xlu0 %5029
      %5031 = vrot.lane.b32.xlu0 %v4990, 64
      %v5032 = vpop.permute.xlu0 %5031
      %vm5047 = vcmask 785920
      %5048 = vst.msk [vmem:[#allocation5] sm:$0xff] %vm5047, %v5006
      %5049 = vst.msk [vmem:[#allocation5 + $0x18] sm:$0xff] %vm5047, %v5008
      %5050 = vst.msk [vmem:[#allocation5 + $0x30] sm:$0xff] %vm5047, %v5010
      %5051 = vst.msk [vmem:[#allocation5 + $0x48] sm:$0xff] %vm5047, %v5012
      %5052 = vst.msk [vmem:[#allocation5 + $0x60] sm:$0xff] %vm5047, %v5014
      %5053 = vst.msk [vmem:[#allocation5 + $0x78] sm:$0xff] %vm5047, %v5016
      %5054 = vst.msk [vmem:[#allocation5 + $0x90] sm:$0xff] %vm5047, %v5018
      %5055 = vst.msk [vmem:[#allocation5 + $0xa8] sm:$0xff] %vm5047, %v5020
      %5056 = vst.msk [vmem:[#allocation5 + $0xc0] sm:$0xff] %vm5047, %v5022
      %5057 = vst.msk [vmem:[#allocation5 + $0xd8] sm:$0xff] %vm5047, %v5024
      %5058 = vst.msk [vmem:[#allocation5 + $0xf0] sm:$0xff] %vm5047, %v5026
      %5059 = vst.msk [vmem:[#allocation5 + $0x108] sm:$0xff] %vm5047, %v5028
      %5060 = vst.msk [vmem:[#allocation5 + $0x120] sm:$0xff] %vm5047, %v5030
      %5061 = vst.msk [vmem:[#allocation5 + $0x138] sm:$0xff] %vm5047, %v5032
      %v5062 = vld [vmem:[#allocation4 + $0x10] sm:$0xff]
      %v5063 = vld [vmem:[#allocation4 + $0x18] sm:$0xff]
      %v5064 = vld [vmem:[#allocation4 + $0x20] sm:$0xff]
      %v5065 = vld [vmem:[#allocation4 + $0x28] sm:$0xff]
      %v5066 = vld [vmem:[#allocation4 + $0x30] sm:$0xff]
      %v5067 = vld [vmem:[#allocation4 + $0x38] sm:$0xff]
      %v5068 = vld [vmem:[#allocation4 + $0x40] sm:$0xff]
      %v5069 = vld [vmem:[#allocation4 + $0x48] sm:$0xff]
      %v5070 = vld [vmem:[#allocation4 + $0x50] sm:$0xff]
      %v5071 = vld [vmem:[#allocation4 + $0x58] sm:$0xff]
      %v5072 = vld [vmem:[#allocation4 + $0x60] sm:$0xff]
      %v5073 = vld [vmem:[#allocation4 + $0x68] sm:$0xff]
      %v5074 = vld [vmem:[#allocation4 + $0x70] sm:$0xff]
      %v5075 = vld [vmem:[#allocation4 + $0x78] sm:$0xff]
      %v5076 = vld [vmem:[#allocation4 + $0x80] sm:$0xff]
      %v5077 = vld [vmem:[#allocation4 + $0x88] sm:$0xff]
      %v5078 = vld [vmem:[#allocation4 + $0x90] sm:$0xff]
      %v5079 = vld [vmem:[#allocation4 + $0x98] sm:$0xff]
      %v5080 = vld [vmem:[#allocation4 + $0xa0] sm:$0xff]
      %v5081 = vld [vmem:[#allocation4 + $0xa8] sm:$0xff]
      %v5082 = vld [vmem:[#allocation4 + $0xb0] sm:$0xff]
      %v5083 = vld [vmem:[#allocation4 + $0xb8] sm:$0xff]
      %v5084 = vld [vmem:[#allocation4 + $0xc0] sm:$0xff]
      %v5085 = vld [vmem:[#allocation4 + $0xc8] sm:$0xff]
      %v5086 = vld [vmem:[#allocation4 + $0xd0] sm:$0xff]
      %v5087 = vld [vmem:[#allocation4 + $0xd8] sm:$0xff]
      %v5088 = vld [vmem:[#allocation4 + $0xe0] sm:$0xff]
      %v5089 = vld [vmem:[#allocation4 + $0xe8] sm:$0xff]
      %v5090 = vpack.c.bf16 %v5063, %v5062
      %v5091 = vpack.c.bf16 %v5065, %v5064
      %v5092 = vpack.c.bf16 %v5067, %v5066
      %v5093 = vpack.c.bf16 %v5069, %v5068
      %v5094 = vpack.c.bf16 %v5071, %v5070
      %v5095 = vpack.c.bf16 %v5073, %v5072
      %v5096 = vpack.c.bf16 %v5075, %v5074
      %v5097 = vpack.c.bf16 %v5077, %v5076
      %v5098 = vpack.c.bf16 %v5079, %v5078
      %v5099 = vpack.c.bf16 %v5081, %v5080
      %v5100 = vpack.c.bf16 %v5083, %v5082
      %v5101 = vpack.c.bf16 %v5085, %v5084
      %v5102 = vpack.c.bf16 %v5087, %v5086
      %v5103 = vpack.c.bf16 %v5089, %v5088
      %5118 = vrot.lane.b32.xlu0 %v5090, 96
      %v5119 = vpop.permute.xlu0 %5118
      %5120 = vrot.lane.b32.xlu0 %v5091, 96
      %v5121 = vpop.permute.xlu0 %5120
      %5122 = vrot.lane.b32.xlu0 %v5092, 96
      %v5123 = vpop.permute.xlu0 %5122
      %5124 = vrot.lane.b32.xlu0 %v5093, 96
      %v5125 = vpop.permute.xlu0 %5124
      %5126 = vrot.lane.b32.xlu0 %v5094, 96
      %v5127 = vpop.permute.xlu0 %5126
      %5128 = vrot.lane.b32.xlu0 %v5095, 96
      %v5129 = vpop.permute.xlu0 %5128
      %5130 = vrot.lane.b32.xlu0 %v5096, 96
      %v5131 = vpop.permute.xlu0 %5130
      %5132 = vrot.lane.b32.xlu0 %v5097, 96
      %v5133 = vpop.permute.xlu0 %5132
      %5134 = vrot.lane.b32.xlu0 %v5098, 96
      %v5135 = vpop.permute.xlu0 %5134
      %5136 = vrot.lane.b32.xlu0 %v5099, 96
      %v5137 = vpop.permute.xlu0 %5136
      %5138 = vrot.lane.b32.xlu0 %v5100, 96
      %v5139 = vpop.permute.xlu0 %5138
      %5140 = vrot.lane.b32.xlu0 %v5101, 96
      %v5141 = vpop.permute.xlu0 %5140
      %5142 = vrot.lane.b32.xlu0 %v5102, 96
      %v5143 = vpop.permute.xlu0 %5142
      %5144 = vrot.lane.b32.xlu0 %v5103, 96
      %v5145 = vpop.permute.xlu0 %5144
      %vm5160 = vcmask 1048320
      %5161 = vst.msk [vmem:[#allocation5] sm:$0xff] %vm5160, %v5119
      %5162 = vst.msk [vmem:[#allocation5 + $0x18] sm:$0xff] %vm5160, %v5121
      %5163 = vst.msk [vmem:[#allocation5 + $0x30] sm:$0xff] %vm5160, %v5123
      %5164 = vst.msk [vmem:[#allocation5 + $0x48] sm:$0xff] %vm5160, %v5125
      %5165 = vst.msk [vmem:[#allocation5 + $0x60] sm:$0xff] %vm5160, %v5127
      %5166 = vst.msk [vmem:[#allocation5 + $0x78] sm:$0xff] %vm5160, %v5129
      %5167 = vst.msk [vmem:[#allocation5 + $0x90] sm:$0xff] %vm5160, %v5131
      %5168 = vst.msk [vmem:[#allocation5 + $0xa8] sm:$0xff] %vm5160, %v5133
      %5169 = vst.msk [vmem:[#allocation5 + $0xc0] sm:$0xff] %vm5160, %v5135
      %5170 = vst.msk [vmem:[#allocation5 + $0xd8] sm:$0xff] %vm5160, %v5137
      %5171 = vst.msk [vmem:[#allocation5 + $0xf0] sm:$0xff] %vm5160, %v5139
      %5172 = vst.msk [vmem:[#allocation5 + $0x108] sm:$0xff] %vm5160, %v5141
      %5173 = vst.msk [vmem:[#allocation5 + $0x120] sm:$0xff] %vm5160, %v5143
      %5174 = vst.msk [vmem:[#allocation5 + $0x138] sm:$0xff] %vm5160, %v5145
      %v5175 = vld [vmem:[#allocation4 + $0x11] sm:$0xff]
      %v5176 = vld [vmem:[#allocation4 + $0x19] sm:$0xff]
      %v5177 = vld [vmem:[#allocation4 + $0x21] sm:$0xff]
      %v5178 = vld [vmem:[#allocation4 + $0x29] sm:$0xff]
      %v5179 = vld [vmem:[#allocation4 + $0x31] sm:$0xff]
      %v5180 = vld [vmem:[#allocation4 + $0x39] sm:$0xff]
      %v5181 = vld [vmem:[#allocation4 + $0x41] sm:$0xff]
      %v5182 = vld [vmem:[#allocation4 + $0x49] sm:$0xff]
      %v5183 = vld [vmem:[#allocation4 + $0x51] sm:$0xff]
      %v5184 = vld [vmem:[#allocation4 + $0x59] sm:$0xff]
      %v5185 = vld [vmem:[#allocation4 + $0x61] sm:$0xff]
      %v5186 = vld [vmem:[#allocation4 + $0x69] sm:$0xff]
      %v5187 = vld [vmem:[#allocation4 + $0x71] sm:$0xff]
      %v5188 = vld [vmem:[#allocation4 + $0x79] sm:$0xff]
      %v5189 = vld [vmem:[#allocation4 + $0x81] sm:$0xff]
      %v5190 = vld [vmem:[#allocation4 + $0x89] sm:$0xff]
      %v5191 = vld [vmem:[#allocation4 + $0x91] sm:$0xff]
      %v5192 = vld [vmem:[#allocation4 + $0x99] sm:$0xff]
      %v5193 = vld [vmem:[#allocation4 + $0xa1] sm:$0xff]
      %v5194 = vld [vmem:[#allocation4 + $0xa9] sm:$0xff]
      %v5195 = vld [vmem:[#allocation4 + $0xb1] sm:$0xff]
      %v5196 = vld [vmem:[#allocation4 + $0xb9] sm:$0xff]
      %v5197 = vld [vmem:[#allocation4 + $0xc1] sm:$0xff]
      %v5198 = vld [vmem:[#allocation4 + $0xc9] sm:$0xff]
      %v5199 = vld [vmem:[#allocation4 + $0xd1] sm:$0xff]
      %v5200 = vld [vmem:[#allocation4 + $0xd9] sm:$0xff]
      %v5201 = vld [vmem:[#allocation4 + $0xe1] sm:$0xff]
      %v5202 = vld [vmem:[#allocation4 + $0xe9] sm:$0xff]
      %v5203 = vpack.c.bf16 %v5176, %v5175
      %v5204 = vpack.c.bf16 %v5178, %v5177
      %v5205 = vpack.c.bf16 %v5180, %v5179
      %v5206 = vpack.c.bf16 %v5182, %v5181
      %v5207 = vpack.c.bf16 %v5184, %v5183
      %v5208 = vpack.c.bf16 %v5186, %v5185
      %v5209 = vpack.c.bf16 %v5188, %v5187
      %v5210 = vpack.c.bf16 %v5190, %v5189
      %v5211 = vpack.c.bf16 %v5192, %v5191
      %v5212 = vpack.c.bf16 %v5194, %v5193
      %v5213 = vpack.c.bf16 %v5196, %v5195
      %v5214 = vpack.c.bf16 %v5198, %v5197
      %v5215 = vpack.c.bf16 %v5200, %v5199
      %v5216 = vpack.c.bf16 %v5202, %v5201
      %5217 = vst.msk [vmem:[#allocation5 + $0x8] sm:$0xff] %vm226, %v5203
      %5218 = vst.msk [vmem:[#allocation5 + $0x20] sm:$0xff] %vm226, %v5204
      %5219 = vst.msk [vmem:[#allocation5 + $0x38] sm:$0xff] %vm226, %v5205
      %5220 = vst.msk [vmem:[#allocation5 + $0x50] sm:$0xff] %vm226, %v5206
      %5221 = vst.msk [vmem:[#allocation5 + $0x68] sm:$0xff] %vm226, %v5207
      %5222 = vst.msk [vmem:[#allocation5 + $0x80] sm:$0xff] %vm226, %v5208
      %5223 = vst.msk [vmem:[#allocation5 + $0x98] sm:$0xff] %vm226, %v5209
      %5224 = vst.msk [vmem:[#allocation5 + $0xb0] sm:$0xff] %vm226, %v5210
      %5225 = vst.msk [vmem:[#allocation5 + $0xc8] sm:$0xff] %vm226, %v5211
      %5226 = vst.msk [vmem:[#allocation5 + $0xe0] sm:$0xff] %vm226, %v5212
      %5227 = vst.msk [vmem:[#allocation5 + $0xf8] sm:$0xff] %vm226, %v5213
      %5228 = vst.msk [vmem:[#allocation5 + $0x110] sm:$0xff] %vm226, %v5214
      %5229 = vst.msk [vmem:[#allocation5 + $0x128] sm:$0xff] %vm226, %v5215
      %5230 = vst.msk [vmem:[#allocation5 + $0x140] sm:$0xff] %vm226, %v5216
      %v5231 = vld [vmem:[#allocation4 + $0x12] sm:$0xff]
      %v5232 = vld [vmem:[#allocation4 + $0x1a] sm:$0xff]
      %v5233 = vld [vmem:[#allocation4 + $0x22] sm:$0xff]
      %v5234 = vld [vmem:[#allocation4 + $0x2a] sm:$0xff]
      %v5235 = vld [vmem:[#allocation4 + $0x32] sm:$0xff]
      %v5236 = vld [vmem:[#allocation4 + $0x3a] sm:$0xff]
      %v5237 = vld [vmem:[#allocation4 + $0x42] sm:$0xff]
      %v5238 = vld [vmem:[#allocation4 + $0x4a] sm:$0xff]
      %v5239 = vld [vmem:[#allocation4 + $0x52] sm:$0xff]
      %v5240 = vld [vmem:[#allocation4 + $0x5a] sm:$0xff]
      %v5241 = vld [vmem:[#allocation4 + $0x62] sm:$0xff]
      %v5242 = vld [vmem:[#allocation4 + $0x6a] sm:$0xff]
      %v5243 = vld [vmem:[#allocation4 + $0x72] sm:$0xff]
      %v5244 = vld [vmem:[#allocation4 + $0x7a] sm:$0xff]
      %v5245 = vld [vmem:[#allocation4 + $0x82] sm:$0xff]
      %v5246 = vld [vmem:[#allocation4 + $0x8a] sm:$0xff]
      %v5247 = vld [vmem:[#allocation4 + $0x92] sm:$0xff]
      %v5248 = vld [vmem:[#allocation4 + $0x9a] sm:$0xff]
      %v5249 = vld [vmem:[#allocation4 + $0xa2] sm:$0xff]
      %v5250 = vld [vmem:[#allocation4 + $0xaa] sm:$0xff]
      %v5251 = vld [vmem:[#allocation4 + $0xb2] sm:$0xff]
      %v5252 = vld [vmem:[#allocation4 + $0xba] sm:$0xff]
      %v5253 = vld [vmem:[#allocation4 + $0xc2] sm:$0xff]
      %v5254 = vld [vmem:[#allocation4 + $0xca] sm:$0xff]
      %v5255 = vld [vmem:[#allocation4 + $0xd2] sm:$0xff]
      %v5256 = vld [vmem:[#allocation4 + $0xda] sm:$0xff]
      %v5257 = vld [vmem:[#allocation4 + $0xe2] sm:$0xff]
      %v5258 = vld [vmem:[#allocation4 + $0xea] sm:$0xff]
      %v5259 = vpack.c.bf16 %v5232, %v5231
      %v5260 = vpack.c.bf16 %v5234, %v5233
      %v5261 = vpack.c.bf16 %v5236, %v5235
      %v5262 = vpack.c.bf16 %v5238, %v5237
      %v5263 = vpack.c.bf16 %v5240, %v5239
      %v5264 = vpack.c.bf16 %v5242, %v5241
      %v5265 = vpack.c.bf16 %v5244, %v5243
      %v5266 = vpack.c.bf16 %v5246, %v5245
      %v5267 = vpack.c.bf16 %v5248, %v5247
      %v5268 = vpack.c.bf16 %v5250, %v5249
      %v5269 = vpack.c.bf16 %v5252, %v5251
      %v5270 = vpack.c.bf16 %v5254, %v5253
      %v5271 = vpack.c.bf16 %v5256, %v5255
      %v5272 = vpack.c.bf16 %v5258, %v5257
      %5287 = vrot.lane.b32.xlu0 %v5259, 32
      %v5288 = vpop.permute.xlu0 %5287
      %5289 = vrot.lane.b32.xlu0 %v5260, 32
      %v5290 = vpop.permute.xlu0 %5289
      %5291 = vrot.lane.b32.xlu0 %v5261, 32
      %v5292 = vpop.permute.xlu0 %5291
      %5293 = vrot.lane.b32.xlu0 %v5262, 32
      %v5294 = vpop.permute.xlu0 %5293
      %5295 = vrot.lane.b32.xlu0 %v5263, 32
      %v5296 = vpop.permute.xlu0 %5295
      %5297 = vrot.lane.b32.xlu0 %v5264, 32
      %v5298 = vpop.permute.xlu0 %5297
      %5299 = vrot.lane.b32.xlu0 %v5265, 32
      %v5300 = vpop.permute.xlu0 %5299
      %5301 = vrot.lane.b32.xlu0 %v5266, 32
      %v5302 = vpop.permute.xlu0 %5301
      %5303 = vrot.lane.b32.xlu0 %v5267, 32
      %v5304 = vpop.permute.xlu0 %5303
      %5305 = vrot.lane.b32.xlu0 %v5268, 32
      %v5306 = vpop.permute.xlu0 %5305
      %5307 = vrot.lane.b32.xlu0 %v5269, 32
      %v5308 = vpop.permute.xlu0 %5307
      %5309 = vrot.lane.b32.xlu0 %v5270, 32
      %v5310 = vpop.permute.xlu0 %5309
      %5311 = vrot.lane.b32.xlu0 %v5271, 32
      %v5312 = vpop.permute.xlu0 %5311
      %5313 = vrot.lane.b32.xlu0 %v5272, 32
      %v5314 = vpop.permute.xlu0 %5313
      %5329 = vst.msk [vmem:[#allocation5 + $0x8] sm:$0xff] %vm4934, %v5288
      %5330 = vst.msk [vmem:[#allocation5 + $0x20] sm:$0xff] %vm4934, %v5290
      %5331 = vst.msk [vmem:[#allocation5 + $0x38] sm:$0xff] %vm4934, %v5292
      %5332 = vst.msk [vmem:[#allocation5 + $0x50] sm:$0xff] %vm4934, %v5294
      %5333 = vst.msk [vmem:[#allocation5 + $0x68] sm:$0xff] %vm4934, %v5296
      %5334 = vst.msk [vmem:[#allocation5 + $0x80] sm:$0xff] %vm4934, %v5298
      %5335 = vst.msk [vmem:[#allocation5 + $0x98] sm:$0xff] %vm4934, %v5300
      %5336 = vst.msk [vmem:[#allocation5 + $0xb0] sm:$0xff] %vm4934, %v5302
      %5337 = vst.msk [vmem:[#allocation5 + $0xc8] sm:$0xff] %vm4934, %v5304
      %5338 = vst.msk [vmem:[#allocation5 + $0xe0] sm:$0xff] %vm4934, %v5306
      %5339 = vst.msk [vmem:[#allocation5 + $0xf8] sm:$0xff] %vm4934, %v5308
      %5340 = vst.msk [vmem:[#allocation5 + $0x110] sm:$0xff] %vm4934, %v5310
      %5341 = vst.msk [vmem:[#allocation5 + $0x128] sm:$0xff] %vm4934, %v5312
      %5342 = vst.msk [vmem:[#allocation5 + $0x140] sm:$0xff] %vm4934, %v5314
      %v5343 = vld [vmem:[#allocation4 + $0x20] sm:$0xff]
      %v5344 = vld [vmem:[#allocation4 + $0x28] sm:$0xff]
      %v5345 = vld [vmem:[#allocation4 + $0x30] sm:$0xff]
      %v5346 = vld [vmem:[#allocation4 + $0x38] sm:$0xff]
      %v5347 = vld [vmem:[#allocation4 + $0x40] sm:$0xff]
      %v5348 = vld [vmem:[#allocation4 + $0x48] sm:$0xff]
      %v5349 = vld [vmem:[#allocation4 + $0x50] sm:$0xff]
      %v5350 = vld [vmem:[#allocation4 + $0x58] sm:$0xff]
      %v5351 = vld [vmem:[#allocation4 + $0x60] sm:$0xff]
      %v5352 = vld [vmem:[#allocation4 + $0x68] sm:$0xff]
      %v5353 = vld [vmem:[#allocation4 + $0x70] sm:$0xff]
      %v5354 = vld [vmem:[#allocation4 + $0x78] sm:$0xff]
      %v5355 = vld [vmem:[#allocation4 + $0x80] sm:$0xff]
      %v5356 = vld [vmem:[#allocation4 + $0x88] sm:$0xff]
      %v5357 = vld [vmem:[#allocation4 + $0x90] sm:$0xff]
      %v5358 = vld [vmem:[#allocation4 + $0x98] sm:$0xff]
      %v5359 = vld [vmem:[#allocation4 + $0xa0] sm:$0xff]
      %v5360 = vld [vmem:[#allocation4 + $0xa8] sm:$0xff]
      %v5361 = vld [vmem:[#allocation4 + $0xb0] sm:$0xff]
      %v5362 = vld [vmem:[#allocation4 + $0xb8] sm:$0xff]
      %v5363 = vld [vmem:[#allocation4 + $0xc0] sm:$0xff]
      %v5364 = vld [vmem:[#allocation4 + $0xc8] sm:$0xff]
      %v5365 = vld [vmem:[#allocation4 + $0xd0] sm:$0xff]
      %v5366 = vld [vmem:[#allocation4 + $0xd8] sm:$0xff]
      %v5367 = vld [vmem:[#allocation4 + $0xe0] sm:$0xff]
      %v5368 = vld [vmem:[#allocation4 + $0xe8] sm:$0xff]
      %v5369 = vld [vmem:[#allocation4 + $0xf0] sm:$0xff]
      %v5370 = vld [vmem:[#allocation4 + $0xf8] sm:$0xff]
      %v5371 = vpack.c.bf16 %v5344, %v5343
      %v5372 = vpack.c.bf16 %v5346, %v5345
      %v5373 = vpack.c.bf16 %v5348, %v5347
      %v5374 = vpack.c.bf16 %v5350, %v5349
      %v5375 = vpack.c.bf16 %v5352, %v5351
      %v5376 = vpack.c.bf16 %v5354, %v5353
      %v5377 = vpack.c.bf16 %v5356, %v5355
      %v5378 = vpack.c.bf16 %v5358, %v5357
      %v5379 = vpack.c.bf16 %v5360, %v5359
      %v5380 = vpack.c.bf16 %v5362, %v5361
      %v5381 = vpack.c.bf16 %v5364, %v5363
      %v5382 = vpack.c.bf16 %v5366, %v5365
      %v5383 = vpack.c.bf16 %v5368, %v5367
      %v5384 = vpack.c.bf16 %v5370, %v5369
      %5399 = vrot.lane.b32.xlu0 %v5371, 64
      %v5400 = vpop.permute.xlu0 %5399
      %5401 = vrot.lane.b32.xlu0 %v5372, 64
      %v5402 = vpop.permute.xlu0 %5401
      %5403 = vrot.lane.b32.xlu0 %v5373, 64
      %v5404 = vpop.permute.xlu0 %5403
      %5405 = vrot.lane.b32.xlu0 %v5374, 64
      %v5406 = vpop.permute.xlu0 %5405
      %5407 = vrot.lane.b32.xlu0 %v5375, 64
      %v5408 = vpop.permute.xlu0 %5407
      %5409 = vrot.lane.b32.xlu0 %v5376, 64
      %v5410 = vpop.permute.xlu0 %5409
      %5411 = vrot.lane.b32.xlu0 %v5377, 64
      %v5412 = vpop.permute.xlu0 %5411
      %5413 = vrot.lane.b32.xlu0 %v5378, 64
      %v5414 = vpop.permute.xlu0 %5413
      %5415 = vrot.lane.b32.xlu0 %v5379, 64
      %v5416 = vpop.permute.xlu0 %5415
      %5417 = vrot.lane.b32.xlu0 %v5380, 64
      %v5418 = vpop.permute.xlu0 %5417
      %5419 = vrot.lane.b32.xlu0 %v5381, 64
      %v5420 = vpop.permute.xlu0 %5419
      %5421 = vrot.lane.b32.xlu0 %v5382, 64
      %v5422 = vpop.permute.xlu0 %5421
      %5423 = vrot.lane.b32.xlu0 %v5383, 64
      %v5424 = vpop.permute.xlu0 %5423
      %5425 = vrot.lane.b32.xlu0 %v5384, 64
      %v5426 = vpop.permute.xlu0 %5425
      %5441 = vst.msk [vmem:[#allocation5 + $0x8] sm:$0xff] %vm5047, %v5400
      %5442 = vst.msk [vmem:[#allocation5 + $0x20] sm:$0xff] %vm5047, %v5402
      %5443 = vst.msk [vmem:[#allocation5 + $0x38] sm:$0xff] %vm5047, %v5404
      %5444 = vst.msk [vmem:[#allocation5 + $0x50] sm:$0xff] %vm5047, %v5406
      %5445 = vst.msk [vmem:[#allocation5 + $0x68] sm:$0xff] %vm5047, %v5408
      %5446 = vst.msk [vmem:[#allocation5 + $0x80] sm:$0xff] %vm5047, %v5410
      %5447 = vst.msk [vmem:[#allocation5 + $0x98] sm:$0xff] %vm5047, %v5412
      %5448 = vst.msk [vmem:[#allocation5 + $0xb0] sm:$0xff] %vm5047, %v5414
      %5449 = vst.msk [vmem:[#allocation5 + $0xc8] sm:$0xff] %vm5047, %v5416
      %5450 = vst.msk [vmem:[#allocation5 + $0xe0] sm:$0xff] %vm5047, %v5418
      %5451 = vst.msk [vmem:[#allocation5 + $0xf8] sm:$0xff] %vm5047, %v5420
      %5452 = vst.msk [vmem:[#allocation5 + $0x110] sm:$0xff] %vm5047, %v5422
      %5453 = vst.msk [vmem:[#allocation5 + $0x128] sm:$0xff] %vm5047, %v5424
      %5454 = vst.msk [vmem:[#allocation5 + $0x140] sm:$0xff] %vm5047, %v5426
      %v5455 = vld [vmem:[#allocation4 + $0x21] sm:$0xff]
      %v5456 = vld [vmem:[#allocation4 + $0x29] sm:$0xff]
      %v5457 = vld [vmem:[#allocation4 + $0x31] sm:$0xff]
      %v5458 = vld [vmem:[#allocation4 + $0x39] sm:$0xff]
      %v5459 = vld [vmem:[#allocation4 + $0x41] sm:$0xff]
      %v5460 = vld [vmem:[#allocation4 + $0x49] sm:$0xff]
      %v5461 = vld [vmem:[#allocation4 + $0x51] sm:$0xff]
      %v5462 = vld [vmem:[#allocation4 + $0x59] sm:$0xff]
      %v5463 = vld [vmem:[#allocation4 + $0x61] sm:$0xff]
      %v5464 = vld [vmem:[#allocation4 + $0x69] sm:$0xff]
      %v5465 = vld [vmem:[#allocation4 + $0x71] sm:$0xff]
      %v5466 = vld [vmem:[#allocation4 + $0x79] sm:$0xff]
      %v5467 = vld [vmem:[#allocation4 + $0x81] sm:$0xff]
      %v5468 = vld [vmem:[#allocation4 + $0x89] sm:$0xff]
      %v5469 = vld [vmem:[#allocation4 + $0x91] sm:$0xff]
      %v5470 = vld [vmem:[#allocation4 + $0x99] sm:$0xff]
      %v5471 = vld [vmem:[#allocation4 + $0xa1] sm:$0xff]
      %v5472 = vld [vmem:[#allocation4 + $0xa9] sm:$0xff]
      %v5473 = vld [vmem:[#allocation4 + $0xb1] sm:$0xff]
      %v5474 = vld [vmem:[#allocation4 + $0xb9] sm:$0xff]
      %v5475 = vld [vmem:[#allocation4 + $0xc1] sm:$0xff]
      %v5476 = vld [vmem:[#allocation4 + $0xc9] sm:$0xff]
      %v5477 = vld [vmem:[#allocation4 + $0xd1] sm:$0xff]
      %v5478 = vld [vmem:[#allocation4 + $0xd9] sm:$0xff]
      %v5479 = vld [vmem:[#allocation4 + $0xe1] sm:$0xff]
      %v5480 = vld [vmem:[#allocation4 + $0xe9] sm:$0xff]
      %v5481 = vld [vmem:[#allocation4 + $0xf1] sm:$0xff]
      %v5482 = vld [vmem:[#allocation4 + $0xf9] sm:$0xff]
      %v5483 = vpack.c.bf16 %v5456, %v5455
      %v5484 = vpack.c.bf16 %v5458, %v5457
      %v5485 = vpack.c.bf16 %v5460, %v5459
      %v5486 = vpack.c.bf16 %v5462, %v5461
      %v5487 = vpack.c.bf16 %v5464, %v5463
      %v5488 = vpack.c.bf16 %v5466, %v5465
      %v5489 = vpack.c.bf16 %v5468, %v5467
      %v5490 = vpack.c.bf16 %v5470, %v5469
      %v5491 = vpack.c.bf16 %v5472, %v5471
      %v5492 = vpack.c.bf16 %v5474, %v5473
      %v5493 = vpack.c.bf16 %v5476, %v5475
      %v5494 = vpack.c.bf16 %v5478, %v5477
      %v5495 = vpack.c.bf16 %v5480, %v5479
      %v5496 = vpack.c.bf16 %v5482, %v5481
      %5511 = vrot.lane.b32.xlu0 %v5483, 96
      %v5512 = vpop.permute.xlu0 %5511
      %5513 = vrot.lane.b32.xlu0 %v5484, 96
      %v5514 = vpop.permute.xlu0 %5513
      %5515 = vrot.lane.b32.xlu0 %v5485, 96
      %v5516 = vpop.permute.xlu0 %5515
      %5517 = vrot.lane.b32.xlu0 %v5486, 96
      %v5518 = vpop.permute.xlu0 %5517
      %5519 = vrot.lane.b32.xlu0 %v5487, 96
      %v5520 = vpop.permute.xlu0 %5519
      %5521 = vrot.lane.b32.xlu0 %v5488, 96
      %v5522 = vpop.permute.xlu0 %5521
      %5523 = vrot.lane.b32.xlu0 %v5489, 96
      %v5524 = vpop.permute.xlu0 %5523
      %5525 = vrot.lane.b32.xlu0 %v5490, 96
      %v5526 = vpop.permute.xlu0 %5525
      %5527 = vrot.lane.b32.xlu0 %v5491, 96
      %v5528 = vpop.permute.xlu0 %5527
      %5529 = vrot.lane.b32.xlu0 %v5492, 96
      %v5530 = vpop.permute.xlu0 %5529
      %5531 = vrot.lane.b32.xlu0 %v5493, 96
      %v5532 = vpop.permute.xlu0 %5531
      %5533 = vrot.lane.b32.xlu0 %v5494, 96
      %v5534 = vpop.permute.xlu0 %5533
      %5535 = vrot.lane.b32.xlu0 %v5495, 96
      %v5536 = vpop.permute.xlu0 %5535
      %5537 = vrot.lane.b32.xlu0 %v5496, 96
      %v5538 = vpop.permute.xlu0 %5537
      %5553 = vst.msk [vmem:[#allocation5 + $0x8] sm:$0xff] %vm5160, %v5512
      %5554 = vst.msk [vmem:[#allocation5 + $0x20] sm:$0xff] %vm5160, %v5514
      %5555 = vst.msk [vmem:[#allocation5 + $0x38] sm:$0xff] %vm5160, %v5516
      %5556 = vst.msk [vmem:[#allocation5 + $0x50] sm:$0xff] %vm5160, %v5518
      %5557 = vst.msk [vmem:[#allocation5 + $0x68] sm:$0xff] %vm5160, %v5520
      %5558 = vst.msk [vmem:[#allocation5 + $0x80] sm:$0xff] %vm5160, %v5522
      %5559 = vst.msk [vmem:[#allocation5 + $0x98] sm:$0xff] %vm5160, %v5524
      %5560 = vst.msk [vmem:[#allocation5 + $0xb0] sm:$0xff] %vm5160, %v5526
      %5561 = vst.msk [vmem:[#allocation5 + $0xc8] sm:$0xff] %vm5160, %v5528
      %5562 = vst.msk [vmem:[#allocation5 + $0xe0] sm:$0xff] %vm5160, %v5530
      %5563 = vst.msk [vmem:[#allocation5 + $0xf8] sm:$0xff] %vm5160, %v5532
      %5564 = vst.msk [vmem:[#allocation5 + $0x110] sm:$0xff] %vm5160, %v5534
      %5565 = vst.msk [vmem:[#allocation5 + $0x128] sm:$0xff] %vm5160, %v5536
      %5566 = vst.msk [vmem:[#allocation5 + $0x140] sm:$0xff] %vm5160, %v5538
      %v5567 = vld [vmem:[#allocation4 + $0x22] sm:$0xff]
      %v5568 = vld [vmem:[#allocation4 + $0x2a] sm:$0xff]
      %v5569 = vld [vmem:[#allocation4 + $0x32] sm:$0xff]
      %v5570 = vld [vmem:[#allocation4 + $0x3a] sm:$0xff]
      %v5571 = vld [vmem:[#allocation4 + $0x42] sm:$0xff]
      %v5572 = vld [vmem:[#allocation4 + $0x4a] sm:$0xff]
      %v5573 = vld [vmem:[#allocation4 + $0x52] sm:$0xff]
      %v5574 = vld [vmem:[#allocation4 + $0x5a] sm:$0xff]
      %v5575 = vld [vmem:[#allocation4 + $0x62] sm:$0xff]
      %v5576 = vld [vmem:[#allocation4 + $0x6a] sm:$0xff]
      %v5577 = vld [vmem:[#allocation4 + $0x72] sm:$0xff]
      %v5578 = vld [vmem:[#allocation4 + $0x7a] sm:$0xff]
      %v5579 = vld [vmem:[#allocation4 + $0x82] sm:$0xff]
      %v5580 = vld [vmem:[#allocation4 + $0x8a] sm:$0xff]
      %v5581 = vld [vmem:[#allocation4 + $0x92] sm:$0xff]
      %v5582 = vld [vmem:[#allocation4 + $0x9a] sm:$0xff]
      %v5583 = vld [vmem:[#allocation4 + $0xa2] sm:$0xff]
      %v5584 = vld [vmem:[#allocation4 + $0xaa] sm:$0xff]
      %v5585 = vld [vmem:[#allocation4 + $0xb2] sm:$0xff]
      %v5586 = vld [vmem:[#allocation4 + $0xba] sm:$0xff]
      %v5587 = vld [vmem:[#allocation4 + $0xc2] sm:$0xff]
      %v5588 = vld [vmem:[#allocation4 + $0xca] sm:$0xff]
      %v5589 = vld [vmem:[#allocation4 + $0xd2] sm:$0xff]
      %v5590 = vld [vmem:[#allocation4 + $0xda] sm:$0xff]
      %v5591 = vld [vmem:[#allocation4 + $0xe2] sm:$0xff]
      %v5592 = vld [vmem:[#allocation4 + $0xea] sm:$0xff]
      %v5593 = vld [vmem:[#allocation4 + $0xf2] sm:$0xff]
      %v5594 = vld [vmem:[#allocation4 + $0xfa] sm:$0xff]
      %v5595 = vpack.c.bf16 %v5568, %v5567
      %v5596 = vpack.c.bf16 %v5570, %v5569
      %v5597 = vpack.c.bf16 %v5572, %v5571
      %v5598 = vpack.c.bf16 %v5574, %v5573
      %v5599 = vpack.c.bf16 %v5576, %v5575
      %v5600 = vpack.c.bf16 %v5578, %v5577
      %v5601 = vpack.c.bf16 %v5580, %v5579
      %v5602 = vpack.c.bf16 %v5582, %v5581
      %v5603 = vpack.c.bf16 %v5584, %v5583
      %v5604 = vpack.c.bf16 %v5586, %v5585
      %v5605 = vpack.c.bf16 %v5588, %v5587
      %v5606 = vpack.c.bf16 %v5590, %v5589
      %v5607 = vpack.c.bf16 %v5592, %v5591
      %v5608 = vpack.c.bf16 %v5594, %v5593
      %5609 = vst.msk [vmem:[#allocation5 + $0x10] sm:$0xff] %vm226, %v5595
      %5610 = vst.msk [vmem:[#allocation5 + $0x28] sm:$0xff] %vm226, %v5596
      %5611 = vst.msk [vmem:[#allocation5 + $0x40] sm:$0xff] %vm226, %v5597
      %5612 = vst.msk [vmem:[#allocation5 + $0x58] sm:$0xff] %vm226, %v5598
      %5613 = vst.msk [vmem:[#allocation5 + $0x70] sm:$0xff] %vm226, %v5599
      %5614 = vst.msk [vmem:[#allocation5 + $0x88] sm:$0xff] %vm226, %v5600
      %5615 = vst.msk [vmem:[#allocation5 + $0xa0] sm:$0xff] %vm226, %v5601
      %5616 = vst.msk [vmem:[#allocation5 + $0xb8] sm:$0xff] %vm226, %v5602
      %5617 = vst.msk [vmem:[#allocation5 + $0xd0] sm:$0xff] %vm226, %v5603
      %5618 = vst.msk [vmem:[#allocation5 + $0xe8] sm:$0xff] %vm226, %v5604
      %5619 = vst.msk [vmem:[#allocation5 + $0x100] sm:$0xff] %vm226, %v5605
      %5620 = vst.msk [vmem:[#allocation5 + $0x118] sm:$0xff] %vm226, %v5606
      %5621 = vst.msk [vmem:[#allocation5 + $0x130] sm:$0xff] %vm226, %v5607
      %5622 = vst.msk [vmem:[#allocation5 + $0x148] sm:$0xff] %vm226, %v5608
      %v5623 = vld [vmem:[#allocation5] sm:$0xff]
      %v5624 = vld [vmem:[#allocation5 + $0x8] sm:$0xff]
      %v5625 = vld [vmem:[#allocation5 + $0x10] sm:$0xff]
      %v5626 = vld [vmem:[#allocation5 + $0x18] sm:$0xff]
      %v5627 = vld [vmem:[#allocation5 + $0x20] sm:$0xff]
      %v5628 = vld [vmem:[#allocation5 + $0x28] sm:$0xff]
      %v5629 = vld [vmem:[#allocation5 + $0x30] sm:$0xff]
      %v5630 = vld [vmem:[#allocation5 + $0x38] sm:$0xff]
      %v5631 = vld [vmem:[#allocation5 + $0x40] sm:$0xff]
      %v5632 = vld [vmem:[#allocation5 + $0x48] sm:$0xff]
      %v5633 = vld [vmem:[#allocation5 + $0x50] sm:$0xff]
      %v5634 = vld [vmem:[#allocation5 + $0x58] sm:$0xff]
      %v5635 = vld [vmem:[#allocation5 + $0x60] sm:$0xff]
      %v5636 = vld [vmem:[#allocation5 + $0x68] sm:$0xff]
      %v5637 = vld [vmem:[#allocation5 + $0x70] sm:$0xff]
      %v5638 = vld [vmem:[#allocation5 + $0x78] sm:$0xff]
      %v5639 = vld [vmem:[#allocation5 + $0x80] sm:$0xff]
      %v5640 = vld [vmem:[#allocation5 + $0x88] sm:$0xff]
      %v5641 = vld [vmem:[#allocation5 + $0x90] sm:$0xff]
      %v5642 = vld [vmem:[#allocation5 + $0x98] sm:$0xff]
      %v5643 = vld [vmem:[#allocation5 + $0xa0] sm:$0xff]
      %v5644 = vld [vmem:[#allocation5 + $0xa8] sm:$0xff]
      %v5645 = vld [vmem:[#allocation5 + $0xb0] sm:$0xff]
      %v5646 = vld [vmem:[#allocation5 + $0xb8] sm:$0xff]
      %v5647 = vld [vmem:[#allocation5 + $0xc0] sm:$0xff]
      %v5648 = vld [vmem:[#allocation5 + $0xc8] sm:$0xff]
      %v5649 = vld [vmem:[#allocation5 + $0xd0] sm:$0xff]
      %v5650 = vld [vmem:[#allocation5 + $0xd8] sm:$0xff]
      %v5651 = vld [vmem:[#allocation5 + $0xe0] sm:$0xff]
      %v5652 = vld [vmem:[#allocation5 + $0xe8] sm:$0xff]
      %v5653 = vld [vmem:[#allocation5 + $0xf0] sm:$0xff]
      %v5654 = vld [vmem:[#allocation5 + $0xf8] sm:$0xff]
      %v5655 = vld [vmem:[#allocation5 + $0x100] sm:$0xff]
      %v5656 = vld [vmem:[#allocation5 + $0x108] sm:$0xff]
      %v5657 = vld [vmem:[#allocation5 + $0x110] sm:$0xff]
      %v5658 = vld [vmem:[#allocation5 + $0x118] sm:$0xff]
      %v5659 = vld [vmem:[#allocation5 + $0x120] sm:$0xff]
      %v5660 = vld [vmem:[#allocation5 + $0x128] sm:$0xff]
      %v5661 = vld [vmem:[#allocation5 + $0x130] sm:$0xff]
      %v5662 = vld [vmem:[#allocation5 + $0x138] sm:$0xff]
      %v5663 = vld [vmem:[#allocation5 + $0x140] sm:$0xff]
      %v5664 = vld [vmem:[#allocation5 + $0x148] sm:$0xff]
      %v5666 = vlaneseq
      %v5667 = vshrl.u32 %v5666, 7
      %v5668 = vsub.s32 0, %v5667
      %v5669 = vrot.slane %v423, %v5668
      %v5707 = vunpack.c.l.b16 %v387
      %v5708 = vunpack.c.l.b16 %v388
      %v5709 = vunpack.c.l.b16 %v389
      %v5710 = vunpack.c.l.b16 %v390
      %v5711 = vunpack.c.l.b16 %v391
      %v5712 = vunpack.c.l.b16 %v392
      %v5713 = vunpack.c.l.b16 %v393
      %v5714 = vunpack.c.l.b16 %v394
      %v5715 = vunpack.c.l.b16 %v395
      %v5716 = vunpack.c.l.b16 %v396
      %v5717 = vunpack.c.l.b16 %v397
      %v5718 = vunpack.c.l.b16 %v398
      %v5719 = vunpack.c.l.b16 %v399
      %v5720 = vunpack.c.l.b16 %v400
      %v5721 = vunpack.c.l.b16 %v401
      %v5722 = vunpack.c.l.b16 %v402
      %v5723 = vunpack.c.l.b16 %v403
      %v5724 = vunpack.c.l.b16 %v404
      %v5725 = vunpack.c.l.b16 %v405
      %v5726 = vunpack.c.l.b16 %v406
      %v5727 = vunpack.c.l.b16 %v407
      %v5728 = vunpack.c.l.b16 %v408
      %v5729 = vunpack.c.l.b16 %v409
      %v5730 = vunpack.c.l.b16 %v410
      %v5731 = vunpack.c.l.b16 %v411
      %v5732 = vunpack.c.l.b16 %v412
      %v5733 = vunpack.c.l.b16 %v413
      %v5734 = vunpack.c.l.b16 %v414
      %v5735 = vunpack.c.l.b16 %v415
      %v5736 = vunpack.c.l.b16 %v416
      %v5737 = vunpack.c.l.b16 %v417
      %v5738 = vunpack.c.l.b16 %v418
      %v5739 = vunpack.c.l.b16 %v419
      %v5740 = vunpack.c.l.b16 %v420
      %v5741 = vunpack.c.l.b16 %v421
      %v5742 = vunpack.c.l.b16 %v422
      %v5743 = vpack.c.b16 %v5708, %v5707
      %v5744 = vpack.c.b16 %v5710, %v5709
      %v5745 = vpack.c.b16 %v5712, %v5711
      %v5746 = vpack.c.b16 %v5714, %v5713
      %v5747 = vpack.c.b16 %v5716, %v5715
      %v5748 = vpack.c.b16 %v5718, %v5717
      %v5749 = vpack.c.b16 %v5720, %v5719
      %v5750 = vpack.c.b16 %v5722, %v5721
      %v5751 = vpack.c.b16 %v5724, %v5723
      %v5752 = vpack.c.b16 %v5726, %v5725
      %v5753 = vpack.c.b16 %v5728, %v5727
      %v5754 = vpack.c.b16 %v5730, %v5729
      %v5755 = vpack.c.b16 %v5732, %v5731
      %v5756 = vpack.c.b16 %v5734, %v5733
      %v5757 = vpack.c.b16 %v5736, %v5735
      %v5758 = vpack.c.b16 %v5738, %v5737
      %v5759 = vpack.c.b16 %v5740, %v5739
      %v5760 = vpack.c.b16 %v5742, %v5741
      %v5780 = vsel %vm226, %v5625, 0
      %v5783 = vsel %vm226, %v5628, 0
      %v5786 = vsel %vm226, %v5631, 0
      %v5789 = vsel %vm226, %v5634, 0
      %v5792 = vsel %vm226, %v5637, 0
      %v5795 = vsel %vm226, %v5640, 0
      %v5798 = vsel %vm226, %v5643, 0
      %v5801 = vsel %vm226, %v5646, 0
      %v5804 = vsel %vm226, %v5649, 0
      %v5807 = vsel %vm226, %v5652, 0
      %v5810 = vsel %vm226, %v5655, 0
      %v5813 = vsel %vm226, %v5658, 0
      %v5816 = vsel %vm226, %v5661, 0
      %v5819 = vsel %vm226, %v5664, 0
      %5821 = vmatprep.subr.bf16.mxu0 0
      %5822 = vmatpush1.bf16.msra.mxu0 %v5743
      %5823 = vmatprep.subr.bf16.mxu0 0
      %5824 = vmatpush1.bf16.msra.mxu0 %v5744
      %5825 = vmatprep.subr.bf16.mxu0 0
      %5826 = vmatpush1.bf16.msra.mxu0 %v5745
      %5827 = vmatprep.subr.bf16.mxu0 0
      %5828 = vmatpush1.bf16.msra.mxu0 %v5746
      %5829 = vmatprep.subr.bf16.mxu0 0
      %5830 = vmatpush1.bf16.msra.mxu0 %v5747
      %5831 = vmatprep.subr.bf16.mxu0 0
      %5832 = vmatpush1.bf16.msra.mxu0 %v5748
      %5833 = vmatprep.subr.bf16.mxu0 0
      %5834 = vmatpush1.bf16.msra.mxu0 %v5749
      %5835 = vmatprep.subr.bf16.mxu0 0
      %5836 = vmatpush1.bf16.msra.mxu0 %v5750
      %5837 = vmatprep.subr.bf16.mxu0 0
      %5838 = vmatpush1.bf16.msra.mxu0 %v5751
      %5839 = vmatprep.subr.bf16.mxu0 0
      %5840 = vmatpush1.bf16.msra.mxu0 %v5752
      %5841 = vmatprep.subr.bf16.mxu0 0
      %5842 = vmatpush1.bf16.msra.mxu0 %v5753
      %5843 = vmatprep.subr.bf16.mxu0 0
      %5844 = vmatpush1.bf16.msra.mxu0 %v5754
      %5845 = vmatprep.subr.bf16.mxu0 0
      %5846 = vmatpush1.bf16.msra.mxu0 %v5755
      %5847 = vmatprep.subr.bf16.mxu0 0
      %5848 = vmatpush1.bf16.msra.mxu0 %v5756
      %5849 = vmatprep.subr.bf16.mxu0 0
      %5850 = vmatpush1.bf16.msra.mxu0 %v5757
      %5851 = vmatprep.subr.bf16.mxu0 0
      %5852 = vmatpush1.bf16.msra.mxu0 %v5758
      %5853 = vmatprep.mubr.bf16.mxu0 %v5624
      %5854 = vmatmul.mubr.bf16.gmra.mrb[0].mxu0 %v5623
      %v5855 = vpop.f32.mrb[0].mxu0
      %v5856 = vadd.f32 %v5669, %v5855
      %v5857 = vpop.f32.mrb[0].mxu0
      %v5858 = vpop.f32.mrb[0].mxu0
      %v5859 = vadd.f32 %v5669, %v5858
      %v5860 = vpop.f32.mrb[0].mxu0
      %5861 = vmatprep.mubr.bf16.mxu0 %v5627
      %5862 = vmatmul.mubr.bf16.gmra.mrb[0].mxu0 %v5626
      %v5863 = vpop.f32.mrb[0].mxu0
      %v5864 = vadd.f32 %v5669, %v5863
      %v5865 = vpop.f32.mrb[0].mxu0
      %v5866 = vpop.f32.mrb[0].mxu0
      %v5867 = vadd.f32 %v5669, %v5866
      %v5868 = vpop.f32.mrb[0].mxu0
      %5869 = vmatprep.mubr.bf16.mxu0 %v5630
      %5870 = vmatmul.mubr.bf16.gmra.mrb[0].mxu0 %v5629
      %v5871 = vpop.f32.mrb[0].mxu0
      %v5872 = vadd.f32 %v5669, %v5871
      %v5873 = vpop.f32.mrb[0].mxu0
      %v5874 = vpop.f32.mrb[0].mxu0
      %v5875 = vadd.f32 %v5669, %v5874
      %v5876 = vpop.f32.mrb[0].mxu0
      %5877 = vmatprep.mubr.bf16.mxu0 %v5633
      %5878 = vmatmul.mubr.bf16.gmra.mrb[0].mxu0 %v5632
      %v5879 = vpop.f32.mrb[0].mxu0
      %v5880 = vadd.f32 %v5669, %v5879
      %v5881 = vpop.f32.mrb[0].mxu0
      %v5882 = vpop.f32.mrb[0].mxu0
      %v5883 = vadd.f32 %v5669, %v5882
      %v5884 = vpop.f32.mrb[0].mxu0
      %5885 = vmatprep.mubr.bf16.mxu0 %v5636
      %5886 = vmatmul.mubr.bf16.gmra.mrb[0].mxu0 %v5635
      %v5887 = vpop.f32.mrb[0].mxu0
      %v5888 = vadd.f32 %v5669, %v5887
      %v5889 = vpop.f32.mrb[0].mxu0
      %v5890 = vpop.f32.mrb[0].mxu0
      %v5891 = vadd.f32 %v5669, %v5890
      %v5892 = vpop.f32.mrb[0].mxu0
      %5893 = vmatprep.mubr.bf16.mxu0 %v5639
      %5894 = vmatmul.mubr.bf16.gmra.mrb[0].mxu0 %v5638
      %v5895 = vpop.f32.mrb[0].mxu0
      %v5896 = vadd.f32 %v5669, %v5895
      %v5897 = vpop.f32.mrb[0].mxu0
      %v5898 = vpop.f32.mrb[0].mxu0
      %v5899 = vadd.f32 %v5669, %v5898
      %v5900 = vpop.f32.mrb[0].mxu0
      %5901 = vmatprep.mubr.bf16.mxu0 %v5642
      %5902 = vmatmul.mubr.bf16.gmra.mrb[0].mxu0 %v5641
      %v5903 = vpop.f32.mrb[0].mxu0
      %v5904 = vadd.f32 %v5669, %v5903
      %v5905 = vpop.f32.mrb[0].mxu0
      %v5906 = vpop.f32.mrb[0].mxu0
      %v5907 = vadd.f32 %v5669, %v5906
      %v5908 = vpop.f32.mrb[0].mxu0
      %5909 = vmatprep.mubr.bf16.mxu0 %v5645
      %5910 = vmatmul.mubr.bf16.gmra.mrb[0].mxu0 %v5644
      %v5911 = vpop.f32.mrb[0].mxu0
      %v5912 = vadd.f32 %v5669, %v5911
      %v5913 = vpop.f32.mrb[0].mxu0
      %v5914 = vpop.f32.mrb[0].mxu0
      %v5915 = vadd.f32 %v5669, %v5914
      %v5916 = vpop.f32.mrb[0].mxu0
      %5917 = vmatprep.mubr.bf16.mxu0 %v5648
      %5918 = vmatmul.mubr.bf16.gmra.mrb[0].mxu0 %v5647
      %v5919 = vpop.f32.mrb[0].mxu0
      %v5920 = vadd.f32 %v5669, %v5919
      %v5921 = vpop.f32.mrb[0].mxu0
      %v5922 = vpop.f32.mrb[0].mxu0
      %v5923 = vadd.f32 %v5669, %v5922
      %v5924 = vpop.f32.mrb[0].mxu0
      %5925 = vmatprep.mubr.bf16.mxu0 %v5651
      %5926 = vmatmul.mubr.bf16.gmra.mrb[0].mxu0 %v5650
      %v5927 = vpop.f32.mrb[0].mxu0
      %v5928 = vadd.f32 %v5669, %v5927
      %v5929 = vpop.f32.mrb[0].mxu0
      %v5930 = vpop.f32.mrb[0].mxu0
      %v5931 = vadd.f32 %v5669, %v5930
      %v5932 = vpop.f32.mrb[0].mxu0
      %5933 = vmatprep.mubr.bf16.mxu0 %v5654
      %5934 = vmatmul.mubr.bf16.gmra.mrb[0].mxu0 %v5653
      %v5935 = vpop.f32.mrb[0].mxu0
      %v5936 = vadd.f32 %v5669, %v5935
      %v5937 = vpop.f32.mrb[0].mxu0
      %v5938 = vpop.f32.mrb[0].mxu0
      %v5939 = vadd.f32 %v5669, %v5938
      %v5940 = vpop.f32.mrb[0].mxu0
      %5941 = vmatprep.mubr.bf16.mxu0 %v5657
      %5942 = vmatmul.mubr.bf16.gmra.mrb[0].mxu0 %v5656
      %v5943 = vpop.f32.mrb[0].mxu0
      %v5944 = vadd.f32 %v5669, %v5943
      %v5945 = vpop.f32.mrb[0].mxu0
      %v5946 = vpop.f32.mrb[0].mxu0
      %v5947 = vadd.f32 %v5669, %v5946
      %v5948 = vpop.f32.mrb[0].mxu0
      %5949 = vmatprep.mubr.bf16.mxu0 %v5660
      %5950 = vmatmul.mubr.bf16.gmra.mrb[0].mxu0 %v5659
      %v5951 = vpop.f32.mrb[0].mxu0
      %v5952 = vadd.f32 %v5669, %v5951
      %v5953 = vpop.f32.mrb[0].mxu0
      %v5954 = vpop.f32.mrb[0].mxu0
      %v5955 = vadd.f32 %v5669, %v5954
      %v5956 = vpop.f32.mrb[0].mxu0
      %5957 = vmatprep.mubr.bf16.mxu0 %v5663
      %5958 = vmatmul.mubr.bf16.gmra.mrb[0].mxu0 %v5662
      %v5959 = vpop.f32.mrb[0].mxu0
      %v5960 = vadd.f32 %v5669, %v5959
      %v5961 = vpop.f32.mrb[0].mxu0
      %v5962 = vpop.f32.mrb[0].mxu0
      %v5963 = vadd.f32 %v5669, %v5962
      %v5964 = vpop.f32.mrb[0].mxu0
      %5965 = vdwg.mxu0
      %5966 = vmatprep.subr.bf16.mxu0 0
      %5967 = vmatpush1.bf16.msra.mxu0 %v5759
      %5968 = vmatprep.subr.bf16.mxu0 0
      %5969 = vmatpush1.bf16.msra.mxu0 %v5760
      %5970 = vmatprep.subr.bf16.mxu0 0
      %5971 = vmatpush1.bf16.msra.mxu0 0
      %5972 = vmatprep.subr.bf16.mxu0 0
      %5973 = vmatpush1.bf16.msra.mxu0 0
      %5974 = vmatprep.subr.bf16.mxu0 0
      %5975 = vmatpush1.bf16.msra.mxu0 0
      %5976 = vmatprep.subr.bf16.mxu0 0
      %5977 = vmatpush1.bf16.msra.mxu0 0
      %5978 = vmatprep.subr.bf16.mxu0 0
      %5979 = vmatpush1.bf16.msra.mxu0 0
      %5980 = vmatprep.subr.bf16.mxu0 0
      %5981 = vmatpush1.bf16.msra.mxu0 0
      %5982 = vmatprep.subr.bf16.mxu0 0
      %5983 = vmatpush1.bf16.msra.mxu0 0
      %5984 = vmatprep.subr.bf16.mxu0 0
      %5985 = vmatpush1.bf16.msra.mxu0 0
      %5986 = vmatprep.subr.bf16.mxu0 0
      %5987 = vmatpush1.bf16.msra.mxu0 0
      %5988 = vmatprep.subr.bf16.mxu0 0
      %5989 = vmatpush1.bf16.msra.mxu0 0
      %5990 = vmatprep.subr.bf16.mxu0 0
      %5991 = vmatpush1.bf16.msra.mxu0 0
      %5992 = vmatprep.subr.bf16.mxu0 0
      %5993 = vmatpush1.bf16.msra.mxu0 0
      %5994 = vmatprep.subr.bf16.mxu0 0
      %5995 = vmatpush1.bf16.msra.mxu0 0
      %5996 = vmatprep.subr.bf16.mxu0 0
      %5997 = vmatpush1.bf16.msra.mxu0 0
      %5998 = vmatprep.mubr.bf16.mxu0 0
      %5999 = vmatmul.mubr.bf16.gmra.mrb[0].mxu0 %v5780
      %v6000 = vpop.f32.mrb[0].mxu0
      %v6001 = vadd.f32 %v5856, %v6000
      %v6002 = vpop.f32.mrb[0].mxu0
      %v6003 = vpop.f32.mrb[0].mxu0
      %v6004 = vadd.f32 %v5859, %v6003
      %v6005 = vpop.f32.mrb[0].mxu0
      %6006 = vmatprep.mubr.bf16.mxu0 0
      %6007 = vmatmul.mubr.bf16.gmra.mrb[0].mxu0 %v5783
      %v6008 = vpop.f32.mrb[0].mxu0
      %v6009 = vadd.f32 %v5864, %v6008
      %v6010 = vpop.f32.mrb[0].mxu0
      %v6011 = vpop.f32.mrb[0].mxu0
      %v6012 = vadd.f32 %v5867, %v6011
      %v6013 = vpop.f32.mrb[0].mxu0
      %6014 = vmatprep.mubr.bf16.mxu0 0
      %6015 = vmatmul.mubr.bf16.gmra.mrb[0].mxu0 %v5786
      %v6016 = vpop.f32.mrb[0].mxu0
      %v6017 = vadd.f32 %v5872, %v6016
      %v6018 = vpop.f32.mrb[0].mxu0
      %v6019 = vpop.f32.mrb[0].mxu0
      %v6020 = vadd.f32 %v5875, %v6019
      %v6021 = vpop.f32.mrb[0].mxu0
      %6022 = vmatprep.mubr.bf16.mxu0 0
      %6023 = vmatmul.mubr.bf16.gmra.mrb[0].mxu0 %v5789
      %v6024 = vpop.f32.mrb[0].mxu0
      %v6025 = vadd.f32 %v5880, %v6024
      %v6026 = vpop.f32.mrb[0].mxu0
      %v6027 = vpop.f32.mrb[0].mxu0
      %v6028 = vadd.f32 %v5883, %v6027
      %v6029 = vpop.f32.mrb[0].mxu0
      %6030 = vmatprep.mubr.bf16.mxu0 0
      %6031 = vmatmul.mubr.bf16.gmra.mrb[0].mxu0 %v5792
      %v6032 = vpop.f32.mrb[0].mxu0
      %v6033 = vadd.f32 %v5888, %v6032
      %v6034 = vpop.f32.mrb[0].mxu0
      %v6035 = vpop.f32.mrb[0].mxu0
      %v6036 = vadd.f32 %v5891, %v6035
      %v6037 = vpop.f32.mrb[0].mxu0
      %6038 = vmatprep.mubr.bf16.mxu0 0
      %6039 = vmatmul.mubr.bf16.gmra.mrb[0].mxu0 %v5795
      %v6040 = vpop.f32.mrb[0].mxu0
      %v6041 = vadd.f32 %v5896, %v6040
      %v6042 = vpop.f32.mrb[0].mxu0
      %v6043 = vpop.f32.mrb[0].mxu0
      %v6044 = vadd.f32 %v5899, %v6043
      %v6045 = vpop.f32.mrb[0].mxu0
      %6046 = vmatprep.mubr.bf16.mxu0 0
      %6047 = vmatmul.mubr.bf16.gmra.mrb[0].mxu0 %v5798
      %v6048 = vpop.f32.mrb[0].mxu0
      %v6049 = vadd.f32 %v5904, %v6048
      %v6050 = vpop.f32.mrb[0].mxu0
      %v6051 = vpop.f32.mrb[0].mxu0
      %v6052 = vadd.f32 %v5907, %v6051
      %v6053 = vpop.f32.mrb[0].mxu0
      %6054 = vmatprep.mubr.bf16.mxu0 0
      %6055 = vmatmul.mubr.bf16.gmra.mrb[0].mxu0 %v5801
      %v6056 = vpop.f32.mrb[0].mxu0
      %v6057 = vadd.f32 %v5912, %v6056
      %v6058 = vpop.f32.mrb[0].mxu0
      %v6059 = vpop.f32.mrb[0].mxu0
      %v6060 = vadd.f32 %v5915, %v6059
      %v6061 = vpop.f32.mrb[0].mxu0
      %6062 = vmatprep.mubr.bf16.mxu0 0
      %6063 = vmatmul.mubr.bf16.gmra.mrb[0].mxu0 %v5804
      %v6064 = vpop.f32.mrb[0].mxu0
      %v6065 = vadd.f32 %v5920, %v6064
      %v6066 = vpop.f32.mrb[0].mxu0
      %v6067 = vpop.f32.mrb[0].mxu0
      %v6068 = vadd.f32 %v5923, %v6067
      %v6069 = vpop.f32.mrb[0].mxu0
      %6070 = vmatprep.mubr.bf16.mxu0 0
      %6071 = vmatmul.mubr.bf16.gmra.mrb[0].mxu0 %v5807
      %v6072 = vpop.f32.mrb[0].mxu0
      %v6073 = vadd.f32 %v5928, %v6072
      %v6074 = vpop.f32.mrb[0].mxu0
      %v6075 = vpop.f32.mrb[0].mxu0
      %v6076 = vadd.f32 %v5931, %v6075
      %v6077 = vpop.f32.mrb[0].mxu0
      %6078 = vmatprep.mubr.bf16.mxu0 0
      %6079 = vmatmul.mubr.bf16.gmra.mrb[0].mxu0 %v5810
      %v6080 = vpop.f32.mrb[0].mxu0
      %v6081 = vadd.f32 %v5936, %v6080
      %v6082 = vpop.f32.mrb[0].mxu0
      %v6083 = vpop.f32.mrb[0].mxu0
      %v6084 = vadd.f32 %v5939, %v6083
      %v6085 = vpop.f32.mrb[0].mxu0
      %6086 = vmatprep.mubr.bf16.mxu0 0
      %6087 = vmatmul.mubr.bf16.gmra.mrb[0].mxu0 %v5813
      %v6088 = vpop.f32.mrb[0].mxu0
      %v6089 = vadd.f32 %v5944, %v6088
      %v6090 = vpop.f32.mrb[0].mxu0
      %v6091 = vpop.f32.mrb[0].mxu0
      %v6092 = vadd.f32 %v5947, %v6091
      %v6093 = vpop.f32.mrb[0].mxu0
      %6094 = vmatprep.mubr.bf16.mxu0 0
      %6095 = vmatmul.mubr.bf16.gmra.mrb[0].mxu0 %v5816
      %v6096 = vpop.f32.mrb[0].mxu0
      %v6097 = vadd.f32 %v5952, %v6096
      %v6098 = vpop.f32.mrb[0].mxu0
      %v6099 = vpop.f32.mrb[0].mxu0
      %v6100 = vadd.f32 %v5955, %v6099
      %v6101 = vpop.f32.mrb[0].mxu0
      %6102 = vmatprep.mubr.bf16.mxu0 0
      %6103 = vmatmul.mubr.bf16.gmra.mrb[0].mxu0 %v5819
      %v6104 = vpop.f32.mrb[0].mxu0
      %v6105 = vadd.f32 %v5960, %v6104
      %v6106 = vpop.f32.mrb[0].mxu0
      %v6107 = vpop.f32.mrb[0].mxu0
      %v6108 = vadd.f32 %v5963, %v6107
      %v6109 = vpop.f32.mrb[0].mxu0
      %6110 = vdwg.mxu0
      %v6111 = vmax.f32 %v6001, 0.0
      %v6112 = vmax.f32 %v6004, 0.0
      %v6113 = vmax.f32 %v6009, 0.0
      %v6114 = vmax.f32 %v6012, 0.0
      %v6115 = vmax.f32 %v6017, 0.0
      %v6116 = vmax.f32 %v6020, 0.0
      %v6117 = vmax.f32 %v6025, 0.0
      %v6118 = vmax.f32 %v6028, 0.0
      %v6119 = vmax.f32 %v6033, 0.0
      %v6120 = vmax.f32 %v6036, 0.0
      %v6121 = vmax.f32 %v6041, 0.0
      %v6122 = vmax.f32 %v6044, 0.0
      %v6123 = vmax.f32 %v6049, 0.0
      %v6124 = vmax.f32 %v6052, 0.0
      %v6125 = vmax.f32 %v6057, 0.0
      %v6126 = vmax.f32 %v6060, 0.0
      %v6127 = vmax.f32 %v6065, 0.0
      %v6128 = vmax.f32 %v6068, 0.0
      %v6129 = vmax.f32 %v6073, 0.0
      %v6130 = vmax.f32 %v6076, 0.0
      %v6131 = vmax.f32 %v6081, 0.0
      %v6132 = vmax.f32 %v6084, 0.0
      %v6133 = vmax.f32 %v6089, 0.0
      %v6134 = vmax.f32 %v6092, 0.0
      %v6135 = vmax.f32 %v6097, 0.0
      %v6136 = vmax.f32 %v6100, 0.0
      %v6137 = vmax.f32 %v6105, 0.0
      %v6138 = vmax.f32 %v6108, 0.0
      %v6139 = vmax.f32 %v6111, %v6113
      %v6140 = vmax.f32 %v6112, %v6114
      %vm6141 = vcmask 523264
      %6142 = vst.msk [vmem:[#allocation6] sm:$0xff] %vm6141, %v6139
      %6143 = vst.msk [vmem:[#allocation6 + $0x8] sm:$0xff] %vm6141, %v6140
      %v6144 = vmax.f32 %v6115, %v6117
      %v6145 = vmax.f32 %v6116, %v6118
      %s6146 = scalar_lea.vmem [#allocation6], 16
      %6147 = vst.msk [vmem:[%s6146] sm:$0xff] %vm6141, %v6144
      %6148 = vst.msk [vmem:[%s6146 + $0x8] sm:$0xff] %vm6141, %v6145
      %v6149 = vmax.f32 %v6119, %v6121
      %v6150 = vmax.f32 %v6120, %v6122
      %s6151 = scalar_lea.vmem [#allocation6], 32
      %6152 = vst.msk [vmem:[%s6151] sm:$0xff] %vm6141, %v6149
      %6153 = vst.msk [vmem:[%s6151 + $0x8] sm:$0xff] %vm6141, %v6150
      %v6154 = vmax.f32 %v6123, %v6125
      %v6155 = vmax.f32 %v6124, %v6126
      %s6156 = scalar_lea.vmem [#allocation6], 48
      %6157 = vst.msk [vmem:[%s6156] sm:$0xff] %vm6141, %v6154
      %6158 = vst.msk [vmem:[%s6156 + $0x8] sm:$0xff] %vm6141, %v6155
      %v6159 = vmax.f32 %v6127, %v6129
      %v6160 = vmax.f32 %v6128, %v6130
      %s6161 = scalar_lea.vmem [#allocation6], 64
      %6162 = vst.msk [vmem:[%s6161] sm:$0xff] %vm6141, %v6159
      %6163 = vst.msk [vmem:[%s6161 + $0x8] sm:$0xff] %vm6141, %v6160
      %v6164 = vmax.f32 %v6131, %v6133
      %v6165 = vmax.f32 %v6132, %v6134
      %s6166 = scalar_lea.vmem [#allocation6], 80
      %6167 = vst.msk [vmem:[%s6166] sm:$0xff] %vm6141, %v6164
      %6168 = vst.msk [vmem:[%s6166 + $0x8] sm:$0xff] %vm6141, %v6165
      %v6169 = vmax.f32 %v6135, %v6137
      %v6170 = vmax.f32 %v6136, %v6138
      %s6171 = scalar_lea.vmem [#allocation6], 96
      %6172 = vst.msk [vmem:[%s6171] sm:$0xff] %vm6141, %v6169
      %6173 = vst.msk [vmem:[%s6171 + $0x8] sm:$0xff] %vm6141, %v6170
      %v6174 = vld [vmem:[#allocation6] ss:$2 sm:$0x7f]
      %s6175 = scalar_lea.vmem [#allocation6], 16
      %v6176 = vld [vmem:[%s6175] ss:$2 sm:$0x7f]
      %s6177 = scalar_lea.vmem [#allocation6], 32
      %v6178 = vld [vmem:[%s6177] ss:$2 sm:$0x7f]
      %s6179 = scalar_lea.vmem [#allocation6], 48
      %v6180 = vld [vmem:[%s6179] ss:$2 sm:$0x7f]
      %s6181 = scalar_lea.vmem [#allocation6], 64
      %v6182 = vld [vmem:[%s6181] ss:$2 sm:$0x7f]
      %s6183 = scalar_lea.vmem [#allocation6], 80
      %v6184 = vld [vmem:[%s6183] ss:$2 sm:$0x7f]
      %s6185 = scalar_lea.vmem [#allocation6], 96
      %v6186 = vld [vmem:[%s6185] ss:$2 sm:$0x7f]
      %s6187 = scalar_lea.vmem [#allocation6], 1
      %v6188 = vld [vmem:[%s6187] ss:$2 sm:$0x7f]
      %s6189 = scalar_lea.vmem [#allocation6], 17
      %v6190 = vld [vmem:[%s6189] ss:$2 sm:$0x7f]
      %s6191 = scalar_lea.vmem [#allocation6], 33
      %v6192 = vld [vmem:[%s6191] ss:$2 sm:$0x7f]
      %s6193 = scalar_lea.vmem [#allocation6], 49
      %v6194 = vld [vmem:[%s6193] ss:$2 sm:$0x7f]
      %s6195 = scalar_lea.vmem [#allocation6], 65
      %v6196 = vld [vmem:[%s6195] ss:$2 sm:$0x7f]
      %s6197 = scalar_lea.vmem [#allocation6], 81
      %v6198 = vld [vmem:[%s6197] ss:$2 sm:$0x7f]
      %s6199 = scalar_lea.vmem [#allocation6], 97
      %v6200 = vld [vmem:[%s6199] ss:$2 sm:$0x7f]
      %v6201 = vmax.f32 %v6174, %v6188
      %v6202 = vmax.f32 %v6176, %v6190
      %v6203 = vmax.f32 %v6178, %v6192
      %v6204 = vmax.f32 %v6180, %v6194
      %v6205 = vmax.f32 %v6182, %v6196
      %v6206 = vmax.f32 %v6184, %v6198
      %v6207 = vmax.f32 %v6186, %v6200
      %v6208 = vpack.c.bf16 %v6201, %v6201
      %v6209 = vpack.c.bf16 %v6202, %v6202
      %v6210 = vpack.c.bf16 %v6203, %v6203
      %v6211 = vpack.c.bf16 %v6204, %v6204
      %v6212 = vpack.c.bf16 %v6205, %v6205
      %v6213 = vpack.c.bf16 %v6206, %v6206
      %v6214 = vpack.c.bf16 %v6207, %v6207
      %vm6215 = vcmask 519168
      %vm6216 = vsmask.f32 3328
      %vm6217 = vmand %vm6215, %vm6216
      %v6218 = vld [vmem:[%s224] sm:$0xf]
      %v6219 = vsel %vm6217, %v6208, %v6218
      %6220 = vst [vmem:[%s224] sm:$0xf] %v6219
      %v6221 = vld [vmem:[%s224 + $0x4] sm:$0xf]
      %v6222 = vsel %vm6217, %v6209, %v6221
      %6223 = vst [vmem:[%s224 + $0x4] sm:$0xf] %v6222
      %v6224 = vld [vmem:[%s224 + $0x8] sm:$0xf]
      %v6225 = vsel %vm6217, %v6210, %v6224
      %6226 = vst [vmem:[%s224 + $0x8] sm:$0xf] %v6225
      %v6227 = vld [vmem:[%s224 + $0xc] sm:$0xf]
      %v6228 = vsel %vm6217, %v6211, %v6227
      %6229 = vst [vmem:[%s224 + $0xc] sm:$0xf] %v6228
      %v6230 = vld [vmem:[%s224 + $0x10] sm:$0xf]
      %v6231 = vsel %vm6217, %v6212, %v6230
      %6232 = vst [vmem:[%s224 + $0x10] sm:$0xf] %v6231
      %v6233 = vld [vmem:[%s224 + $0x14] sm:$0xf]
      %v6234 = vsel %vm6217, %v6213, %v6233
      %6235 = vst [vmem:[%s224 + $0x14] sm:$0xf] %v6234
      %v6236 = vld [vmem:[%s224 + $0x18] sm:$0xf]
      %v6237 = vsel %vm6217, %v6214, %v6236
      %6238 = vst [vmem:[%s224 + $0x18] sm:$0xf] %v6237
      %p6239 = scmp.lt.s32.totalorder %s16, 1
      %s6240 = scalar_select %p6239, %s16, 1
      %s6241 = smul.addr %s6240, 7
      %s6242 = smul.addr %s6241, 4
      %s6243 = scalar_lea.vmem %s5, %s6242
      // Predicated region
      $region41: #{improved_cnn_forward.2} parent=39 // pred_check
        %p6244 = pneg %p144
      $region42: #{improved_cnn_forward.2} parent=39 // pred_check_branch
        %6246 = sbr.rel (%p6244) target = $region44
      $region43: #{improved_cnn_forward.2} parent=39 // pred_region
        _
      $region44: #{improved_cnn_forward.2} parent=39 // pred_fallthru
        _
    $region40: #{improved_cnn_forward.2} parent=5 // pred_fallthru
      _
    %p6247 = scmp.le.s32.totalorder 2, %s11
    // Predicated region
    $region45: #{improved_cnn_forward.2} parent=5 // pred_check
      %p6248 = pneg %p6247
    $region46: #{improved_cnn_forward.2} parent=5 // pred_check_branch
      %6250 = sbr.rel (%p6248) target = $region48
    $region47: #{improved_cnn_forward.2} parent=5 // pred_region
      %s6251 = ssub.s32 %s11, 2
      // Predicated region
      $region49: #{improved_cnn_forward.2} parent=47 // pred_check
        %p6252 = pneg %p150
      $region50: #{improved_cnn_forward.2} parent=47 // pred_check_branch
        %6254 = sbr.rel (%p6252) target = $region52
      $region51: #{improved_cnn_forward.2} parent=47 // pred_region
        %p6255 = scmp.lt.s32.totalorder %s17, 1
        %s6256 = scalar_select %p6255, %s17, 1
        %s6257 = smul.addr %s6256, 7
        %s6258 = smul.addr %s6257, 4
        %s6259 = scalar_lea.vmem %s5, %s6258
      $region52: #{improved_cnn_forward.2} parent=47 // pred_fallthru
        _
    $region48: #{improved_cnn_forward.2} parent=5 // pred_fallthru
      _
  $region6: #{improved_cnn_forward.2} parent=0 // loop_footer
    %s15 = sadd.s32 1, %s11
  $region7: #{improved_cnn_forward.2} parent=0 // loop_footer_branch
    %10 = sbr.rel target = $region3
  $region8: #{improved_cnn_forward.2} parent=0 // loop_exit
    _

</llo_original>
